<compile_context>
chip_gen: v7x
topology: tpu7x:2x2x1
jax: 0.10.0
libtpu: 0.0.40
codegen_flags: <defaults>
</compile_context>

<pallas_src>
from functools import partial

import jax
import jax.numpy as jnp
from jax.experimental import pallas as pl
from jax.experimental.pallas import tpu as pltpu

LANE = 128


def _round_up(x: int, m: int) -> int:
    return (x + m - 1) // m * m


# ---------------------------------------------------------------------------
# Pallas kernels
# ---------------------------------------------------------------------------
def _conv_relu_pool_kernel(x_ref, w_ref, b_ref, o_ref, *, taps: int):
    """Fused conv-GEMM + bias + ReLU + maxpool.

    x_ref: (taps, R, Kp) im2col patches, one slab per pooling-window slot
    w_ref: (Kp, Cp)      weights, output channels zero-padded to 128 lanes
    b_ref: (1, Cp)       bias, zero-padded
    o_ref: (R, Cp)       pooled output, rows = (n, ph, pw), lane-dense
    """
    w = w_ref[...]
    b = b_ref[...]
    acc = jnp.dot(x_ref[0], w, preferred_element_type=jnp.float32) + b
    for t in range(1, taps):                      # static unroll over window slots
        y = jnp.dot(x_ref[t], w, preferred_element_type=jnp.float32) + b
        acc = jnp.maximum(acc, y)                 # maxpool over the window
    # ReLU commutes with max, so apply it once at the end.
    o_ref[...] = jnp.maximum(acc, 0.0).astype(o_ref.dtype)


def _mlp_kernel(x_ref, w1_ref, b1_ref, w2_ref, b2_ref, w3_ref, b3_ref, o_ref):
    """fc1 -> ReLU -> fc2 -> ReLU -> fc3, all widths padded to 128 lanes."""
    h = jnp.dot(x_ref[...], w1_ref[...], preferred_element_type=jnp.float32) + b1_ref[...]
    h = jnp.maximum(h, 0.0)
    h = jnp.dot(h, w2_ref[...], preferred_element_type=jnp.float32) + b2_ref[...]
    h = jnp.maximum(h, 0.0)
    h = jnp.dot(h, w3_ref[...], preferred_element_type=jnp.float32) + b3_ref[...]
    o_ref[...] = h.astype(o_ref.dtype)


# ---------------------------------------------------------------------------
# Wrappers
# ---------------------------------------------------------------------------
def conv_relu_pool_pallas(x_nhwc, w_oihw, b, pool: int, *, row_grid: int = 1):
    """Valid conv (stride 1) + bias + ReLU + non-overlapping pool, one kernel."""
    N, H, W, Cin = x_nhwc.shape
    Cout, _, kh, kw = w_oihw.shape
    OH, OW = H - kh + 1, W - kw + 1
    PH, PW = OH // pool, OW // pool
    K = kh * kw * Cin
    Kp = _round_up(K, 32)            # sublane-friendly contraction dim
    Cp = _round_up(Cout, LANE)       # lane-dense output
    T = pool * pool
    R = N * PH * PW

    # ---- glue: im2col, then group rows by pooling-window slot --------------
    # TODO(synk): the shifted-window gather itself stays in XLA glue; there is
    # no clean single-DMA Pallas expression for this strided patch extraction.
    cols = [x_nhwc[:, i:i + OH, j:j + OW, :] for i in range(kh) for j in range(kw)]
    patches = jnp.stack(cols, axis=3).reshape(N, OH, OW, K)          # feat=(di,dj,cin)
    patches = patches.reshape(N, PH, pool, PW, pool, K)
    patches = patches.transpose(2, 4, 0, 1, 3, 5).reshape(T, R, K)   # window-major
    if Kp != K:
        patches = jnp.pad(patches, ((0, 0), (0, 0), (0, Kp - K)))

    # ---- weights: (out,in,kh,kw) -> (kh,kw,in,out), pad K and Cout ---------
    w_mat = jnp.transpose(w_oihw, (2, 3, 1, 0)).reshape(K, Cout)
    w_mat = jnp.pad(w_mat, ((0, Kp - K), (0, Cp - Cout)))
    b_row = jnp.pad(b, (0, Cp - Cout)).reshape(1, Cp)

    if R % row_grid != 0:
        row_grid = 1
    Rt = R // row_grid

    out = pl.pallas_call(
        partial(_conv_relu_pool_kernel, taps=T),
        out_shape=jax.ShapeDtypeStruct((R, Cp), jnp.float32),
        grid=(row_grid,),
        in_specs=[
            pl.BlockSpec((T, Rt, Kp), lambda i: (0, i, 0)),
            pl.BlockSpec((Kp, Cp), lambda i: (0, 0)),
            pl.BlockSpec((1, Cp), lambda i: (0, 0)),
        ],
        out_specs=pl.BlockSpec((Rt, Cp), lambda i: (i, 0)),
        compiler_params=pltpu.CompilerParams(dimension_semantics=("parallel",)),
    )(patches, w_mat, b_row)

    return out[:, :Cout].reshape(N, PH, PW, Cout)


def mlp_pallas(x, w1, b1, w2, b2, w3, b3):
    """Fused fc1(+ReLU) -> fc2(+ReLU) -> fc3; hidden/output widths padded to 128."""
    M, K1 = x.shape
    H1, H2, NO = w1.shape[1], w2.shape[1], w3.shape[1]
    H1p, H2p, NOp = (_round_up(d, LANE) for d in (H1, H2, NO))

    w1p = jnp.pad(w1, ((0, 0), (0, H1p - H1)))
    b1p = jnp.pad(b1, (0, H1p - H1)).reshape(1, H1p)
    w2p = jnp.pad(w2, ((0, H1p - H1), (0, H2p - H2)))
    b2p = jnp.pad(b2, (0, H2p - H2)).reshape(1, H2p)
    w3p = jnp.pad(w3, ((0, H2p - H2), (0, NOp - NO)))
    b3p = jnp.pad(b3, (0, NOp - NO)).reshape(1, NOp)

    out = pl.pallas_call(
        _mlp_kernel,
        out_shape=jax.ShapeDtypeStruct((M, NOp), jnp.float32),
        grid=(1,),
        in_specs=[
            pl.BlockSpec((M, K1), lambda i: (0, 0)),
            pl.BlockSpec((K1, H1p), lambda i: (0, 0)),
            pl.BlockSpec((1, H1p), lambda i: (0, 0)),
            pl.BlockSpec((H1p, H2p), lambda i: (0, 0)),
            pl.BlockSpec((1, H2p), lambda i: (0, 0)),
            pl.BlockSpec((H2p, NOp), lambda i: (0, 0)),
            pl.BlockSpec((1, NOp), lambda i: (0, 0)),
        ],
        out_specs=pl.BlockSpec((M, NOp), lambda i: (0, 0)),
    )(x, w1p, b1p, w2p, b2p, w3p, b3p)
    return out[:, :NO]


# ---------------------------------------------------------------------------
# Parameters (deterministic init, PyTorch-like uniform bounds)
# ---------------------------------------------------------------------------
def init_params(key, lfinal=10, l1=120, l2=84):
    def uniform(k, shape, fan_in):
        bound = 1.0 / jnp.sqrt(jnp.float32(fan_in))
        return jax.random.uniform(k, shape, jnp.float32, -bound, bound)

    ks = jax.random.split(key, 10)
    p = {}
    p["conv1_w"] = uniform(ks[0], (6, 1, 5, 5), 1 * 5 * 5)
    p["conv1_b"] = uniform(ks[1], (6,), 1 * 5 * 5)
    p["conv2_w"] = uniform(ks[2], (16, 6, 5, 5), 6 * 5 * 5)
    p["conv2_b"] = uniform(ks[3], (16,), 6 * 5 * 5)
    p["fc1_w"] = uniform(ks[4], (16 * 4 * 4, l1), 16 * 4 * 4)   # (in, out)
    p["fc1_b"] = uniform(ks[5], (l1,), 16 * 4 * 4)
    p["fc2_w"] = uniform(ks[6], (l1, l2), l1)
    p["fc2_b"] = uniform(ks[7], (l2,), l1)
    p["fc3_w"] = uniform(ks[8], (l2, lfinal), l2)
    p["fc3_b"] = uniform(ks[9], (lfinal,), l2)
    return p


# ---------------------------------------------------------------------------
# Forward pass (matches PyTorch Net.forward semantics)
# ---------------------------------------------------------------------------
@jax.jit
def net_forward(params, x_nchw):
    x = jnp.transpose(x_nchw, (0, 2, 3, 1)).astype(jnp.float32)    # NCHW -> NHWC

    # conv1 (1->6, k=5) + ReLU + 3x3 maxpool, fused; 2-way parallel row grid
    # so the GEMMs shard across both TensorCores on v7x.
    x = conv_relu_pool_pallas(x, params["conv1_w"], params["conv1_b"], pool=3,
                              row_grid=2)                          # (N, 20, 20, 6)

    # conv2 (6->16, k=5) + ReLU + 4x4 maxpool, fused.
    x = conv_relu_pool_pallas(x, params["conv2_w"], params["conv2_b"], pool=4,
                              row_grid=1)                          # (N, 4, 4, 16)

    # Flatten in PyTorch's (C, H, W) order: NHWC -> NCHW -> view(-1, 256).
    n = x.shape[0]
    x = jnp.transpose(x, (0, 3, 1, 2)).reshape(n, 16 * 4 * 4)

    # fc1 -> ReLU -> fc2 -> ReLU -> fc3, one fused kernel.
    return mlp_pallas(x, params["fc1_w"], params["fc1_b"],
                      params["fc2_w"], params["fc2_b"],
                      params["fc3_w"], params["fc3_b"])


if __name__ == "__main__":
    key = jax.random.PRNGKey(0)
    pkey, xkey = jax.random.split(key)

    LFINAL = 10
    params = init_params(pkey, lfinal=LFINAL)

    # fc1 expects 16*4*4 features => input spatial size 64 (64->60->20->16->4).
    x = jax.random.normal(xkey, (2, 1, 64, 64), dtype=jnp.float32)

    out = net_forward(params, x)
    out = jax.block_until_ready(out)
    assert out.shape == (2, LFINAL), out.shape
    print("KERNEL_OK")
</pallas_src>

<mosaic_0001>
module attributes {stable_mosaic.version = 11 : i64} {
  func.func @_conv_relu_pool_kernel(%arg0: i32, %arg1: memref<9x400x32xf32, #tpu.memory_space<vmem>>, %arg2: memref<32x128xf32, #tpu.memory_space<vmem>>, %arg3: memref<1x128xf32, #tpu.memory_space<vmem>>, %arg4: memref<400x128xf32, #tpu.memory_space<vmem>>) attributes {dimension_semantics = [#tpu.dimension_semantics<parallel>], iteration_bounds = array<i64: 2>, scalar_prefetch = 0 : i64, scratch_operands = 0 : i64, tpu.core_type = #tpu.core_type<tc>, window_params = [{transform_indices = @transform_0, window_bounds = array<i64: 9, 400, 32>}, {pipeline_mode = #tpu.pipeline_mode<synchronous>, transform_indices = @transform_1, window_bounds = array<i64: 32, 128>}, {pipeline_mode = #tpu.pipeline_mode<synchronous>, transform_indices = @transform_2, window_bounds = array<i64: 1, 128>}, {transform_indices = @transform_3, window_bounds = array<i64: 400, 128>}]} {
    %c0 = arith.constant 0 : index
    %c0_0 = arith.constant 0 : index
    %0 = vector.load %arg2[%c0, %c0_0] : memref<32x128xf32, #tpu.memory_space<vmem>>, vector<32x128xf32>
    %c0_1 = arith.constant 0 : index
    %c0_2 = arith.constant 0 : index
    %1 = vector.load %arg3[%c0_1, %c0_2] : memref<1x128xf32, #tpu.memory_space<vmem>>, vector<1x128xf32>
    %c0_3 = arith.constant 0 : index
    %c0_4 = arith.constant 0 : index
    %c0_5 = arith.constant 0 : index
    %2 = vector.load %arg1[%c0_3, %c0_4, %c0_5] : memref<9x400x32xf32, #tpu.memory_space<vmem>>, vector<1x400x32xf32>
    %3 = vector.shape_cast %2 : vector<1x400x32xf32> to vector<400x32xf32>
    %cst = arith.constant dense<0.000000e+00> : vector<400x128xf32>
    %4 = tpu.matmul %3, %0, %cst {dimension_numbers = #tpu.dot_dimension_numbers<[1], [0], [0], [1], [0, 0, 1, 1], [], []>} : vector<400x32xf32>, vector<32x128xf32>, vector<400x128xf32> -> vector<400x128xf32>
    %5 = vector.broadcast %1 : vector<1x128xf32> to vector<400x128xf32>
    %6 = arith.addf %4, %5 : vector<400x128xf32>
    %c1 = arith.constant 1 : index
    %c0_6 = arith.constant 0 : index
    %c0_7 = arith.constant 0 : index
    %7 = vector.load %arg1[%c1, %c0_6, %c0_7] : memref<9x400x32xf32, #tpu.memory_space<vmem>>, vector<1x400x32xf32>
    %8 = vector.shape_cast %7 : vector<1x400x32xf32> to vector<400x32xf32>
    %cst_8 = arith.constant dense<0.000000e+00> : vector<400x128xf32>
    %9 = tpu.matmul %8, %0, %cst_8 {dimension_numbers = #tpu.dot_dimension_numbers<[1], [0], [0], [1], [0, 0, 1, 1], [], []>} : vector<400x32xf32>, vector<32x128xf32>, vector<400x128xf32> -> vector<400x128xf32>
    %10 = vector.broadcast %1 : vector<1x128xf32> to vector<400x128xf32>
    %11 = arith.addf %9, %10 : vector<400x128xf32>
    %12 = arith.maximumf %6, %11 : vector<400x128xf32>
    %c2 = arith.constant 2 : index
    %c0_9 = arith.constant 0 : index
    %c0_10 = arith.constant 0 : index
    %13 = vector.load %arg1[%c2, %c0_9, %c0_10] : memref<9x400x32xf32, #tpu.memory_space<vmem>>, vector<1x400x32xf32>
    %14 = vector.shape_cast %13 : vector<1x400x32xf32> to vector<400x32xf32>
    %cst_11 = arith.constant dense<0.000000e+00> : vector<400x128xf32>
    %15 = tpu.matmul %14, %0, %cst_11 {dimension_numbers = #tpu.dot_dimension_numbers<[1], [0], [0], [1], [0, 0, 1, 1], [], []>} : vector<400x32xf32>, vector<32x128xf32>, vector<400x128xf32> -> vector<400x128xf32>
    %16 = vector.broadcast %1 : vector<1x128xf32> to vector<400x128xf32>
    %17 = arith.addf %15, %16 : vector<400x128xf32>
    %18 = arith.maximumf %12, %17 : vector<400x128xf32>
    %c3 = arith.constant 3 : index
    %c0_12 = arith.constant 0 : index
    %c0_13 = arith.constant 0 : index
    %19 = vector.load %arg1[%c3, %c0_12, %c0_13] : memref<9x400x32xf32, #tpu.memory_space<vmem>>, vector<1x400x32xf32>
    %20 = vector.shape_cast %19 : vector<1x400x32xf32> to vector<400x32xf32>
    %cst_14 = arith.constant dense<0.000000e+00> : vector<400x128xf32>
    %21 = tpu.matmul %20, %0, %cst_14 {dimension_numbers = #tpu.dot_dimension_numbers<[1], [0], [0], [1], [0, 0, 1, 1], [], []>} : vector<400x32xf32>, vector<32x128xf32>, vector<400x128xf32> -> vector<400x128xf32>
    %22 = vector.broadcast %1 : vector<1x128xf32> to vector<400x128xf32>
    %23 = arith.addf %21, %22 : vector<400x128xf32>
    %24 = arith.maximumf %18, %23 : vector<400x128xf32>
    %c4 = arith.constant 4 : index
    %c0_15 = arith.constant 0 : index
    %c0_16 = arith.constant 0 : index
    %25 = vector.load %arg1[%c4, %c0_15, %c0_16] : memref<9x400x32xf32, #tpu.memory_space<vmem>>, vector<1x400x32xf32>
    %26 = vector.shape_cast %25 : vector<1x400x32xf32> to vector<400x32xf32>
    %cst_17 = arith.constant dense<0.000000e+00> : vector<400x128xf32>
    %27 = tpu.matmul %26, %0, %cst_17 {dimension_numbers = #tpu.dot_dimension_numbers<[1], [0], [0], [1], [0, 0, 1, 1], [], []>} : vector<400x32xf32>, vector<32x128xf32>, vector<400x128xf32> -> vector<400x128xf32>
    %28 = vector.broadcast %1 : vector<1x128xf32> to vector<400x128xf32>
    %29 = arith.addf %27, %28 : vector<400x128xf32>
    %30 = arith.maximumf %24, %29 : vector<400x128xf32>
    %c5 = arith.constant 5 : index
    %c0_18 = arith.constant 0 : index
    %c0_19 = arith.constant 0 : index
    %31 = vector.load %arg1[%c5, %c0_18, %c0_19] : memref<9x400x32xf32, #tpu.memory_space<vmem>>, vector<1x400x32xf32>
    %32 = vector.shape_cast %31 : vector<1x400x32xf32> to vector<400x32xf32>
    %cst_20 = arith.constant dense<0.000000e+00> : vector<400x128xf32>
    %33 = tpu.matmul %32, %0, %cst_20 {dimension_numbers = #tpu.dot_dimension_numbers<[1], [0], [0], [1], [0, 0, 1, 1], [], []>} : vector<400x32xf32>, vector<32x128xf32>, vector<400x128xf32> -> vector<400x128xf32>
    %34 = vector.broadcast %1 : vector<1x128xf32> to vector<400x128xf32>
    %35 = arith.addf %33, %34 : vector<400x128xf32>
    %36 = arith.maximumf %30, %35 : vector<400x128xf32>
    %c6 = arith.constant 6 : index
    %c0_21 = arith.constant 0 : index
    %c0_22 = arith.constant 0 : index
    %37 = vector.load %arg1[%c6, %c0_21, %c0_22] : memref<9x400x32xf32, #tpu.memory_space<vmem>>, vector<1x400x32xf32>
    %38 = vector.shape_cast %37 : vector<1x400x32xf32> to vector<400x32xf32>
    %cst_23 = arith.constant dense<0.000000e+00> : vector<400x128xf32>
    %39 = tpu.matmul %38, %0, %cst_23 {dimension_numbers = #tpu.dot_dimension_numbers<[1], [0], [0], [1], [0, 0, 1, 1], [], []>} : vector<400x32xf32>, vector<32x128xf32>, vector<400x128xf32> -> vector<400x128xf32>
    %40 = vector.broadcast %1 : vector<1x128xf32> to vector<400x128xf32>
    %41 = arith.addf %39, %40 : vector<400x128xf32>
    %42 = arith.maximumf %36, %41 : vector<400x128xf32>
    %c7 = arith.constant 7 : index
    %c0_24 = arith.constant 0 : index
    %c0_25 = arith.constant 0 : index
    %43 = vector.load %arg1[%c7, %c0_24, %c0_25] : memref<9x400x32xf32, #tpu.memory_space<vmem>>, vector<1x400x32xf32>
    %44 = vector.shape_cast %43 : vector<1x400x32xf32> to vector<400x32xf32>
    %cst_26 = arith.constant dense<0.000000e+00> : vector<400x128xf32>
    %45 = tpu.matmul %44, %0, %cst_26 {dimension_numbers = #tpu.dot_dimension_numbers<[1], [0], [0], [1], [0, 0, 1, 1], [], []>} : vector<400x32xf32>, vector<32x128xf32>, vector<400x128xf32> -> vector<400x128xf32>
    %46 = vector.broadcast %1 : vector<1x128xf32> to vector<400x128xf32>
    %47 = arith.addf %45, %46 : vector<400x128xf32>
    %48 = arith.maximumf %42, %47 : vector<400x128xf32>
    %c8 = arith.constant 8 : index
    %c0_27 = arith.constant 0 : index
    %c0_28 = arith.constant 0 : index
    %49 = vector.load %arg1[%c8, %c0_27, %c0_28] : memref<9x400x32xf32, #tpu.memory_space<vmem>>, vector<1x400x32xf32>
    %50 = vector.shape_cast %49 : vector<1x400x32xf32> to vector<400x32xf32>
    %cst_29 = arith.constant dense<0.000000e+00> : vector<400x128xf32>
    %51 = tpu.matmul %50, %0, %cst_29 {dimension_numbers = #tpu.dot_dimension_numbers<[1], [0], [0], [1], [0, 0, 1, 1], [], []>} : vector<400x32xf32>, vector<32x128xf32>, vector<400x128xf32> -> vector<400x128xf32>
    %52 = vector.broadcast %1 : vector<1x128xf32> to vector<400x128xf32>
    %53 = arith.addf %51, %52 : vector<400x128xf32>
    %54 = arith.maximumf %48, %53 : vector<400x128xf32>
    %cst_30 = arith.constant 0.000000e+00 : f32
    %55 = vector.broadcast %cst_30 : f32 to vector<400x128xf32>
    %56 = arith.maximumf %54, %55 : vector<400x128xf32>
    %c0_31 = arith.constant 0 : index
    %c0_32 = arith.constant 0 : index
    %57 = vector.load %arg4[%c0_31, %c0_32] : memref<400x128xf32, #tpu.memory_space<vmem>>, vector<400x128xf32>
    tpu.vector_store %arg4[%c0_31, %c0_32], %56 {strides = array<i32>} : memref<400x128xf32, #tpu.memory_space<vmem>>, vector<400x128xf32>,
    return
  }
  func.func @transform_0(%arg0: i32) -> (i32, i32, i32) {
    %c0_i32 = arith.constant 0 : i32
    %c0_i32_0 = arith.constant 0 : i32
    %c0_i32_1 = arith.constant 0 : i32
    return %c0_i32, %arg0, %c0_i32_0 : i32, i32, i32
  }
  func.func @transform_1(%arg0: i32) -> (i32, i32) {
    %c0_i32 = arith.constant 0 : i32
    %c0_i32_0 = arith.constant 0 : i32
    %c0_i32_1 = arith.constant 0 : i32
    return %c0_i32, %c0_i32_0 : i32, i32
  }
  func.func @transform_2(%arg0: i32) -> (i32, i32) {
    %c0_i32 = arith.constant 0 : i32
    %c0_i32_0 = arith.constant 0 : i32
    %c0_i32_1 = arith.constant 0 : i32
    return %c0_i32, %c0_i32_0 : i32, i32
  }
  func.func @transform_3(%arg0: i32) -> (i32, i32) {
    %c0_i32 = arith.constant 0 : i32
    %c0_i32_0 = arith.constant 0 : i32
    return %arg0, %c0_i32 : i32, i32
  }
}

module attributes {stable_mosaic.version = 11 : i64} {
  func.func @_conv_relu_pool_kernel(%arg0: i32, %arg1: memref<16x32x160xf32, #tpu.memory_space<vmem>>, %arg2: memref<160x128xf32, #tpu.memory_space<vmem>>, %arg3: memref<1x128xf32, #tpu.memory_space<vmem>>, %arg4: memref<32x128xf32, #tpu.memory_space<vmem>>) attributes {dimension_semantics = [#tpu.dimension_semantics<parallel>], iteration_bounds = array<i64: 1>, scalar_prefetch = 0 : i64, scratch_operands = 0 : i64, tpu.core_type = #tpu.core_type<tc>, window_params = [{transform_indices = @transform_0, window_bounds = array<i64: 16, 32, 160>}, {pipeline_mode = #tpu.pipeline_mode<synchronous>, transform_indices = @transform_1, window_bounds = array<i64: 160, 128>}, {pipeline_mode = #tpu.pipeline_mode<synchronous>, transform_indices = @transform_2, window_bounds = array<i64: 1, 128>}, {transform_indices = @transform_3, window_bounds = array<i64: 32, 128>}]} {
    %c0 = arith.constant 0 : index
    %c0_0 = arith.constant 0 : index
    %0 = vector.load %arg2[%c0, %c0_0] : memref<160x128xf32, #tpu.memory_space<vmem>>, vector<160x128xf32>
    %c0_1 = arith.constant 0 : index
    %c0_2 = arith.constant 0 : index
    %1 = vector.load %arg3[%c0_1, %c0_2] : memref<1x128xf32, #tpu.memory_space<vmem>>, vector<1x128xf32>
    %c0_3 = arith.constant 0 : index
    %c0_4 = arith.constant 0 : index
    %c0_5 = arith.constant 0 : index
    %2 = vector.load %arg1[%c0_3, %c0_4, %c0_5] : memref<16x32x160xf32, #tpu.memory_space<vmem>>, vector<1x32x160xf32>
    %3 = vector.shape_cast %2 : vector<1x32x160xf32> to vector<32x160xf32>
    %cst = arith.constant dense<0.000000e+00> : vector<32x128xf32>
    %4 = tpu.matmul %3, %0, %cst {dimension_numbers = #tpu.dot_dimension_numbers<[1], [0], [0], [1], [0, 0, 1, 1], [], []>} : vector<32x160xf32>, vector<160x128xf32>, vector<32x128xf32> -> vector<32x128xf32>
    %5 = vector.broadcast %1 : vector<1x128xf32> to vector<32x128xf32>
    %6 = arith.addf %4, %5 : vector<32x128xf32>
    %c1 = arith.constant 1 : index
    %c0_6 = arith.constant 0 : index
    %c0_7 = arith.constant 0 : index
    %7 = vector.load %arg1[%c1, %c0_6, %c0_7] : memref<16x32x160xf32, #tpu.memory_space<vmem>>, vector<1x32x160xf32>
    %8 = vector.shape_cast %7 : vector<1x32x160xf32> to vector<32x160xf32>
    %cst_8 = arith.constant dense<0.000000e+00> : vector<32x128xf32>
    %9 = tpu.matmul %8, %0, %cst_8 {dimension_numbers = #tpu.dot_dimension_numbers<[1], [0], [0], [1], [0, 0, 1, 1], [], []>} : vector<32x160xf32>, vector<160x128xf32>, vector<32x128xf32> -> vector<32x128xf32>
    %10 = vector.broadcast %1 : vector<1x128xf32> to vector<32x128xf32>
    %11 = arith.addf %9, %10 : vector<32x128xf32>
    %12 = arith.maximumf %6, %11 : vector<32x128xf32>
    %c2 = arith.constant 2 : index
    %c0_9 = arith.constant 0 : index
    %c0_10 = arith.constant 0 : index
    %13 = vector.load %arg1[%c2, %c0_9, %c0_10] : memref<16x32x160xf32, #tpu.memory_space<vmem>>, vector<1x32x160xf32>
    %14 = vector.shape_cast %13 : vector<1x32x160xf32> to vector<32x160xf32>
    %cst_11 = arith.constant dense<0.000000e+00> : vector<32x128xf32>
    %15 = tpu.matmul %14, %0, %cst_11 {dimension_numbers = #tpu.dot_dimension_numbers<[1], [0], [0], [1], [0, 0, 1, 1], [], []>} : vector<32x160xf32>, vector<160x128xf32>, vector<32x128xf32> -> vector<32x128xf32>
    %16 = vector.broadcast %1 : vector<1x128xf32> to vector<32x128xf32>
    %17 = arith.addf %15, %16 : vector<32x128xf32>
    %18 = arith.maximumf %12, %17 : vector<32x128xf32>
    %c3 = arith.constant 3 : index
    %c0_12 = arith.constant 0 : index
    %c0_13 = arith.constant 0 : index
    %19 = vector.load %arg1[%c3, %c0_12, %c0_13] : memref<16x32x160xf32, #tpu.memory_space<vmem>>, vector<1x32x160xf32>
    %20 = vector.shape_cast %19 : vector<1x32x160xf32> to vector<32x160xf32>
    %cst_14 = arith.constant dense<0.000000e+00> : vector<32x128xf32>
    %21 = tpu.matmul %20, %0, %cst_14 {dimension_numbers = #tpu.dot_dimension_numbers<[1], [0], [0], [1], [0, 0, 1, 1], [], []>} : vector<32x160xf32>, vector<160x128xf32>, vector<32x128xf32> -> vector<32x128xf32>
    %22 = vector.broadcast %1 : vector<1x128xf32> to vector<32x128xf32>
    %23 = arith.addf %21, %22 : vector<32x128xf32>
    %24 = arith.maximumf %18, %23 : vector<32x128xf32>
    %c4 = arith.constant 4 : index
    %c0_15 = arith.constant 0 : index
    %c0_16 = arith.constant 0 : index
    %25 = vector.load %arg1[%c4, %c0_15, %c0_16] : memref<16x32x160xf32, #tpu.memory_space<vmem>>, vector<1x32x160xf32>
    %26 = vector.shape_cast %25 : vector<1x32x160xf32> to vector<32x160xf32>
    %cst_17 = arith.constant dense<0.000000e+00> : vector<32x128xf32>
    %27 = tpu.matmul %26, %0, %cst_17 {dimension_numbers = #tpu.dot_dimension_numbers<[1], [0], [0], [1], [0, 0, 1, 1], [], []>} : vector<32x160xf32>, vector<160x128xf32>, vector<32x128xf32> -> vector<32x128xf32>
    %28 = vector.broadcast %1 : vector<1x128xf32> to vector<32x128xf32>
    %29 = arith.addf %27, %28 : vector<32x128xf32>
    %30 = arith.maximumf %24, %29 : vector<32x128xf32>
    %c5 = arith.constant 5 : index
    %c0_18 = arith.constant 0 : index
    %c0_19 = arith.constant 0 : index
    %31 = vector.load %arg1[%c5, %c0_18, %c0_19] : memref<16x32x160xf32, #tpu.memory_space<vmem>>, vector<1x32x160xf32>
    %32 = vector.shape_cast %31 : vector<1x32x160xf32> to vector<32x160xf32>
    %cst_20 = arith.constant dense<0.000000e+00> : vector<32x128xf32>
    %33 = tpu.matmul %32, %0, %cst_20 {dimension_numbers = #tpu.dot_dimension_numbers<[1], [0], [0], [1], [0, 0, 1, 1], [], []>} : vector<32x160xf32>, vector<160x128xf32>, vector<32x128xf32> -> vector<32x128xf32>
    %34 = vector.broadcast %1 : vector<1x128xf32> to vector<32x128xf32>
    %35 = arith.addf %33, %34 : vector<32x128xf32>
    %36 = arith.maximumf %30, %35 : vector<32x128xf32>
    %c6 = arith.constant 6 : index
    %c0_21 = arith.constant 0 : index
    %c0_22 = arith.constant 0 : index
    %37 = vector.load %arg1[%c6, %c0_21, %c0_22] : memref<16x32x160xf32, #tpu.memory_space<vmem>>, vector<1x32x160xf32>
    %38 = vector.shape_cast %37 : vector<1x32x160xf32> to vector<32x160xf32>
    %cst_23 = arith.constant dense<0.000000e+00> : vector<32x128xf32>
    %39 = tpu.matmul %38, %0, %cst_23 {dimension_numbers = #tpu.dot_dimension_numbers<[1], [0], [0], [1], [0, 0, 1, 1], [], []>} : vector<32x160xf32>, vector<160x128xf32>, vector<32x128xf32> -> vector<32x128xf32>
    %40 = vector.broadcast %1 : vector<1x128xf32> to vector<32x128xf32>
    %41 = arith.addf %39, %40 : vector<32x128xf32>
    %42 = arith.maximumf %36, %41 : vector<32x128xf32>
    %c7 = arith.constant 7 : index
    %c0_24 = arith.constant 0 : index
    %c0_25 = arith.constant 0 : index
    %43 = vector.load %arg1[%c7, %c0_24, %c0_25] : memref<16x32x160xf32, #tpu.memory_space<vmem>>, vector<1x32x160xf32>
    %44 = vector.shape_cast %43 : vector<1x32x160xf32> to vector<32x160xf32>
    %cst_26 = arith.constant dense<0.000000e+00> : vector<32x128xf32>
    %45 = tpu.matmul %44, %0, %cst_26 {dimension_numbers = #tpu.dot_dimension_numbers<[1], [0], [0], [1], [0, 0, 1, 1], [], []>} : vector<32x160xf32>, vector<160x128xf32>, vector<32x128xf32> -> vector<32x128xf32>
    %46 = vector.broadcast %1 : vector<1x128xf32> to vector<32x128xf32>
    %47 = arith.addf %45, %46 : vector<32x128xf32>
    %48 = arith.maximumf %42, %47 : vector<32x128xf32>
    %c8 = arith.constant 8 : index
    %c0_27 = arith.constant 0 : index
    %c0_28 = arith.constant 0 : index
    %49 = vector.load %arg1[%c8, %c0_27, %c0_28] : memref<16x32x160xf32, #tpu.memory_space<vmem>>, vector<1x32x160xf32>
    %50 = vector.shape_cast %49 : vector<1x32x160xf32> to vector<32x160xf32>
    %cst_29 = arith.constant dense<0.000000e+00> : vector<32x128xf32>
    %51 = tpu.matmul %50, %0, %cst_29 {dimension_numbers = #tpu.dot_dimension_numbers<[1], [0], [0], [1], [0, 0, 1, 1], [], []>} : vector<32x160xf32>, vector<160x128xf32>, vector<32x128xf32> -> vector<32x128xf32>
    %52 = vector.broadcast %1 : vector<1x128xf32> to vector<32x128xf32>
    %53 = arith.addf %51, %52 : vector<32x128xf32>
    %54 = arith.maximumf %48, %53 : vector<32x128xf32>
    %c9 = arith.constant 9 : index
    %c0_30 = arith.constant 0 : index
    %c0_31 = arith.constant 0 : index
    %55 = vector.load %arg1[%c9, %c0_30, %c0_31] : memref<16x32x160xf32, #tpu.memory_space<vmem>>, vector<1x32x160xf32>
    %56 = vector.shape_cast %55 : vector<1x32x160xf32> to vector<32x160xf32>
    %cst_32 = arith.constant dense<0.000000e+00> : vector<32x128xf32>
    %57 = tpu.matmul %56, %0, %cst_32 {dimension_numbers = #tpu.dot_dimension_numbers<[1], [0], [0], [1], [0, 0, 1, 1], [], []>} : vector<32x160xf32>, vector<160x128xf32>, vector<32x128xf32> -> vector<32x128xf32>
    %58 = vector.broadcast %1 : vector<1x128xf32> to vector<32x128xf32>
    %59 = arith.addf %57, %58 : vector<32x128xf32>
    %60 = arith.maximumf %54, %59 : vector<32x128xf32>
    %c10 = arith.constant 10 : index
    %c0_33 = arith.constant 0 : index
    %c0_34 = arith.constant 0 : index
    %61 = vector.load %arg1[%c10, %c0_33, %c0_34] : memref<16x32x160xf32, #tpu.memory_space<vmem>>, vector<1x32x160xf32>
    %62 = vector.shape_cast %61 : vector<1x32x160xf32> to vector<32x160xf32>
    %cst_35 = arith.constant dense<0.000000e+00> : vector<32x128xf32>
    %63 = tpu.matmul %62, %0, %cst_35 {dimension_numbers = #tpu.dot_dimension_numbers<[1], [0], [0], [1], [0, 0, 1, 1], [], []>} : vector<32x160xf32>, vector<160x128xf32>, vector<32x128xf32> -> vector<32x128xf32>
    %64 = vector.broadcast %1 : vector<1x128xf32> to vector<32x128xf32>
    %65 = arith.addf %63, %64 : vector<32x128xf32>
    %66 = arith.maximumf %60, %65 : vector<32x128xf32>
    %c11 = arith.constant 11 : index
    %c0_36 = arith.constant 0 : index
    %c0_37 = arith.constant 0 : index
    %67 = vector.load %arg1[%c11, %c0_36, %c0_37] : memref<16x32x160xf32, #tpu.memory_space<vmem>>, vector<1x32x160xf32>
    %68 = vector.shape_cast %67 : vector<1x32x160xf32> to vector<32x160xf32>
    %cst_38 = arith.constant dense<0.000000e+00> : vector<32x128xf32>
    %69 = tpu.matmul %68, %0, %cst_38 {dimension_numbers = #tpu.dot_dimension_numbers<[1], [0], [0], [1], [0, 0, 1, 1], [], []>} : vector<32x160xf32>, vector<160x128xf32>, vector<32x128xf32> -> vector<32x128xf32>
    %70 = vector.broadcast %1 : vector<1x128xf32> to vector<32x128xf32>
    %71 = arith.addf %69, %70 : vector<32x128xf32>
    %72 = arith.maximumf %66, %71 : vector<32x128xf32>
    %c12 = arith.constant 12 : index
    %c0_39 = arith.constant 0 : index
    %c0_40 = arith.constant 0 : index
    %73 = vector.load %arg1[%c12, %c0_39, %c0_40] : memref<16x32x160xf32, #tpu.memory_space<vmem>>, vector<1x32x160xf32>
    %74 = vector.shape_cast %73 : vector<1x32x160xf32> to vector<32x160xf32>
    %cst_41 = arith.constant dense<0.000000e+00> : vector<32x128xf32>
    %75 = tpu.matmul %74, %0, %cst_41 {dimension_numbers = #tpu.dot_dimension_numbers<[1], [0], [0], [1], [0, 0, 1, 1], [], []>} : vector<32x160xf32>, vector<160x128xf32>, vector<32x128xf32> -> vector<32x128xf32>
    %76 = vector.broadcast %1 : vector<1x128xf32> to vector<32x128xf32>
    %77 = arith.addf %75, %76 : vector<32x128xf32>
    %78 = arith.maximumf %72, %77 : vector<32x128xf32>
    %c13 = arith.constant 13 : index
    %c0_42 = arith.constant 0 : index
    %c0_43 = arith.constant 0 : index
    %79 = vector.load %arg1[%c13, %c0_42, %c0_43] : memref<16x32x160xf32, #tpu.memory_space<vmem>>, vector<1x32x160xf32>
    %80 = vector.shape_cast %79 : vector<1x32x160xf32> to vector<32x160xf32>
    %cst_44 = arith.constant dense<0.000000e+00> : vector<32x128xf32>
    %81 = tpu.matmul %80, %0, %cst_44 {dimension_numbers = #tpu.dot_dimension_numbers<[1], [0], [0], [1], [0, 0, 1, 1], [], []>} : vector<32x160xf32>, vector<160x128xf32>, vector<32x128xf32> -> vector<32x128xf32>
    %82 = vector.broadcast %1 : vector<1x128xf32> to vector<32x128xf32>
    %83 = arith.addf %81, %82 : vector<32x128xf32>
    %84 = arith.maximumf %78, %83 : vector<32x128xf32>
    %c14 = arith.constant 14 : index
    %c0_45 = arith.constant 0 : index
    %c0_46 = arith.constant 0 : index
    %85 = vector.load %arg1[%c14, %c0_45, %c0_46] : memref<16x32x160xf32, #tpu.memory_space<vmem>>, vector<1x32x160xf32>
    %86 = vector.shape_cast %85 : vector<1x32x160xf32> to vector<32x160xf32>
    %cst_47 = arith.constant dense<0.000000e+00> : vector<32x128xf32>
    %87 = tpu.matmul %86, %0, %cst_47 {dimension_numbers = #tpu.dot_dimension_numbers<[1], [0], [0], [1], [0, 0, 1, 1], [], []>} : vector<32x160xf32>, vector<160x128xf32>, vector<32x128xf32> -> vector<32x128xf32>
    %88 = vector.broadcast %1 : vector<1x128xf32> to vector<32x128xf32>
    %89 = arith.addf %87, %88 : vector<32x128xf32>
    %90 = arith.maximumf %84, %89 : vector<32x128xf32>
    %c15 = arith.constant 15 : index
    %c0_48 = arith.constant 0 : index
    %c0_49 = arith.constant 0 : index
    %91 = vector.load %arg1[%c15, %c0_48, %c0_49] : memref<16x32x160xf32, #tpu.memory_space<vmem>>, vector<1x32x160xf32>
    %92 = vector.shape_cast %91 : vector<1x32x160xf32> to vector<32x160xf32>
    %cst_50 = arith.constant dense<0.000000e+00> : vector<32x128xf32>
    %93 = tpu.matmul %92, %0, %cst_50 {dimension_numbers = #tpu.dot_dimension_numbers<[1], [0], [0], [1], [0, 0, 1, 1], [], []>} : vector<32x160xf32>, vector<160x128xf32>, vector<32x128xf32> -> vector<32x128xf32>
    %94 = vector.broadcast %1 : vector<1x128xf32> to vector<32x128xf32>
    %95 = arith.addf %93, %94 : vector<32x128xf32>
    %96 = arith.maximumf %90, %95 : vector<32x128xf32>
    %cst_51 = arith.constant 0.000000e+00 : f32
    %97 = vector.broadcast %cst_51 : f32 to vector<32x128xf32>
    %98 = arith.maximumf %96, %97 : vector<32x128xf32>
    %c0_52 = arith.constant 0 : index
    %c0_53 = arith.constant 0 : index
    %99 = vector.load %arg4[%c0_52, %c0_53] : memref<32x128xf32, #tpu.memory_space<vmem>>, vector<32x128xf32>
    tpu.vector_store %arg4[%c0_52, %c0_53], %98 {strides = array<i32>} : memref<32x128xf32, #tpu.memory_space<vmem>>, vector<32x128xf32>,
    return
  }
  func.func @transform_0(%arg0: i32) -> (i32, i32, i32) {
    %c0_i32 = arith.constant 0 : i32
    %c0_i32_0 = arith.constant 0 : i32
    %c0_i32_1 = arith.constant 0 : i32
    return %c0_i32, %arg0, %c0_i32_0 : i32, i32, i32
  }
  func.func @transform_1(%arg0: i32) -> (i32, i32) {
    %c0_i32 = arith.constant 0 : i32
    %c0_i32_0 = arith.constant 0 : i32
    %c0_i32_1 = arith.constant 0 : i32
    return %c0_i32, %c0_i32_0 : i32, i32
  }
  func.func @transform_2(%arg0: i32) -> (i32, i32) {
    %c0_i32 = arith.constant 0 : i32
    %c0_i32_0 = arith.constant 0 : i32
    %c0_i32_1 = arith.constant 0 : i32
    return %c0_i32, %c0_i32_0 : i32, i32
  }
  func.func @transform_3(%arg0: i32) -> (i32, i32) {
    %c0_i32 = arith.constant 0 : i32
    %c0_i32_0 = arith.constant 0 : i32
    return %arg0, %c0_i32 : i32, i32
  }
}

module attributes {stable_mosaic.version = 11 : i64} {
  func.func @_mlp_kernel(%arg0: i32, %arg1: memref<2x256xf32, #tpu.memory_space<vmem>>, %arg2: memref<256x128xf32, #tpu.memory_space<vmem>>, %arg3: memref<1x128xf32, #tpu.memory_space<vmem>>, %arg4: memref<128x128xf32, #tpu.memory_space<vmem>>, %arg5: memref<1x128xf32, #tpu.memory_space<vmem>>, %arg6: memref<128x128xf32, #tpu.memory_space<vmem>>, %arg7: memref<1x128xf32, #tpu.memory_space<vmem>>, %arg8: memref<2x128xf32, #tpu.memory_space<vmem>>) attributes {dimension_semantics = [#tpu.dimension_semantics<arbitrary>], iteration_bounds = array<i64: 1>, scalar_prefetch = 0 : i64, scratch_operands = 0 : i64, tpu.core_type = #tpu.core_type<tc>, window_params = [{pipeline_mode = #tpu.pipeline_mode<synchronous>, transform_indices = @transform_0, window_bounds = array<i64: 2, 256>}, {pipeline_mode = #tpu.pipeline_mode<synchronous>, transform_indices = @transform_1, window_bounds = array<i64: 256, 128>}, {pipeline_mode = #tpu.pipeline_mode<synchronous>, transform_indices = @transform_2, window_bounds = array<i64: 1, 128>}, {pipeline_mode = #tpu.pipeline_mode<synchronous>, transform_indices = @transform_3, window_bounds = array<i64: 128, 128>}, {pipeline_mode = #tpu.pipeline_mode<synchronous>, transform_indices = @transform_4, window_bounds = array<i64: 1, 128>}, {pipeline_mode = #tpu.pipeline_mode<synchronous>, transform_indices = @transform_5, window_bounds = array<i64: 128, 128>}, {pipeline_mode = #tpu.pipeline_mode<synchronous>, transform_indices = @transform_6, window_bounds = array<i64: 1, 128>}, {pipeline_mode = #tpu.pipeline_mode<synchronous>, transform_indices = @transform_7, window_bounds = array<i64: 2, 128>}]} {
    %c0 = arith.constant 0 : index
    %c0_0 = arith.constant 0 : index
    %0 = vector.load %arg1[%c0, %c0_0] : memref<2x256xf32, #tpu.memory_space<vmem>>, vector<2x256xf32>
    %c0_1 = arith.constant 0 : index
    %c0_2 = arith.constant 0 : index
    %1 = vector.load %arg2[%c0_1, %c0_2] : memref<256x128xf32, #tpu.memory_space<vmem>>, vector<256x128xf32>
    %cst = arith.constant dense<0.000000e+00> : vector<2x128xf32>
    %2 = tpu.matmul %0, %1, %cst {dimension_numbers = #tpu.dot_dimension_numbers<[1], [0], [0], [1], [0, 0, 1, 1], [], []>} : vector<2x256xf32>, vector<256x128xf32>, vector<2x128xf32> -> vector<2x128xf32>
    %c0_3 = arith.constant 0 : index
    %c0_4 = arith.constant 0 : index
    %3 = vector.load %arg3[%c0_3, %c0_4] : memref<1x128xf32, #tpu.memory_space<vmem>>, vector<1x128xf32>
    %4 = vector.broadcast %3 : vector<1x128xf32> to vector<2x128xf32>
    %5 = arith.addf %2, %4 : vector<2x128xf32>
    %cst_5 = arith.constant 0.000000e+00 : f32
    %6 = vector.broadcast %cst_5 : f32 to vector<2x128xf32>
    %7 = arith.maximumf %5, %6 : vector<2x128xf32>
    %c0_6 = arith.constant 0 : index
    %c0_7 = arith.constant 0 : index
    %8 = vector.load %arg4[%c0_6, %c0_7] : memref<128x128xf32, #tpu.memory_space<vmem>>, vector<128x128xf32>
    %cst_8 = arith.constant dense<0.000000e+00> : vector<2x128xf32>
    %9 = tpu.matmul %7, %8, %cst_8 {dimension_numbers = #tpu.dot_dimension_numbers<[1], [0], [0], [1], [0, 0, 1, 1], [], []>} : vector<2x128xf32>, vector<128x128xf32>, vector<2x128xf32> -> vector<2x128xf32>
    %c0_9 = arith.constant 0 : index
    %c0_10 = arith.constant 0 : index
    %10 = vector.load %arg5[%c0_9, %c0_10] : memref<1x128xf32, #tpu.memory_space<vmem>>, vector<1x128xf32>
    %11 = vector.broadcast %10 : vector<1x128xf32> to vector<2x128xf32>
    %12 = arith.addf %9, %11 : vector<2x128xf32>
    %cst_11 = arith.constant 0.000000e+00 : f32
    %13 = vector.broadcast %cst_11 : f32 to vector<2x128xf32>
    %14 = arith.maximumf %12, %13 : vector<2x128xf32>
    %c0_12 = arith.constant 0 : index
    %c0_13 = arith.constant 0 : index
    %15 = vector.load %arg6[%c0_12, %c0_13] : memref<128x128xf32, #tpu.memory_space<vmem>>, vector<128x128xf32>
    %cst_14 = arith.constant dense<0.000000e+00> : vector<2x128xf32>
    %16 = tpu.matmul %14, %15, %cst_14 {dimension_numbers = #tpu.dot_dimension_numbers<[1], [0], [0], [1], [0, 0, 1, 1], [], []>} : vector<2x128xf32>, vector<128x128xf32>, vector<2x128xf32> -> vector<2x128xf32>
    %c0_15 = arith.constant 0 : index
    %c0_16 = arith.constant 0 : index
    %17 = vector.load %arg7[%c0_15, %c0_16] : memref<1x128xf32, #tpu.memory_space<vmem>>, vector<1x128xf32>
    %18 = vector.broadcast %17 : vector<1x128xf32> to vector<2x128xf32>
    %19 = arith.addf %16, %18 : vector<2x128xf32>
    %c0_17 = arith.constant 0 : index
    %c0_18 = arith.constant 0 : index
    %20 = vector.load %arg8[%c0_17, %c0_18] : memref<2x128xf32, #tpu.memory_space<vmem>>, vector<2x128xf32>
    tpu.vector_store %arg8[%c0_17, %c0_18], %19 {strides = array<i32>} : memref<2x128xf32, #tpu.memory_space<vmem>>, vector<2x128xf32>,
    return
  }
  func.func @transform_0(%arg0: i32) -> (i32, i32) {
    %c0_i32 = arith.constant 0 : i32
    %c0_i32_0 = arith.constant 0 : i32
    %c0_i32_1 = arith.constant 0 : i32
    return %c0_i32, %c0_i32_0 : i32, i32
  }
  func.func @transform_1(%arg0: i32) -> (i32, i32) {
    %c0_i32 = arith.constant 0 : i32
    %c0_i32_0 = arith.constant 0 : i32
    %c0_i32_1 = arith.constant 0 : i32
    return %c0_i32, %c0_i32_0 : i32, i32
  }
  func.func @transform_2(%arg0: i32) -> (i32, i32) {
    %c0_i32 = arith.constant 0 : i32
    %c0_i32_0 = arith.constant 0 : i32
    %c0_i32_1 = arith.constant 0 : i32
    return %c0_i32, %c0_i32_0 : i32, i32
  }
  func.func @transform_3(%arg0: i32) -> (i32, i32) {
    %c0_i32 = arith.constant 0 : i32
    %c0_i32_0 = arith.constant 0 : i32
    %c0_i32_1 = arith.constant 0 : i32
    return %c0_i32, %c0_i32_0 : i32, i32
  }
  func.func @transform_4(%arg0: i32) -> (i32, i32) {
    %c0_i32 = arith.constant 0 : i32
    %c0_i32_0 = arith.constant 0 : i32
    %c0_i32_1 = arith.constant 0 : i32
    return %c0_i32, %c0_i32_0 : i32, i32
  }
  func.func @transform_5(%arg0: i32) -> (i32, i32) {
    %c0_i32 = arith.constant 0 : i32
    %c0_i32_0 = arith.constant 0 : i32
    %c0_i32_1 = arith.constant 0 : i32
    return %c0_i32, %c0_i32_0 : i32, i32
  }
  func.func @transform_6(%arg0: i32) -> (i32, i32) {
    %c0_i32 = arith.constant 0 : i32
    %c0_i32_0 = arith.constant 0 : i32
    %c0_i32_1 = arith.constant 0 : i32
    return %c0_i32, %c0_i32_0 : i32, i32
  }
  func.func @transform_7(%arg0: i32) -> (i32, i32) {
    %c0_i32 = arith.constant 0 : i32
    %c0_i32_0 = arith.constant 0 : i32
    %c0_i32_1 = arith.constant 0 : i32
    return %c0_i32, %c0_i32_0 : i32, i32
  }
}

</mosaic_0001>

<llo_original>
// kernel: net_forward.3
$region0: #{net_forward.3}
  #allocation0 [shape = 'u32[]', space=smem, size = 0x4, offset = 0x4, fixed_abs, tag = 'smem constant byte address 0x4 - core index']
  #allocation1 [shape = 'u32[144,128]{1,0:T(1,128)}', space=vmem, size = 0x12000, scoped, tag = 'internal scratch']
  %s0 = inlined_call_operand.vmem [shape: f32[9,800,32], index: 0, kind: input, shape index: {}]
  %s1 = inlined_call_operand.vmem [shape: f32[32,128], index: 1, kind: input, shape index: {}]
  %s2 = inlined_call_operand.vmem [shape: f32[1,128], index: 2, kind: input, shape index: {}]
  %s3 = inlined_call_operand.vmem [shape: f32[800,128], index: 3, kind: output, shape index: {}]
  %s4 = sld [smem:[#allocation0]]
  $region83: #{net_forward.3} parent=0
    _
  %s6 = ssub.s32 1, %s4
  %s7 = scalar_select 0, %s6, %s4
  $region1: #{net_forward.3} parent=0
    #allocation2 [shape = 'u8[3686400]{0}', space=vmem, size = 0x384000, scoped, tag = 'input window, operand 0']
    loop: start=0, step=1, limit=4
    $region2: #{net_forward.3} parent=1 // loop_pre_header
      _
    $region3: #{net_forward.3} parent=1 // loop_header
      %s9 = sphi 0, %s13
      %p10 = scmp.ge.s32.totalorder %s9, 4
      %s19 = sphi 0, %s21
      %s22 = sphi 0, %s19
      %s23 = sphi 0, %s22
      %s39 = sphi 0, %s23
      %s43 = sphi 0, %s43
      %s45 = sphi 0, %s43
      %s46 = sphi 0, %s45
      %s60 = sphi 0, %s46
      %s64 = sphi 0, %s64
      %s66 = sphi 0, %s64
      %s67 = sphi 0, %s66
      %s81 = sphi 0, %s67
      %s87 = sphi 0, %s89
      %s90 = sphi 0, %s87
      %s91 = sphi 0, %s90
      %s107 = sphi 0, %s91
    $region4: #{net_forward.3} parent=1 // loop_header_branch
      %12 = sbr.rel (%p10) target = $region8
    $region5: #{net_forward.3} parent=1 // loop_body
      %s14 = ssub.s32 %s9, 1
      %s15 = ssub.s32 %s9, 2
      %s16 = sadd.s32 %s9, 1
      %s17 = ssub.s32 %s9, %s16
      %p18 = scmp.eq.s32.totalorder %s17, 0
      %s20 = sadd.s32 %s19, 1
      %s21 = scalar_select %p18, %s19, %s20
      %p24 = pneg %p18
      %p25 = scmp.eq.s32.totalorder %s9, 1
      %p26 = por %p24, %p25
      %p27 = scmp.ne.s32.totalorder %s19, %s22
      %p28 = scmp.eq.s32.totalorder %s9, 0
      %p29 = por %p27, %p28
      %p30 = scmp.ne.s32.totalorder %s19, %s22
      %p31 = scmp.eq.s32.totalorder %s14, 1
      %p32 = por %p30, %p31
      %p33 = scmp.ne.s32.totalorder %s22, %s23
      %p34 = scmp.eq.s32.totalorder %s14, 0
      %p35 = por %p33, %p34
      %p36 = scmp.ne.s32.totalorder %s22, %s23
      %p37 = scmp.eq.s32.totalorder %s15, 1
      %p38 = por %p36, %p37
      %p40 = scmp.ne.s32.totalorder %s23, %s39
      %p41 = scmp.eq.s32.totalorder %s15, 0
      %p42 = por %p40, %p41
      %s44 = sadd.s32 %s43, 1
      %p47 = scmp.eq.s32.totalorder %s9, 1
      %p48 = scmp.ne.s32.totalorder %s43, %s45
      %p49 = scmp.eq.s32.totalorder %s9, 0
      %p50 = por %p48, %p49
      %p51 = scmp.ne.s32.totalorder %s43, %s45
      %p52 = scmp.eq.s32.totalorder %s14, 1
      %p53 = por %p51, %p52
      %p54 = scmp.ne.s32.totalorder %s45, %s46
      %p55 = scmp.eq.s32.totalorder %s14, 0
      %p56 = por %p54, %p55
      %p57 = scmp.ne.s32.totalorder %s45, %s46
      %p58 = scmp.eq.s32.totalorder %s15, 1
      %p59 = por %p57, %p58
      %p61 = scmp.ne.s32.totalorder %s46, %s60
      %p62 = scmp.eq.s32.totalorder %s15, 0
      %p63 = por %p61, %p62
      %s65 = sadd.s32 %s64, 1
      %p68 = scmp.eq.s32.totalorder %s9, 1
      %p69 = scmp.ne.s32.totalorder %s64, %s66
      %p70 = scmp.eq.s32.totalorder %s9, 0
      %p71 = por %p69, %p70
      %p72 = scmp.ne.s32.totalorder %s64, %s66
      %p73 = scmp.eq.s32.totalorder %s14, 1
      %p74 = por %p72, %p73
      %p75 = scmp.ne.s32.totalorder %s66, %s67
      %p76 = scmp.eq.s32.totalorder %s14, 0
      %p77 = por %p75, %p76
      %p78 = scmp.ne.s32.totalorder %s66, %s67
      %p79 = scmp.eq.s32.totalorder %s15, 1
      %p80 = por %p78, %p79
      %p82 = scmp.ne.s32.totalorder %s67, %s81
      %p83 = scmp.eq.s32.totalorder %s15, 0
      %p84 = por %p82, %p83
      %s85 = ssub.s32 %s9, %s16
      %p86 = scmp.eq.s32.totalorder %s85, 0
      %s88 = sadd.s32 %s87, 1
      %s89 = scalar_select %p86, %s87, %s88
      %p92 = pneg %p86
      %p93 = scmp.eq.s32.totalorder %s9, 1
      %p94 = por %p92, %p93
      %p95 = scmp.ne.s32.totalorder %s87, %s90
      %p96 = scmp.eq.s32.totalorder %s9, 0
      %p97 = por %p95, %p96
      %p98 = scmp.ne.s32.totalorder %s87, %s90
      %p99 = scmp.eq.s32.totalorder %s14, 1
      %p100 = por %p98, %p99
      %p101 = scmp.ne.s32.totalorder %s90, %s91
      %p102 = scmp.eq.s32.totalorder %s14, 0
      %p103 = por %p101, %p102
      %p104 = scmp.ne.s32.totalorder %s90, %s91
      %p105 = scmp.eq.s32.totalorder %s15, 1
      %p106 = por %p104, %p105
      %p108 = scmp.ne.s32.totalorder %s91, %s107
      %p109 = scmp.eq.s32.totalorder %s15, 0
      %p110 = por %p108, %p109
      %p111 = scmp.le.s32.totalorder 1, %s9
      %p112 = scmp.lt.s32.totalorder %s9, 3
      %p113 = pnand %p111, %p112
      %p114 = pneg %p113
      // Predicated region
      $region9: #{net_forward.3} parent=5 // pred_check
        _
      $region10: #{net_forward.3} parent=5 // pred_check_branch
        %116 = sbr.rel (%p113) target = $region12
      $region11: #{net_forward.3} parent=5 // pred_region
        %s117 = ssub.s32 %s9, 1
        // Predicated region
        $region13: #{net_forward.3} parent=11 // pred_check
          %p118 = pneg %p56
        $region14: #{net_forward.3} parent=11 // pred_check_branch
          %120 = sbr.rel (%p118) target = $region16
        $region15: #{net_forward.3} parent=11 // pred_region
          _
        $region16: #{net_forward.3} parent=11 // pred_fallthru
          _
        // Predicated region
        $region17: #{net_forward.3} parent=11 // pred_check
          %p121 = pneg %p77
        $region18: #{net_forward.3} parent=11 // pred_check_branch
          %123 = sbr.rel (%p121) target = $region20
        $region19: #{net_forward.3} parent=11 // pred_region
          _
        $region20: #{net_forward.3} parent=11 // pred_fallthru
          _
      $region12: #{net_forward.3} parent=5 // pred_fallthru
        _
      %p124 = scmp.lt.s32.totalorder %s9, 2
      // Predicated region
      $region21: #{net_forward.3} parent=5 // pred_check
        %p125 = pneg %p124
      $region22: #{net_forward.3} parent=5 // pred_check_branch
        %127 = sbr.rel (%p125) target = $region24
      $region23: #{net_forward.3} parent=5 // pred_region
        // Predicated region
        $region25: #{net_forward.3} parent=23 // pred_check
          %p128 = pneg %p29
        $region26: #{net_forward.3} parent=23 // pred_check_branch
          %130 = sbr.rel (%p128) target = $region28
        $region27: #{net_forward.3} parent=23 // pred_region
          %s131 = sand.u32 %s19, 1
          %s132 = sand.u32 %s19, 1
          %s133 = smul.addr %s132, 3600
          %s134 = scalar_lea.vmem [#allocation2], %s133
          %s135 = smul.u32 50, %s9
          %s136 = smul.addr %s135, 8
          %s137 = scalar_lea.vmem %s0, %s136
          // Predicated region
          $region29: #{net_forward.3} parent=27 // pred_check
            _
          $region30: #{net_forward.3} parent=27 // pred_check_branch
            %139 = sbr.rel (0) target = $region32
          $region31: #{net_forward.3} parent=27 // pred_region
            // Predicated region
            $region33: #{net_forward.3} parent=31 // pred_check
              _
            $region34: #{net_forward.3} parent=31 // pred_check_branch
              %141 = sbr.rel (0) target = $region36
            $region35: #{net_forward.3} parent=31 // pred_region
              // Predicated region
              $region48: #{net_forward.3} parent=35 // pred_check
                _
              $region49: #{net_forward.3} parent=35 // pred_check_branch
                %1054 = sbr.rel (0) target = $region51
              $region50: #{net_forward.3} parent=35 // pred_region
                loop: start=0, step=1, limit=1
                $region52: #{net_forward.3} parent=50 // loop_pre_header
                  _
                $region53: #{net_forward.3} parent=50 // loop_header
                  %s1056 = sphi 0, %s1060
                  %p1057 = scmp.ge.s32.totalorder %s1056, 1
                  %s1061 = sphi %s137, %s137
                  %s1062 = sphi %s134, %s134
                $region54: #{net_forward.3} parent=50 // loop_header_branch
                  %1059 = sbr.rel (%p1057) target = $region58
                $region55: #{net_forward.3} parent=50 // loop_body
                  %v1063 = vld [vmem:[%s1061] sm:$0xff]
                  %1064 = vst [vmem:[%s1062] sm:$0xff] %v1063
                  %v1065 = vld [vmem:[%s1061 + $0x8] sm:$0xff]
                  %1066 = vst [vmem:[%s1062 + $0x8] sm:$0xff] %v1065
                  %v1067 = vld [vmem:[%s1061 + $0x10] sm:$0xff]
                  %1068 = vst [vmem:[%s1062 + $0x10] sm:$0xff] %v1067
                  %v1069 = vld [vmem:[%s1061 + $0x18] sm:$0xff]
                  %1070 = vst [vmem:[%s1062 + $0x18] sm:$0xff] %v1069
                  %v1071 = vld [vmem:[%s1061 + $0x20] sm:$0xff]
                  %1072 = vst [vmem:[%s1062 + $0x20] sm:$0xff] %v1071
                  %v1073 = vld [vmem:[%s1061 + $0x28] sm:$0xff]
                  %1074 = vst [vmem:[%s1062 + $0x28] sm:$0xff] %v1073
                  %v1075 = vld [vmem:[%s1061 + $0x30] sm:$0xff]
                  %1076 = vst [vmem:[%s1062 + $0x30] sm:$0xff] %v1075
                  %v1077 = vld [vmem:[%s1061 + $0x38] sm:$0xff]
                  %1078 = vst [vmem:[%s1062 + $0x38] sm:$0xff] %v1077
                  %v1079 = vld [vmem:[%s1061 + $0x40] sm:$0xff]
                  %1080 = vst [vmem:[%s1062 + $0x40] sm:$0xff] %v1079
                  %v1081 = vld [vmem:[%s1061 + $0x48] sm:$0xff]
                  %1082 = vst [vmem:[%s1062 + $0x48] sm:$0xff] %v1081
                  %v1083 = vld [vmem:[%s1061 + $0x50] sm:$0xff]
                  %1084 = vst [vmem:[%s1062 + $0x50] sm:$0xff] %v1083
                  %v1085 = vld [vmem:[%s1061 + $0x58] sm:$0xff]
                  %1086 = vst [vmem:[%s1062 + $0x58] sm:$0xff] %v1085
                  %v1087 = vld [vmem:[%s1061 + $0x60] sm:$0xff]
                  %1088 = vst [vmem:[%s1062 + $0x60] sm:$0xff] %v1087
                  %v1089 = vld [vmem:[%s1061 + $0x68] sm:$0xff]
                  %1090 = vst [vmem:[%s1062 + $0x68] sm:$0xff] %v1089
                  %v1091 = vld [vmem:[%s1061 + $0x70] sm:$0xff]
                  %1092 = vst [vmem:[%s1062 + $0x70] sm:$0xff] %v1091
                  %v1093 = vld [vmem:[%s1061 + $0x78] sm:$0xff]
                  %1094 = vst [vmem:[%s1062 + $0x78] sm:$0xff] %v1093
                  %v1095 = vld [vmem:[%s1061 + $0x80] sm:$0xff]
                  %1096 = vst [vmem:[%s1062 + $0x80] sm:$0xff] %v1095
                  %v1097 = vld [vmem:[%s1061 + $0x88] sm:$0xff]
                  %1098 = vst [vmem:[%s1062 + $0x88] sm:$0xff] %v1097
                  %v1099 = vld [vmem:[%s1061 + $0x90] sm:$0xff]
                  %1100 = vst [vmem:[%s1062 + $0x90] sm:$0xff] %v1099
                  %v1101 = vld [vmem:[%s1061 + $0x98] sm:$0xff]
                  %1102 = vst [vmem:[%s1062 + $0x98] sm:$0xff] %v1101
                  %v1103 = vld [vmem:[%s1061 + $0xa0] sm:$0xff]
                  %1104 = vst [vmem:[%s1062 + $0xa0] sm:$0xff] %v1103
                  %v1105 = vld [vmem:[%s1061 + $0xa8] sm:$0xff]
                  %1106 = vst [vmem:[%s1062 + $0xa8] sm:$0xff] %v1105
                  %v1107 = vld [vmem:[%s1061 + $0xb0] sm:$0xff]
                  %1108 = vst [vmem:[%s1062 + $0xb0] sm:$0xff] %v1107
                  %v1109 = vld [vmem:[%s1061 + $0xb8] sm:$0xff]
                  %1110 = vst [vmem:[%s1062 + $0xb8] sm:$0xff] %v1109
                  %v1111 = vld [vmem:[%s1061 + $0xc0] sm:$0xff]
                  %1112 = vst [vmem:[%s1062 + $0xc0] sm:$0xff] %v1111
                  %v1113 = vld [vmem:[%s1061 + $0xc8] sm:$0xff]
                  %1114 = vst [vmem:[%s1062 + $0xc8] sm:$0xff] %v1113
                  %v1115 = vld [vmem:[%s1061 + $0xd0] sm:$0xff]
                  %1116 = vst [vmem:[%s1062 + $0xd0] sm:$0xff] %v1115
                  %v1117 = vld [vmem:[%s1061 + $0xd8] sm:$0xff]
                  %1118 = vst [vmem:[%s1062 + $0xd8] sm:$0xff] %v1117
                  %v1119 = vld [vmem:[%s1061 + $0xe0] sm:$0xff]
                  %1120 = vst [vmem:[%s1062 + $0xe0] sm:$0xff] %v1119
                  %v1121 = vld [vmem:[%s1061 + $0xe8] sm:$0xff]
                  %1122 = vst [vmem:[%s1062 + $0xe8] sm:$0xff] %v1121
                  %v1123 = vld [vmem:[%s1061 + $0xf0] sm:$0xff]
                  %1124 = vst [vmem:[%s1062 + $0xf0] sm:$0xff] %v1123
                  %v1125 = vld [vmem:[%s1061 + $0xf8] sm:$0xff]
                  %1126 = vst [vmem:[%s1062 + $0xf8] sm:$0xff] %v1125
                  %v1127 = vld [vmem:[%s1061 + $0x100] sm:$0xff]
                  %1128 = vst [vmem:[%s1062 + $0x100] sm:$0xff] %v1127
                  %v1129 = vld [vmem:[%s1061 + $0x108] sm:$0xff]
                  %1130 = vst [vmem:[%s1062 + $0x108] sm:$0xff] %v1129
                  %v1131 = vld [vmem:[%s1061 + $0x110] sm:$0xff]
                  %1132 = vst [vmem:[%s1062 + $0x110] sm:$0xff] %v1131
                  %v1133 = vld [vmem:[%s1061 + $0x118] sm:$0xff]
                  %1134 = vst [vmem:[%s1062 + $0x118] sm:$0xff] %v1133
                  %v1135 = vld [vmem:[%s1061 + $0x120] sm:$0xff]
                  %1136 = vst [vmem:[%s1062 + $0x120] sm:$0xff] %v1135
                  %v1137 = vld [vmem:[%s1061 + $0x128] sm:$0xff]
                  %1138 = vst [vmem:[%s1062 + $0x128] sm:$0xff] %v1137
                  %v1139 = vld [vmem:[%s1061 + $0x130] sm:$0xff]
                  %1140 = vst [vmem:[%s1062 + $0x130] sm:$0xff] %v1139
                  %v1141 = vld [vmem:[%s1061 + $0x138] sm:$0xff]
                  %1142 = vst [vmem:[%s1062 + $0x138] sm:$0xff] %v1141
                  %v1143 = vld [vmem:[%s1061 + $0x140] sm:$0xff]
                  %1144 = vst [vmem:[%s1062 + $0x140] sm:$0xff] %v1143
                  %v1145 = vld [vmem:[%s1061 + $0x148] sm:$0xff]
                  %1146 = vst [vmem:[%s1062 + $0x148] sm:$0xff] %v1145
                  %v1147 = vld [vmem:[%s1061 + $0x150] sm:$0xff]
                  %1148 = vst [vmem:[%s1062 + $0x150] sm:$0xff] %v1147
                  %v1149 = vld [vmem:[%s1061 + $0x158] sm:$0xff]
                  %1150 = vst [vmem:[%s1062 + $0x158] sm:$0xff] %v1149
                  %v1151 = vld [vmem:[%s1061 + $0x160] sm:$0xff]
                  %1152 = vst [vmem:[%s1062 + $0x160] sm:$0xff] %v1151
                  %v1153 = vld [vmem:[%s1061 + $0x168] sm:$0xff]
                  %1154 = vst [vmem:[%s1062 + $0x168] sm:$0xff] %v1153
                  %v1155 = vld [vmem:[%s1061 + $0x170] sm:$0xff]
                  %1156 = vst [vmem:[%s1062 + $0x170] sm:$0xff] %v1155
                  %v1157 = vld [vmem:[%s1061 + $0x178] sm:$0xff]
                  %1158 = vst [vmem:[%s1062 + $0x178] sm:$0xff] %v1157
                  %v1159 = vld [vmem:[%s1061 + $0x180] sm:$0xff]
                  %1160 = vst [vmem:[%s1062 + $0x180] sm:$0xff] %v1159
                  %v1161 = vld [vmem:[%s1061 + $0x188] sm:$0xff]
                  %1162 = vst [vmem:[%s1062 + $0x188] sm:$0xff] %v1161
                  %v1163 = vld [vmem:[%s1061 + $0x320] sm:$0xff]
                  %1164 = vst [vmem:[%s1062 + $0x190] sm:$0xff] %v1163
                  %v1165 = vld [vmem:[%s1061 + $0x328] sm:$0xff]
                  %1166 = vst [vmem:[%s1062 + $0x198] sm:$0xff] %v1165
                  %v1167 = vld [vmem:[%s1061 + $0x330] sm:$0xff]
                  %1168 = vst [vmem:[%s1062 + $0x1a0] sm:$0xff] %v1167
                  %v1169 = vld [vmem:[%s1061 + $0x338] sm:$0xff]
                  %1170 = vst [vmem:[%s1062 + $0x1a8] sm:$0xff] %v1169
                  %v1171 = vld [vmem:[%s1061 + $0x340] sm:$0xff]
                  %1172 = vst [vmem:[%s1062 + $0x1b0] sm:$0xff] %v1171
                  %v1173 = vld [vmem:[%s1061 + $0x348] sm:$0xff]
                  %1174 = vst [vmem:[%s1062 + $0x1b8] sm:$0xff] %v1173
                  %v1175 = vld [vmem:[%s1061 + $0x350] sm:$0xff]
                  %1176 = vst [vmem:[%s1062 + $0x1c0] sm:$0xff] %v1175
                  %v1177 = vld [vmem:[%s1061 + $0x358] sm:$0xff]
                  %1178 = vst [vmem:[%s1062 + $0x1c8] sm:$0xff] %v1177
                  %v1179 = vld [vmem:[%s1061 + $0x360] sm:$0xff]
                  %1180 = vst [vmem:[%s1062 + $0x1d0] sm:$0xff] %v1179
                  %v1181 = vld [vmem:[%s1061 + $0x368] sm:$0xff]
                  %1182 = vst [vmem:[%s1062 + $0x1d8] sm:$0xff] %v1181
                  %v1183 = vld [vmem:[%s1061 + $0x370] sm:$0xff]
                  %1184 = vst [vmem:[%s1062 + $0x1e0] sm:$0xff] %v1183
                  %v1185 = vld [vmem:[%s1061 + $0x378] sm:$0xff]
                  %1186 = vst [vmem:[%s1062 + $0x1e8] sm:$0xff] %v1185
                  %v1187 = vld [vmem:[%s1061 + $0x380] sm:$0xff]
                  %1188 = vst [vmem:[%s1062 + $0x1f0] sm:$0xff] %v1187
                  %v1189 = vld [vmem:[%s1061 + $0x388] sm:$0xff]
                  %1190 = vst [vmem:[%s1062 + $0x1f8] sm:$0xff] %v1189
                  %v1191 = vld [vmem:[%s1061 + $0x390] sm:$0xff]
                  %1192 = vst [vmem:[%s1062 + $0x200] sm:$0xff] %v1191
                  %v1193 = vld [vmem:[%s1061 + $0x398] sm:$0xff]
                  %1194 = vst [vmem:[%s1062 + $0x208] sm:$0xff] %v1193
                  %v1195 = vld [vmem:[%s1061 + $0x3a0] sm:$0xff]
                  %1196 = vst [vmem:[%s1062 + $0x210] sm:$0xff] %v1195
                  %v1197 = vld [vmem:[%s1061 + $0x3a8] sm:$0xff]
                  %1198 = vst [vmem:[%s1062 + $0x218] sm:$0xff] %v1197
                  %v1199 = vld [vmem:[%s1061 + $0x3b0] sm:$0xff]
                  %1200 = vst [vmem:[%s1062 + $0x220] sm:$0xff] %v1199
                  %v1201 = vld [vmem:[%s1061 + $0x3b8] sm:$0xff]
                  %1202 = vst [vmem:[%s1062 + $0x228] sm:$0xff] %v1201
                  %v1203 = vld [vmem:[%s1061 + $0x3c0] sm:$0xff]
                  %1204 = vst [vmem:[%s1062 + $0x230] sm:$0xff] %v1203
                  %v1205 = vld [vmem:[%s1061 + $0x3c8] sm:$0xff]
                  %1206 = vst [vmem:[%s1062 + $0x238] sm:$0xff] %v1205
                  %v1207 = vld [vmem:[%s1061 + $0x3d0] sm:$0xff]
                  %1208 = vst [vmem:[%s1062 + $0x240] sm:$0xff] %v1207
                  %v1209 = vld [vmem:[%s1061 + $0x3d8] sm:$0xff]
                  %1210 = vst [vmem:[%s1062 + $0x248] sm:$0xff] %v1209
                  %v1211 = vld [vmem:[%s1061 + $0x3e0] sm:$0xff]
                  %1212 = vst [vmem:[%s1062 + $0x250] sm:$0xff] %v1211
                  %v1213 = vld [vmem:[%s1061 + $0x3e8] sm:$0xff]
                  %1214 = vst [vmem:[%s1062 + $0x258] sm:$0xff] %v1213
                  %v1215 = vld [vmem:[%s1061 + $0x3f0] sm:$0xff]
                  %1216 = vst [vmem:[%s1062 + $0x260] sm:$0xff] %v1215
                  %v1217 = vld [vmem:[%s1061 + $0x3f8] sm:$0xff]
                  %1218 = vst [vmem:[%s1062 + $0x268] sm:$0xff] %v1217
                  %v1219 = vld [vmem:[%s1061 + $0x400] sm:$0xff]
                  %1220 = vst [vmem:[%s1062 + $0x270] sm:$0xff] %v1219
                  %v1221 = vld [vmem:[%s1061 + $0x408] sm:$0xff]
                  %1222 = vst [vmem:[%s1062 + $0x278] sm:$0xff] %v1221
                  %v1223 = vld [vmem:[%s1061 + $0x410] sm:$0xff]
                  %1224 = vst [vmem:[%s1062 + $0x280] sm:$0xff] %v1223
                  %v1225 = vld [vmem:[%s1061 + $0x418] sm:$0xff]
                  %1226 = vst [vmem:[%s1062 + $0x288] sm:$0xff] %v1225
                  %v1227 = vld [vmem:[%s1061 + $0x420] sm:$0xff]
                  %1228 = vst [vmem:[%s1062 + $0x290] sm:$0xff] %v1227
                  %v1229 = vld [vmem:[%s1061 + $0x428] sm:$0xff]
                  %1230 = vst [vmem:[%s1062 + $0x298] sm:$0xff] %v1229
                  %v1231 = vld [vmem:[%s1061 + $0x430] sm:$0xff]
                  %1232 = vst [vmem:[%s1062 + $0x2a0] sm:$0xff] %v1231
                  %v1233 = vld [vmem:[%s1061 + $0x438] sm:$0xff]
                  %1234 = vst [vmem:[%s1062 + $0x2a8] sm:$0xff] %v1233
                  %v1235 = vld [vmem:[%s1061 + $0x440] sm:$0xff]
                  %1236 = vst [vmem:[%s1062 + $0x2b0] sm:$0xff] %v1235
                  %v1237 = vld [vmem:[%s1061 + $0x448] sm:$0xff]
                  %1238 = vst [vmem:[%s1062 + $0x2b8] sm:$0xff] %v1237
                  %v1239 = vld [vmem:[%s1061 + $0x450] sm:$0xff]
                  %1240 = vst [vmem:[%s1062 + $0x2c0] sm:$0xff] %v1239
                  %v1241 = vld [vmem:[%s1061 + $0x458] sm:$0xff]
                  %1242 = vst [vmem:[%s1062 + $0x2c8] sm:$0xff] %v1241
                  %v1243 = vld [vmem:[%s1061 + $0x460] sm:$0xff]
                  %1244 = vst [vmem:[%s1062 + $0x2d0] sm:$0xff] %v1243
                  %v1245 = vld [vmem:[%s1061 + $0x468] sm:$0xff]
                  %1246 = vst [vmem:[%s1062 + $0x2d8] sm:$0xff] %v1245
                  %v1247 = vld [vmem:[%s1061 + $0x470] sm:$0xff]
                  %1248 = vst [vmem:[%s1062 + $0x2e0] sm:$0xff] %v1247
                  %v1249 = vld [vmem:[%s1061 + $0x478] sm:$0xff]
                  %1250 = vst [vmem:[%s1062 + $0x2e8] sm:$0xff] %v1249
                  %v1251 = vld [vmem:[%s1061 + $0x480] sm:$0xff]
                  %1252 = vst [vmem:[%s1062 + $0x2f0] sm:$0xff] %v1251
                  %v1253 = vld [vmem:[%s1061 + $0x488] sm:$0xff]
                  %1254 = vst [vmem:[%s1062 + $0x2f8] sm:$0xff] %v1253
                  %v1255 = vld [vmem:[%s1061 + $0x490] sm:$0xff]
                  %1256 = vst [vmem:[%s1062 + $0x300] sm:$0xff] %v1255
                  %v1257 = vld [vmem:[%s1061 + $0x498] sm:$0xff]
                  %1258 = vst [vmem:[%s1062 + $0x308] sm:$0xff] %v1257
                  %v1259 = vld [vmem:[%s1061 + $0x4a0] sm:$0xff]
                  %1260 = vst [vmem:[%s1062 + $0x310] sm:$0xff] %v1259
                  %v1261 = vld [vmem:[%s1061 + $0x4a8] sm:$0xff]
                  %1262 = vst [vmem:[%s1062 + $0x318] sm:$0xff] %v1261
                  %v1263 = vld [vmem:[%s1061 + $0x640] sm:$0xff]
                  %1264 = vst [vmem:[%s1062 + $0x320] sm:$0xff] %v1263
                  %v1265 = vld [vmem:[%s1061 + $0x648] sm:$0xff]
                  %1266 = vst [vmem:[%s1062 + $0x328] sm:$0xff] %v1265
                  %v1267 = vld [vmem:[%s1061 + $0x650] sm:$0xff]
                  %1268 = vst [vmem:[%s1062 + $0x330] sm:$0xff] %v1267
                  %v1269 = vld [vmem:[%s1061 + $0x658] sm:$0xff]
                  %1270 = vst [vmem:[%s1062 + $0x338] sm:$0xff] %v1269
                  %v1271 = vld [vmem:[%s1061 + $0x660] sm:$0xff]
                  %1272 = vst [vmem:[%s1062 + $0x340] sm:$0xff] %v1271
                  %v1273 = vld [vmem:[%s1061 + $0x668] sm:$0xff]
                  %1274 = vst [vmem:[%s1062 + $0x348] sm:$0xff] %v1273
                  %v1275 = vld [vmem:[%s1061 + $0x670] sm:$0xff]
                  %1276 = vst [vmem:[%s1062 + $0x350] sm:$0xff] %v1275
                  %v1277 = vld [vmem:[%s1061 + $0x678] sm:$0xff]
                  %1278 = vst [vmem:[%s1062 + $0x358] sm:$0xff] %v1277
                  %v1279 = vld [vmem:[%s1061 + $0x680] sm:$0xff]
                  %1280 = vst [vmem:[%s1062 + $0x360] sm:$0xff] %v1279
                  %v1281 = vld [vmem:[%s1061 + $0x688] sm:$0xff]
                  %1282 = vst [vmem:[%s1062 + $0x368] sm:$0xff] %v1281
                  %v1283 = vld [vmem:[%s1061 + $0x690] sm:$0xff]
                  %1284 = vst [vmem:[%s1062 + $0x370] sm:$0xff] %v1283
                  %v1285 = vld [vmem:[%s1061 + $0x698] sm:$0xff]
                  %1286 = vst [vmem:[%s1062 + $0x378] sm:$0xff] %v1285
                  %v1287 = vld [vmem:[%s1061 + $0x6a0] sm:$0xff]
                  %1288 = vst [vmem:[%s1062 + $0x380] sm:$0xff] %v1287
                  %v1289 = vld [vmem:[%s1061 + $0x6a8] sm:$0xff]
                  %1290 = vst [vmem:[%s1062 + $0x388] sm:$0xff] %v1289
                  %v1291 = vld [vmem:[%s1061 + $0x6b0] sm:$0xff]
                  %1292 = vst [vmem:[%s1062 + $0x390] sm:$0xff] %v1291
                  %v1293 = vld [vmem:[%s1061 + $0x6b8] sm:$0xff]
                  %1294 = vst [vmem:[%s1062 + $0x398] sm:$0xff] %v1293
                  %v1295 = vld [vmem:[%s1061 + $0x6c0] sm:$0xff]
                  %1296 = vst [vmem:[%s1062 + $0x3a0] sm:$0xff] %v1295
                  %v1297 = vld [vmem:[%s1061 + $0x6c8] sm:$0xff]
                  %1298 = vst [vmem:[%s1062 + $0x3a8] sm:$0xff] %v1297
                  %v1299 = vld [vmem:[%s1061 + $0x6d0] sm:$0xff]
                  %1300 = vst [vmem:[%s1062 + $0x3b0] sm:$0xff] %v1299
                  %v1301 = vld [vmem:[%s1061 + $0x6d8] sm:$0xff]
                  %1302 = vst [vmem:[%s1062 + $0x3b8] sm:$0xff] %v1301
                  %v1303 = vld [vmem:[%s1061 + $0x6e0] sm:$0xff]
                  %1304 = vst [vmem:[%s1062 + $0x3c0] sm:$0xff] %v1303
                  %v1305 = vld [vmem:[%s1061 + $0x6e8] sm:$0xff]
                  %1306 = vst [vmem:[%s1062 + $0x3c8] sm:$0xff] %v1305
                  %v1307 = vld [vmem:[%s1061 + $0x6f0] sm:$0xff]
                  %1308 = vst [vmem:[%s1062 + $0x3d0] sm:$0xff] %v1307
                  %v1309 = vld [vmem:[%s1061 + $0x6f8] sm:$0xff]
                  %1310 = vst [vmem:[%s1062 + $0x3d8] sm:$0xff] %v1309
                  %v1311 = vld [vmem:[%s1061 + $0x700] sm:$0xff]
                  %1312 = vst [vmem:[%s1062 + $0x3e0] sm:$0xff] %v1311
                  %v1313 = vld [vmem:[%s1061 + $0x708] sm:$0xff]
                  %1314 = vst [vmem:[%s1062 + $0x3e8] sm:$0xff] %v1313
                  %v1315 = vld [vmem:[%s1061 + $0x710] sm:$0xff]
                  %1316 = vst [vmem:[%s1062 + $0x3f0] sm:$0xff] %v1315
                  %v1317 = vld [vmem:[%s1061 + $0x718] sm:$0xff]
                  %1318 = vst [vmem:[%s1062 + $0x3f8] sm:$0xff] %v1317
                  %v1319 = vld [vmem:[%s1061 + $0x720] sm:$0xff]
                  %1320 = vst [vmem:[%s1062 + $0x400] sm:$0xff] %v1319
                  %v1321 = vld [vmem:[%s1061 + $0x728] sm:$0xff]
                  %1322 = vst [vmem:[%s1062 + $0x408] sm:$0xff] %v1321
                  %v1323 = vld [vmem:[%s1061 + $0x730] sm:$0xff]
                  %1324 = vst [vmem:[%s1062 + $0x410] sm:$0xff] %v1323
                  %v1325 = vld [vmem:[%s1061 + $0x738] sm:$0xff]
                  %1326 = vst [vmem:[%s1062 + $0x418] sm:$0xff] %v1325
                  %v1327 = vld [vmem:[%s1061 + $0x740] sm:$0xff]
                  %1328 = vst [vmem:[%s1062 + $0x420] sm:$0xff] %v1327
                  %v1329 = vld [vmem:[%s1061 + $0x748] sm:$0xff]
                  %1330 = vst [vmem:[%s1062 + $0x428] sm:$0xff] %v1329
                  %v1331 = vld [vmem:[%s1061 + $0x750] sm:$0xff]
                  %1332 = vst [vmem:[%s1062 + $0x430] sm:$0xff] %v1331
                  %v1333 = vld [vmem:[%s1061 + $0x758] sm:$0xff]
                  %1334 = vst [vmem:[%s1062 + $0x438] sm:$0xff] %v1333
                  %v1335 = vld [vmem:[%s1061 + $0x760] sm:$0xff]
                  %1336 = vst [vmem:[%s1062 + $0x440] sm:$0xff] %v1335
                  %v1337 = vld [vmem:[%s1061 + $0x768] sm:$0xff]
                  %1338 = vst [vmem:[%s1062 + $0x448] sm:$0xff] %v1337
                  %v1339 = vld [vmem:[%s1061 + $0x770] sm:$0xff]
                  %1340 = vst [vmem:[%s1062 + $0x450] sm:$0xff] %v1339
                  %v1341 = vld [vmem:[%s1061 + $0x778] sm:$0xff]
                  %1342 = vst [vmem:[%s1062 + $0x458] sm:$0xff] %v1341
                  %v1343 = vld [vmem:[%s1061 + $0x780] sm:$0xff]
                  %1344 = vst [vmem:[%s1062 + $0x460] sm:$0xff] %v1343
                  %v1345 = vld [vmem:[%s1061 + $0x788] sm:$0xff]
                  %1346 = vst [vmem:[%s1062 + $0x468] sm:$0xff] %v1345
                  %v1347 = vld [vmem:[%s1061 + $0x790] sm:$0xff]
                  %1348 = vst [vmem:[%s1062 + $0x470] sm:$0xff] %v1347
                  %v1349 = vld [vmem:[%s1061 + $0x798] sm:$0xff]
                  %1350 = vst [vmem:[%s1062 + $0x478] sm:$0xff] %v1349
                  %v1351 = vld [vmem:[%s1061 + $0x7a0] sm:$0xff]
                  %1352 = vst [vmem:[%s1062 + $0x480] sm:$0xff] %v1351
                  %v1353 = vld [vmem:[%s1061 + $0x7a8] sm:$0xff]
                  %1354 = vst [vmem:[%s1062 + $0x488] sm:$0xff] %v1353
                  %v1355 = vld [vmem:[%s1061 + $0x7b0] sm:$0xff]
                  %1356 = vst [vmem:[%s1062 + $0x490] sm:$0xff] %v1355
                  %v1357 = vld [vmem:[%s1061 + $0x7b8] sm:$0xff]
                  %1358 = vst [vmem:[%s1062 + $0x498] sm:$0xff] %v1357
                  %v1359 = vld [vmem:[%s1061 + $0x7c0] sm:$0xff]
                  %1360 = vst [vmem:[%s1062 + $0x4a0] sm:$0xff] %v1359
                  %v1361 = vld [vmem:[%s1061 + $0x7c8] sm:$0xff]
                  %1362 = vst [vmem:[%s1062 + $0x4a8] sm:$0xff] %v1361
                  %v1363 = vld [vmem:[%s1061 + $0x960] sm:$0xff]
                  %1364 = vst [vmem:[%s1062 + $0x4b0] sm:$0xff] %v1363
                  %v1365 = vld [vmem:[%s1061 + $0x968] sm:$0xff]
                  %1366 = vst [vmem:[%s1062 + $0x4b8] sm:$0xff] %v1365
                  %v1367 = vld [vmem:[%s1061 + $0x970] sm:$0xff]
                  %1368 = vst [vmem:[%s1062 + $0x4c0] sm:$0xff] %v1367
                  %v1369 = vld [vmem:[%s1061 + $0x978] sm:$0xff]
                  %1370 = vst [vmem:[%s1062 + $0x4c8] sm:$0xff] %v1369
                  %v1371 = vld [vmem:[%s1061 + $0x980] sm:$0xff]
                  %1372 = vst [vmem:[%s1062 + $0x4d0] sm:$0xff] %v1371
                  %v1373 = vld [vmem:[%s1061 + $0x988] sm:$0xff]
                  %1374 = vst [vmem:[%s1062 + $0x4d8] sm:$0xff] %v1373
                  %v1375 = vld [vmem:[%s1061 + $0x990] sm:$0xff]
                  %1376 = vst [vmem:[%s1062 + $0x4e0] sm:$0xff] %v1375
                  %v1377 = vld [vmem:[%s1061 + $0x998] sm:$0xff]
                  %1378 = vst [vmem:[%s1062 + $0x4e8] sm:$0xff] %v1377
                  %v1379 = vld [vmem:[%s1061 + $0x9a0] sm:$0xff]
                  %1380 = vst [vmem:[%s1062 + $0x4f0] sm:$0xff] %v1379
                  %v1381 = vld [vmem:[%s1061 + $0x9a8] sm:$0xff]
                  %1382 = vst [vmem:[%s1062 + $0x4f8] sm:$0xff] %v1381
                  %v1383 = vld [vmem:[%s1061 + $0x9b0] sm:$0xff]
                  %1384 = vst [vmem:[%s1062 + $0x500] sm:$0xff] %v1383
                  %v1385 = vld [vmem:[%s1061 + $0x9b8] sm:$0xff]
                  %1386 = vst [vmem:[%s1062 + $0x508] sm:$0xff] %v1385
                  %v1387 = vld [vmem:[%s1061 + $0x9c0] sm:$0xff]
                  %1388 = vst [vmem:[%s1062 + $0x510] sm:$0xff] %v1387
                  %v1389 = vld [vmem:[%s1061 + $0x9c8] sm:$0xff]
                  %1390 = vst [vmem:[%s1062 + $0x518] sm:$0xff] %v1389
                  %v1391 = vld [vmem:[%s1061 + $0x9d0] sm:$0xff]
                  %1392 = vst [vmem:[%s1062 + $0x520] sm:$0xff] %v1391
                  %v1393 = vld [vmem:[%s1061 + $0x9d8] sm:$0xff]
                  %1394 = vst [vmem:[%s1062 + $0x528] sm:$0xff] %v1393
                  %v1395 = vld [vmem:[%s1061 + $0x9e0] sm:$0xff]
                  %1396 = vst [vmem:[%s1062 + $0x530] sm:$0xff] %v1395
                  %v1397 = vld [vmem:[%s1061 + $0x9e8] sm:$0xff]
                  %1398 = vst [vmem:[%s1062 + $0x538] sm:$0xff] %v1397
                  %v1399 = vld [vmem:[%s1061 + $0x9f0] sm:$0xff]
                  %1400 = vst [vmem:[%s1062 + $0x540] sm:$0xff] %v1399
                  %v1401 = vld [vmem:[%s1061 + $0x9f8] sm:$0xff]
                  %1402 = vst [vmem:[%s1062 + $0x548] sm:$0xff] %v1401
                  %v1403 = vld [vmem:[%s1061 + $0xa00] sm:$0xff]
                  %1404 = vst [vmem:[%s1062 + $0x550] sm:$0xff] %v1403
                  %v1405 = vld [vmem:[%s1061 + $0xa08] sm:$0xff]
                  %1406 = vst [vmem:[%s1062 + $0x558] sm:$0xff] %v1405
                  %v1407 = vld [vmem:[%s1061 + $0xa10] sm:$0xff]
                  %1408 = vst [vmem:[%s1062 + $0x560] sm:$0xff] %v1407
                  %v1409 = vld [vmem:[%s1061 + $0xa18] sm:$0xff]
                  %1410 = vst [vmem:[%s1062 + $0x568] sm:$0xff] %v1409
                  %v1411 = vld [vmem:[%s1061 + $0xa20] sm:$0xff]
                  %1412 = vst [vmem:[%s1062 + $0x570] sm:$0xff] %v1411
                  %v1413 = vld [vmem:[%s1061 + $0xa28] sm:$0xff]
                  %1414 = vst [vmem:[%s1062 + $0x578] sm:$0xff] %v1413
                  %v1415 = vld [vmem:[%s1061 + $0xa30] sm:$0xff]
                  %1416 = vst [vmem:[%s1062 + $0x580] sm:$0xff] %v1415
                  %v1417 = vld [vmem:[%s1061 + $0xa38] sm:$0xff]
                  %1418 = vst [vmem:[%s1062 + $0x588] sm:$0xff] %v1417
                  %v1419 = vld [vmem:[%s1061 + $0xa40] sm:$0xff]
                  %1420 = vst [vmem:[%s1062 + $0x590] sm:$0xff] %v1419
                  %v1421 = vld [vmem:[%s1061 + $0xa48] sm:$0xff]
                  %1422 = vst [vmem:[%s1062 + $0x598] sm:$0xff] %v1421
                  %v1423 = vld [vmem:[%s1061 + $0xa50] sm:$0xff]
                  %1424 = vst [vmem:[%s1062 + $0x5a0] sm:$0xff] %v1423
                  %v1425 = vld [vmem:[%s1061 + $0xa58] sm:$0xff]
                  %1426 = vst [vmem:[%s1062 + $0x5a8] sm:$0xff] %v1425
                  %v1427 = vld [vmem:[%s1061 + $0xa60] sm:$0xff]
                  %1428 = vst [vmem:[%s1062 + $0x5b0] sm:$0xff] %v1427
                  %v1429 = vld [vmem:[%s1061 + $0xa68] sm:$0xff]
                  %1430 = vst [vmem:[%s1062 + $0x5b8] sm:$0xff] %v1429
                  %v1431 = vld [vmem:[%s1061 + $0xa70] sm:$0xff]
                  %1432 = vst [vmem:[%s1062 + $0x5c0] sm:$0xff] %v1431
                  %v1433 = vld [vmem:[%s1061 + $0xa78] sm:$0xff]
                  %1434 = vst [vmem:[%s1062 + $0x5c8] sm:$0xff] %v1433
                  %v1435 = vld [vmem:[%s1061 + $0xa80] sm:$0xff]
                  %1436 = vst [vmem:[%s1062 + $0x5d0] sm:$0xff] %v1435
                  %v1437 = vld [vmem:[%s1061 + $0xa88] sm:$0xff]
                  %1438 = vst [vmem:[%s1062 + $0x5d8] sm:$0xff] %v1437
                  %v1439 = vld [vmem:[%s1061 + $0xa90] sm:$0xff]
                  %1440 = vst [vmem:[%s1062 + $0x5e0] sm:$0xff] %v1439
                  %v1441 = vld [vmem:[%s1061 + $0xa98] sm:$0xff]
                  %1442 = vst [vmem:[%s1062 + $0x5e8] sm:$0xff] %v1441
                  %v1443 = vld [vmem:[%s1061 + $0xaa0] sm:$0xff]
                  %1444 = vst [vmem:[%s1062 + $0x5f0] sm:$0xff] %v1443
                  %v1445 = vld [vmem:[%s1061 + $0xaa8] sm:$0xff]
                  %1446 = vst [vmem:[%s1062 + $0x5f8] sm:$0xff] %v1445
                  %v1447 = vld [vmem:[%s1061 + $0xab0] sm:$0xff]
                  %1448 = vst [vmem:[%s1062 + $0x600] sm:$0xff] %v1447
                  %v1449 = vld [vmem:[%s1061 + $0xab8] sm:$0xff]
                  %1450 = vst [vmem:[%s1062 + $0x608] sm:$0xff] %v1449
                  %v1451 = vld [vmem:[%s1061 + $0xac0] sm:$0xff]
                  %1452 = vst [vmem:[%s1062 + $0x610] sm:$0xff] %v1451
                  %v1453 = vld [vmem:[%s1061 + $0xac8] sm:$0xff]
                  %1454 = vst [vmem:[%s1062 + $0x618] sm:$0xff] %v1453
                  %v1455 = vld [vmem:[%s1061 + $0xad0] sm:$0xff]
                  %1456 = vst [vmem:[%s1062 + $0x620] sm:$0xff] %v1455
                  %v1457 = vld [vmem:[%s1061 + $0xad8] sm:$0xff]
                  %1458 = vst [vmem:[%s1062 + $0x628] sm:$0xff] %v1457
                  %v1459 = vld [vmem:[%s1061 + $0xae0] sm:$0xff]
                  %1460 = vst [vmem:[%s1062 + $0x630] sm:$0xff] %v1459
                  %v1461 = vld [vmem:[%s1061 + $0xae8] sm:$0xff]
                  %1462 = vst [vmem:[%s1062 + $0x638] sm:$0xff] %v1461
                  %v1463 = vld [vmem:[%s1061 + $0xc80] sm:$0xff]
                  %1464 = vst [vmem:[%s1062 + $0x640] sm:$0xff] %v1463
                  %v1465 = vld [vmem:[%s1061 + $0xc88] sm:$0xff]
                  %1466 = vst [vmem:[%s1062 + $0x648] sm:$0xff] %v1465
                  %v1467 = vld [vmem:[%s1061 + $0xc90] sm:$0xff]
                  %1468 = vst [vmem:[%s1062 + $0x650] sm:$0xff] %v1467
                  %v1469 = vld [vmem:[%s1061 + $0xc98] sm:$0xff]
                  %1470 = vst [vmem:[%s1062 + $0x658] sm:$0xff] %v1469
                  %v1471 = vld [vmem:[%s1061 + $0xca0] sm:$0xff]
                  %1472 = vst [vmem:[%s1062 + $0x660] sm:$0xff] %v1471
                  %v1473 = vld [vmem:[%s1061 + $0xca8] sm:$0xff]
                  %1474 = vst [vmem:[%s1062 + $0x668] sm:$0xff] %v1473
                  %v1475 = vld [vmem:[%s1061 + $0xcb0] sm:$0xff]
                  %1476 = vst [vmem:[%s1062 + $0x670] sm:$0xff] %v1475
                  %v1477 = vld [vmem:[%s1061 + $0xcb8] sm:$0xff]
                  %1478 = vst [vmem:[%s1062 + $0x678] sm:$0xff] %v1477
                  %v1479 = vld [vmem:[%s1061 + $0xcc0] sm:$0xff]
                  %1480 = vst [vmem:[%s1062 + $0x680] sm:$0xff] %v1479
                  %v1481 = vld [vmem:[%s1061 + $0xcc8] sm:$0xff]
                  %1482 = vst [vmem:[%s1062 + $0x688] sm:$0xff] %v1481
                  %v1483 = vld [vmem:[%s1061 + $0xcd0] sm:$0xff]
                  %1484 = vst [vmem:[%s1062 + $0x690] sm:$0xff] %v1483
                  %v1485 = vld [vmem:[%s1061 + $0xcd8] sm:$0xff]
                  %1486 = vst [vmem:[%s1062 + $0x698] sm:$0xff] %v1485
                  %v1487 = vld [vmem:[%s1061 + $0xce0] sm:$0xff]
                  %1488 = vst [vmem:[%s1062 + $0x6a0] sm:$0xff] %v1487
                  %v1489 = vld [vmem:[%s1061 + $0xce8] sm:$0xff]
                  %1490 = vst [vmem:[%s1062 + $0x6a8] sm:$0xff] %v1489
                  %v1491 = vld [vmem:[%s1061 + $0xcf0] sm:$0xff]
                  %1492 = vst [vmem:[%s1062 + $0x6b0] sm:$0xff] %v1491
                  %v1493 = vld [vmem:[%s1061 + $0xcf8] sm:$0xff]
                  %1494 = vst [vmem:[%s1062 + $0x6b8] sm:$0xff] %v1493
                  %v1495 = vld [vmem:[%s1061 + $0xd00] sm:$0xff]
                  %1496 = vst [vmem:[%s1062 + $0x6c0] sm:$0xff] %v1495
                  %v1497 = vld [vmem:[%s1061 + $0xd08] sm:$0xff]
                  %1498 = vst [vmem:[%s1062 + $0x6c8] sm:$0xff] %v1497
                  %v1499 = vld [vmem:[%s1061 + $0xd10] sm:$0xff]
                  %1500 = vst [vmem:[%s1062 + $0x6d0] sm:$0xff] %v1499
                  %v1501 = vld [vmem:[%s1061 + $0xd18] sm:$0xff]
                  %1502 = vst [vmem:[%s1062 + $0x6d8] sm:$0xff] %v1501
                  %v1503 = vld [vmem:[%s1061 + $0xd20] sm:$0xff]
                  %1504 = vst [vmem:[%s1062 + $0x6e0] sm:$0xff] %v1503
                  %v1505 = vld [vmem:[%s1061 + $0xd28] sm:$0xff]
                  %1506 = vst [vmem:[%s1062 + $0x6e8] sm:$0xff] %v1505
                  %v1507 = vld [vmem:[%s1061 + $0xd30] sm:$0xff]
                  %1508 = vst [vmem:[%s1062 + $0x6f0] sm:$0xff] %v1507
                  %v1509 = vld [vmem:[%s1061 + $0xd38] sm:$0xff]
                  %1510 = vst [vmem:[%s1062 + $0x6f8] sm:$0xff] %v1509
                  %v1511 = vld [vmem:[%s1061 + $0xd40] sm:$0xff]
                  %1512 = vst [vmem:[%s1062 + $0x700] sm:$0xff] %v1511
                  %v1513 = vld [vmem:[%s1061 + $0xd48] sm:$0xff]
                  %1514 = vst [vmem:[%s1062 + $0x708] sm:$0xff] %v1513
                  %v1515 = vld [vmem:[%s1061 + $0xd50] sm:$0xff]
                  %1516 = vst [vmem:[%s1062 + $0x710] sm:$0xff] %v1515
                  %v1517 = vld [vmem:[%s1061 + $0xd58] sm:$0xff]
                  %1518 = vst [vmem:[%s1062 + $0x718] sm:$0xff] %v1517
                  %v1519 = vld [vmem:[%s1061 + $0xd60] sm:$0xff]
                  %1520 = vst [vmem:[%s1062 + $0x720] sm:$0xff] %v1519
                  %v1521 = vld [vmem:[%s1061 + $0xd68] sm:$0xff]
                  %1522 = vst [vmem:[%s1062 + $0x728] sm:$0xff] %v1521
                  %v1523 = vld [vmem:[%s1061 + $0xd70] sm:$0xff]
                  %1524 = vst [vmem:[%s1062 + $0x730] sm:$0xff] %v1523
                  %v1525 = vld [vmem:[%s1061 + $0xd78] sm:$0xff]
                  %1526 = vst [vmem:[%s1062 + $0x738] sm:$0xff] %v1525
                  %v1527 = vld [vmem:[%s1061 + $0xd80] sm:$0xff]
                  %1528 = vst [vmem:[%s1062 + $0x740] sm:$0xff] %v1527
                  %v1529 = vld [vmem:[%s1061 + $0xd88] sm:$0xff]
                  %1530 = vst [vmem:[%s1062 + $0x748] sm:$0xff] %v1529
                  %v1531 = vld [vmem:[%s1061 + $0xd90] sm:$0xff]
                  %1532 = vst [vmem:[%s1062 + $0x750] sm:$0xff] %v1531
                  %v1533 = vld [vmem:[%s1061 + $0xd98] sm:$0xff]
                  %1534 = vst [vmem:[%s1062 + $0x758] sm:$0xff] %v1533
                  %v1535 = vld [vmem:[%s1061 + $0xda0] sm:$0xff]
                  %1536 = vst [vmem:[%s1062 + $0x760] sm:$0xff] %v1535
                  %v1537 = vld [vmem:[%s1061 + $0xda8] sm:$0xff]
                  %1538 = vst [vmem:[%s1062 + $0x768] sm:$0xff] %v1537
                  %v1539 = vld [vmem:[%s1061 + $0xdb0] sm:$0xff]
                  %1540 = vst [vmem:[%s1062 + $0x770] sm:$0xff] %v1539
                  %v1541 = vld [vmem:[%s1061 + $0xdb8] sm:$0xff]
                  %1542 = vst [vmem:[%s1062 + $0x778] sm:$0xff] %v1541
                  %v1543 = vld [vmem:[%s1061 + $0xdc0] sm:$0xff]
                  %1544 = vst [vmem:[%s1062 + $0x780] sm:$0xff] %v1543
                  %v1545 = vld [vmem:[%s1061 + $0xdc8] sm:$0xff]
                  %1546 = vst [vmem:[%s1062 + $0x788] sm:$0xff] %v1545
                  %v1547 = vld [vmem:[%s1061 + $0xdd0] sm:$0xff]
                  %1548 = vst [vmem:[%s1062 + $0x790] sm:$0xff] %v1547
                  %v1549 = vld [vmem:[%s1061 + $0xdd8] sm:$0xff]
                  %1550 = vst [vmem:[%s1062 + $0x798] sm:$0xff] %v1549
                  %v1551 = vld [vmem:[%s1061 + $0xde0] sm:$0xff]
                  %1552 = vst [vmem:[%s1062 + $0x7a0] sm:$0xff] %v1551
                  %v1553 = vld [vmem:[%s1061 + $0xde8] sm:$0xff]
                  %1554 = vst [vmem:[%s1062 + $0x7a8] sm:$0xff] %v1553
                  %v1555 = vld [vmem:[%s1061 + $0xdf0] sm:$0xff]
                  %1556 = vst [vmem:[%s1062 + $0x7b0] sm:$0xff] %v1555
                  %v1557 = vld [vmem:[%s1061 + $0xdf8] sm:$0xff]
                  %1558 = vst [vmem:[%s1062 + $0x7b8] sm:$0xff] %v1557
                  %v1559 = vld [vmem:[%s1061 + $0xe00] sm:$0xff]
                  %1560 = vst [vmem:[%s1062 + $0x7c0] sm:$0xff] %v1559
                  %v1561 = vld [vmem:[%s1061 + $0xe08] sm:$0xff]
                  %1562 = vst [vmem:[%s1062 + $0x7c8] sm:$0xff] %v1561
                  %v1563 = vld [vmem:[%s1061 + $0xfa0] sm:$0xff]
                  %1564 = vst [vmem:[%s1062 + $0x7d0] sm:$0xff] %v1563
                  %v1565 = vld [vmem:[%s1061 + $0xfa8] sm:$0xff]
                  %1566 = vst [vmem:[%s1062 + $0x7d8] sm:$0xff] %v1565
                  %v1567 = vld [vmem:[%s1061 + $0xfb0] sm:$0xff]
                  %1568 = vst [vmem:[%s1062 + $0x7e0] sm:$0xff] %v1567
                  %v1569 = vld [vmem:[%s1061 + $0xfb8] sm:$0xff]
                  %1570 = vst [vmem:[%s1062 + $0x7e8] sm:$0xff] %v1569
                  %v1571 = vld [vmem:[%s1061 + $0xfc0] sm:$0xff]
                  %1572 = vst [vmem:[%s1062 + $0x7f0] sm:$0xff] %v1571
                  %v1573 = vld [vmem:[%s1061 + $0xfc8] sm:$0xff]
                  %1574 = vst [vmem:[%s1062 + $0x7f8] sm:$0xff] %v1573
                  %v1575 = vld [vmem:[%s1061 + $0xfd0] sm:$0xff]
                  %1576 = vst [vmem:[%s1062 + $0x800] sm:$0xff] %v1575
                  %v1577 = vld [vmem:[%s1061 + $0xfd8] sm:$0xff]
                  %1578 = vst [vmem:[%s1062 + $0x808] sm:$0xff] %v1577
                  %v1579 = vld [vmem:[%s1061 + $0xfe0] sm:$0xff]
                  %1580 = vst [vmem:[%s1062 + $0x810] sm:$0xff] %v1579
                  %v1581 = vld [vmem:[%s1061 + $0xfe8] sm:$0xff]
                  %1582 = vst [vmem:[%s1062 + $0x818] sm:$0xff] %v1581
                  %v1583 = vld [vmem:[%s1061 + $0xff0] sm:$0xff]
                  %1584 = vst [vmem:[%s1062 + $0x820] sm:$0xff] %v1583
                  %v1585 = vld [vmem:[%s1061 + $0xff8] sm:$0xff]
                  %1586 = vst [vmem:[%s1062 + $0x828] sm:$0xff] %v1585
                  %v1587 = vld [vmem:[%s1061 + $0x1000] sm:$0xff]
                  %1588 = vst [vmem:[%s1062 + $0x830] sm:$0xff] %v1587
                  %v1589 = vld [vmem:[%s1061 + $0x1008] sm:$0xff]
                  %1590 = vst [vmem:[%s1062 + $0x838] sm:$0xff] %v1589
                  %v1591 = vld [vmem:[%s1061 + $0x1010] sm:$0xff]
                  %1592 = vst [vmem:[%s1062 + $0x840] sm:$0xff] %v1591
                  %v1593 = vld [vmem:[%s1061 + $0x1018] sm:$0xff]
                  %1594 = vst [vmem:[%s1062 + $0x848] sm:$0xff] %v1593
                  %v1595 = vld [vmem:[%s1061 + $0x1020] sm:$0xff]
                  %1596 = vst [vmem:[%s1062 + $0x850] sm:$0xff] %v1595
                  %v1597 = vld [vmem:[%s1061 + $0x1028] sm:$0xff]
                  %1598 = vst [vmem:[%s1062 + $0x858] sm:$0xff] %v1597
                  %v1599 = vld [vmem:[%s1061 + $0x1030] sm:$0xff]
                  %1600 = vst [vmem:[%s1062 + $0x860] sm:$0xff] %v1599
                  %v1601 = vld [vmem:[%s1061 + $0x1038] sm:$0xff]
                  %1602 = vst [vmem:[%s1062 + $0x868] sm:$0xff] %v1601
                  %v1603 = vld [vmem:[%s1061 + $0x1040] sm:$0xff]
                  %1604 = vst [vmem:[%s1062 + $0x870] sm:$0xff] %v1603
                  %v1605 = vld [vmem:[%s1061 + $0x1048] sm:$0xff]
                  %1606 = vst [vmem:[%s1062 + $0x878] sm:$0xff] %v1605
                  %v1607 = vld [vmem:[%s1061 + $0x1050] sm:$0xff]
                  %1608 = vst [vmem:[%s1062 + $0x880] sm:$0xff] %v1607
                  %v1609 = vld [vmem:[%s1061 + $0x1058] sm:$0xff]
                  %1610 = vst [vmem:[%s1062 + $0x888] sm:$0xff] %v1609
                  %v1611 = vld [vmem:[%s1061 + $0x1060] sm:$0xff]
                  %1612 = vst [vmem:[%s1062 + $0x890] sm:$0xff] %v1611
                  %v1613 = vld [vmem:[%s1061 + $0x1068] sm:$0xff]
                  %1614 = vst [vmem:[%s1062 + $0x898] sm:$0xff] %v1613
                  %v1615 = vld [vmem:[%s1061 + $0x1070] sm:$0xff]
                  %1616 = vst [vmem:[%s1062 + $0x8a0] sm:$0xff] %v1615
                  %v1617 = vld [vmem:[%s1061 + $0x1078] sm:$0xff]
                  %1618 = vst [vmem:[%s1062 + $0x8a8] sm:$0xff] %v1617
                  %v1619 = vld [vmem:[%s1061 + $0x1080] sm:$0xff]
                  %1620 = vst [vmem:[%s1062 + $0x8b0] sm:$0xff] %v1619
                  %v1621 = vld [vmem:[%s1061 + $0x1088] sm:$0xff]
                  %1622 = vst [vmem:[%s1062 + $0x8b8] sm:$0xff] %v1621
                  %v1623 = vld [vmem:[%s1061 + $0x1090] sm:$0xff]
                  %1624 = vst [vmem:[%s1062 + $0x8c0] sm:$0xff] %v1623
                  %v1625 = vld [vmem:[%s1061 + $0x1098] sm:$0xff]
                  %1626 = vst [vmem:[%s1062 + $0x8c8] sm:$0xff] %v1625
                  %v1627 = vld [vmem:[%s1061 + $0x10a0] sm:$0xff]
                  %1628 = vst [vmem:[%s1062 + $0x8d0] sm:$0xff] %v1627
                  %v1629 = vld [vmem:[%s1061 + $0x10a8] sm:$0xff]
                  %1630 = vst [vmem:[%s1062 + $0x8d8] sm:$0xff] %v1629
                  %v1631 = vld [vmem:[%s1061 + $0x10b0] sm:$0xff]
                  %1632 = vst [vmem:[%s1062 + $0x8e0] sm:$0xff] %v1631
                  %v1633 = vld [vmem:[%s1061 + $0x10b8] sm:$0xff]
                  %1634 = vst [vmem:[%s1062 + $0x8e8] sm:$0xff] %v1633
                  %v1635 = vld [vmem:[%s1061 + $0x10c0] sm:$0xff]
                  %1636 = vst [vmem:[%s1062 + $0x8f0] sm:$0xff] %v1635
                  %v1637 = vld [vmem:[%s1061 + $0x10c8] sm:$0xff]
                  %1638 = vst [vmem:[%s1062 + $0x8f8] sm:$0xff] %v1637
                  %v1639 = vld [vmem:[%s1061 + $0x10d0] sm:$0xff]
                  %1640 = vst [vmem:[%s1062 + $0x900] sm:$0xff] %v1639
                  %v1641 = vld [vmem:[%s1061 + $0x10d8] sm:$0xff]
                  %1642 = vst [vmem:[%s1062 + $0x908] sm:$0xff] %v1641
                  %v1643 = vld [vmem:[%s1061 + $0x10e0] sm:$0xff]
                  %1644 = vst [vmem:[%s1062 + $0x910] sm:$0xff] %v1643
                  %v1645 = vld [vmem:[%s1061 + $0x10e8] sm:$0xff]
                  %1646 = vst [vmem:[%s1062 + $0x918] sm:$0xff] %v1645
                  %v1647 = vld [vmem:[%s1061 + $0x10f0] sm:$0xff]
                  %1648 = vst [vmem:[%s1062 + $0x920] sm:$0xff] %v1647
                  %v1649 = vld [vmem:[%s1061 + $0x10f8] sm:$0xff]
                  %1650 = vst [vmem:[%s1062 + $0x928] sm:$0xff] %v1649
                  %v1651 = vld [vmem:[%s1061 + $0x1100] sm:$0xff]
                  %1652 = vst [vmem:[%s1062 + $0x930] sm:$0xff] %v1651
                  %v1653 = vld [vmem:[%s1061 + $0x1108] sm:$0xff]
                  %1654 = vst [vmem:[%s1062 + $0x938] sm:$0xff] %v1653
                  %v1655 = vld [vmem:[%s1061 + $0x1110] sm:$0xff]
                  %1656 = vst [vmem:[%s1062 + $0x940] sm:$0xff] %v1655
                  %v1657 = vld [vmem:[%s1061 + $0x1118] sm:$0xff]
                  %1658 = vst [vmem:[%s1062 + $0x948] sm:$0xff] %v1657
                  %v1659 = vld [vmem:[%s1061 + $0x1120] sm:$0xff]
                  %1660 = vst [vmem:[%s1062 + $0x950] sm:$0xff] %v1659
                  %v1661 = vld [vmem:[%s1061 + $0x1128] sm:$0xff]
                  %1662 = vst [vmem:[%s1062 + $0x958] sm:$0xff] %v1661
                  %v1663 = vld [vmem:[%s1061 + $0x12c0] sm:$0xff]
                  %1664 = vst [vmem:[%s1062 + $0x960] sm:$0xff] %v1663
                  %v1665 = vld [vmem:[%s1061 + $0x12c8] sm:$0xff]
                  %1666 = vst [vmem:[%s1062 + $0x968] sm:$0xff] %v1665
                  %v1667 = vld [vmem:[%s1061 + $0x12d0] sm:$0xff]
                  %1668 = vst [vmem:[%s1062 + $0x970] sm:$0xff] %v1667
                  %v1669 = vld [vmem:[%s1061 + $0x12d8] sm:$0xff]
                  %1670 = vst [vmem:[%s1062 + $0x978] sm:$0xff] %v1669
                  %v1671 = vld [vmem:[%s1061 + $0x12e0] sm:$0xff]
                  %1672 = vst [vmem:[%s1062 + $0x980] sm:$0xff] %v1671
                  %v1673 = vld [vmem:[%s1061 + $0x12e8] sm:$0xff]
                  %1674 = vst [vmem:[%s1062 + $0x988] sm:$0xff] %v1673
                  %v1675 = vld [vmem:[%s1061 + $0x12f0] sm:$0xff]
                  %1676 = vst [vmem:[%s1062 + $0x990] sm:$0xff] %v1675
                  %v1677 = vld [vmem:[%s1061 + $0x12f8] sm:$0xff]
                  %1678 = vst [vmem:[%s1062 + $0x998] sm:$0xff] %v1677
                  %v1679 = vld [vmem:[%s1061 + $0x1300] sm:$0xff]
                  %1680 = vst [vmem:[%s1062 + $0x9a0] sm:$0xff] %v1679
                  %v1681 = vld [vmem:[%s1061 + $0x1308] sm:$0xff]
                  %1682 = vst [vmem:[%s1062 + $0x9a8] sm:$0xff] %v1681
                  %v1683 = vld [vmem:[%s1061 + $0x1310] sm:$0xff]
                  %1684 = vst [vmem:[%s1062 + $0x9b0] sm:$0xff] %v1683
                  %v1685 = vld [vmem:[%s1061 + $0x1318] sm:$0xff]
                  %1686 = vst [vmem:[%s1062 + $0x9b8] sm:$0xff] %v1685
                  %v1687 = vld [vmem:[%s1061 + $0x1320] sm:$0xff]
                  %1688 = vst [vmem:[%s1062 + $0x9c0] sm:$0xff] %v1687
                  %v1689 = vld [vmem:[%s1061 + $0x1328] sm:$0xff]
                  %1690 = vst [vmem:[%s1062 + $0x9c8] sm:$0xff] %v1689
                  %v1691 = vld [vmem:[%s1061 + $0x1330] sm:$0xff]
                  %1692 = vst [vmem:[%s1062 + $0x9d0] sm:$0xff] %v1691
                  %v1693 = vld [vmem:[%s1061 + $0x1338] sm:$0xff]
                  %1694 = vst [vmem:[%s1062 + $0x9d8] sm:$0xff] %v1693
                  %v1695 = vld [vmem:[%s1061 + $0x1340] sm:$0xff]
                  %1696 = vst [vmem:[%s1062 + $0x9e0] sm:$0xff] %v1695
                  %v1697 = vld [vmem:[%s1061 + $0x1348] sm:$0xff]
                  %1698 = vst [vmem:[%s1062 + $0x9e8] sm:$0xff] %v1697
                  %v1699 = vld [vmem:[%s1061 + $0x1350] sm:$0xff]
                  %1700 = vst [vmem:[%s1062 + $0x9f0] sm:$0xff] %v1699
                  %v1701 = vld [vmem:[%s1061 + $0x1358] sm:$0xff]
                  %1702 = vst [vmem:[%s1062 + $0x9f8] sm:$0xff] %v1701
                  %v1703 = vld [vmem:[%s1061 + $0x1360] sm:$0xff]
                  %1704 = vst [vmem:[%s1062 + $0xa00] sm:$0xff] %v1703
                  %v1705 = vld [vmem:[%s1061 + $0x1368] sm:$0xff]
                  %1706 = vst [vmem:[%s1062 + $0xa08] sm:$0xff] %v1705
                  %v1707 = vld [vmem:[%s1061 + $0x1370] sm:$0xff]
                  %1708 = vst [vmem:[%s1062 + $0xa10] sm:$0xff] %v1707
                  %v1709 = vld [vmem:[%s1061 + $0x1378] sm:$0xff]
                  %1710 = vst [vmem:[%s1062 + $0xa18] sm:$0xff] %v1709
                  %v1711 = vld [vmem:[%s1061 + $0x1380] sm:$0xff]
                  %1712 = vst [vmem:[%s1062 + $0xa20] sm:$0xff] %v1711
                  %v1713 = vld [vmem:[%s1061 + $0x1388] sm:$0xff]
                  %1714 = vst [vmem:[%s1062 + $0xa28] sm:$0xff] %v1713
                  %v1715 = vld [vmem:[%s1061 + $0x1390] sm:$0xff]
                  %1716 = vst [vmem:[%s1062 + $0xa30] sm:$0xff] %v1715
                  %v1717 = vld [vmem:[%s1061 + $0x1398] sm:$0xff]
                  %1718 = vst [vmem:[%s1062 + $0xa38] sm:$0xff] %v1717
                  %v1719 = vld [vmem:[%s1061 + $0x13a0] sm:$0xff]
                  %1720 = vst [vmem:[%s1062 + $0xa40] sm:$0xff] %v1719
                  %v1721 = vld [vmem:[%s1061 + $0x13a8] sm:$0xff]
                  %1722 = vst [vmem:[%s1062 + $0xa48] sm:$0xff] %v1721
                  %v1723 = vld [vmem:[%s1061 + $0x13b0] sm:$0xff]
                  %1724 = vst [vmem:[%s1062 + $0xa50] sm:$0xff] %v1723
                  %v1725 = vld [vmem:[%s1061 + $0x13b8] sm:$0xff]
                  %1726 = vst [vmem:[%s1062 + $0xa58] sm:$0xff] %v1725
                  %v1727 = vld [vmem:[%s1061 + $0x13c0] sm:$0xff]
                  %1728 = vst [vmem:[%s1062 + $0xa60] sm:$0xff] %v1727
                  %v1729 = vld [vmem:[%s1061 + $0x13c8] sm:$0xff]
                  %1730 = vst [vmem:[%s1062 + $0xa68] sm:$0xff] %v1729
                  %v1731 = vld [vmem:[%s1061 + $0x13d0] sm:$0xff]
                  %1732 = vst [vmem:[%s1062 + $0xa70] sm:$0xff] %v1731
                  %v1733 = vld [vmem:[%s1061 + $0x13d8] sm:$0xff]
                  %1734 = vst [vmem:[%s1062 + $0xa78] sm:$0xff] %v1733
                  %v1735 = vld [vmem:[%s1061 + $0x13e0] sm:$0xff]
                  %1736 = vst [vmem:[%s1062 + $0xa80] sm:$0xff] %v1735
                  %v1737 = vld [vmem:[%s1061 + $0x13e8] sm:$0xff]
                  %1738 = vst [vmem:[%s1062 + $0xa88] sm:$0xff] %v1737
                  %v1739 = vld [vmem:[%s1061 + $0x13f0] sm:$0xff]
                  %1740 = vst [vmem:[%s1062 + $0xa90] sm:$0xff] %v1739
                  %v1741 = vld [vmem:[%s1061 + $0x13f8] sm:$0xff]
                  %1742 = vst [vmem:[%s1062 + $0xa98] sm:$0xff] %v1741
                  %v1743 = vld [vmem:[%s1061 + $0x1400] sm:$0xff]
                  %1744 = vst [vmem:[%s1062 + $0xaa0] sm:$0xff] %v1743
                  %v1745 = vld [vmem:[%s1061 + $0x1408] sm:$0xff]
                  %1746 = vst [vmem:[%s1062 + $0xaa8] sm:$0xff] %v1745
                  %v1747 = vld [vmem:[%s1061 + $0x1410] sm:$0xff]
                  %1748 = vst [vmem:[%s1062 + $0xab0] sm:$0xff] %v1747
                  %v1749 = vld [vmem:[%s1061 + $0x1418] sm:$0xff]
                  %1750 = vst [vmem:[%s1062 + $0xab8] sm:$0xff] %v1749
                  %v1751 = vld [vmem:[%s1061 + $0x1420] sm:$0xff]
                  %1752 = vst [vmem:[%s1062 + $0xac0] sm:$0xff] %v1751
                  %v1753 = vld [vmem:[%s1061 + $0x1428] sm:$0xff]
                  %1754 = vst [vmem:[%s1062 + $0xac8] sm:$0xff] %v1753
                  %v1755 = vld [vmem:[%s1061 + $0x1430] sm:$0xff]
                  %1756 = vst [vmem:[%s1062 + $0xad0] sm:$0xff] %v1755
                  %v1757 = vld [vmem:[%s1061 + $0x1438] sm:$0xff]
                  %1758 = vst [vmem:[%s1062 + $0xad8] sm:$0xff] %v1757
                  %v1759 = vld [vmem:[%s1061 + $0x1440] sm:$0xff]
                  %1760 = vst [vmem:[%s1062 + $0xae0] sm:$0xff] %v1759
                  %v1761 = vld [vmem:[%s1061 + $0x1448] sm:$0xff]
                  %1762 = vst [vmem:[%s1062 + $0xae8] sm:$0xff] %v1761
                  %v1763 = vld [vmem:[%s1061 + $0x15e0] sm:$0xff]
                  %1764 = vst [vmem:[%s1062 + $0xaf0] sm:$0xff] %v1763
                  %v1765 = vld [vmem:[%s1061 + $0x15e8] sm:$0xff]
                  %1766 = vst [vmem:[%s1062 + $0xaf8] sm:$0xff] %v1765
                  %v1767 = vld [vmem:[%s1061 + $0x15f0] sm:$0xff]
                  %1768 = vst [vmem:[%s1062 + $0xb00] sm:$0xff] %v1767
                  %v1769 = vld [vmem:[%s1061 + $0x15f8] sm:$0xff]
                  %1770 = vst [vmem:[%s1062 + $0xb08] sm:$0xff] %v1769
                  %v1771 = vld [vmem:[%s1061 + $0x1600] sm:$0xff]
                  %1772 = vst [vmem:[%s1062 + $0xb10] sm:$0xff] %v1771
                  %v1773 = vld [vmem:[%s1061 + $0x1608] sm:$0xff]
                  %1774 = vst [vmem:[%s1062 + $0xb18] sm:$0xff] %v1773
                  %v1775 = vld [vmem:[%s1061 + $0x1610] sm:$0xff]
                  %1776 = vst [vmem:[%s1062 + $0xb20] sm:$0xff] %v1775
                  %v1777 = vld [vmem:[%s1061 + $0x1618] sm:$0xff]
                  %1778 = vst [vmem:[%s1062 + $0xb28] sm:$0xff] %v1777
                  %v1779 = vld [vmem:[%s1061 + $0x1620] sm:$0xff]
                  %1780 = vst [vmem:[%s1062 + $0xb30] sm:$0xff] %v1779
                  %v1781 = vld [vmem:[%s1061 + $0x1628] sm:$0xff]
                  %1782 = vst [vmem:[%s1062 + $0xb38] sm:$0xff] %v1781
                  %v1783 = vld [vmem:[%s1061 + $0x1630] sm:$0xff]
                  %1784 = vst [vmem:[%s1062 + $0xb40] sm:$0xff] %v1783
                  %v1785 = vld [vmem:[%s1061 + $0x1638] sm:$0xff]
                  %1786 = vst [vmem:[%s1062 + $0xb48] sm:$0xff] %v1785
                  %v1787 = vld [vmem:[%s1061 + $0x1640] sm:$0xff]
                  %1788 = vst [vmem:[%s1062 + $0xb50] sm:$0xff] %v1787
                  %v1789 = vld [vmem:[%s1061 + $0x1648] sm:$0xff]
                  %1790 = vst [vmem:[%s1062 + $0xb58] sm:$0xff] %v1789
                  %v1791 = vld [vmem:[%s1061 + $0x1650] sm:$0xff]
                  %1792 = vst [vmem:[%s1062 + $0xb60] sm:$0xff] %v1791
                  %v1793 = vld [vmem:[%s1061 + $0x1658] sm:$0xff]
                  %1794 = vst [vmem:[%s1062 + $0xb68] sm:$0xff] %v1793
                  %v1795 = vld [vmem:[%s1061 + $0x1660] sm:$0xff]
                  %1796 = vst [vmem:[%s1062 + $0xb70] sm:$0xff] %v1795
                  %v1797 = vld [vmem:[%s1061 + $0x1668] sm:$0xff]
                  %1798 = vst [vmem:[%s1062 + $0xb78] sm:$0xff] %v1797
                  %v1799 = vld [vmem:[%s1061 + $0x1670] sm:$0xff]
                  %1800 = vst [vmem:[%s1062 + $0xb80] sm:$0xff] %v1799
                  %v1801 = vld [vmem:[%s1061 + $0x1678] sm:$0xff]
                  %1802 = vst [vmem:[%s1062 + $0xb88] sm:$0xff] %v1801
                  %v1803 = vld [vmem:[%s1061 + $0x1680] sm:$0xff]
                  %1804 = vst [vmem:[%s1062 + $0xb90] sm:$0xff] %v1803
                  %v1805 = vld [vmem:[%s1061 + $0x1688] sm:$0xff]
                  %1806 = vst [vmem:[%s1062 + $0xb98] sm:$0xff] %v1805
                  %v1807 = vld [vmem:[%s1061 + $0x1690] sm:$0xff]
                  %1808 = vst [vmem:[%s1062 + $0xba0] sm:$0xff] %v1807
                  %v1809 = vld [vmem:[%s1061 + $0x1698] sm:$0xff]
                  %1810 = vst [vmem:[%s1062 + $0xba8] sm:$0xff] %v1809
                  %v1811 = vld [vmem:[%s1061 + $0x16a0] sm:$0xff]
                  %1812 = vst [vmem:[%s1062 + $0xbb0] sm:$0xff] %v1811
                  %v1813 = vld [vmem:[%s1061 + $0x16a8] sm:$0xff]
                  %1814 = vst [vmem:[%s1062 + $0xbb8] sm:$0xff] %v1813
                  %v1815 = vld [vmem:[%s1061 + $0x16b0] sm:$0xff]
                  %1816 = vst [vmem:[%s1062 + $0xbc0] sm:$0xff] %v1815
                  %v1817 = vld [vmem:[%s1061 + $0x16b8] sm:$0xff]
                  %1818 = vst [vmem:[%s1062 + $0xbc8] sm:$0xff] %v1817
                  %v1819 = vld [vmem:[%s1061 + $0x16c0] sm:$0xff]
                  %1820 = vst [vmem:[%s1062 + $0xbd0] sm:$0xff] %v1819
                  %v1821 = vld [vmem:[%s1061 + $0x16c8] sm:$0xff]
                  %1822 = vst [vmem:[%s1062 + $0xbd8] sm:$0xff] %v1821
                  %v1823 = vld [vmem:[%s1061 + $0x16d0] sm:$0xff]
                  %1824 = vst [vmem:[%s1062 + $0xbe0] sm:$0xff] %v1823
                  %v1825 = vld [vmem:[%s1061 + $0x16d8] sm:$0xff]
                  %1826 = vst [vmem:[%s1062 + $0xbe8] sm:$0xff] %v1825
                  %v1827 = vld [vmem:[%s1061 + $0x16e0] sm:$0xff]
                  %1828 = vst [vmem:[%s1062 + $0xbf0] sm:$0xff] %v1827
                  %v1829 = vld [vmem:[%s1061 + $0x16e8] sm:$0xff]
                  %1830 = vst [vmem:[%s1062 + $0xbf8] sm:$0xff] %v1829
                  %v1831 = vld [vmem:[%s1061 + $0x16f0] sm:$0xff]
                  %1832 = vst [vmem:[%s1062 + $0xc00] sm:$0xff] %v1831
                  %v1833 = vld [vmem:[%s1061 + $0x16f8] sm:$0xff]
                  %1834 = vst [vmem:[%s1062 + $0xc08] sm:$0xff] %v1833
                  %v1835 = vld [vmem:[%s1061 + $0x1700] sm:$0xff]
                  %1836 = vst [vmem:[%s1062 + $0xc10] sm:$0xff] %v1835
                  %v1837 = vld [vmem:[%s1061 + $0x1708] sm:$0xff]
                  %1838 = vst [vmem:[%s1062 + $0xc18] sm:$0xff] %v1837
                  %v1839 = vld [vmem:[%s1061 + $0x1710] sm:$0xff]
                  %1840 = vst [vmem:[%s1062 + $0xc20] sm:$0xff] %v1839
                  %v1841 = vld [vmem:[%s1061 + $0x1718] sm:$0xff]
                  %1842 = vst [vmem:[%s1062 + $0xc28] sm:$0xff] %v1841
                  %v1843 = vld [vmem:[%s1061 + $0x1720] sm:$0xff]
                  %1844 = vst [vmem:[%s1062 + $0xc30] sm:$0xff] %v1843
                  %v1845 = vld [vmem:[%s1061 + $0x1728] sm:$0xff]
                  %1846 = vst [vmem:[%s1062 + $0xc38] sm:$0xff] %v1845
                  %v1847 = vld [vmem:[%s1061 + $0x1730] sm:$0xff]
                  %1848 = vst [vmem:[%s1062 + $0xc40] sm:$0xff] %v1847
                  %v1849 = vld [vmem:[%s1061 + $0x1738] sm:$0xff]
                  %1850 = vst [vmem:[%s1062 + $0xc48] sm:$0xff] %v1849
                  %v1851 = vld [vmem:[%s1061 + $0x1740] sm:$0xff]
                  %1852 = vst [vmem:[%s1062 + $0xc50] sm:$0xff] %v1851
                  %v1853 = vld [vmem:[%s1061 + $0x1748] sm:$0xff]
                  %1854 = vst [vmem:[%s1062 + $0xc58] sm:$0xff] %v1853
                  %v1855 = vld [vmem:[%s1061 + $0x1750] sm:$0xff]
                  %1856 = vst [vmem:[%s1062 + $0xc60] sm:$0xff] %v1855
                  %v1857 = vld [vmem:[%s1061 + $0x1758] sm:$0xff]
                  %1858 = vst [vmem:[%s1062 + $0xc68] sm:$0xff] %v1857
                  %v1859 = vld [vmem:[%s1061 + $0x1760] sm:$0xff]
                  %1860 = vst [vmem:[%s1062 + $0xc70] sm:$0xff] %v1859
                  %v1861 = vld [vmem:[%s1061 + $0x1768] sm:$0xff]
                  %1862 = vst [vmem:[%s1062 + $0xc78] sm:$0xff] %v1861
                  %v1863 = vld [vmem:[%s1061 + $0x1900] sm:$0xff]
                  %1864 = vst [vmem:[%s1062 + $0xc80] sm:$0xff] %v1863
                  %v1865 = vld [vmem:[%s1061 + $0x1908] sm:$0xff]
                  %1866 = vst [vmem:[%s1062 + $0xc88] sm:$0xff] %v1865
                  %v1867 = vld [vmem:[%s1061 + $0x1910] sm:$0xff]
                  %1868 = vst [vmem:[%s1062 + $0xc90] sm:$0xff] %v1867
                  %v1869 = vld [vmem:[%s1061 + $0x1918] sm:$0xff]
                  %1870 = vst [vmem:[%s1062 + $0xc98] sm:$0xff] %v1869
                  %v1871 = vld [vmem:[%s1061 + $0x1920] sm:$0xff]
                  %1872 = vst [vmem:[%s1062 + $0xca0] sm:$0xff] %v1871
                  %v1873 = vld [vmem:[%s1061 + $0x1928] sm:$0xff]
                  %1874 = vst [vmem:[%s1062 + $0xca8] sm:$0xff] %v1873
                  %v1875 = vld [vmem:[%s1061 + $0x1930] sm:$0xff]
                  %1876 = vst [vmem:[%s1062 + $0xcb0] sm:$0xff] %v1875
                  %v1877 = vld [vmem:[%s1061 + $0x1938] sm:$0xff]
                  %1878 = vst [vmem:[%s1062 + $0xcb8] sm:$0xff] %v1877
                  %v1879 = vld [vmem:[%s1061 + $0x1940] sm:$0xff]
                  %1880 = vst [vmem:[%s1062 + $0xcc0] sm:$0xff] %v1879
                  %v1881 = vld [vmem:[%s1061 + $0x1948] sm:$0xff]
                  %1882 = vst [vmem:[%s1062 + $0xcc8] sm:$0xff] %v1881
                  %v1883 = vld [vmem:[%s1061 + $0x1950] sm:$0xff]
                  %1884 = vst [vmem:[%s1062 + $0xcd0] sm:$0xff] %v1883
                  %v1885 = vld [vmem:[%s1061 + $0x1958] sm:$0xff]
                  %1886 = vst [vmem:[%s1062 + $0xcd8] sm:$0xff] %v1885
                  %v1887 = vld [vmem:[%s1061 + $0x1960] sm:$0xff]
                  %1888 = vst [vmem:[%s1062 + $0xce0] sm:$0xff] %v1887
                  %v1889 = vld [vmem:[%s1061 + $0x1968] sm:$0xff]
                  %1890 = vst [vmem:[%s1062 + $0xce8] sm:$0xff] %v1889
                  %v1891 = vld [vmem:[%s1061 + $0x1970] sm:$0xff]
                  %1892 = vst [vmem:[%s1062 + $0xcf0] sm:$0xff] %v1891
                  %v1893 = vld [vmem:[%s1061 + $0x1978] sm:$0xff]
                  %1894 = vst [vmem:[%s1062 + $0xcf8] sm:$0xff] %v1893
                  %v1895 = vld [vmem:[%s1061 + $0x1980] sm:$0xff]
                  %1896 = vst [vmem:[%s1062 + $0xd00] sm:$0xff] %v1895
                  %v1897 = vld [vmem:[%s1061 + $0x1988] sm:$0xff]
                  %1898 = vst [vmem:[%s1062 + $0xd08] sm:$0xff] %v1897
                  %v1899 = vld [vmem:[%s1061 + $0x1990] sm:$0xff]
                  %1900 = vst [vmem:[%s1062 + $0xd10] sm:$0xff] %v1899
                  %v1901 = vld [vmem:[%s1061 + $0x1998] sm:$0xff]
                  %1902 = vst [vmem:[%s1062 + $0xd18] sm:$0xff] %v1901
                  %v1903 = vld [vmem:[%s1061 + $0x19a0] sm:$0xff]
                  %1904 = vst [vmem:[%s1062 + $0xd20] sm:$0xff] %v1903
                  %v1905 = vld [vmem:[%s1061 + $0x19a8] sm:$0xff]
                  %1906 = vst [vmem:[%s1062 + $0xd28] sm:$0xff] %v1905
                  %v1907 = vld [vmem:[%s1061 + $0x19b0] sm:$0xff]
                  %1908 = vst [vmem:[%s1062 + $0xd30] sm:$0xff] %v1907
                  %v1909 = vld [vmem:[%s1061 + $0x19b8] sm:$0xff]
                  %1910 = vst [vmem:[%s1062 + $0xd38] sm:$0xff] %v1909
                  %v1911 = vld [vmem:[%s1061 + $0x19c0] sm:$0xff]
                  %1912 = vst [vmem:[%s1062 + $0xd40] sm:$0xff] %v1911
                  %v1913 = vld [vmem:[%s1061 + $0x19c8] sm:$0xff]
                  %1914 = vst [vmem:[%s1062 + $0xd48] sm:$0xff] %v1913
                  %v1915 = vld [vmem:[%s1061 + $0x19d0] sm:$0xff]
                  %1916 = vst [vmem:[%s1062 + $0xd50] sm:$0xff] %v1915
                  %v1917 = vld [vmem:[%s1061 + $0x19d8] sm:$0xff]
                  %1918 = vst [vmem:[%s1062 + $0xd58] sm:$0xff] %v1917
                  %v1919 = vld [vmem:[%s1061 + $0x19e0] sm:$0xff]
                  %1920 = vst [vmem:[%s1062 + $0xd60] sm:$0xff] %v1919
                  %v1921 = vld [vmem:[%s1061 + $0x19e8] sm:$0xff]
                  %1922 = vst [vmem:[%s1062 + $0xd68] sm:$0xff] %v1921
                  %v1923 = vld [vmem:[%s1061 + $0x19f0] sm:$0xff]
                  %1924 = vst [vmem:[%s1062 + $0xd70] sm:$0xff] %v1923
                  %v1925 = vld [vmem:[%s1061 + $0x19f8] sm:$0xff]
                  %1926 = vst [vmem:[%s1062 + $0xd78] sm:$0xff] %v1925
                  %v1927 = vld [vmem:[%s1061 + $0x1a00] sm:$0xff]
                  %1928 = vst [vmem:[%s1062 + $0xd80] sm:$0xff] %v1927
                  %v1929 = vld [vmem:[%s1061 + $0x1a08] sm:$0xff]
                  %1930 = vst [vmem:[%s1062 + $0xd88] sm:$0xff] %v1929
                  %v1931 = vld [vmem:[%s1061 + $0x1a10] sm:$0xff]
                  %1932 = vst [vmem:[%s1062 + $0xd90] sm:$0xff] %v1931
                  %v1933 = vld [vmem:[%s1061 + $0x1a18] sm:$0xff]
                  %1934 = vst [vmem:[%s1062 + $0xd98] sm:$0xff] %v1933
                  %v1935 = vld [vmem:[%s1061 + $0x1a20] sm:$0xff]
                  %1936 = vst [vmem:[%s1062 + $0xda0] sm:$0xff] %v1935
                  %v1937 = vld [vmem:[%s1061 + $0x1a28] sm:$0xff]
                  %1938 = vst [vmem:[%s1062 + $0xda8] sm:$0xff] %v1937
                  %v1939 = vld [vmem:[%s1061 + $0x1a30] sm:$0xff]
                  %1940 = vst [vmem:[%s1062 + $0xdb0] sm:$0xff] %v1939
                  %v1941 = vld [vmem:[%s1061 + $0x1a38] sm:$0xff]
                  %1942 = vst [vmem:[%s1062 + $0xdb8] sm:$0xff] %v1941
                  %v1943 = vld [vmem:[%s1061 + $0x1a40] sm:$0xff]
                  %1944 = vst [vmem:[%s1062 + $0xdc0] sm:$0xff] %v1943
                  %v1945 = vld [vmem:[%s1061 + $0x1a48] sm:$0xff]
                  %1946 = vst [vmem:[%s1062 + $0xdc8] sm:$0xff] %v1945
                  %v1947 = vld [vmem:[%s1061 + $0x1a50] sm:$0xff]
                  %1948 = vst [vmem:[%s1062 + $0xdd0] sm:$0xff] %v1947
                  %v1949 = vld [vmem:[%s1061 + $0x1a58] sm:$0xff]
                  %1950 = vst [vmem:[%s1062 + $0xdd8] sm:$0xff] %v1949
                  %v1951 = vld [vmem:[%s1061 + $0x1a60] sm:$0xff]
                  %1952 = vst [vmem:[%s1062 + $0xde0] sm:$0xff] %v1951
                  %v1953 = vld [vmem:[%s1061 + $0x1a68] sm:$0xff]
                  %1954 = vst [vmem:[%s1062 + $0xde8] sm:$0xff] %v1953
                  %v1955 = vld [vmem:[%s1061 + $0x1a70] sm:$0xff]
                  %1956 = vst [vmem:[%s1062 + $0xdf0] sm:$0xff] %v1955
                  %v1957 = vld [vmem:[%s1061 + $0x1a78] sm:$0xff]
                  %1958 = vst [vmem:[%s1062 + $0xdf8] sm:$0xff] %v1957
                  %v1959 = vld [vmem:[%s1061 + $0x1a80] sm:$0xff]
                  %1960 = vst [vmem:[%s1062 + $0xe00] sm:$0xff] %v1959
                  %v1961 = vld [vmem:[%s1061 + $0x1a88] sm:$0xff]
                  %1962 = vst [vmem:[%s1062 + $0xe08] sm:$0xff] %v1961
                $region56: #{net_forward.3} parent=50 // loop_footer
                  %s1060 = sadd.s32 1, %s1056
                $region57: #{net_forward.3} parent=50 // loop_footer_branch
                  %1055 = sbr.rel target = $region53
                $region58: #{net_forward.3} parent=50 // loop_exit
                  _
              $region51: #{net_forward.3} parent=35 // pred_fallthru
                _
              // Predicated region
              $region59: #{net_forward.3} parent=35 // pred_check
                _
              $region60: #{net_forward.3} parent=35 // pred_check_branch
                %1964 = sbr.rel target = $region62
              $region61: #{net_forward.3} parent=35 // pred_region
                _
              $region62: #{net_forward.3} parent=35 // pred_fallthru
                _
            $region36: #{net_forward.3} parent=31 // pred_fallthru
              _
            // Predicated region
            $region37: #{net_forward.3} parent=31 // pred_check
              _
            $region38: #{net_forward.3} parent=31 // pred_check_branch
              %143 = sbr.rel target = $region40
            $region39: #{net_forward.3} parent=31 // pred_region
              loop: start=0, step=1, limit=1
              $region41: #{net_forward.3} parent=39 // loop_pre_header
                _
              $region42: #{net_forward.3} parent=39 // loop_header
                %s146 = sphi 0, %s150
                %p147 = scmp.ge.s32.totalorder %s146, 1
                %s151 = sphi %s137, %s137
                %s152 = sphi %s134, %s134
              $region43: #{net_forward.3} parent=39 // loop_header_branch
                %149 = sbr.rel (%p147) target = $region47
              $region44: #{net_forward.3} parent=39 // loop_body
                %v153 = vld [vmem:[%s151] sm:$0xff]
                %154 = vst [vmem:[%s152] sm:$0xff] %v153
                %v155 = vld [vmem:[%s151 + $0x8] sm:$0xff]
                %156 = vst [vmem:[%s152 + $0x8] sm:$0xff] %v155
                %v157 = vld [vmem:[%s151 + $0x10] sm:$0xff]
                %158 = vst [vmem:[%s152 + $0x10] sm:$0xff] %v157
                %v159 = vld [vmem:[%s151 + $0x18] sm:$0xff]
                %160 = vst [vmem:[%s152 + $0x18] sm:$0xff] %v159
                %v161 = vld [vmem:[%s151 + $0x20] sm:$0xff]
                %162 = vst [vmem:[%s152 + $0x20] sm:$0xff] %v161
                %v163 = vld [vmem:[%s151 + $0x28] sm:$0xff]
                %164 = vst [vmem:[%s152 + $0x28] sm:$0xff] %v163
                %v165 = vld [vmem:[%s151 + $0x30] sm:$0xff]
                %166 = vst [vmem:[%s152 + $0x30] sm:$0xff] %v165
                %v167 = vld [vmem:[%s151 + $0x38] sm:$0xff]
                %168 = vst [vmem:[%s152 + $0x38] sm:$0xff] %v167
                %v169 = vld [vmem:[%s151 + $0x40] sm:$0xff]
                %170 = vst [vmem:[%s152 + $0x40] sm:$0xff] %v169
                %v171 = vld [vmem:[%s151 + $0x48] sm:$0xff]
                %172 = vst [vmem:[%s152 + $0x48] sm:$0xff] %v171
                %v173 = vld [vmem:[%s151 + $0x50] sm:$0xff]
                %174 = vst [vmem:[%s152 + $0x50] sm:$0xff] %v173
                %v175 = vld [vmem:[%s151 + $0x58] sm:$0xff]
                %176 = vst [vmem:[%s152 + $0x58] sm:$0xff] %v175
                %v177 = vld [vmem:[%s151 + $0x60] sm:$0xff]
                %178 = vst [vmem:[%s152 + $0x60] sm:$0xff] %v177
                %v179 = vld [vmem:[%s151 + $0x68] sm:$0xff]
                %180 = vst [vmem:[%s152 + $0x68] sm:$0xff] %v179
                %v181 = vld [vmem:[%s151 + $0x70] sm:$0xff]
                %182 = vst [vmem:[%s152 + $0x70] sm:$0xff] %v181
                %v183 = vld [vmem:[%s151 + $0x78] sm:$0xff]
                %184 = vst [vmem:[%s152 + $0x78] sm:$0xff] %v183
                %v185 = vld [vmem:[%s151 + $0x80] sm:$0xff]
                %186 = vst [vmem:[%s152 + $0x80] sm:$0xff] %v185
                %v187 = vld [vmem:[%s151 + $0x88] sm:$0xff]
                %188 = vst [vmem:[%s152 + $0x88] sm:$0xff] %v187
                %v189 = vld [vmem:[%s151 + $0x90] sm:$0xff]
                %190 = vst [vmem:[%s152 + $0x90] sm:$0xff] %v189
                %v191 = vld [vmem:[%s151 + $0x98] sm:$0xff]
                %192 = vst [vmem:[%s152 + $0x98] sm:$0xff] %v191
                %v193 = vld [vmem:[%s151 + $0xa0] sm:$0xff]
                %194 = vst [vmem:[%s152 + $0xa0] sm:$0xff] %v193
                %v195 = vld [vmem:[%s151 + $0xa8] sm:$0xff]
                %196 = vst [vmem:[%s152 + $0xa8] sm:$0xff] %v195
                %v197 = vld [vmem:[%s151 + $0xb0] sm:$0xff]
                %198 = vst [vmem:[%s152 + $0xb0] sm:$0xff] %v197
                %v199 = vld [vmem:[%s151 + $0xb8] sm:$0xff]
                %200 = vst [vmem:[%s152 + $0xb8] sm:$0xff] %v199
                %v201 = vld [vmem:[%s151 + $0xc0] sm:$0xff]
                %202 = vst [vmem:[%s152 + $0xc0] sm:$0xff] %v201
                %v203 = vld [vmem:[%s151 + $0xc8] sm:$0xff]
                %204 = vst [vmem:[%s152 + $0xc8] sm:$0xff] %v203
                %v205 = vld [vmem:[%s151 + $0xd0] sm:$0xff]
                %206 = vst [vmem:[%s152 + $0xd0] sm:$0xff] %v205
                %v207 = vld [vmem:[%s151 + $0xd8] sm:$0xff]
                %208 = vst [vmem:[%s152 + $0xd8] sm:$0xff] %v207
                %v209 = vld [vmem:[%s151 + $0xe0] sm:$0xff]
                %210 = vst [vmem:[%s152 + $0xe0] sm:$0xff] %v209
                %v211 = vld [vmem:[%s151 + $0xe8] sm:$0xff]
                %212 = vst [vmem:[%s152 + $0xe8] sm:$0xff] %v211
                %v213 = vld [vmem:[%s151 + $0xf0] sm:$0xff]
                %214 = vst [vmem:[%s152 + $0xf0] sm:$0xff] %v213
                %v215 = vld [vmem:[%s151 + $0xf8] sm:$0xff]
                %216 = vst [vmem:[%s152 + $0xf8] sm:$0xff] %v215
                %v217 = vld [vmem:[%s151 + $0x100] sm:$0xff]
                %218 = vst [vmem:[%s152 + $0x100] sm:$0xff] %v217
                %v219 = vld [vmem:[%s151 + $0x108] sm:$0xff]
                %220 = vst [vmem:[%s152 + $0x108] sm:$0xff] %v219
                %v221 = vld [vmem:[%s151 + $0x110] sm:$0xff]
                %222 = vst [vmem:[%s152 + $0x110] sm:$0xff] %v221
                %v223 = vld [vmem:[%s151 + $0x118] sm:$0xff]
                %224 = vst [vmem:[%s152 + $0x118] sm:$0xff] %v223
                %v225 = vld [vmem:[%s151 + $0x120] sm:$0xff]
                %226 = vst [vmem:[%s152 + $0x120] sm:$0xff] %v225
                %v227 = vld [vmem:[%s151 + $0x128] sm:$0xff]
                %228 = vst [vmem:[%s152 + $0x128] sm:$0xff] %v227
                %v229 = vld [vmem:[%s151 + $0x130] sm:$0xff]
                %230 = vst [vmem:[%s152 + $0x130] sm:$0xff] %v229
                %v231 = vld [vmem:[%s151 + $0x138] sm:$0xff]
                %232 = vst [vmem:[%s152 + $0x138] sm:$0xff] %v231
                %v233 = vld [vmem:[%s151 + $0x140] sm:$0xff]
                %234 = vst [vmem:[%s152 + $0x140] sm:$0xff] %v233
                %v235 = vld [vmem:[%s151 + $0x148] sm:$0xff]
                %236 = vst [vmem:[%s152 + $0x148] sm:$0xff] %v235
                %v237 = vld [vmem:[%s151 + $0x150] sm:$0xff]
                %238 = vst [vmem:[%s152 + $0x150] sm:$0xff] %v237
                %v239 = vld [vmem:[%s151 + $0x158] sm:$0xff]
                %240 = vst [vmem:[%s152 + $0x158] sm:$0xff] %v239
                %v241 = vld [vmem:[%s151 + $0x160] sm:$0xff]
                %242 = vst [vmem:[%s152 + $0x160] sm:$0xff] %v241
                %v243 = vld [vmem:[%s151 + $0x168] sm:$0xff]
                %244 = vst [vmem:[%s152 + $0x168] sm:$0xff] %v243
                %v245 = vld [vmem:[%s151 + $0x170] sm:$0xff]
                %246 = vst [vmem:[%s152 + $0x170] sm:$0xff] %v245
                %v247 = vld [vmem:[%s151 + $0x178] sm:$0xff]
                %248 = vst [vmem:[%s152 + $0x178] sm:$0xff] %v247
                %v249 = vld [vmem:[%s151 + $0x180] sm:$0xff]
                %250 = vst [vmem:[%s152 + $0x180] sm:$0xff] %v249
                %v251 = vld [vmem:[%s151 + $0x188] sm:$0xff]
                %252 = vst [vmem:[%s152 + $0x188] sm:$0xff] %v251
                %v253 = vld [vmem:[%s151 + $0x320] sm:$0xff]
                %254 = vst [vmem:[%s152 + $0x190] sm:$0xff] %v253
                %v255 = vld [vmem:[%s151 + $0x328] sm:$0xff]
                %256 = vst [vmem:[%s152 + $0x198] sm:$0xff] %v255
                %v257 = vld [vmem:[%s151 + $0x330] sm:$0xff]
                %258 = vst [vmem:[%s152 + $0x1a0] sm:$0xff] %v257
                %v259 = vld [vmem:[%s151 + $0x338] sm:$0xff]
                %260 = vst [vmem:[%s152 + $0x1a8] sm:$0xff] %v259
                %v261 = vld [vmem:[%s151 + $0x340] sm:$0xff]
                %262 = vst [vmem:[%s152 + $0x1b0] sm:$0xff] %v261
                %v263 = vld [vmem:[%s151 + $0x348] sm:$0xff]
                %264 = vst [vmem:[%s152 + $0x1b8] sm:$0xff] %v263
                %v265 = vld [vmem:[%s151 + $0x350] sm:$0xff]
                %266 = vst [vmem:[%s152 + $0x1c0] sm:$0xff] %v265
                %v267 = vld [vmem:[%s151 + $0x358] sm:$0xff]
                %268 = vst [vmem:[%s152 + $0x1c8] sm:$0xff] %v267
                %v269 = vld [vmem:[%s151 + $0x360] sm:$0xff]
                %270 = vst [vmem:[%s152 + $0x1d0] sm:$0xff] %v269
                %v271 = vld [vmem:[%s151 + $0x368] sm:$0xff]
                %272 = vst [vmem:[%s152 + $0x1d8] sm:$0xff] %v271
                %v273 = vld [vmem:[%s151 + $0x370] sm:$0xff]
                %274 = vst [vmem:[%s152 + $0x1e0] sm:$0xff] %v273
                %v275 = vld [vmem:[%s151 + $0x378] sm:$0xff]
                %276 = vst [vmem:[%s152 + $0x1e8] sm:$0xff] %v275
                %v277 = vld [vmem:[%s151 + $0x380] sm:$0xff]
                %278 = vst [vmem:[%s152 + $0x1f0] sm:$0xff] %v277
                %v279 = vld [vmem:[%s151 + $0x388] sm:$0xff]
                %280 = vst [vmem:[%s152 + $0x1f8] sm:$0xff] %v279
                %v281 = vld [vmem:[%s151 + $0x390] sm:$0xff]
                %282 = vst [vmem:[%s152 + $0x200] sm:$0xff] %v281
                %v283 = vld [vmem:[%s151 + $0x398] sm:$0xff]
                %284 = vst [vmem:[%s152 + $0x208] sm:$0xff] %v283
                %v285 = vld [vmem:[%s151 + $0x3a0] sm:$0xff]
                %286 = vst [vmem:[%s152 + $0x210] sm:$0xff] %v285
                %v287 = vld [vmem:[%s151 + $0x3a8] sm:$0xff]
                %288 = vst [vmem:[%s152 + $0x218] sm:$0xff] %v287
                %v289 = vld [vmem:[%s151 + $0x3b0] sm:$0xff]
                %290 = vst [vmem:[%s152 + $0x220] sm:$0xff] %v289
                %v291 = vld [vmem:[%s151 + $0x3b8] sm:$0xff]
                %292 = vst [vmem:[%s152 + $0x228] sm:$0xff] %v291
                %v293 = vld [vmem:[%s151 + $0x3c0] sm:$0xff]
                %294 = vst [vmem:[%s152 + $0x230] sm:$0xff] %v293
                %v295 = vld [vmem:[%s151 + $0x3c8] sm:$0xff]
                %296 = vst [vmem:[%s152 + $0x238] sm:$0xff] %v295
                %v297 = vld [vmem:[%s151 + $0x3d0] sm:$0xff]
                %298 = vst [vmem:[%s152 + $0x240] sm:$0xff] %v297
                %v299 = vld [vmem:[%s151 + $0x3d8] sm:$0xff]
                %300 = vst [vmem:[%s152 + $0x248] sm:$0xff] %v299
                %v301 = vld [vmem:[%s151 + $0x3e0] sm:$0xff]
                %302 = vst [vmem:[%s152 + $0x250] sm:$0xff] %v301
                %v303 = vld [vmem:[%s151 + $0x3e8] sm:$0xff]
                %304 = vst [vmem:[%s152 + $0x258] sm:$0xff] %v303
                %v305 = vld [vmem:[%s151 + $0x3f0] sm:$0xff]
                %306 = vst [vmem:[%s152 + $0x260] sm:$0xff] %v305
                %v307 = vld [vmem:[%s151 + $0x3f8] sm:$0xff]
                %308 = vst [vmem:[%s152 + $0x268] sm:$0xff] %v307
                %v309 = vld [vmem:[%s151 + $0x400] sm:$0xff]
                %310 = vst [vmem:[%s152 + $0x270] sm:$0xff] %v309
                %v311 = vld [vmem:[%s151 + $0x408] sm:$0xff]
                %312 = vst [vmem:[%s152 + $0x278] sm:$0xff] %v311
                %v313 = vld [vmem:[%s151 + $0x410] sm:$0xff]
                %314 = vst [vmem:[%s152 + $0x280] sm:$0xff] %v313
                %v315 = vld [vmem:[%s151 + $0x418] sm:$0xff]
                %316 = vst [vmem:[%s152 + $0x288] sm:$0xff] %v315
                %v317 = vld [vmem:[%s151 + $0x420] sm:$0xff]
                %318 = vst [vmem:[%s152 + $0x290] sm:$0xff] %v317
                %v319 = vld [vmem:[%s151 + $0x428] sm:$0xff]
                %320 = vst [vmem:[%s152 + $0x298] sm:$0xff] %v319
                %v321 = vld [vmem:[%s151 + $0x430] sm:$0xff]
                %322 = vst [vmem:[%s152 + $0x2a0] sm:$0xff] %v321
                %v323 = vld [vmem:[%s151 + $0x438] sm:$0xff]
                %324 = vst [vmem:[%s152 + $0x2a8] sm:$0xff] %v323
                %v325 = vld [vmem:[%s151 + $0x440] sm:$0xff]
                %326 = vst [vmem:[%s152 + $0x2b0] sm:$0xff] %v325
                %v327 = vld [vmem:[%s151 + $0x448] sm:$0xff]
                %328 = vst [vmem:[%s152 + $0x2b8] sm:$0xff] %v327
                %v329 = vld [vmem:[%s151 + $0x450] sm:$0xff]
                %330 = vst [vmem:[%s152 + $0x2c0] sm:$0xff] %v329
                %v331 = vld [vmem:[%s151 + $0x458] sm:$0xff]
                %332 = vst [vmem:[%s152 + $0x2c8] sm:$0xff] %v331
                %v333 = vld [vmem:[%s151 + $0x460] sm:$0xff]
                %334 = vst [vmem:[%s152 + $0x2d0] sm:$0xff] %v333
                %v335 = vld [vmem:[%s151 + $0x468] sm:$0xff]
                %336 = vst [vmem:[%s152 + $0x2d8] sm:$0xff] %v335
                %v337 = vld [vmem:[%s151 + $0x470] sm:$0xff]
                %338 = vst [vmem:[%s152 + $0x2e0] sm:$0xff] %v337
                %v339 = vld [vmem:[%s151 + $0x478] sm:$0xff]
                %340 = vst [vmem:[%s152 + $0x2e8] sm:$0xff] %v339
                %v341 = vld [vmem:[%s151 + $0x480] sm:$0xff]
                %342 = vst [vmem:[%s152 + $0x2f0] sm:$0xff] %v341
                %v343 = vld [vmem:[%s151 + $0x488] sm:$0xff]
                %344 = vst [vmem:[%s152 + $0x2f8] sm:$0xff] %v343
                %v345 = vld [vmem:[%s151 + $0x490] sm:$0xff]
                %346 = vst [vmem:[%s152 + $0x300] sm:$0xff] %v345
                %v347 = vld [vmem:[%s151 + $0x498] sm:$0xff]
                %348 = vst [vmem:[%s152 + $0x308] sm:$0xff] %v347
                %v349 = vld [vmem:[%s151 + $0x4a0] sm:$0xff]
                %350 = vst [vmem:[%s152 + $0x310] sm:$0xff] %v349
                %v351 = vld [vmem:[%s151 + $0x4a8] sm:$0xff]
                %352 = vst [vmem:[%s152 + $0x318] sm:$0xff] %v351
                %v353 = vld [vmem:[%s151 + $0x640] sm:$0xff]
                %354 = vst [vmem:[%s152 + $0x320] sm:$0xff] %v353
                %v355 = vld [vmem:[%s151 + $0x648] sm:$0xff]
                %356 = vst [vmem:[%s152 + $0x328] sm:$0xff] %v355
                %v357 = vld [vmem:[%s151 + $0x650] sm:$0xff]
                %358 = vst [vmem:[%s152 + $0x330] sm:$0xff] %v357
                %v359 = vld [vmem:[%s151 + $0x658] sm:$0xff]
                %360 = vst [vmem:[%s152 + $0x338] sm:$0xff] %v359
                %v361 = vld [vmem:[%s151 + $0x660] sm:$0xff]
                %362 = vst [vmem:[%s152 + $0x340] sm:$0xff] %v361
                %v363 = vld [vmem:[%s151 + $0x668] sm:$0xff]
                %364 = vst [vmem:[%s152 + $0x348] sm:$0xff] %v363
                %v365 = vld [vmem:[%s151 + $0x670] sm:$0xff]
                %366 = vst [vmem:[%s152 + $0x350] sm:$0xff] %v365
                %v367 = vld [vmem:[%s151 + $0x678] sm:$0xff]
                %368 = vst [vmem:[%s152 + $0x358] sm:$0xff] %v367
                %v369 = vld [vmem:[%s151 + $0x680] sm:$0xff]
                %370 = vst [vmem:[%s152 + $0x360] sm:$0xff] %v369
                %v371 = vld [vmem:[%s151 + $0x688] sm:$0xff]
                %372 = vst [vmem:[%s152 + $0x368] sm:$0xff] %v371
                %v373 = vld [vmem:[%s151 + $0x690] sm:$0xff]
                %374 = vst [vmem:[%s152 + $0x370] sm:$0xff] %v373
                %v375 = vld [vmem:[%s151 + $0x698] sm:$0xff]
                %376 = vst [vmem:[%s152 + $0x378] sm:$0xff] %v375
                %v377 = vld [vmem:[%s151 + $0x6a0] sm:$0xff]
                %378 = vst [vmem:[%s152 + $0x380] sm:$0xff] %v377
                %v379 = vld [vmem:[%s151 + $0x6a8] sm:$0xff]
                %380 = vst [vmem:[%s152 + $0x388] sm:$0xff] %v379
                %v381 = vld [vmem:[%s151 + $0x6b0] sm:$0xff]
                %382 = vst [vmem:[%s152 + $0x390] sm:$0xff] %v381
                %v383 = vld [vmem:[%s151 + $0x6b8] sm:$0xff]
                %384 = vst [vmem:[%s152 + $0x398] sm:$0xff] %v383
                %v385 = vld [vmem:[%s151 + $0x6c0] sm:$0xff]
                %386 = vst [vmem:[%s152 + $0x3a0] sm:$0xff] %v385
                %v387 = vld [vmem:[%s151 + $0x6c8] sm:$0xff]
                %388 = vst [vmem:[%s152 + $0x3a8] sm:$0xff] %v387
                %v389 = vld [vmem:[%s151 + $0x6d0] sm:$0xff]
                %390 = vst [vmem:[%s152 + $0x3b0] sm:$0xff] %v389
                %v391 = vld [vmem:[%s151 + $0x6d8] sm:$0xff]
                %392 = vst [vmem:[%s152 + $0x3b8] sm:$0xff] %v391
                %v393 = vld [vmem:[%s151 + $0x6e0] sm:$0xff]
                %394 = vst [vmem:[%s152 + $0x3c0] sm:$0xff] %v393
                %v395 = vld [vmem:[%s151 + $0x6e8] sm:$0xff]
                %396 = vst [vmem:[%s152 + $0x3c8] sm:$0xff] %v395
                %v397 = vld [vmem:[%s151 + $0x6f0] sm:$0xff]
                %398 = vst [vmem:[%s152 + $0x3d0] sm:$0xff] %v397
                %v399 = vld [vmem:[%s151 + $0x6f8] sm:$0xff]
                %400 = vst [vmem:[%s152 + $0x3d8] sm:$0xff] %v399
                %v401 = vld [vmem:[%s151 + $0x700] sm:$0xff]
                %402 = vst [vmem:[%s152 + $0x3e0] sm:$0xff] %v401
                %v403 = vld [vmem:[%s151 + $0x708] sm:$0xff]
                %404 = vst [vmem:[%s152 + $0x3e8] sm:$0xff] %v403
                %v405 = vld [vmem:[%s151 + $0x710] sm:$0xff]
                %406 = vst [vmem:[%s152 + $0x3f0] sm:$0xff] %v405
                %v407 = vld [vmem:[%s151 + $0x718] sm:$0xff]
                %408 = vst [vmem:[%s152 + $0x3f8] sm:$0xff] %v407
                %v409 = vld [vmem:[%s151 + $0x720] sm:$0xff]
                %410 = vst [vmem:[%s152 + $0x400] sm:$0xff] %v409
                %v411 = vld [vmem:[%s151 + $0x728] sm:$0xff]
                %412 = vst [vmem:[%s152 + $0x408] sm:$0xff] %v411
                %v413 = vld [vmem:[%s151 + $0x730] sm:$0xff]
                %414 = vst [vmem:[%s152 + $0x410] sm:$0xff] %v413
                %v415 = vld [vmem:[%s151 + $0x738] sm:$0xff]
                %416 = vst [vmem:[%s152 + $0x418] sm:$0xff] %v415
                %v417 = vld [vmem:[%s151 + $0x740] sm:$0xff]
                %418 = vst [vmem:[%s152 + $0x420] sm:$0xff] %v417
                %v419 = vld [vmem:[%s151 + $0x748] sm:$0xff]
                %420 = vst [vmem:[%s152 + $0x428] sm:$0xff] %v419
                %v421 = vld [vmem:[%s151 + $0x750] sm:$0xff]
                %422 = vst [vmem:[%s152 + $0x430] sm:$0xff] %v421
                %v423 = vld [vmem:[%s151 + $0x758] sm:$0xff]
                %424 = vst [vmem:[%s152 + $0x438] sm:$0xff] %v423
                %v425 = vld [vmem:[%s151 + $0x760] sm:$0xff]
                %426 = vst [vmem:[%s152 + $0x440] sm:$0xff] %v425
                %v427 = vld [vmem:[%s151 + $0x768] sm:$0xff]
                %428 = vst [vmem:[%s152 + $0x448] sm:$0xff] %v427
                %v429 = vld [vmem:[%s151 + $0x770] sm:$0xff]
                %430 = vst [vmem:[%s152 + $0x450] sm:$0xff] %v429
                %v431 = vld [vmem:[%s151 + $0x778] sm:$0xff]
                %432 = vst [vmem:[%s152 + $0x458] sm:$0xff] %v431
                %v433 = vld [vmem:[%s151 + $0x780] sm:$0xff]
                %434 = vst [vmem:[%s152 + $0x460] sm:$0xff] %v433
                %v435 = vld [vmem:[%s151 + $0x788] sm:$0xff]
                %436 = vst [vmem:[%s152 + $0x468] sm:$0xff] %v435
                %v437 = vld [vmem:[%s151 + $0x790] sm:$0xff]
                %438 = vst [vmem:[%s152 + $0x470] sm:$0xff] %v437
                %v439 = vld [vmem:[%s151 + $0x798] sm:$0xff]
                %440 = vst [vmem:[%s152 + $0x478] sm:$0xff] %v439
                %v441 = vld [vmem:[%s151 + $0x7a0] sm:$0xff]
                %442 = vst [vmem:[%s152 + $0x480] sm:$0xff] %v441
                %v443 = vld [vmem:[%s151 + $0x7a8] sm:$0xff]
                %444 = vst [vmem:[%s152 + $0x488] sm:$0xff] %v443
                %v445 = vld [vmem:[%s151 + $0x7b0] sm:$0xff]
                %446 = vst [vmem:[%s152 + $0x490] sm:$0xff] %v445
                %v447 = vld [vmem:[%s151 + $0x7b8] sm:$0xff]
                %448 = vst [vmem:[%s152 + $0x498] sm:$0xff] %v447
                %v449 = vld [vmem:[%s151 + $0x7c0] sm:$0xff]
                %450 = vst [vmem:[%s152 + $0x4a0] sm:$0xff] %v449
                %v451 = vld [vmem:[%s151 + $0x7c8] sm:$0xff]
                %452 = vst [vmem:[%s152 + $0x4a8] sm:$0xff] %v451
                %v453 = vld [vmem:[%s151 + $0x960] sm:$0xff]
                %454 = vst [vmem:[%s152 + $0x4b0] sm:$0xff] %v453
                %v455 = vld [vmem:[%s151 + $0x968] sm:$0xff]
                %456 = vst [vmem:[%s152 + $0x4b8] sm:$0xff] %v455
                %v457 = vld [vmem:[%s151 + $0x970] sm:$0xff]
                %458 = vst [vmem:[%s152 + $0x4c0] sm:$0xff] %v457
                %v459 = vld [vmem:[%s151 + $0x978] sm:$0xff]
                %460 = vst [vmem:[%s152 + $0x4c8] sm:$0xff] %v459
                %v461 = vld [vmem:[%s151 + $0x980] sm:$0xff]
                %462 = vst [vmem:[%s152 + $0x4d0] sm:$0xff] %v461
                %v463 = vld [vmem:[%s151 + $0x988] sm:$0xff]
                %464 = vst [vmem:[%s152 + $0x4d8] sm:$0xff] %v463
                %v465 = vld [vmem:[%s151 + $0x990] sm:$0xff]
                %466 = vst [vmem:[%s152 + $0x4e0] sm:$0xff] %v465
                %v467 = vld [vmem:[%s151 + $0x998] sm:$0xff]
                %468 = vst [vmem:[%s152 + $0x4e8] sm:$0xff] %v467
                %v469 = vld [vmem:[%s151 + $0x9a0] sm:$0xff]
                %470 = vst [vmem:[%s152 + $0x4f0] sm:$0xff] %v469
                %v471 = vld [vmem:[%s151 + $0x9a8] sm:$0xff]
                %472 = vst [vmem:[%s152 + $0x4f8] sm:$0xff] %v471
                %v473 = vld [vmem:[%s151 + $0x9b0] sm:$0xff]
                %474 = vst [vmem:[%s152 + $0x500] sm:$0xff] %v473
                %v475 = vld [vmem:[%s151 + $0x9b8] sm:$0xff]
                %476 = vst [vmem:[%s152 + $0x508] sm:$0xff] %v475
                %v477 = vld [vmem:[%s151 + $0x9c0] sm:$0xff]
                %478 = vst [vmem:[%s152 + $0x510] sm:$0xff] %v477
                %v479 = vld [vmem:[%s151 + $0x9c8] sm:$0xff]
                %480 = vst [vmem:[%s152 + $0x518] sm:$0xff] %v479
                %v481 = vld [vmem:[%s151 + $0x9d0] sm:$0xff]
                %482 = vst [vmem:[%s152 + $0x520] sm:$0xff] %v481
                %v483 = vld [vmem:[%s151 + $0x9d8] sm:$0xff]
                %484 = vst [vmem:[%s152 + $0x528] sm:$0xff] %v483
                %v485 = vld [vmem:[%s151 + $0x9e0] sm:$0xff]
                %486 = vst [vmem:[%s152 + $0x530] sm:$0xff] %v485
                %v487 = vld [vmem:[%s151 + $0x9e8] sm:$0xff]
                %488 = vst [vmem:[%s152 + $0x538] sm:$0xff] %v487
                %v489 = vld [vmem:[%s151 + $0x9f0] sm:$0xff]
                %490 = vst [vmem:[%s152 + $0x540] sm:$0xff] %v489
                %v491 = vld [vmem:[%s151 + $0x9f8] sm:$0xff]
                %492 = vst [vmem:[%s152 + $0x548] sm:$0xff] %v491
                %v493 = vld [vmem:[%s151 + $0xa00] sm:$0xff]
                %494 = vst [vmem:[%s152 + $0x550] sm:$0xff] %v493
                %v495 = vld [vmem:[%s151 + $0xa08] sm:$0xff]
                %496 = vst [vmem:[%s152 + $0x558] sm:$0xff] %v495
                %v497 = vld [vmem:[%s151 + $0xa10] sm:$0xff]
                %498 = vst [vmem:[%s152 + $0x560] sm:$0xff] %v497
                %v499 = vld [vmem:[%s151 + $0xa18] sm:$0xff]
                %500 = vst [vmem:[%s152 + $0x568] sm:$0xff] %v499
                %v501 = vld [vmem:[%s151 + $0xa20] sm:$0xff]
                %502 = vst [vmem:[%s152 + $0x570] sm:$0xff] %v501
                %v503 = vld [vmem:[%s151 + $0xa28] sm:$0xff]
                %504 = vst [vmem:[%s152 + $0x578] sm:$0xff] %v503
                %v505 = vld [vmem:[%s151 + $0xa30] sm:$0xff]
                %506 = vst [vmem:[%s152 + $0x580] sm:$0xff] %v505
                %v507 = vld [vmem:[%s151 + $0xa38] sm:$0xff]
                %508 = vst [vmem:[%s152 + $0x588] sm:$0xff] %v507
                %v509 = vld [vmem:[%s151 + $0xa40] sm:$0xff]
                %510 = vst [vmem:[%s152 + $0x590] sm:$0xff] %v509
                %v511 = vld [vmem:[%s151 + $0xa48] sm:$0xff]
                %512 = vst [vmem:[%s152 + $0x598] sm:$0xff] %v511
                %v513 = vld [vmem:[%s151 + $0xa50] sm:$0xff]
                %514 = vst [vmem:[%s152 + $0x5a0] sm:$0xff] %v513
                %v515 = vld [vmem:[%s151 + $0xa58] sm:$0xff]
                %516 = vst [vmem:[%s152 + $0x5a8] sm:$0xff] %v515
                %v517 = vld [vmem:[%s151 + $0xa60] sm:$0xff]
                %518 = vst [vmem:[%s152 + $0x5b0] sm:$0xff] %v517
                %v519 = vld [vmem:[%s151 + $0xa68] sm:$0xff]
                %520 = vst [vmem:[%s152 + $0x5b8] sm:$0xff] %v519
                %v521 = vld [vmem:[%s151 + $0xa70] sm:$0xff]
                %522 = vst [vmem:[%s152 + $0x5c0] sm:$0xff] %v521
                %v523 = vld [vmem:[%s151 + $0xa78] sm:$0xff]
                %524 = vst [vmem:[%s152 + $0x5c8] sm:$0xff] %v523
                %v525 = vld [vmem:[%s151 + $0xa80] sm:$0xff]
                %526 = vst [vmem:[%s152 + $0x5d0] sm:$0xff] %v525
                %v527 = vld [vmem:[%s151 + $0xa88] sm:$0xff]
                %528 = vst [vmem:[%s152 + $0x5d8] sm:$0xff] %v527
                %v529 = vld [vmem:[%s151 + $0xa90] sm:$0xff]
                %530 = vst [vmem:[%s152 + $0x5e0] sm:$0xff] %v529
                %v531 = vld [vmem:[%s151 + $0xa98] sm:$0xff]
                %532 = vst [vmem:[%s152 + $0x5e8] sm:$0xff] %v531
                %v533 = vld [vmem:[%s151 + $0xaa0] sm:$0xff]
                %534 = vst [vmem:[%s152 + $0x5f0] sm:$0xff] %v533
                %v535 = vld [vmem:[%s151 + $0xaa8] sm:$0xff]
                %536 = vst [vmem:[%s152 + $0x5f8] sm:$0xff] %v535
                %v537 = vld [vmem:[%s151 + $0xab0] sm:$0xff]
                %538 = vst [vmem:[%s152 + $0x600] sm:$0xff] %v537
                %v539 = vld [vmem:[%s151 + $0xab8] sm:$0xff]
                %540 = vst [vmem:[%s152 + $0x608] sm:$0xff] %v539
                %v541 = vld [vmem:[%s151 + $0xac0] sm:$0xff]
                %542 = vst [vmem:[%s152 + $0x610] sm:$0xff] %v541
                %v543 = vld [vmem:[%s151 + $0xac8] sm:$0xff]
                %544 = vst [vmem:[%s152 + $0x618] sm:$0xff] %v543
                %v545 = vld [vmem:[%s151 + $0xad0] sm:$0xff]
                %546 = vst [vmem:[%s152 + $0x620] sm:$0xff] %v545
                %v547 = vld [vmem:[%s151 + $0xad8] sm:$0xff]
                %548 = vst [vmem:[%s152 + $0x628] sm:$0xff] %v547
                %v549 = vld [vmem:[%s151 + $0xae0] sm:$0xff]
                %550 = vst [vmem:[%s152 + $0x630] sm:$0xff] %v549
                %v551 = vld [vmem:[%s151 + $0xae8] sm:$0xff]
                %552 = vst [vmem:[%s152 + $0x638] sm:$0xff] %v551
                %v553 = vld [vmem:[%s151 + $0xc80] sm:$0xff]
                %554 = vst [vmem:[%s152 + $0x640] sm:$0xff] %v553
                %v555 = vld [vmem:[%s151 + $0xc88] sm:$0xff]
                %556 = vst [vmem:[%s152 + $0x648] sm:$0xff] %v555
                %v557 = vld [vmem:[%s151 + $0xc90] sm:$0xff]
                %558 = vst [vmem:[%s152 + $0x650] sm:$0xff] %v557
                %v559 = vld [vmem:[%s151 + $0xc98] sm:$0xff]
                %560 = vst [vmem:[%s152 + $0x658] sm:$0xff] %v559
                %v561 = vld [vmem:[%s151 + $0xca0] sm:$0xff]
                %562 = vst [vmem:[%s152 + $0x660] sm:$0xff] %v561
                %v563 = vld [vmem:[%s151 + $0xca8] sm:$0xff]
                %564 = vst [vmem:[%s152 + $0x668] sm:$0xff] %v563
                %v565 = vld [vmem:[%s151 + $0xcb0] sm:$0xff]
                %566 = vst [vmem:[%s152 + $0x670] sm:$0xff] %v565
                %v567 = vld [vmem:[%s151 + $0xcb8] sm:$0xff]
                %568 = vst [vmem:[%s152 + $0x678] sm:$0xff] %v567
                %v569 = vld [vmem:[%s151 + $0xcc0] sm:$0xff]
                %570 = vst [vmem:[%s152 + $0x680] sm:$0xff] %v569
                %v571 = vld [vmem:[%s151 + $0xcc8] sm:$0xff]
                %572 = vst [vmem:[%s152 + $0x688] sm:$0xff] %v571
                %v573 = vld [vmem:[%s151 + $0xcd0] sm:$0xff]
                %574 = vst [vmem:[%s152 + $0x690] sm:$0xff] %v573
                %v575 = vld [vmem:[%s151 + $0xcd8] sm:$0xff]
                %576 = vst [vmem:[%s152 + $0x698] sm:$0xff] %v575
                %v577 = vld [vmem:[%s151 + $0xce0] sm:$0xff]
                %578 = vst [vmem:[%s152 + $0x6a0] sm:$0xff] %v577
                %v579 = vld [vmem:[%s151 + $0xce8] sm:$0xff]
                %580 = vst [vmem:[%s152 + $0x6a8] sm:$0xff] %v579
                %v581 = vld [vmem:[%s151 + $0xcf0] sm:$0xff]
                %582 = vst [vmem:[%s152 + $0x6b0] sm:$0xff] %v581
                %v583 = vld [vmem:[%s151 + $0xcf8] sm:$0xff]
                %584 = vst [vmem:[%s152 + $0x6b8] sm:$0xff] %v583
                %v585 = vld [vmem:[%s151 + $0xd00] sm:$0xff]
                %586 = vst [vmem:[%s152 + $0x6c0] sm:$0xff] %v585
                %v587 = vld [vmem:[%s151 + $0xd08] sm:$0xff]
                %588 = vst [vmem:[%s152 + $0x6c8] sm:$0xff] %v587
                %v589 = vld [vmem:[%s151 + $0xd10] sm:$0xff]
                %590 = vst [vmem:[%s152 + $0x6d0] sm:$0xff] %v589
                %v591 = vld [vmem:[%s151 + $0xd18] sm:$0xff]
                %592 = vst [vmem:[%s152 + $0x6d8] sm:$0xff] %v591
                %v593 = vld [vmem:[%s151 + $0xd20] sm:$0xff]
                %594 = vst [vmem:[%s152 + $0x6e0] sm:$0xff] %v593
                %v595 = vld [vmem:[%s151 + $0xd28] sm:$0xff]
                %596 = vst [vmem:[%s152 + $0x6e8] sm:$0xff] %v595
                %v597 = vld [vmem:[%s151 + $0xd30] sm:$0xff]
                %598 = vst [vmem:[%s152 + $0x6f0] sm:$0xff] %v597
                %v599 = vld [vmem:[%s151 + $0xd38] sm:$0xff]
                %600 = vst [vmem:[%s152 + $0x6f8] sm:$0xff] %v599
                %v601 = vld [vmem:[%s151 + $0xd40] sm:$0xff]
                %602 = vst [vmem:[%s152 + $0x700] sm:$0xff] %v601
                %v603 = vld [vmem:[%s151 + $0xd48] sm:$0xff]
                %604 = vst [vmem:[%s152 + $0x708] sm:$0xff] %v603
                %v605 = vld [vmem:[%s151 + $0xd50] sm:$0xff]
                %606 = vst [vmem:[%s152 + $0x710] sm:$0xff] %v605
                %v607 = vld [vmem:[%s151 + $0xd58] sm:$0xff]
                %608 = vst [vmem:[%s152 + $0x718] sm:$0xff] %v607
                %v609 = vld [vmem:[%s151 + $0xd60] sm:$0xff]
                %610 = vst [vmem:[%s152 + $0x720] sm:$0xff] %v609
                %v611 = vld [vmem:[%s151 + $0xd68] sm:$0xff]
                %612 = vst [vmem:[%s152 + $0x728] sm:$0xff] %v611
                %v613 = vld [vmem:[%s151 + $0xd70] sm:$0xff]
                %614 = vst [vmem:[%s152 + $0x730] sm:$0xff] %v613
                %v615 = vld [vmem:[%s151 + $0xd78] sm:$0xff]
                %616 = vst [vmem:[%s152 + $0x738] sm:$0xff] %v615
                %v617 = vld [vmem:[%s151 + $0xd80] sm:$0xff]
                %618 = vst [vmem:[%s152 + $0x740] sm:$0xff] %v617
                %v619 = vld [vmem:[%s151 + $0xd88] sm:$0xff]
                %620 = vst [vmem:[%s152 + $0x748] sm:$0xff] %v619
                %v621 = vld [vmem:[%s151 + $0xd90] sm:$0xff]
                %622 = vst [vmem:[%s152 + $0x750] sm:$0xff] %v621
                %v623 = vld [vmem:[%s151 + $0xd98] sm:$0xff]
                %624 = vst [vmem:[%s152 + $0x758] sm:$0xff] %v623
                %v625 = vld [vmem:[%s151 + $0xda0] sm:$0xff]
                %626 = vst [vmem:[%s152 + $0x760] sm:$0xff] %v625
                %v627 = vld [vmem:[%s151 + $0xda8] sm:$0xff]
                %628 = vst [vmem:[%s152 + $0x768] sm:$0xff] %v627
                %v629 = vld [vmem:[%s151 + $0xdb0] sm:$0xff]
                %630 = vst [vmem:[%s152 + $0x770] sm:$0xff] %v629
                %v631 = vld [vmem:[%s151 + $0xdb8] sm:$0xff]
                %632 = vst [vmem:[%s152 + $0x778] sm:$0xff] %v631
                %v633 = vld [vmem:[%s151 + $0xdc0] sm:$0xff]
                %634 = vst [vmem:[%s152 + $0x780] sm:$0xff] %v633
                %v635 = vld [vmem:[%s151 + $0xdc8] sm:$0xff]
                %636 = vst [vmem:[%s152 + $0x788] sm:$0xff] %v635
                %v637 = vld [vmem:[%s151 + $0xdd0] sm:$0xff]
                %638 = vst [vmem:[%s152 + $0x790] sm:$0xff] %v637
                %v639 = vld [vmem:[%s151 + $0xdd8] sm:$0xff]
                %640 = vst [vmem:[%s152 + $0x798] sm:$0xff] %v639
                %v641 = vld [vmem:[%s151 + $0xde0] sm:$0xff]
                %642 = vst [vmem:[%s152 + $0x7a0] sm:$0xff] %v641
                %v643 = vld [vmem:[%s151 + $0xde8] sm:$0xff]
                %644 = vst [vmem:[%s152 + $0x7a8] sm:$0xff] %v643
                %v645 = vld [vmem:[%s151 + $0xdf0] sm:$0xff]
                %646 = vst [vmem:[%s152 + $0x7b0] sm:$0xff] %v645
                %v647 = vld [vmem:[%s151 + $0xdf8] sm:$0xff]
                %648 = vst [vmem:[%s152 + $0x7b8] sm:$0xff] %v647
                %v649 = vld [vmem:[%s151 + $0xe00] sm:$0xff]
                %650 = vst [vmem:[%s152 + $0x7c0] sm:$0xff] %v649
                %v651 = vld [vmem:[%s151 + $0xe08] sm:$0xff]
                %652 = vst [vmem:[%s152 + $0x7c8] sm:$0xff] %v651
                %v653 = vld [vmem:[%s151 + $0xfa0] sm:$0xff]
                %654 = vst [vmem:[%s152 + $0x7d0] sm:$0xff] %v653
                %v655 = vld [vmem:[%s151 + $0xfa8] sm:$0xff]
                %656 = vst [vmem:[%s152 + $0x7d8] sm:$0xff] %v655
                %v657 = vld [vmem:[%s151 + $0xfb0] sm:$0xff]
                %658 = vst [vmem:[%s152 + $0x7e0] sm:$0xff] %v657
                %v659 = vld [vmem:[%s151 + $0xfb8] sm:$0xff]
                %660 = vst [vmem:[%s152 + $0x7e8] sm:$0xff] %v659
                %v661 = vld [vmem:[%s151 + $0xfc0] sm:$0xff]
                %662 = vst [vmem:[%s152 + $0x7f0] sm:$0xff] %v661
                %v663 = vld [vmem:[%s151 + $0xfc8] sm:$0xff]
                %664 = vst [vmem:[%s152 + $0x7f8] sm:$0xff] %v663
                %v665 = vld [vmem:[%s151 + $0xfd0] sm:$0xff]
                %666 = vst [vmem:[%s152 + $0x800] sm:$0xff] %v665
                %v667 = vld [vmem:[%s151 + $0xfd8] sm:$0xff]
                %668 = vst [vmem:[%s152 + $0x808] sm:$0xff] %v667
                %v669 = vld [vmem:[%s151 + $0xfe0] sm:$0xff]
                %670 = vst [vmem:[%s152 + $0x810] sm:$0xff] %v669
                %v671 = vld [vmem:[%s151 + $0xfe8] sm:$0xff]
                %672 = vst [vmem:[%s152 + $0x818] sm:$0xff] %v671
                %v673 = vld [vmem:[%s151 + $0xff0] sm:$0xff]
                %674 = vst [vmem:[%s152 + $0x820] sm:$0xff] %v673
                %v675 = vld [vmem:[%s151 + $0xff8] sm:$0xff]
                %676 = vst [vmem:[%s152 + $0x828] sm:$0xff] %v675
                %v677 = vld [vmem:[%s151 + $0x1000] sm:$0xff]
                %678 = vst [vmem:[%s152 + $0x830] sm:$0xff] %v677
                %v679 = vld [vmem:[%s151 + $0x1008] sm:$0xff]
                %680 = vst [vmem:[%s152 + $0x838] sm:$0xff] %v679
                %v681 = vld [vmem:[%s151 + $0x1010] sm:$0xff]
                %682 = vst [vmem:[%s152 + $0x840] sm:$0xff] %v681
                %v683 = vld [vmem:[%s151 + $0x1018] sm:$0xff]
                %684 = vst [vmem:[%s152 + $0x848] sm:$0xff] %v683
                %v685 = vld [vmem:[%s151 + $0x1020] sm:$0xff]
                %686 = vst [vmem:[%s152 + $0x850] sm:$0xff] %v685
                %v687 = vld [vmem:[%s151 + $0x1028] sm:$0xff]
                %688 = vst [vmem:[%s152 + $0x858] sm:$0xff] %v687
                %v689 = vld [vmem:[%s151 + $0x1030] sm:$0xff]
                %690 = vst [vmem:[%s152 + $0x860] sm:$0xff] %v689
                %v691 = vld [vmem:[%s151 + $0x1038] sm:$0xff]
                %692 = vst [vmem:[%s152 + $0x868] sm:$0xff] %v691
                %v693 = vld [vmem:[%s151 + $0x1040] sm:$0xff]
                %694 = vst [vmem:[%s152 + $0x870] sm:$0xff] %v693
                %v695 = vld [vmem:[%s151 + $0x1048] sm:$0xff]
                %696 = vst [vmem:[%s152 + $0x878] sm:$0xff] %v695
                %v697 = vld [vmem:[%s151 + $0x1050] sm:$0xff]
                %698 = vst [vmem:[%s152 + $0x880] sm:$0xff] %v697
                %v699 = vld [vmem:[%s151 + $0x1058] sm:$0xff]
                %700 = vst [vmem:[%s152 + $0x888] sm:$0xff] %v699
                %v701 = vld [vmem:[%s151 + $0x1060] sm:$0xff]
                %702 = vst [vmem:[%s152 + $0x890] sm:$0xff] %v701
                %v703 = vld [vmem:[%s151 + $0x1068] sm:$0xff]
                %704 = vst [vmem:[%s152 + $0x898] sm:$0xff] %v703
                %v705 = vld [vmem:[%s151 + $0x1070] sm:$0xff]
                %706 = vst [vmem:[%s152 + $0x8a0] sm:$0xff] %v705
                %v707 = vld [vmem:[%s151 + $0x1078] sm:$0xff]
                %708 = vst [vmem:[%s152 + $0x8a8] sm:$0xff] %v707
                %v709 = vld [vmem:[%s151 + $0x1080] sm:$0xff]
                %710 = vst [vmem:[%s152 + $0x8b0] sm:$0xff] %v709
                %v711 = vld [vmem:[%s151 + $0x1088] sm:$0xff]
                %712 = vst [vmem:[%s152 + $0x8b8] sm:$0xff] %v711
                %v713 = vld [vmem:[%s151 + $0x1090] sm:$0xff]
                %714 = vst [vmem:[%s152 + $0x8c0] sm:$0xff] %v713
                %v715 = vld [vmem:[%s151 + $0x1098] sm:$0xff]
                %716 = vst [vmem:[%s152 + $0x8c8] sm:$0xff] %v715
                %v717 = vld [vmem:[%s151 + $0x10a0] sm:$0xff]
                %718 = vst [vmem:[%s152 + $0x8d0] sm:$0xff] %v717
                %v719 = vld [vmem:[%s151 + $0x10a8] sm:$0xff]
                %720 = vst [vmem:[%s152 + $0x8d8] sm:$0xff] %v719
                %v721 = vld [vmem:[%s151 + $0x10b0] sm:$0xff]
                %722 = vst [vmem:[%s152 + $0x8e0] sm:$0xff] %v721
                %v723 = vld [vmem:[%s151 + $0x10b8] sm:$0xff]
                %724 = vst [vmem:[%s152 + $0x8e8] sm:$0xff] %v723
                %v725 = vld [vmem:[%s151 + $0x10c0] sm:$0xff]
                %726 = vst [vmem:[%s152 + $0x8f0] sm:$0xff] %v725
                %v727 = vld [vmem:[%s151 + $0x10c8] sm:$0xff]
                %728 = vst [vmem:[%s152 + $0x8f8] sm:$0xff] %v727
                %v729 = vld [vmem:[%s151 + $0x10d0] sm:$0xff]
                %730 = vst [vmem:[%s152 + $0x900] sm:$0xff] %v729
                %v731 = vld [vmem:[%s151 + $0x10d8] sm:$0xff]
                %732 = vst [vmem:[%s152 + $0x908] sm:$0xff] %v731
                %v733 = vld [vmem:[%s151 + $0x10e0] sm:$0xff]
                %734 = vst [vmem:[%s152 + $0x910] sm:$0xff] %v733
                %v735 = vld [vmem:[%s151 + $0x10e8] sm:$0xff]
                %736 = vst [vmem:[%s152 + $0x918] sm:$0xff] %v735
                %v737 = vld [vmem:[%s151 + $0x10f0] sm:$0xff]
                %738 = vst [vmem:[%s152 + $0x920] sm:$0xff] %v737
                %v739 = vld [vmem:[%s151 + $0x10f8] sm:$0xff]
                %740 = vst [vmem:[%s152 + $0x928] sm:$0xff] %v739
                %v741 = vld [vmem:[%s151 + $0x1100] sm:$0xff]
                %742 = vst [vmem:[%s152 + $0x930] sm:$0xff] %v741
                %v743 = vld [vmem:[%s151 + $0x1108] sm:$0xff]
                %744 = vst [vmem:[%s152 + $0x938] sm:$0xff] %v743
                %v745 = vld [vmem:[%s151 + $0x1110] sm:$0xff]
                %746 = vst [vmem:[%s152 + $0x940] sm:$0xff] %v745
                %v747 = vld [vmem:[%s151 + $0x1118] sm:$0xff]
                %748 = vst [vmem:[%s152 + $0x948] sm:$0xff] %v747
                %v749 = vld [vmem:[%s151 + $0x1120] sm:$0xff]
                %750 = vst [vmem:[%s152 + $0x950] sm:$0xff] %v749
                %v751 = vld [vmem:[%s151 + $0x1128] sm:$0xff]
                %752 = vst [vmem:[%s152 + $0x958] sm:$0xff] %v751
                %v753 = vld [vmem:[%s151 + $0x12c0] sm:$0xff]
                %754 = vst [vmem:[%s152 + $0x960] sm:$0xff] %v753
                %v755 = vld [vmem:[%s151 + $0x12c8] sm:$0xff]
                %756 = vst [vmem:[%s152 + $0x968] sm:$0xff] %v755
                %v757 = vld [vmem:[%s151 + $0x12d0] sm:$0xff]
                %758 = vst [vmem:[%s152 + $0x970] sm:$0xff] %v757
                %v759 = vld [vmem:[%s151 + $0x12d8] sm:$0xff]
                %760 = vst [vmem:[%s152 + $0x978] sm:$0xff] %v759
                %v761 = vld [vmem:[%s151 + $0x12e0] sm:$0xff]
                %762 = vst [vmem:[%s152 + $0x980] sm:$0xff] %v761
                %v763 = vld [vmem:[%s151 + $0x12e8] sm:$0xff]
                %764 = vst [vmem:[%s152 + $0x988] sm:$0xff] %v763
                %v765 = vld [vmem:[%s151 + $0x12f0] sm:$0xff]
                %766 = vst [vmem:[%s152 + $0x990] sm:$0xff] %v765
                %v767 = vld [vmem:[%s151 + $0x12f8] sm:$0xff]
                %768 = vst [vmem:[%s152 + $0x998] sm:$0xff] %v767
                %v769 = vld [vmem:[%s151 + $0x1300] sm:$0xff]
                %770 = vst [vmem:[%s152 + $0x9a0] sm:$0xff] %v769
                %v771 = vld [vmem:[%s151 + $0x1308] sm:$0xff]
                %772 = vst [vmem:[%s152 + $0x9a8] sm:$0xff] %v771
                %v773 = vld [vmem:[%s151 + $0x1310] sm:$0xff]
                %774 = vst [vmem:[%s152 + $0x9b0] sm:$0xff] %v773
                %v775 = vld [vmem:[%s151 + $0x1318] sm:$0xff]
                %776 = vst [vmem:[%s152 + $0x9b8] sm:$0xff] %v775
                %v777 = vld [vmem:[%s151 + $0x1320] sm:$0xff]
                %778 = vst [vmem:[%s152 + $0x9c0] sm:$0xff] %v777
                %v779 = vld [vmem:[%s151 + $0x1328] sm:$0xff]
                %780 = vst [vmem:[%s152 + $0x9c8] sm:$0xff] %v779
                %v781 = vld [vmem:[%s151 + $0x1330] sm:$0xff]
                %782 = vst [vmem:[%s152 + $0x9d0] sm:$0xff] %v781
                %v783 = vld [vmem:[%s151 + $0x1338] sm:$0xff]
                %784 = vst [vmem:[%s152 + $0x9d8] sm:$0xff] %v783
                %v785 = vld [vmem:[%s151 + $0x1340] sm:$0xff]
                %786 = vst [vmem:[%s152 + $0x9e0] sm:$0xff] %v785
                %v787 = vld [vmem:[%s151 + $0x1348] sm:$0xff]
                %788 = vst [vmem:[%s152 + $0x9e8] sm:$0xff] %v787
                %v789 = vld [vmem:[%s151 + $0x1350] sm:$0xff]
                %790 = vst [vmem:[%s152 + $0x9f0] sm:$0xff] %v789
                %v791 = vld [vmem:[%s151 + $0x1358] sm:$0xff]
                %792 = vst [vmem:[%s152 + $0x9f8] sm:$0xff] %v791
                %v793 = vld [vmem:[%s151 + $0x1360] sm:$0xff]
                %794 = vst [vmem:[%s152 + $0xa00] sm:$0xff] %v793
                %v795 = vld [vmem:[%s151 + $0x1368] sm:$0xff]
                %796 = vst [vmem:[%s152 + $0xa08] sm:$0xff] %v795
                %v797 = vld [vmem:[%s151 + $0x1370] sm:$0xff]
                %798 = vst [vmem:[%s152 + $0xa10] sm:$0xff] %v797
                %v799 = vld [vmem:[%s151 + $0x1378] sm:$0xff]
                %800 = vst [vmem:[%s152 + $0xa18] sm:$0xff] %v799
                %v801 = vld [vmem:[%s151 + $0x1380] sm:$0xff]
                %802 = vst [vmem:[%s152 + $0xa20] sm:$0xff] %v801
                %v803 = vld [vmem:[%s151 + $0x1388] sm:$0xff]
                %804 = vst [vmem:[%s152 + $0xa28] sm:$0xff] %v803
                %v805 = vld [vmem:[%s151 + $0x1390] sm:$0xff]
                %806 = vst [vmem:[%s152 + $0xa30] sm:$0xff] %v805
                %v807 = vld [vmem:[%s151 + $0x1398] sm:$0xff]
                %808 = vst [vmem:[%s152 + $0xa38] sm:$0xff] %v807
                %v809 = vld [vmem:[%s151 + $0x13a0] sm:$0xff]
                %810 = vst [vmem:[%s152 + $0xa40] sm:$0xff] %v809
                %v811 = vld [vmem:[%s151 + $0x13a8] sm:$0xff]
                %812 = vst [vmem:[%s152 + $0xa48] sm:$0xff] %v811
                %v813 = vld [vmem:[%s151 + $0x13b0] sm:$0xff]
                %814 = vst [vmem:[%s152 + $0xa50] sm:$0xff] %v813
                %v815 = vld [vmem:[%s151 + $0x13b8] sm:$0xff]
                %816 = vst [vmem:[%s152 + $0xa58] sm:$0xff] %v815
                %v817 = vld [vmem:[%s151 + $0x13c0] sm:$0xff]
                %818 = vst [vmem:[%s152 + $0xa60] sm:$0xff] %v817
                %v819 = vld [vmem:[%s151 + $0x13c8] sm:$0xff]
                %820 = vst [vmem:[%s152 + $0xa68] sm:$0xff] %v819
                %v821 = vld [vmem:[%s151 + $0x13d0] sm:$0xff]
                %822 = vst [vmem:[%s152 + $0xa70] sm:$0xff] %v821
                %v823 = vld [vmem:[%s151 + $0x13d8] sm:$0xff]
                %824 = vst [vmem:[%s152 + $0xa78] sm:$0xff] %v823
                %v825 = vld [vmem:[%s151 + $0x13e0] sm:$0xff]
                %826 = vst [vmem:[%s152 + $0xa80] sm:$0xff] %v825
                %v827 = vld [vmem:[%s151 + $0x13e8] sm:$0xff]
                %828 = vst [vmem:[%s152 + $0xa88] sm:$0xff] %v827
                %v829 = vld [vmem:[%s151 + $0x13f0] sm:$0xff]
                %830 = vst [vmem:[%s152 + $0xa90] sm:$0xff] %v829
                %v831 = vld [vmem:[%s151 + $0x13f8] sm:$0xff]
                %832 = vst [vmem:[%s152 + $0xa98] sm:$0xff] %v831
                %v833 = vld [vmem:[%s151 + $0x1400] sm:$0xff]
                %834 = vst [vmem:[%s152 + $0xaa0] sm:$0xff] %v833
                %v835 = vld [vmem:[%s151 + $0x1408] sm:$0xff]
                %836 = vst [vmem:[%s152 + $0xaa8] sm:$0xff] %v835
                %v837 = vld [vmem:[%s151 + $0x1410] sm:$0xff]
                %838 = vst [vmem:[%s152 + $0xab0] sm:$0xff] %v837
                %v839 = vld [vmem:[%s151 + $0x1418] sm:$0xff]
                %840 = vst [vmem:[%s152 + $0xab8] sm:$0xff] %v839
                %v841 = vld [vmem:[%s151 + $0x1420] sm:$0xff]
                %842 = vst [vmem:[%s152 + $0xac0] sm:$0xff] %v841
                %v843 = vld [vmem:[%s151 + $0x1428] sm:$0xff]
                %844 = vst [vmem:[%s152 + $0xac8] sm:$0xff] %v843
                %v845 = vld [vmem:[%s151 + $0x1430] sm:$0xff]
                %846 = vst [vmem:[%s152 + $0xad0] sm:$0xff] %v845
                %v847 = vld [vmem:[%s151 + $0x1438] sm:$0xff]
                %848 = vst [vmem:[%s152 + $0xad8] sm:$0xff] %v847
                %v849 = vld [vmem:[%s151 + $0x1440] sm:$0xff]
                %850 = vst [vmem:[%s152 + $0xae0] sm:$0xff] %v849
                %v851 = vld [vmem:[%s151 + $0x1448] sm:$0xff]
                %852 = vst [vmem:[%s152 + $0xae8] sm:$0xff] %v851
                %v853 = vld [vmem:[%s151 + $0x15e0] sm:$0xff]
                %854 = vst [vmem:[%s152 + $0xaf0] sm:$0xff] %v853
                %v855 = vld [vmem:[%s151 + $0x15e8] sm:$0xff]
                %856 = vst [vmem:[%s152 + $0xaf8] sm:$0xff] %v855
                %v857 = vld [vmem:[%s151 + $0x15f0] sm:$0xff]
                %858 = vst [vmem:[%s152 + $0xb00] sm:$0xff] %v857
                %v859 = vld [vmem:[%s151 + $0x15f8] sm:$0xff]
                %860 = vst [vmem:[%s152 + $0xb08] sm:$0xff] %v859
                %v861 = vld [vmem:[%s151 + $0x1600] sm:$0xff]
                %862 = vst [vmem:[%s152 + $0xb10] sm:$0xff] %v861
                %v863 = vld [vmem:[%s151 + $0x1608] sm:$0xff]
                %864 = vst [vmem:[%s152 + $0xb18] sm:$0xff] %v863
                %v865 = vld [vmem:[%s151 + $0x1610] sm:$0xff]
                %866 = vst [vmem:[%s152 + $0xb20] sm:$0xff] %v865
                %v867 = vld [vmem:[%s151 + $0x1618] sm:$0xff]
                %868 = vst [vmem:[%s152 + $0xb28] sm:$0xff] %v867
                %v869 = vld [vmem:[%s151 + $0x1620] sm:$0xff]
                %870 = vst [vmem:[%s152 + $0xb30] sm:$0xff] %v869
                %v871 = vld [vmem:[%s151 + $0x1628] sm:$0xff]
                %872 = vst [vmem:[%s152 + $0xb38] sm:$0xff] %v871
                %v873 = vld [vmem:[%s151 + $0x1630] sm:$0xff]
                %874 = vst [vmem:[%s152 + $0xb40] sm:$0xff] %v873
                %v875 = vld [vmem:[%s151 + $0x1638] sm:$0xff]
                %876 = vst [vmem:[%s152 + $0xb48] sm:$0xff] %v875
                %v877 = vld [vmem:[%s151 + $0x1640] sm:$0xff]
                %878 = vst [vmem:[%s152 + $0xb50] sm:$0xff] %v877
                %v879 = vld [vmem:[%s151 + $0x1648] sm:$0xff]
                %880 = vst [vmem:[%s152 + $0xb58] sm:$0xff] %v879
                %v881 = vld [vmem:[%s151 + $0x1650] sm:$0xff]
                %882 = vst [vmem:[%s152 + $0xb60] sm:$0xff] %v881
                %v883 = vld [vmem:[%s151 + $0x1658] sm:$0xff]
                %884 = vst [vmem:[%s152 + $0xb68] sm:$0xff] %v883
                %v885 = vld [vmem:[%s151 + $0x1660] sm:$0xff]
                %886 = vst [vmem:[%s152 + $0xb70] sm:$0xff] %v885
                %v887 = vld [vmem:[%s151 + $0x1668] sm:$0xff]
                %888 = vst [vmem:[%s152 + $0xb78] sm:$0xff] %v887
                %v889 = vld [vmem:[%s151 + $0x1670] sm:$0xff]
                %890 = vst [vmem:[%s152 + $0xb80] sm:$0xff] %v889
                %v891 = vld [vmem:[%s151 + $0x1678] sm:$0xff]
                %892 = vst [vmem:[%s152 + $0xb88] sm:$0xff] %v891
                %v893 = vld [vmem:[%s151 + $0x1680] sm:$0xff]
                %894 = vst [vmem:[%s152 + $0xb90] sm:$0xff] %v893
                %v895 = vld [vmem:[%s151 + $0x1688] sm:$0xff]
                %896 = vst [vmem:[%s152 + $0xb98] sm:$0xff] %v895
                %v897 = vld [vmem:[%s151 + $0x1690] sm:$0xff]
                %898 = vst [vmem:[%s152 + $0xba0] sm:$0xff] %v897
                %v899 = vld [vmem:[%s151 + $0x1698] sm:$0xff]
                %900 = vst [vmem:[%s152 + $0xba8] sm:$0xff] %v899
                %v901 = vld [vmem:[%s151 + $0x16a0] sm:$0xff]
                %902 = vst [vmem:[%s152 + $0xbb0] sm:$0xff] %v901
                %v903 = vld [vmem:[%s151 + $0x16a8] sm:$0xff]
                %904 = vst [vmem:[%s152 + $0xbb8] sm:$0xff] %v903
                %v905 = vld [vmem:[%s151 + $0x16b0] sm:$0xff]
                %906 = vst [vmem:[%s152 + $0xbc0] sm:$0xff] %v905
                %v907 = vld [vmem:[%s151 + $0x16b8] sm:$0xff]
                %908 = vst [vmem:[%s152 + $0xbc8] sm:$0xff] %v907
                %v909 = vld [vmem:[%s151 + $0x16c0] sm:$0xff]
                %910 = vst [vmem:[%s152 + $0xbd0] sm:$0xff] %v909
                %v911 = vld [vmem:[%s151 + $0x16c8] sm:$0xff]
                %912 = vst [vmem:[%s152 + $0xbd8] sm:$0xff] %v911
                %v913 = vld [vmem:[%s151 + $0x16d0] sm:$0xff]
                %914 = vst [vmem:[%s152 + $0xbe0] sm:$0xff] %v913
                %v915 = vld [vmem:[%s151 + $0x16d8] sm:$0xff]
                %916 = vst [vmem:[%s152 + $0xbe8] sm:$0xff] %v915
                %v917 = vld [vmem:[%s151 + $0x16e0] sm:$0xff]
                %918 = vst [vmem:[%s152 + $0xbf0] sm:$0xff] %v917
                %v919 = vld [vmem:[%s151 + $0x16e8] sm:$0xff]
                %920 = vst [vmem:[%s152 + $0xbf8] sm:$0xff] %v919
                %v921 = vld [vmem:[%s151 + $0x16f0] sm:$0xff]
                %922 = vst [vmem:[%s152 + $0xc00] sm:$0xff] %v921
                %v923 = vld [vmem:[%s151 + $0x16f8] sm:$0xff]
                %924 = vst [vmem:[%s152 + $0xc08] sm:$0xff] %v923
                %v925 = vld [vmem:[%s151 + $0x1700] sm:$0xff]
                %926 = vst [vmem:[%s152 + $0xc10] sm:$0xff] %v925
                %v927 = vld [vmem:[%s151 + $0x1708] sm:$0xff]
                %928 = vst [vmem:[%s152 + $0xc18] sm:$0xff] %v927
                %v929 = vld [vmem:[%s151 + $0x1710] sm:$0xff]
                %930 = vst [vmem:[%s152 + $0xc20] sm:$0xff] %v929
                %v931 = vld [vmem:[%s151 + $0x1718] sm:$0xff]
                %932 = vst [vmem:[%s152 + $0xc28] sm:$0xff] %v931
                %v933 = vld [vmem:[%s151 + $0x1720] sm:$0xff]
                %934 = vst [vmem:[%s152 + $0xc30] sm:$0xff] %v933
                %v935 = vld [vmem:[%s151 + $0x1728] sm:$0xff]
                %936 = vst [vmem:[%s152 + $0xc38] sm:$0xff] %v935
                %v937 = vld [vmem:[%s151 + $0x1730] sm:$0xff]
                %938 = vst [vmem:[%s152 + $0xc40] sm:$0xff] %v937
                %v939 = vld [vmem:[%s151 + $0x1738] sm:$0xff]
                %940 = vst [vmem:[%s152 + $0xc48] sm:$0xff] %v939
                %v941 = vld [vmem:[%s151 + $0x1740] sm:$0xff]
                %942 = vst [vmem:[%s152 + $0xc50] sm:$0xff] %v941
                %v943 = vld [vmem:[%s151 + $0x1748] sm:$0xff]
                %944 = vst [vmem:[%s152 + $0xc58] sm:$0xff] %v943
                %v945 = vld [vmem:[%s151 + $0x1750] sm:$0xff]
                %946 = vst [vmem:[%s152 + $0xc60] sm:$0xff] %v945
                %v947 = vld [vmem:[%s151 + $0x1758] sm:$0xff]
                %948 = vst [vmem:[%s152 + $0xc68] sm:$0xff] %v947
                %v949 = vld [vmem:[%s151 + $0x1760] sm:$0xff]
                %950 = vst [vmem:[%s152 + $0xc70] sm:$0xff] %v949
                %v951 = vld [vmem:[%s151 + $0x1768] sm:$0xff]
                %952 = vst [vmem:[%s152 + $0xc78] sm:$0xff] %v951
                %v953 = vld [vmem:[%s151 + $0x1900] sm:$0xff]
                %954 = vst [vmem:[%s152 + $0xc80] sm:$0xff] %v953
                %v955 = vld [vmem:[%s151 + $0x1908] sm:$0xff]
                %956 = vst [vmem:[%s152 + $0xc88] sm:$0xff] %v955
                %v957 = vld [vmem:[%s151 + $0x1910] sm:$0xff]
                %958 = vst [vmem:[%s152 + $0xc90] sm:$0xff] %v957
                %v959 = vld [vmem:[%s151 + $0x1918] sm:$0xff]
                %960 = vst [vmem:[%s152 + $0xc98] sm:$0xff] %v959
                %v961 = vld [vmem:[%s151 + $0x1920] sm:$0xff]
                %962 = vst [vmem:[%s152 + $0xca0] sm:$0xff] %v961
                %v963 = vld [vmem:[%s151 + $0x1928] sm:$0xff]
                %964 = vst [vmem:[%s152 + $0xca8] sm:$0xff] %v963
                %v965 = vld [vmem:[%s151 + $0x1930] sm:$0xff]
                %966 = vst [vmem:[%s152 + $0xcb0] sm:$0xff] %v965
                %v967 = vld [vmem:[%s151 + $0x1938] sm:$0xff]
                %968 = vst [vmem:[%s152 + $0xcb8] sm:$0xff] %v967
                %v969 = vld [vmem:[%s151 + $0x1940] sm:$0xff]
                %970 = vst [vmem:[%s152 + $0xcc0] sm:$0xff] %v969
                %v971 = vld [vmem:[%s151 + $0x1948] sm:$0xff]
                %972 = vst [vmem:[%s152 + $0xcc8] sm:$0xff] %v971
                %v973 = vld [vmem:[%s151 + $0x1950] sm:$0xff]
                %974 = vst [vmem:[%s152 + $0xcd0] sm:$0xff] %v973
                %v975 = vld [vmem:[%s151 + $0x1958] sm:$0xff]
                %976 = vst [vmem:[%s152 + $0xcd8] sm:$0xff] %v975
                %v977 = vld [vmem:[%s151 + $0x1960] sm:$0xff]
                %978 = vst [vmem:[%s152 + $0xce0] sm:$0xff] %v977
                %v979 = vld [vmem:[%s151 + $0x1968] sm:$0xff]
                %980 = vst [vmem:[%s152 + $0xce8] sm:$0xff] %v979
                %v981 = vld [vmem:[%s151 + $0x1970] sm:$0xff]
                %982 = vst [vmem:[%s152 + $0xcf0] sm:$0xff] %v981
                %v983 = vld [vmem:[%s151 + $0x1978] sm:$0xff]
                %984 = vst [vmem:[%s152 + $0xcf8] sm:$0xff] %v983
                %v985 = vld [vmem:[%s151 + $0x1980] sm:$0xff]
                %986 = vst [vmem:[%s152 + $0xd00] sm:$0xff] %v985
                %v987 = vld [vmem:[%s151 + $0x1988] sm:$0xff]
                %988 = vst [vmem:[%s152 + $0xd08] sm:$0xff] %v987
                %v989 = vld [vmem:[%s151 + $0x1990] sm:$0xff]
                %990 = vst [vmem:[%s152 + $0xd10] sm:$0xff] %v989
                %v991 = vld [vmem:[%s151 + $0x1998] sm:$0xff]
                %992 = vst [vmem:[%s152 + $0xd18] sm:$0xff] %v991
                %v993 = vld [vmem:[%s151 + $0x19a0] sm:$0xff]
                %994 = vst [vmem:[%s152 + $0xd20] sm:$0xff] %v993
                %v995 = vld [vmem:[%s151 + $0x19a8] sm:$0xff]
                %996 = vst [vmem:[%s152 + $0xd28] sm:$0xff] %v995
                %v997 = vld [vmem:[%s151 + $0x19b0] sm:$0xff]
                %998 = vst [vmem:[%s152 + $0xd30] sm:$0xff] %v997
                %v999 = vld [vmem:[%s151 + $0x19b8] sm:$0xff]
                %1000 = vst [vmem:[%s152 + $0xd38] sm:$0xff] %v999
                %v1001 = vld [vmem:[%s151 + $0x19c0] sm:$0xff]
                %1002 = vst [vmem:[%s152 + $0xd40] sm:$0xff] %v1001
                %v1003 = vld [vmem:[%s151 + $0x19c8] sm:$0xff]
                %1004 = vst [vmem:[%s152 + $0xd48] sm:$0xff] %v1003
                %v1005 = vld [vmem:[%s151 + $0x19d0] sm:$0xff]
                %1006 = vst [vmem:[%s152 + $0xd50] sm:$0xff] %v1005
                %v1007 = vld [vmem:[%s151 + $0x19d8] sm:$0xff]
                %1008 = vst [vmem:[%s152 + $0xd58] sm:$0xff] %v1007
                %v1009 = vld [vmem:[%s151 + $0x19e0] sm:$0xff]
                %1010 = vst [vmem:[%s152 + $0xd60] sm:$0xff] %v1009
                %v1011 = vld [vmem:[%s151 + $0x19e8] sm:$0xff]
                %1012 = vst [vmem:[%s152 + $0xd68] sm:$0xff] %v1011
                %v1013 = vld [vmem:[%s151 + $0x19f0] sm:$0xff]
                %1014 = vst [vmem:[%s152 + $0xd70] sm:$0xff] %v1013
                %v1015 = vld [vmem:[%s151 + $0x19f8] sm:$0xff]
                %1016 = vst [vmem:[%s152 + $0xd78] sm:$0xff] %v1015
                %v1017 = vld [vmem:[%s151 + $0x1a00] sm:$0xff]
                %1018 = vst [vmem:[%s152 + $0xd80] sm:$0xff] %v1017
                %v1019 = vld [vmem:[%s151 + $0x1a08] sm:$0xff]
                %1020 = vst [vmem:[%s152 + $0xd88] sm:$0xff] %v1019
                %v1021 = vld [vmem:[%s151 + $0x1a10] sm:$0xff]
                %1022 = vst [vmem:[%s152 + $0xd90] sm:$0xff] %v1021
                %v1023 = vld [vmem:[%s151 + $0x1a18] sm:$0xff]
                %1024 = vst [vmem:[%s152 + $0xd98] sm:$0xff] %v1023
                %v1025 = vld [vmem:[%s151 + $0x1a20] sm:$0xff]
                %1026 = vst [vmem:[%s152 + $0xda0] sm:$0xff] %v1025
                %v1027 = vld [vmem:[%s151 + $0x1a28] sm:$0xff]
                %1028 = vst [vmem:[%s152 + $0xda8] sm:$0xff] %v1027
                %v1029 = vld [vmem:[%s151 + $0x1a30] sm:$0xff]
                %1030 = vst [vmem:[%s152 + $0xdb0] sm:$0xff] %v1029
                %v1031 = vld [vmem:[%s151 + $0x1a38] sm:$0xff]
                %1032 = vst [vmem:[%s152 + $0xdb8] sm:$0xff] %v1031
                %v1033 = vld [vmem:[%s151 + $0x1a40] sm:$0xff]
                %1034 = vst [vmem:[%s152 + $0xdc0] sm:$0xff] %v1033
                %v1035 = vld [vmem:[%s151 + $0x1a48] sm:$0xff]
                %1036 = vst [vmem:[%s152 + $0xdc8] sm:$0xff] %v1035
                %v1037 = vld [vmem:[%s151 + $0x1a50] sm:$0xff]
                %1038 = vst [vmem:[%s152 + $0xdd0] sm:$0xff] %v1037
                %v1039 = vld [vmem:[%s151 + $0x1a58] sm:$0xff]
                %1040 = vst [vmem:[%s152 + $0xdd8] sm:$0xff] %v1039
                %v1041 = vld [vmem:[%s151 + $0x1a60] sm:$0xff]
                %1042 = vst [vmem:[%s152 + $0xde0] sm:$0xff] %v1041
                %v1043 = vld [vmem:[%s151 + $0x1a68] sm:$0xff]
                %1044 = vst [vmem:[%s152 + $0xde8] sm:$0xff] %v1043
                %v1045 = vld [vmem:[%s151 + $0x1a70] sm:$0xff]
                %1046 = vst [vmem:[%s152 + $0xdf0] sm:$0xff] %v1045
                %v1047 = vld [vmem:[%s151 + $0x1a78] sm:$0xff]
                %1048 = vst [vmem:[%s152 + $0xdf8] sm:$0xff] %v1047
                %v1049 = vld [vmem:[%s151 + $0x1a80] sm:$0xff]
                %1050 = vst [vmem:[%s152 + $0xe00] sm:$0xff] %v1049
                %v1051 = vld [vmem:[%s151 + $0x1a88] sm:$0xff]
                %1052 = vst [vmem:[%s152 + $0xe08] sm:$0xff] %v1051
              $region45: #{net_forward.3} parent=39 // loop_footer
                %s150 = sadd.s32 1, %s146
              $region46: #{net_forward.3} parent=39 // loop_footer_branch
                %145 = sbr.rel target = $region42
              $region47: #{net_forward.3} parent=39 // loop_exit
                _
            $region40: #{net_forward.3} parent=31 // pred_fallthru
              _
          $region32: #{net_forward.3} parent=27 // pred_fallthru
            _
          %1965 = vnop
        $region28: #{net_forward.3} parent=23 // pred_fallthru
          _
      $region24: #{net_forward.3} parent=5 // pred_fallthru
        _
      %p1966 = scmp.le.s32.totalorder 1, %s9
      %p1967 = scmp.lt.s32.totalorder %s9, 3
      %p1968 = pnand %p1966, %p1967
      %p1969 = pneg %p1968
      // Predicated region
      $region63: #{net_forward.3} parent=5 // pred_check
        _
      $region64: #{net_forward.3} parent=5 // pred_check_branch
        %1971 = sbr.rel (%p1968) target = $region66
      $region65: #{net_forward.3} parent=5 // pred_region
        %s1972 = ssub.s32 %s9, 1
        %s1973 = sand.u32 %s22, 1
        %s1974 = sand.u32 %s22, 1
        %s1975 = smul.addr %s1974, 3600
        %s1976 = scalar_lea.vmem [#allocation2], %s1975
        // Predicated region
        $region67: #{net_forward.3} parent=65 // pred_check
          %p1977 = pneg %p35
        $region68: #{net_forward.3} parent=65 // pred_check_branch
          %1979 = sbr.rel (%p1977) target = $region70
        $region69: #{net_forward.3} parent=65 // pred_region
          _
        $region70: #{net_forward.3} parent=65 // pred_fallthru
          _
        %s1980 = sand.u32 %s22, 1
        %s1981 = sand.u32 %s22, 1
        %s1982 = smul.addr %s1981, 3600
        %s1983 = scalar_lea.vmem [#allocation2], %s1982
        %p1984 = pneg %p35
        %p1985 = pneg %p32
        %p1986 = pneg %p56
        %p1987 = pneg %p53
        %p1988 = pneg %p77
        %p1989 = pneg %p74
        %p1990 = pneg %p103
        %p1991 = pneg %p100
        %s1992 = smul.u32 50, %s14
        %p1993 = scmp.lt.s32.totalorder %s1992, 99
        %s1994 = scalar_select %p1993, %s1992, 99
        %s1995 = smul.addr %s1994, 8
        %s1996 = scalar_lea.vmem %s3, %s1995
        %s1997 = smul.u32 50, %s14
        %s1998 = smul.u32 50, %s14
        %p1999 = scmp.lt.s32.totalorder %s1998, 99
        %s2000 = scalar_select %p1999, %s1998, 99
        %s2001 = smul.addr %s2000, 8
        %s2002 = scalar_lea.vmem %s3, %s2001
        %s2003 = smul.u32 50, %s14
        %v2004 = vld [vmem:[%s1] sm:$0xff]
        %v2005 = vld [vmem:[%s1 + $0x8] sm:$0xff]
        %v2006 = vld [vmem:[%s1 + $0x10] sm:$0xff]
        %v2007 = vld [vmem:[%s1 + $0x18] sm:$0xff]
        %v2008 = vld [vmem:[%s2] sm:$0x1]
        %v2009 = vld [vmem:[%s1976] sm:$0xff]
        %v2010 = vld [vmem:[%s1976 + $0x8] sm:$0xff]
        %v2011 = vld [vmem:[%s1976 + $0x10] sm:$0xff]
        %v2012 = vld [vmem:[%s1976 + $0x18] sm:$0xff]
        %v2013 = vld [vmem:[%s1976 + $0x20] sm:$0xff]
        %v2014 = vld [vmem:[%s1976 + $0x28] sm:$0xff]
        %v2015 = vld [vmem:[%s1976 + $0x30] sm:$0xff]
        %v2016 = vld [vmem:[%s1976 + $0x38] sm:$0xff]
        %v2017 = vld [vmem:[%s1976 + $0x40] sm:$0xff]
        %v2018 = vld [vmem:[%s1976 + $0x48] sm:$0xff]
        %v2019 = vld [vmem:[%s1976 + $0x50] sm:$0xff]
        %v2020 = vld [vmem:[%s1976 + $0x58] sm:$0xff]
        %v2021 = vld [vmem:[%s1976 + $0x60] sm:$0xff]
        %v2022 = vld [vmem:[%s1976 + $0x68] sm:$0xff]
        %v2023 = vld [vmem:[%s1976 + $0x70] sm:$0xff]
        %v2024 = vld [vmem:[%s1976 + $0x78] sm:$0xff]
        %v2025 = vld [vmem:[%s1976 + $0x80] sm:$0xff]
        %v2026 = vld [vmem:[%s1976 + $0x88] sm:$0xff]
        %v2027 = vld [vmem:[%s1976 + $0x90] sm:$0xff]
        %v2028 = vld [vmem:[%s1976 + $0x98] sm:$0xff]
        %v2029 = vld [vmem:[%s1976 + $0xa0] sm:$0xff]
        %v2030 = vld [vmem:[%s1976 + $0xa8] sm:$0xff]
        %v2031 = vld [vmem:[%s1976 + $0xb0] sm:$0xff]
        %v2032 = vld [vmem:[%s1976 + $0xb8] sm:$0xff]
        %v2033 = vld [vmem:[%s1976 + $0xc0] sm:$0xff]
        %v2034 = vld [vmem:[%s1976 + $0xc8] sm:$0xff]
        %v2035 = vld [vmem:[%s1976 + $0xd0] sm:$0xff]
        %v2036 = vld [vmem:[%s1976 + $0xd8] sm:$0xff]
        %v2037 = vld [vmem:[%s1976 + $0xe0] sm:$0xff]
        %v2038 = vld [vmem:[%s1976 + $0xe8] sm:$0xff]
        %v2039 = vld [vmem:[%s1976 + $0xf0] sm:$0xff]
        %v2040 = vld [vmem:[%s1976 + $0xf8] sm:$0xff]
        %v2041 = vld [vmem:[%s1976 + $0x100] sm:$0xff]
        %v2042 = vld [vmem:[%s1976 + $0x108] sm:$0xff]
        %v2043 = vld [vmem:[%s1976 + $0x110] sm:$0xff]
        %v2044 = vld [vmem:[%s1976 + $0x118] sm:$0xff]
        %v2045 = vld [vmem:[%s1976 + $0x120] sm:$0xff]
        %v2046 = vld [vmem:[%s1976 + $0x128] sm:$0xff]
        %v2047 = vld [vmem:[%s1976 + $0x130] sm:$0xff]
        %v2048 = vld [vmem:[%s1976 + $0x138] sm:$0xff]
        %v2049 = vld [vmem:[%s1976 + $0x140] sm:$0xff]
        %v2050 = vld [vmem:[%s1976 + $0x148] sm:$0xff]
        %v2051 = vld [vmem:[%s1976 + $0x150] sm:$0xff]
        %v2052 = vld [vmem:[%s1976 + $0x158] sm:$0xff]
        %v2053 = vld [vmem:[%s1976 + $0x160] sm:$0xff]
        %v2054 = vld [vmem:[%s1976 + $0x168] sm:$0xff]
        %v2055 = vld [vmem:[%s1976 + $0x170] sm:$0xff]
        %v2056 = vld [vmem:[%s1976 + $0x178] sm:$0xff]
        %v2057 = vld [vmem:[%s1976 + $0x180] sm:$0xff]
        %v2058 = vld [vmem:[%s1976 + $0x188] sm:$0xff]
        %v2060 = vlaneseq
        %v2061 = vshrl.u32 %v2060, 7
        %v2062 = vsub.s32 0, %v2061
        %v2063 = vrot.slane %v2008, %v2062
        %vm2065 = vcmask 261120
        %v2067 = vsel %vm2065, %v2009, 0
        %v2070 = vsel %vm2065, %v2010, 0
        %v2073 = vsel %vm2065, %v2011, 0
        %v2076 = vsel %vm2065, %v2012, 0
        %v2079 = vsel %vm2065, %v2013, 0
        %v2082 = vsel %vm2065, %v2014, 0
        %v2085 = vsel %vm2065, %v2015, 0
        %v2088 = vsel %vm2065, %v2016, 0
        %v2091 = vsel %vm2065, %v2017, 0
        %v2094 = vsel %vm2065, %v2018, 0
        %v2097 = vsel %vm2065, %v2019, 0
        %v2100 = vsel %vm2065, %v2020, 0
        %v2103 = vsel %vm2065, %v2021, 0
        %v2106 = vsel %vm2065, %v2022, 0
        %v2109 = vsel %vm2065, %v2023, 0
        %v2112 = vsel %vm2065, %v2024, 0
        %v2115 = vsel %vm2065, %v2025, 0
        %v2118 = vsel %vm2065, %v2026, 0
        %v2121 = vsel %vm2065, %v2027, 0
        %v2124 = vsel %vm2065, %v2028, 0
        %v2127 = vsel %vm2065, %v2029, 0
        %v2130 = vsel %vm2065, %v2030, 0
        %v2133 = vsel %vm2065, %v2031, 0
        %v2136 = vsel %vm2065, %v2032, 0
        %v2139 = vsel %vm2065, %v2033, 0
        %v2142 = vsel %vm2065, %v2034, 0
        %v2145 = vsel %vm2065, %v2035, 0
        %v2148 = vsel %vm2065, %v2036, 0
        %v2151 = vsel %vm2065, %v2037, 0
        %v2154 = vsel %vm2065, %v2038, 0
        %v2157 = vsel %vm2065, %v2039, 0
        %v2160 = vsel %vm2065, %v2040, 0
        %v2163 = vsel %vm2065, %v2041, 0
        %v2166 = vsel %vm2065, %v2042, 0
        %v2169 = vsel %vm2065, %v2043, 0
        %v2172 = vsel %vm2065, %v2044, 0
        %v2175 = vsel %vm2065, %v2045, 0
        %v2178 = vsel %vm2065, %v2046, 0
        %v2181 = vsel %vm2065, %v2047, 0
        %v2184 = vsel %vm2065, %v2048, 0
        %v2187 = vsel %vm2065, %v2049, 0
        %v2190 = vsel %vm2065, %v2050, 0
        %v2193 = vsel %vm2065, %v2051, 0
        %v2196 = vsel %vm2065, %v2052, 0
        %v2199 = vsel %vm2065, %v2053, 0
        %v2202 = vsel %vm2065, %v2054, 0
        %v2205 = vsel %vm2065, %v2055, 0
        %v2208 = vsel %vm2065, %v2056, 0
        %v2211 = vsel %vm2065, %v2057, 0
        %v2214 = vsel %vm2065, %v2058, 0
        %2216 = vmatprep.subr.mxu0 0.0
        %2217 = vmatpush1.msra.mxu0 %v2004
        %2218 = vmatprep.subr.mxu0 0.0
        %2219 = vmatpush1.msra.mxu0 %v2005
        %2220 = vmatprep.subr.mxu0 0.0
        %2221 = vmatpush1.msra.mxu0 %v2006
        %2222 = vmatprep.subr.mxu0 0.0
        %2223 = vmatpush1.msra.mxu0 %v2007
        %2224 = vmatprep.subr.mxu0 0.0
        %2225 = vmatpush1.msra.mxu0 0.0
        %2226 = vmatprep.subr.mxu0 0.0
        %2227 = vmatpush1.msra.mxu0 0.0
        %2228 = vmatprep.subr.mxu0 0.0
        %2229 = vmatpush1.msra.mxu0 0.0
        %2230 = vmatprep.subr.mxu0 0.0
        %2231 = vmatpush1.msra.mxu0 0.0
        %2232 = vmatprep.subr.mxu0 0.0
        %2233 = vmatpush1.msra.mxu0 0.0
        %2234 = vmatprep.subr.mxu0 0.0
        %2235 = vmatpush1.msra.mxu0 0.0
        %2236 = vmatprep.subr.mxu0 0.0
        %2237 = vmatpush1.msra.mxu0 0.0
        %2238 = vmatprep.subr.mxu0 0.0
        %2239 = vmatpush1.msra.mxu0 0.0
        %2240 = vmatprep.subr.mxu0 0.0
        %2241 = vmatpush1.msra.mxu0 0.0
        %2242 = vmatprep.subr.mxu0 0.0
        %2243 = vmatpush1.msra.mxu0 0.0
        %2244 = vmatprep.subr.mxu0 0.0
        %2245 = vmatpush1.msra.mxu0 0.0
        %2246 = vmatprep.subr.mxu0 0.0
        %2247 = vmatpush1.msra.mxu0 0.0
        %2248 = vmatprep.subr.mxu0 0.0
        %2249 = vmatpush1.msra.mxu0 0.0
        %2250 = vmatprep.subr.mxu0 0.0
        %2251 = vmatpush1.msra.mxu0 0.0
        %2252 = vmatprep.subr.mxu0 0.0
        %2253 = vmatpush1.msra.mxu0 0.0
        %2254 = vmatprep.subr.mxu0 0.0
        %2255 = vmatpush1.msra.mxu0 0.0
        %2256 = vmatprep.subr.mxu0 0.0
        %2257 = vmatpush1.msra.mxu0 0.0
        %2258 = vmatprep.subr.mxu0 0.0
        %2259 = vmatpush1.msra.mxu0 0.0
        %2260 = vmatprep.subr.mxu0 0.0
        %2261 = vmatpush1.msra.mxu0 0.0
        %2262 = vmatprep.subr.mxu0 0.0
        %2263 = vmatpush1.msra.mxu0 0.0
        %2264 = vmatprep.subr.mxu0 0.0
        %2265 = vmatpush1.msra.mxu0 0.0
        %2266 = vmatprep.subr.mxu0 0.0
        %2267 = vmatpush1.msra.mxu0 0.0
        %2268 = vmatprep.subr.mxu0 0.0
        %2269 = vmatpush1.msra.mxu0 0.0
        %2270 = vmatprep.subr.mxu0 0.0
        %2271 = vmatpush1.msra.mxu0 0.0
        %2272 = vmatprep.subr.mxu0 0.0
        %2273 = vmatpush1.msra.mxu0 0.0
        %2274 = vmatprep.subr.mxu0 0.0
        %2275 = vmatpush1.msra.mxu0 0.0
        %2276 = vmatprep.subr.mxu0 0.0
        %2277 = vmatpush1.msra.mxu0 0.0
        %2278 = vmatprep.subr.mxu0 0.0
        %2279 = vmatpush1.msra.mxu0 0.0
        %2280 = vmatprep.mubr.f32.mxu0 0.0
        %2281 = vmatmul.mubr.f32.gmra.mrb[0].mxu0 %v2067
        %v2282 = vpop.f32.mrb[0].mxu0
        %v2283 = vadd.f32 %v2063, %v2282
        %v2284 = vpop.f32.mrb[0].mxu0
        %2285 = vmatprep.mubr.f32.mxu0 0.0
        %2286 = vmatmul.mubr.f32.gmra.mrb[0].mxu0 %v2070
        %v2287 = vpop.f32.mrb[0].mxu0
        %v2288 = vadd.f32 %v2063, %v2287
        %v2289 = vpop.f32.mrb[0].mxu0
        %2290 = vmatprep.mubr.f32.mxu0 0.0
        %2291 = vmatmul.mubr.f32.gmra.mrb[0].mxu0 %v2073
        %v2292 = vpop.f32.mrb[0].mxu0
        %v2293 = vadd.f32 %v2063, %v2292
        %v2294 = vpop.f32.mrb[0].mxu0
        %2295 = vmatprep.mubr.f32.mxu0 0.0
        %2296 = vmatmul.mubr.f32.gmra.mrb[0].mxu0 %v2076
        %v2297 = vpop.f32.mrb[0].mxu0
        %v2298 = vadd.f32 %v2063, %v2297
        %v2299 = vpop.f32.mrb[0].mxu0
        %2300 = vmatprep.mubr.f32.mxu0 0.0
        %2301 = vmatmul.mubr.f32.gmra.mrb[0].mxu0 %v2079
        %v2302 = vpop.f32.mrb[0].mxu0
        %v2303 = vadd.f32 %v2063, %v2302
        %v2304 = vpop.f32.mrb[0].mxu0
        %2305 = vmatprep.mubr.f32.mxu0 0.0
        %2306 = vmatmul.mubr.f32.gmra.mrb[0].mxu0 %v2082
        %v2307 = vpop.f32.mrb[0].mxu0
        %v2308 = vadd.f32 %v2063, %v2307
        %v2309 = vpop.f32.mrb[0].mxu0
        %2310 = vmatprep.mubr.f32.mxu0 0.0
        %2311 = vmatmul.mubr.f32.gmra.mrb[0].mxu0 %v2085
        %v2312 = vpop.f32.mrb[0].mxu0
        %v2313 = vadd.f32 %v2063, %v2312
        %v2314 = vpop.f32.mrb[0].mxu0
        %2315 = vmatprep.mubr.f32.mxu0 0.0
        %2316 = vmatmul.mubr.f32.gmra.mrb[0].mxu0 %v2088
        %v2317 = vpop.f32.mrb[0].mxu0
        %v2318 = vadd.f32 %v2063, %v2317
        %v2319 = vpop.f32.mrb[0].mxu0
        %2320 = vmatprep.mubr.f32.mxu0 0.0
        %2321 = vmatmul.mubr.f32.gmra.mrb[0].mxu0 %v2091
        %v2322 = vpop.f32.mrb[0].mxu0
        %v2323 = vadd.f32 %v2063, %v2322
        %v2324 = vpop.f32.mrb[0].mxu0
        %2325 = vmatprep.mubr.f32.mxu0 0.0
        %2326 = vmatmul.mubr.f32.gmra.mrb[0].mxu0 %v2094
        %v2327 = vpop.f32.mrb[0].mxu0
        %v2328 = vadd.f32 %v2063, %v2327
        %v2329 = vpop.f32.mrb[0].mxu0
        %2330 = vmatprep.mubr.f32.mxu0 0.0
        %2331 = vmatmul.mubr.f32.gmra.mrb[0].mxu0 %v2097
        %v2332 = vpop.f32.mrb[0].mxu0
        %v2333 = vadd.f32 %v2063, %v2332
        %v2334 = vpop.f32.mrb[0].mxu0
        %2335 = vmatprep.mubr.f32.mxu0 0.0
        %2336 = vmatmul.mubr.f32.gmra.mrb[0].mxu0 %v2100
        %v2337 = vpop.f32.mrb[0].mxu0
        %v2338 = vadd.f32 %v2063, %v2337
        %v2339 = vpop.f32.mrb[0].mxu0
        %2340 = vmatprep.mubr.f32.mxu0 0.0
        %2341 = vmatmul.mubr.f32.gmra.mrb[0].mxu0 %v2103
        %v2342 = vpop.f32.mrb[0].mxu0
        %v2343 = vadd.f32 %v2063, %v2342
        %v2344 = vpop.f32.mrb[0].mxu0
        %2345 = vmatprep.mubr.f32.mxu0 0.0
        %2346 = vmatmul.mubr.f32.gmra.mrb[0].mxu0 %v2106
        %v2347 = vpop.f32.mrb[0].mxu0
        %v2348 = vadd.f32 %v2063, %v2347
        %v2349 = vpop.f32.mrb[0].mxu0
        %2350 = vmatprep.mubr.f32.mxu0 0.0
        %2351 = vmatmul.mubr.f32.gmra.mrb[0].mxu0 %v2109
        %v2352 = vpop.f32.mrb[0].mxu0
        %v2353 = vadd.f32 %v2063, %v2352
        %v2354 = vpop.f32.mrb[0].mxu0
        %2355 = vmatprep.mubr.f32.mxu0 0.0
        %2356 = vmatmul.mubr.f32.gmra.mrb[0].mxu0 %v2112
        %v2357 = vpop.f32.mrb[0].mxu0
        %v2358 = vadd.f32 %v2063, %v2357
        %v2359 = vpop.f32.mrb[0].mxu0
        %2360 = vmatprep.mubr.f32.mxu0 0.0
        %2361 = vmatmul.mubr.f32.gmra.mrb[0].mxu0 %v2115
        %v2362 = vpop.f32.mrb[0].mxu0
        %v2363 = vadd.f32 %v2063, %v2362
        %v2364 = vpop.f32.mrb[0].mxu0
        %2365 = vmatprep.mubr.f32.mxu0 0.0
        %2366 = vmatmul.mubr.f32.gmra.mrb[0].mxu0 %v2118
        %v2367 = vpop.f32.mrb[0].mxu0
        %v2368 = vadd.f32 %v2063, %v2367
        %v2369 = vpop.f32.mrb[0].mxu0
        %2370 = vmatprep.mubr.f32.mxu0 0.0
        %2371 = vmatmul.mubr.f32.gmra.mrb[0].mxu0 %v2121
        %v2372 = vpop.f32.mrb[0].mxu0
        %v2373 = vadd.f32 %v2063, %v2372
        %v2374 = vpop.f32.mrb[0].mxu0
        %2375 = vmatprep.mubr.f32.mxu0 0.0
        %2376 = vmatmul.mubr.f32.gmra.mrb[0].mxu0 %v2124
        %v2377 = vpop.f32.mrb[0].mxu0
        %v2378 = vadd.f32 %v2063, %v2377
        %v2379 = vpop.f32.mrb[0].mxu0
        %2380 = vmatprep.mubr.f32.mxu0 0.0
        %2381 = vmatmul.mubr.f32.gmra.mrb[0].mxu0 %v2127
        %v2382 = vpop.f32.mrb[0].mxu0
        %v2383 = vadd.f32 %v2063, %v2382
        %v2384 = vpop.f32.mrb[0].mxu0
        %2385 = vmatprep.mubr.f32.mxu0 0.0
        %2386 = vmatmul.mubr.f32.gmra.mrb[0].mxu0 %v2130
        %v2387 = vpop.f32.mrb[0].mxu0
        %v2388 = vadd.f32 %v2063, %v2387
        %v2389 = vpop.f32.mrb[0].mxu0
        %2390 = vmatprep.mubr.f32.mxu0 0.0
        %2391 = vmatmul.mubr.f32.gmra.mrb[0].mxu0 %v2133
        %v2392 = vpop.f32.mrb[0].mxu0
        %v2393 = vadd.f32 %v2063, %v2392
        %v2394 = vpop.f32.mrb[0].mxu0
        %2395 = vmatprep.mubr.f32.mxu0 0.0
        %2396 = vmatmul.mubr.f32.gmra.mrb[0].mxu0 %v2136
        %v2397 = vpop.f32.mrb[0].mxu0
        %v2398 = vadd.f32 %v2063, %v2397
        %v2399 = vpop.f32.mrb[0].mxu0
        %2400 = vmatprep.mubr.f32.mxu0 0.0
        %2401 = vmatmul.mubr.f32.gmra.mrb[0].mxu0 %v2139
        %v2402 = vpop.f32.mrb[0].mxu0
        %v2403 = vadd.f32 %v2063, %v2402
        %v2404 = vpop.f32.mrb[0].mxu0
        %2405 = vmatprep.mubr.f32.mxu0 0.0
        %2406 = vmatmul.mubr.f32.gmra.mrb[0].mxu0 %v2142
        %v2407 = vpop.f32.mrb[0].mxu0
        %v2408 = vadd.f32 %v2063, %v2407
        %v2409 = vpop.f32.mrb[0].mxu0
        %2410 = vmatprep.mubr.f32.mxu0 0.0
        %2411 = vmatmul.mubr.f32.gmra.mrb[0].mxu0 %v2145
        %v2412 = vpop.f32.mrb[0].mxu0
        %v2413 = vadd.f32 %v2063, %v2412
        %v2414 = vpop.f32.mrb[0].mxu0
        %2415 = vmatprep.mubr.f32.mxu0 0.0
        %2416 = vmatmul.mubr.f32.gmra.mrb[0].mxu0 %v2148
        %v2417 = vpop.f32.mrb[0].mxu0
        %v2418 = vadd.f32 %v2063, %v2417
        %v2419 = vpop.f32.mrb[0].mxu0
        %2420 = vmatprep.mubr.f32.mxu0 0.0
        %2421 = vmatmul.mubr.f32.gmra.mrb[0].mxu0 %v2151
        %v2422 = vpop.f32.mrb[0].mxu0
        %v2423 = vadd.f32 %v2063, %v2422
        %v2424 = vpop.f32.mrb[0].mxu0
        %2425 = vmatprep.mubr.f32.mxu0 0.0
        %2426 = vmatmul.mubr.f32.gmra.mrb[0].mxu0 %v2154
        %v2427 = vpop.f32.mrb[0].mxu0
        %v2428 = vadd.f32 %v2063, %v2427
        %v2429 = vpop.f32.mrb[0].mxu0
        %2430 = vmatprep.mubr.f32.mxu0 0.0
        %2431 = vmatmul.mubr.f32.gmra.mrb[0].mxu0 %v2157
        %v2432 = vpop.f32.mrb[0].mxu0
        %v2433 = vadd.f32 %v2063, %v2432
        %v2434 = vpop.f32.mrb[0].mxu0
        %2435 = vmatprep.mubr.f32.mxu0 0.0
        %2436 = vmatmul.mubr.f32.gmra.mrb[0].mxu0 %v2160
        %v2437 = vpop.f32.mrb[0].mxu0
        %v2438 = vadd.f32 %v2063, %v2437
        %v2439 = vpop.f32.mrb[0].mxu0
        %2440 = vmatprep.mubr.f32.mxu0 0.0
        %2441 = vmatmul.mubr.f32.gmra.mrb[0].mxu0 %v2163
        %v2442 = vpop.f32.mrb[0].mxu0
        %v2443 = vadd.f32 %v2063, %v2442
        %v2444 = vpop.f32.mrb[0].mxu0
        %2445 = vmatprep.mubr.f32.mxu0 0.0
        %2446 = vmatmul.mubr.f32.gmra.mrb[0].mxu0 %v2166
        %v2447 = vpop.f32.mrb[0].mxu0
        %v2448 = vadd.f32 %v2063, %v2447
        %v2449 = vpop.f32.mrb[0].mxu0
        %2450 = vmatprep.mubr.f32.mxu0 0.0
        %2451 = vmatmul.mubr.f32.gmra.mrb[0].mxu0 %v2169
        %v2452 = vpop.f32.mrb[0].mxu0
        %v2453 = vadd.f32 %v2063, %v2452
        %v2454 = vpop.f32.mrb[0].mxu0
        %2455 = vmatprep.mubr.f32.mxu0 0.0
        %2456 = vmatmul.mubr.f32.gmra.mrb[0].mxu0 %v2172
        %v2457 = vpop.f32.mrb[0].mxu0
        %v2458 = vadd.f32 %v2063, %v2457
        %v2459 = vpop.f32.mrb[0].mxu0
        %2460 = vmatprep.mubr.f32.mxu0 0.0
        %2461 = vmatmul.mubr.f32.gmra.mrb[0].mxu0 %v2175
        %v2462 = vpop.f32.mrb[0].mxu0
        %v2463 = vadd.f32 %v2063, %v2462
        %v2464 = vpop.f32.mrb[0].mxu0
        %2465 = vmatprep.mubr.f32.mxu0 0.0
        %2466 = vmatmul.mubr.f32.gmra.mrb[0].mxu0 %v2178
        %v2467 = vpop.f32.mrb[0].mxu0
        %v2468 = vadd.f32 %v2063, %v2467
        %v2469 = vpop.f32.mrb[0].mxu0
        %2470 = vmatprep.mubr.f32.mxu0 0.0
        %2471 = vmatmul.mubr.f32.gmra.mrb[0].mxu0 %v2181
        %v2472 = vpop.f32.mrb[0].mxu0
        %v2473 = vadd.f32 %v2063, %v2472
        %v2474 = vpop.f32.mrb[0].mxu0
        %2475 = vmatprep.mubr.f32.mxu0 0.0
        %2476 = vmatmul.mubr.f32.gmra.mrb[0].mxu0 %v2184
        %v2477 = vpop.f32.mrb[0].mxu0
        %v2478 = vadd.f32 %v2063, %v2477
        %v2479 = vpop.f32.mrb[0].mxu0
        %2480 = vmatprep.mubr.f32.mxu0 0.0
        %2481 = vmatmul.mubr.f32.gmra.mrb[0].mxu0 %v2187
        %v2482 = vpop.f32.mrb[0].mxu0
        %v2483 = vadd.f32 %v2063, %v2482
        %v2484 = vpop.f32.mrb[0].mxu0
        %2485 = vmatprep.mubr.f32.mxu0 0.0
        %2486 = vmatmul.mubr.f32.gmra.mrb[0].mxu0 %v2190
        %v2487 = vpop.f32.mrb[0].mxu0
        %v2488 = vadd.f32 %v2063, %v2487
        %v2489 = vpop.f32.mrb[0].mxu0
        %2490 = vmatprep.mubr.f32.mxu0 0.0
        %2491 = vmatmul.mubr.f32.gmra.mrb[0].mxu0 %v2193
        %v2492 = vpop.f32.mrb[0].mxu0
        %v2493 = vadd.f32 %v2063, %v2492
        %v2494 = vpop.f32.mrb[0].mxu0
        %2495 = vmatprep.mubr.f32.mxu0 0.0
        %2496 = vmatmul.mubr.f32.gmra.mrb[0].mxu0 %v2196
        %v2497 = vpop.f32.mrb[0].mxu0
        %v2498 = vadd.f32 %v2063, %v2497
        %v2499 = vpop.f32.mrb[0].mxu0
        %2500 = vmatprep.mubr.f32.mxu0 0.0
        %2501 = vmatmul.mubr.f32.gmra.mrb[0].mxu0 %v2199
        %v2502 = vpop.f32.mrb[0].mxu0
        %v2503 = vadd.f32 %v2063, %v2502
        %v2504 = vpop.f32.mrb[0].mxu0
        %2505 = vmatprep.mubr.f32.mxu0 0.0
        %2506 = vmatmul.mubr.f32.gmra.mrb[0].mxu0 %v2202
        %v2507 = vpop.f32.mrb[0].mxu0
        %v2508 = vadd.f32 %v2063, %v2507
        %v2509 = vpop.f32.mrb[0].mxu0
        %2510 = vmatprep.mubr.f32.mxu0 0.0
        %2511 = vmatmul.mubr.f32.gmra.mrb[0].mxu0 %v2205
        %v2512 = vpop.f32.mrb[0].mxu0
        %v2513 = vadd.f32 %v2063, %v2512
        %v2514 = vpop.f32.mrb[0].mxu0
        %2515 = vmatprep.mubr.f32.mxu0 0.0
        %2516 = vmatmul.mubr.f32.gmra.mrb[0].mxu0 %v2208
        %v2517 = vpop.f32.mrb[0].mxu0
        %v2518 = vadd.f32 %v2063, %v2517
        %v2519 = vpop.f32.mrb[0].mxu0
        %2520 = vmatprep.mubr.f32.mxu0 0.0
        %2521 = vmatmul.mubr.f32.gmra.mrb[0].mxu0 %v2211
        %v2522 = vpop.f32.mrb[0].mxu0
        %v2523 = vadd.f32 %v2063, %v2522
        %v2524 = vpop.f32.mrb[0].mxu0
        %2525 = vmatprep.mubr.f32.mxu0 0.0
        %2526 = vmatmul.mubr.f32.gmra.mrb[0].mxu0 %v2214
        %v2527 = vpop.f32.mrb[0].mxu0
        %v2528 = vadd.f32 %v2063, %v2527
        %v2529 = vpop.f32.mrb[0].mxu0
        %2530 = vdwg.mxu0
        %s2531 = scalar_lea.vmem %s1976, 400 [#allocation2]
        %v2532 = vld [vmem:[%s2531] sm:$0xff]
        %v2533 = vld [vmem:[%s2531 + $0x8] sm:$0xff]
        %v2534 = vld [vmem:[%s2531 + $0x10] sm:$0xff]
        %v2535 = vld [vmem:[%s2531 + $0x18] sm:$0xff]
        %v2536 = vld [vmem:[%s2531 + $0x20] sm:$0xff]
        %v2537 = vld [vmem:[%s2531 + $0x28] sm:$0xff]
        %v2538 = vld [vmem:[%s2531 + $0x30] sm:$0xff]
        %v2539 = vld [vmem:[%s2531 + $0x38] sm:$0xff]
        %v2540 = vld [vmem:[%s2531 + $0x40] sm:$0xff]
        %v2541 = vld [vmem:[%s2531 + $0x48] sm:$0xff]
        %v2542 = vld [vmem:[%s2531 + $0x50] sm:$0xff]
        %v2543 = vld [vmem:[%s2531 + $0x58] sm:$0xff]
        %v2544 = vld [vmem:[%s2531 + $0x60] sm:$0xff]
        %v2545 = vld [vmem:[%s2531 + $0x68] sm:$0xff]
        %v2546 = vld [vmem:[%s2531 + $0x70] sm:$0xff]
        %v2547 = vld [vmem:[%s2531 + $0x78] sm:$0xff]
        %v2548 = vld [vmem:[%s2531 + $0x80] sm:$0xff]
        %v2549 = vld [vmem:[%s2531 + $0x88] sm:$0xff]
        %v2550 = vld [vmem:[%s2531 + $0x90] sm:$0xff]
        %v2551 = vld [vmem:[%s2531 + $0x98] sm:$0xff]
        %v2552 = vld [vmem:[%s2531 + $0xa0] sm:$0xff]
        %v2553 = vld [vmem:[%s2531 + $0xa8] sm:$0xff]
        %v2554 = vld [vmem:[%s2531 + $0xb0] sm:$0xff]
        %v2555 = vld [vmem:[%s2531 + $0xb8] sm:$0xff]
        %v2556 = vld [vmem:[%s2531 + $0xc0] sm:$0xff]
        %v2557 = vld [vmem:[%s2531 + $0xc8] sm:$0xff]
        %v2558 = vld [vmem:[%s2531 + $0xd0] sm:$0xff]
        %v2559 = vld [vmem:[%s2531 + $0xd8] sm:$0xff]
        %v2560 = vld [vmem:[%s2531 + $0xe0] sm:$0xff]
        %v2561 = vld [vmem:[%s2531 + $0xe8] sm:$0xff]
        %v2562 = vld [vmem:[%s2531 + $0xf0] sm:$0xff]
        %v2563 = vld [vmem:[%s2531 + $0xf8] sm:$0xff]
        %v2564 = vld [vmem:[%s2531 + $0x100] sm:$0xff]
        %v2565 = vld [vmem:[%s2531 + $0x108] sm:$0xff]
        %v2566 = vld [vmem:[%s2531 + $0x110] sm:$0xff]
        %v2567 = vld [vmem:[%s2531 + $0x118] sm:$0xff]
        %v2568 = vld [vmem:[%s2531 + $0x120] sm:$0xff]
        %v2569 = vld [vmem:[%s2531 + $0x128] sm:$0xff]
        %v2570 = vld [vmem:[%s2531 + $0x130] sm:$0xff]
        %v2571 = vld [vmem:[%s2531 + $0x138] sm:$0xff]
        %v2572 = vld [vmem:[%s2531 + $0x140] sm:$0xff]
        %v2573 = vld [vmem:[%s2531 + $0x148] sm:$0xff]
        %v2574 = vld [vmem:[%s2531 + $0x150] sm:$0xff]
        %v2575 = vld [vmem:[%s2531 + $0x158] sm:$0xff]
        %v2576 = vld [vmem:[%s2531 + $0x160] sm:$0xff]
        %v2577 = vld [vmem:[%s2531 + $0x168] sm:$0xff]
        %v2578 = vld [vmem:[%s2531 + $0x170] sm:$0xff]
        %v2579 = vld [vmem:[%s2531 + $0x178] sm:$0xff]
        %v2580 = vld [vmem:[%s2531 + $0x180] sm:$0xff]
        %v2581 = vld [vmem:[%s2531 + $0x188] sm:$0xff]
        %v2583 = vsel %vm2065, %v2532, 0
        %v2586 = vsel %vm2065, %v2533, 0
        %v2589 = vsel %vm2065, %v2534, 0
        %v2592 = vsel %vm2065, %v2535, 0
        %v2595 = vsel %vm2065, %v2536, 0
        %v2598 = vsel %vm2065, %v2537, 0
        %v2601 = vsel %vm2065, %v2538, 0
        %v2604 = vsel %vm2065, %v2539, 0
        %v2607 = vsel %vm2065, %v2540, 0
        %v2610 = vsel %vm2065, %v2541, 0
        %v2613 = vsel %vm2065, %v2542, 0
        %v2616 = vsel %vm2065, %v2543, 0
        %v2619 = vsel %vm2065, %v2544, 0
        %v2622 = vsel %vm2065, %v2545, 0
        %v2625 = vsel %vm2065, %v2546, 0
        %v2628 = vsel %vm2065, %v2547, 0
        %v2631 = vsel %vm2065, %v2548, 0
        %v2634 = vsel %vm2065, %v2549, 0
        %v2637 = vsel %vm2065, %v2550, 0
        %v2640 = vsel %vm2065, %v2551, 0
        %v2643 = vsel %vm2065, %v2552, 0
        %v2646 = vsel %vm2065, %v2553, 0
        %v2649 = vsel %vm2065, %v2554, 0
        %v2652 = vsel %vm2065, %v2555, 0
        %v2655 = vsel %vm2065, %v2556, 0
        %v2658 = vsel %vm2065, %v2557, 0
        %v2661 = vsel %vm2065, %v2558, 0
        %v2664 = vsel %vm2065, %v2559, 0
        %v2667 = vsel %vm2065, %v2560, 0
        %v2670 = vsel %vm2065, %v2561, 0
        %v2673 = vsel %vm2065, %v2562, 0
        %v2676 = vsel %vm2065, %v2563, 0
        %v2679 = vsel %vm2065, %v2564, 0
        %v2682 = vsel %vm2065, %v2565, 0
        %v2685 = vsel %vm2065, %v2566, 0
        %v2688 = vsel %vm2065, %v2567, 0
        %v2691 = vsel %vm2065, %v2568, 0
        %v2694 = vsel %vm2065, %v2569, 0
        %v2697 = vsel %vm2065, %v2570, 0
        %v2700 = vsel %vm2065, %v2571, 0
        %v2703 = vsel %vm2065, %v2572, 0
        %v2706 = vsel %vm2065, %v2573, 0
        %v2709 = vsel %vm2065, %v2574, 0
        %v2712 = vsel %vm2065, %v2575, 0
        %v2715 = vsel %vm2065, %v2576, 0
        %v2718 = vsel %vm2065, %v2577, 0
        %v2721 = vsel %vm2065, %v2578, 0
        %v2724 = vsel %vm2065, %v2579, 0
        %v2727 = vsel %vm2065, %v2580, 0
        %v2730 = vsel %vm2065, %v2581, 0
        %2732 = vmatprep.subr.mxu0 0.0
        %2733 = vmatpush1.msra.mxu0 %v2004
        %2734 = vmatprep.subr.mxu0 0.0
        %2735 = vmatpush1.msra.mxu0 %v2005
        %2736 = vmatprep.subr.mxu0 0.0
        %2737 = vmatpush1.msra.mxu0 %v2006
        %2738 = vmatprep.subr.mxu0 0.0
        %2739 = vmatpush1.msra.mxu0 %v2007
        %2740 = vmatprep.subr.mxu0 0.0
        %2741 = vmatpush1.msra.mxu0 0.0
        %2742 = vmatprep.subr.mxu0 0.0
        %2743 = vmatpush1.msra.mxu0 0.0
        %2744 = vmatprep.subr.mxu0 0.0
        %2745 = vmatpush1.msra.mxu0 0.0
        %2746 = vmatprep.subr.mxu0 0.0
        %2747 = vmatpush1.msra.mxu0 0.0
        %2748 = vmatprep.subr.mxu0 0.0
        %2749 = vmatpush1.msra.mxu0 0.0
        %2750 = vmatprep.subr.mxu0 0.0
        %2751 = vmatpush1.msra.mxu0 0.0
        %2752 = vmatprep.subr.mxu0 0.0
        %2753 = vmatpush1.msra.mxu0 0.0
        %2754 = vmatprep.subr.mxu0 0.0
        %2755 = vmatpush1.msra.mxu0 0.0
        %2756 = vmatprep.subr.mxu0 0.0
        %2757 = vmatpush1.msra.mxu0 0.0
        %2758 = vmatprep.subr.mxu0 0.0
        %2759 = vmatpush1.msra.mxu0 0.0
        %2760 = vmatprep.subr.mxu0 0.0
        %2761 = vmatpush1.msra.mxu0 0.0
        %2762 = vmatprep.subr.mxu0 0.0
        %2763 = vmatpush1.msra.mxu0 0.0
        %2764 = vmatprep.subr.mxu0 0.0
        %2765 = vmatpush1.msra.mxu0 0.0
        %2766 = vmatprep.subr.mxu0 0.0
        %2767 = vmatpush1.msra.mxu0 0.0
        %2768 = vmatprep.subr.mxu0 0.0
        %2769 = vmatpush1.msra.mxu0 0.0
        %2770 = vmatprep.subr.mxu0 0.0
        %2771 = vmatpush1.msra.mxu0 0.0
        %2772 = vmatprep.subr.mxu0 0.0
        %2773 = vmatpush1.msra.mxu0 0.0
        %2774 = vmatprep.subr.mxu0 0.0
        %2775 = vmatpush1.msra.mxu0 0.0
        %2776 = vmatprep.subr.mxu0 0.0
        %2777 = vmatpush1.msra.mxu0 0.0
        %2778 = vmatprep.subr.mxu0 0.0
        %2779 = vmatpush1.msra.mxu0 0.0
        %2780 = vmatprep.subr.mxu0 0.0
        %2781 = vmatpush1.msra.mxu0 0.0
        %2782 = vmatprep.subr.mxu0 0.0
        %2783 = vmatpush1.msra.mxu0 0.0
        %2784 = vmatprep.subr.mxu0 0.0
        %2785 = vmatpush1.msra.mxu0 0.0
        %2786 = vmatprep.subr.mxu0 0.0
        %2787 = vmatpush1.msra.mxu0 0.0
        %2788 = vmatprep.subr.mxu0 0.0
        %2789 = vmatpush1.msra.mxu0 0.0
        %2790 = vmatprep.subr.mxu0 0.0
        %2791 = vmatpush1.msra.mxu0 0.0
        %2792 = vmatprep.subr.mxu0 0.0
        %2793 = vmatpush1.msra.mxu0 0.0
        %2794 = vmatprep.subr.mxu0 0.0
        %2795 = vmatpush1.msra.mxu0 0.0
        %2796 = vmatprep.mubr.f32.mxu0 0.0
        %2797 = vmatmul.mubr.f32.gmra.mrb[0].mxu0 %v2583
        %v2798 = vpop.f32.mrb[0].mxu0
        %v2799 = vadd.f32 %v2063, %v2798
        %v2800 = vpop.f32.mrb[0].mxu0
        %2801 = vmatprep.mubr.f32.mxu0 0.0
        %2802 = vmatmul.mubr.f32.gmra.mrb[0].mxu0 %v2586
        %v2803 = vpop.f32.mrb[0].mxu0
        %v2804 = vadd.f32 %v2063, %v2803
        %v2805 = vpop.f32.mrb[0].mxu0
        %2806 = vmatprep.mubr.f32.mxu0 0.0
        %2807 = vmatmul.mubr.f32.gmra.mrb[0].mxu0 %v2589
        %v2808 = vpop.f32.mrb[0].mxu0
        %v2809 = vadd.f32 %v2063, %v2808
        %v2810 = vpop.f32.mrb[0].mxu0
        %2811 = vmatprep.mubr.f32.mxu0 0.0
        %2812 = vmatmul.mubr.f32.gmra.mrb[0].mxu0 %v2592
        %v2813 = vpop.f32.mrb[0].mxu0
        %v2814 = vadd.f32 %v2063, %v2813
        %v2815 = vpop.f32.mrb[0].mxu0
        %2816 = vmatprep.mubr.f32.mxu0 0.0
        %2817 = vmatmul.mubr.f32.gmra.mrb[0].mxu0 %v2595
        %v2818 = vpop.f32.mrb[0].mxu0
        %v2819 = vadd.f32 %v2063, %v2818
        %v2820 = vpop.f32.mrb[0].mxu0
        %2821 = vmatprep.mubr.f32.mxu0 0.0
        %2822 = vmatmul.mubr.f32.gmra.mrb[0].mxu0 %v2598
        %v2823 = vpop.f32.mrb[0].mxu0
        %v2824 = vadd.f32 %v2063, %v2823
        %v2825 = vpop.f32.mrb[0].mxu0
        %2826 = vmatprep.mubr.f32.mxu0 0.0
        %2827 = vmatmul.mubr.f32.gmra.mrb[0].mxu0 %v2601
        %v2828 = vpop.f32.mrb[0].mxu0
        %v2829 = vadd.f32 %v2063, %v2828
        %v2830 = vpop.f32.mrb[0].mxu0
        %2831 = vmatprep.mubr.f32.mxu0 0.0
        %2832 = vmatmul.mubr.f32.gmra.mrb[0].mxu0 %v2604
        %v2833 = vpop.f32.mrb[0].mxu0
        %v2834 = vadd.f32 %v2063, %v2833
        %v2835 = vpop.f32.mrb[0].mxu0
        %2836 = vmatprep.mubr.f32.mxu0 0.0
        %2837 = vmatmul.mubr.f32.gmra.mrb[0].mxu0 %v2607
        %v2838 = vpop.f32.mrb[0].mxu0
        %v2839 = vadd.f32 %v2063, %v2838
        %v2840 = vpop.f32.mrb[0].mxu0
        %2841 = vmatprep.mubr.f32.mxu0 0.0
        %2842 = vmatmul.mubr.f32.gmra.mrb[0].mxu0 %v2610
        %v2843 = vpop.f32.mrb[0].mxu0
        %v2844 = vadd.f32 %v2063, %v2843
        %v2845 = vpop.f32.mrb[0].mxu0
        %2846 = vmatprep.mubr.f32.mxu0 0.0
        %2847 = vmatmul.mubr.f32.gmra.mrb[0].mxu0 %v2613
        %v2848 = vpop.f32.mrb[0].mxu0
        %v2849 = vadd.f32 %v2063, %v2848
        %v2850 = vpop.f32.mrb[0].mxu0
        %2851 = vmatprep.mubr.f32.mxu0 0.0
        %2852 = vmatmul.mubr.f32.gmra.mrb[0].mxu0 %v2616
        %v2853 = vpop.f32.mrb[0].mxu0
        %v2854 = vadd.f32 %v2063, %v2853
        %v2855 = vpop.f32.mrb[0].mxu0
        %2856 = vmatprep.mubr.f32.mxu0 0.0
        %2857 = vmatmul.mubr.f32.gmra.mrb[0].mxu0 %v2619
        %v2858 = vpop.f32.mrb[0].mxu0
        %v2859 = vadd.f32 %v2063, %v2858
        %v2860 = vpop.f32.mrb[0].mxu0
        %2861 = vmatprep.mubr.f32.mxu0 0.0
        %2862 = vmatmul.mubr.f32.gmra.mrb[0].mxu0 %v2622
        %v2863 = vpop.f32.mrb[0].mxu0
        %v2864 = vadd.f32 %v2063, %v2863
        %v2865 = vpop.f32.mrb[0].mxu0
        %2866 = vmatprep.mubr.f32.mxu0 0.0
        %2867 = vmatmul.mubr.f32.gmra.mrb[0].mxu0 %v2625
        %v2868 = vpop.f32.mrb[0].mxu0
        %v2869 = vadd.f32 %v2063, %v2868
        %v2870 = vpop.f32.mrb[0].mxu0
        %2871 = vmatprep.mubr.f32.mxu0 0.0
        %2872 = vmatmul.mubr.f32.gmra.mrb[0].mxu0 %v2628
        %v2873 = vpop.f32.mrb[0].mxu0
        %v2874 = vadd.f32 %v2063, %v2873
        %v2875 = vpop.f32.mrb[0].mxu0
        %2876 = vmatprep.mubr.f32.mxu0 0.0
        %2877 = vmatmul.mubr.f32.gmra.mrb[0].mxu0 %v2631
        %v2878 = vpop.f32.mrb[0].mxu0
        %v2879 = vadd.f32 %v2063, %v2878
        %v2880 = vpop.f32.mrb[0].mxu0
        %2881 = vmatprep.mubr.f32.mxu0 0.0
        %2882 = vmatmul.mubr.f32.gmra.mrb[0].mxu0 %v2634
        %v2883 = vpop.f32.mrb[0].mxu0
        %v2884 = vadd.f32 %v2063, %v2883
        %v2885 = vpop.f32.mrb[0].mxu0
        %2886 = vmatprep.mubr.f32.mxu0 0.0
        %2887 = vmatmul.mubr.f32.gmra.mrb[0].mxu0 %v2637
        %v2888 = vpop.f32.mrb[0].mxu0
        %v2889 = vadd.f32 %v2063, %v2888
        %v2890 = vpop.f32.mrb[0].mxu0
        %2891 = vmatprep.mubr.f32.mxu0 0.0
        %2892 = vmatmul.mubr.f32.gmra.mrb[0].mxu0 %v2640
        %v2893 = vpop.f32.mrb[0].mxu0
        %v2894 = vadd.f32 %v2063, %v2893
        %v2895 = vpop.f32.mrb[0].mxu0
        %2896 = vmatprep.mubr.f32.mxu0 0.0
        %2897 = vmatmul.mubr.f32.gmra.mrb[0].mxu0 %v2643
        %v2898 = vpop.f32.mrb[0].mxu0
        %v2899 = vadd.f32 %v2063, %v2898
        %v2900 = vpop.f32.mrb[0].mxu0
        %2901 = vmatprep.mubr.f32.mxu0 0.0
        %2902 = vmatmul.mubr.f32.gmra.mrb[0].mxu0 %v2646
        %v2903 = vpop.f32.mrb[0].mxu0
        %v2904 = vadd.f32 %v2063, %v2903
        %v2905 = vpop.f32.mrb[0].mxu0
        %2906 = vmatprep.mubr.f32.mxu0 0.0
        %2907 = vmatmul.mubr.f32.gmra.mrb[0].mxu0 %v2649
        %v2908 = vpop.f32.mrb[0].mxu0
        %v2909 = vadd.f32 %v2063, %v2908
        %v2910 = vpop.f32.mrb[0].mxu0
        %2911 = vmatprep.mubr.f32.mxu0 0.0
        %2912 = vmatmul.mubr.f32.gmra.mrb[0].mxu0 %v2652
        %v2913 = vpop.f32.mrb[0].mxu0
        %v2914 = vadd.f32 %v2063, %v2913
        %v2915 = vpop.f32.mrb[0].mxu0
        %2916 = vmatprep.mubr.f32.mxu0 0.0
        %2917 = vmatmul.mubr.f32.gmra.mrb[0].mxu0 %v2655
        %v2918 = vpop.f32.mrb[0].mxu0
        %v2919 = vadd.f32 %v2063, %v2918
        %v2920 = vpop.f32.mrb[0].mxu0
        %2921 = vmatprep.mubr.f32.mxu0 0.0
        %2922 = vmatmul.mubr.f32.gmra.mrb[0].mxu0 %v2658
        %v2923 = vpop.f32.mrb[0].mxu0
        %v2924 = vadd.f32 %v2063, %v2923
        %v2925 = vpop.f32.mrb[0].mxu0
        %2926 = vmatprep.mubr.f32.mxu0 0.0
        %2927 = vmatmul.mubr.f32.gmra.mrb[0].mxu0 %v2661
        %v2928 = vpop.f32.mrb[0].mxu0
        %v2929 = vadd.f32 %v2063, %v2928
        %v2930 = vpop.f32.mrb[0].mxu0
        %2931 = vmatprep.mubr.f32.mxu0 0.0
        %2932 = vmatmul.mubr.f32.gmra.mrb[0].mxu0 %v2664
        %v2933 = vpop.f32.mrb[0].mxu0
        %v2934 = vadd.f32 %v2063, %v2933
        %v2935 = vpop.f32.mrb[0].mxu0
        %2936 = vmatprep.mubr.f32.mxu0 0.0
        %2937 = vmatmul.mubr.f32.gmra.mrb[0].mxu0 %v2667
        %v2938 = vpop.f32.mrb[0].mxu0
        %v2939 = vadd.f32 %v2063, %v2938
        %v2940 = vpop.f32.mrb[0].mxu0
        %2941 = vmatprep.mubr.f32.mxu0 0.0
        %2942 = vmatmul.mubr.f32.gmra.mrb[0].mxu0 %v2670
        %v2943 = vpop.f32.mrb[0].mxu0
        %v2944 = vadd.f32 %v2063, %v2943
        %v2945 = vpop.f32.mrb[0].mxu0
        %2946 = vmatprep.mubr.f32.mxu0 0.0
        %2947 = vmatmul.mubr.f32.gmra.mrb[0].mxu0 %v2673
        %v2948 = vpop.f32.mrb[0].mxu0
        %v2949 = vadd.f32 %v2063, %v2948
        %v2950 = vpop.f32.mrb[0].mxu0
        %2951 = vmatprep.mubr.f32.mxu0 0.0
        %2952 = vmatmul.mubr.f32.gmra.mrb[0].mxu0 %v2676
        %v2953 = vpop.f32.mrb[0].mxu0
        %v2954 = vadd.f32 %v2063, %v2953
        %v2955 = vpop.f32.mrb[0].mxu0
        %2956 = vmatprep.mubr.f32.mxu0 0.0
        %2957 = vmatmul.mubr.f32.gmra.mrb[0].mxu0 %v2679
        %v2958 = vpop.f32.mrb[0].mxu0
        %v2959 = vadd.f32 %v2063, %v2958
        %v2960 = vpop.f32.mrb[0].mxu0
        %2961 = vmatprep.mubr.f32.mxu0 0.0
        %2962 = vmatmul.mubr.f32.gmra.mrb[0].mxu0 %v2682
        %v2963 = vpop.f32.mrb[0].mxu0
        %v2964 = vadd.f32 %v2063, %v2963
        %v2965 = vpop.f32.mrb[0].mxu0
        %2966 = vmatprep.mubr.f32.mxu0 0.0
        %2967 = vmatmul.mubr.f32.gmra.mrb[0].mxu0 %v2685
        %v2968 = vpop.f32.mrb[0].mxu0
        %v2969 = vadd.f32 %v2063, %v2968
        %v2970 = vpop.f32.mrb[0].mxu0
        %2971 = vmatprep.mubr.f32.mxu0 0.0
        %2972 = vmatmul.mubr.f32.gmra.mrb[0].mxu0 %v2688
        %v2973 = vpop.f32.mrb[0].mxu0
        %v2974 = vadd.f32 %v2063, %v2973
        %v2975 = vpop.f32.mrb[0].mxu0
        %2976 = vmatprep.mubr.f32.mxu0 0.0
        %2977 = vmatmul.mubr.f32.gmra.mrb[0].mxu0 %v2691
        %v2978 = vpop.f32.mrb[0].mxu0
        %v2979 = vadd.f32 %v2063, %v2978
        %v2980 = vpop.f32.mrb[0].mxu0
        %2981 = vmatprep.mubr.f32.mxu0 0.0
        %2982 = vmatmul.mubr.f32.gmra.mrb[0].mxu0 %v2694
        %v2983 = vpop.f32.mrb[0].mxu0
        %v2984 = vadd.f32 %v2063, %v2983
        %v2985 = vpop.f32.mrb[0].mxu0
        %2986 = vmatprep.mubr.f32.mxu0 0.0
        %2987 = vmatmul.mubr.f32.gmra.mrb[0].mxu0 %v2697
        %v2988 = vpop.f32.mrb[0].mxu0
        %v2989 = vadd.f32 %v2063, %v2988
        %v2990 = vpop.f32.mrb[0].mxu0
        %2991 = vmatprep.mubr.f32.mxu0 0.0
        %2992 = vmatmul.mubr.f32.gmra.mrb[0].mxu0 %v2700
        %v2993 = vpop.f32.mrb[0].mxu0
        %v2994 = vadd.f32 %v2063, %v2993
        %v2995 = vpop.f32.mrb[0].mxu0
        %2996 = vmatprep.mubr.f32.mxu0 0.0
        %2997 = vmatmul.mubr.f32.gmra.mrb[0].mxu0 %v2703
        %v2998 = vpop.f32.mrb[0].mxu0
        %v2999 = vadd.f32 %v2063, %v2998
        %v3000 = vpop.f32.mrb[0].mxu0
        %3001 = vmatprep.mubr.f32.mxu0 0.0
        %3002 = vmatmul.mubr.f32.gmra.mrb[0].mxu0 %v2706
        %v3003 = vpop.f32.mrb[0].mxu0
        %v3004 = vadd.f32 %v2063, %v3003
        %v3005 = vpop.f32.mrb[0].mxu0
        %3006 = vmatprep.mubr.f32.mxu0 0.0
        %3007 = vmatmul.mubr.f32.gmra.mrb[0].mxu0 %v2709
        %v3008 = vpop.f32.mrb[0].mxu0
        %v3009 = vadd.f32 %v2063, %v3008
        %v3010 = vpop.f32.mrb[0].mxu0
        %3011 = vmatprep.mubr.f32.mxu0 0.0
        %3012 = vmatmul.mubr.f32.gmra.mrb[0].mxu0 %v2712
        %v3013 = vpop.f32.mrb[0].mxu0
        %v3014 = vadd.f32 %v2063, %v3013
        %v3015 = vpop.f32.mrb[0].mxu0
        %3016 = vmatprep.mubr.f32.mxu0 0.0
        %3017 = vmatmul.mubr.f32.gmra.mrb[0].mxu0 %v2715
        %v3018 = vpop.f32.mrb[0].mxu0
        %v3019 = vadd.f32 %v2063, %v3018
        %v3020 = vpop.f32.mrb[0].mxu0
        %3021 = vmatprep.mubr.f32.mxu0 0.0
        %3022 = vmatmul.mubr.f32.gmra.mrb[0].mxu0 %v2718
        %v3023 = vpop.f32.mrb[0].mxu0
        %v3024 = vadd.f32 %v2063, %v3023
        %v3025 = vpop.f32.mrb[0].mxu0
        %3026 = vmatprep.mubr.f32.mxu0 0.0
        %3027 = vmatmul.mubr.f32.gmra.mrb[0].mxu0 %v2721
        %v3028 = vpop.f32.mrb[0].mxu0
        %v3029 = vadd.f32 %v2063, %v3028
        %v3030 = vpop.f32.mrb[0].mxu0
        %3031 = vmatprep.mubr.f32.mxu0 0.0
        %3032 = vmatmul.mubr.f32.gmra.mrb[0].mxu0 %v2724
        %v3033 = vpop.f32.mrb[0].mxu0
        %v3034 = vadd.f32 %v2063, %v3033
        %v3035 = vpop.f32.mrb[0].mxu0
        %3036 = vmatprep.mubr.f32.mxu0 0.0
        %3037 = vmatmul.mubr.f32.gmra.mrb[0].mxu0 %v2727
        %v3038 = vpop.f32.mrb[0].mxu0
        %v3039 = vadd.f32 %v2063, %v3038
        %v3040 = vpop.f32.mrb[0].mxu0
        %3041 = vmatprep.mubr.f32.mxu0 0.0
        %3042 = vmatmul.mubr.f32.gmra.mrb[0].mxu0 %v2730
        %v3043 = vpop.f32.mrb[0].mxu0
        %v3044 = vadd.f32 %v2063, %v3043
        %v3045 = vpop.f32.mrb[0].mxu0
        %3046 = vdwg.mxu0
        %v3047 = vmax.f32 %v2283, %v2799
        %v3048 = vmax.f32 %v2288, %v2804
        %v3049 = vmax.f32 %v2293, %v2809
        %v3050 = vmax.f32 %v2298, %v2814
        %v3051 = vmax.f32 %v2303, %v2819
        %v3052 = vmax.f32 %v2308, %v2824
        %v3053 = vmax.f32 %v2313, %v2829
        %v3054 = vmax.f32 %v2318, %v2834
        %v3055 = vmax.f32 %v2323, %v2839
        %v3056 = vmax.f32 %v2328, %v2844
        %v3057 = vmax.f32 %v2333, %v2849
        %v3058 = vmax.f32 %v2338, %v2854
        %v3059 = vmax.f32 %v2343, %v2859
        %v3060 = vmax.f32 %v2348, %v2864
        %v3061 = vmax.f32 %v2353, %v2869
        %v3062 = vmax.f32 %v2358, %v2874
        %v3063 = vmax.f32 %v2363, %v2879
        %v3064 = vmax.f32 %v2368, %v2884
        %v3065 = vmax.f32 %v2373, %v2889
        %v3066 = vmax.f32 %v2378, %v2894
        %v3067 = vmax.f32 %v2383, %v2899
        %v3068 = vmax.f32 %v2388, %v2904
        %v3069 = vmax.f32 %v2393, %v2909
        %v3070 = vmax.f32 %v2398, %v2914
        %v3071 = vmax.f32 %v2403, %v2919
        %v3072 = vmax.f32 %v2408, %v2924
        %v3073 = vmax.f32 %v2413, %v2929
        %v3074 = vmax.f32 %v2418, %v2934
        %v3075 = vmax.f32 %v2423, %v2939
        %v3076 = vmax.f32 %v2428, %v2944
        %v3077 = vmax.f32 %v2433, %v2949
        %v3078 = vmax.f32 %v2438, %v2954
        %v3079 = vmax.f32 %v2443, %v2959
        %v3080 = vmax.f32 %v2448, %v2964
        %v3081 = vmax.f32 %v2453, %v2969
        %v3082 = vmax.f32 %v2458, %v2974
        %v3083 = vmax.f32 %v2463, %v2979
        %v3084 = vmax.f32 %v2468, %v2984
        %v3085 = vmax.f32 %v2473, %v2989
        %v3086 = vmax.f32 %v2478, %v2994
        %v3087 = vmax.f32 %v2483, %v2999
        %v3088 = vmax.f32 %v2488, %v3004
        %v3089 = vmax.f32 %v2493, %v3009
        %v3090 = vmax.f32 %v2498, %v3014
        %v3091 = vmax.f32 %v2503, %v3019
        %v3092 = vmax.f32 %v2508, %v3024
        %v3093 = vmax.f32 %v2513, %v3029
        %v3094 = vmax.f32 %v2518, %v3034
        %v3095 = vmax.f32 %v2523, %v3039
        %v3096 = vmax.f32 %v2528, %v3044
        %s3097 = scalar_lea.vmem %s1976, 800 [#allocation2]
        %v3098 = vld [vmem:[%s3097] sm:$0xff]
        %v3099 = vld [vmem:[%s3097 + $0x8] sm:$0xff]
        %v3100 = vld [vmem:[%s3097 + $0x10] sm:$0xff]
        %v3101 = vld [vmem:[%s3097 + $0x18] sm:$0xff]
        %v3102 = vld [vmem:[%s3097 + $0x20] sm:$0xff]
        %v3103 = vld [vmem:[%s3097 + $0x28] sm:$0xff]
        %v3104 = vld [vmem:[%s3097 + $0x30] sm:$0xff]
        %v3105 = vld [vmem:[%s3097 + $0x38] sm:$0xff]
        %v3106 = vld [vmem:[%s3097 + $0x40] sm:$0xff]
        %v3107 = vld [vmem:[%s3097 + $0x48] sm:$0xff]
        %v3108 = vld [vmem:[%s3097 + $0x50] sm:$0xff]
        %v3109 = vld [vmem:[%s3097 + $0x58] sm:$0xff]
        %v3110 = vld [vmem:[%s3097 + $0x60] sm:$0xff]
        %v3111 = vld [vmem:[%s3097 + $0x68] sm:$0xff]
        %v3112 = vld [vmem:[%s3097 + $0x70] sm:$0xff]
        %v3113 = vld [vmem:[%s3097 + $0x78] sm:$0xff]
        %v3114 = vld [vmem:[%s3097 + $0x80] sm:$0xff]
        %v3115 = vld [vmem:[%s3097 + $0x88] sm:$0xff]
        %v3116 = vld [vmem:[%s3097 + $0x90] sm:$0xff]
        %v3117 = vld [vmem:[%s3097 + $0x98] sm:$0xff]
        %v3118 = vld [vmem:[%s3097 + $0xa0] sm:$0xff]
        %v3119 = vld [vmem:[%s3097 + $0xa8] sm:$0xff]
        %v3120 = vld [vmem:[%s3097 + $0xb0] sm:$0xff]
        %v3121 = vld [vmem:[%s3097 + $0xb8] sm:$0xff]
        %v3122 = vld [vmem:[%s3097 + $0xc0] sm:$0xff]
        %v3123 = vld [vmem:[%s3097 + $0xc8] sm:$0xff]
        %v3124 = vld [vmem:[%s3097 + $0xd0] sm:$0xff]
        %v3125 = vld [vmem:[%s3097 + $0xd8] sm:$0xff]
        %v3126 = vld [vmem:[%s3097 + $0xe0] sm:$0xff]
        %v3127 = vld [vmem:[%s3097 + $0xe8] sm:$0xff]
        %v3128 = vld [vmem:[%s3097 + $0xf0] sm:$0xff]
        %v3129 = vld [vmem:[%s3097 + $0xf8] sm:$0xff]
        %v3130 = vld [vmem:[%s3097 + $0x100] sm:$0xff]
        %v3131 = vld [vmem:[%s3097 + $0x108] sm:$0xff]
        %v3132 = vld [vmem:[%s3097 + $0x110] sm:$0xff]
        %v3133 = vld [vmem:[%s3097 + $0x118] sm:$0xff]
        %v3134 = vld [vmem:[%s3097 + $0x120] sm:$0xff]
        %v3135 = vld [vmem:[%s3097 + $0x128] sm:$0xff]
        %v3136 = vld [vmem:[%s3097 + $0x130] sm:$0xff]
        %v3137 = vld [vmem:[%s3097 + $0x138] sm:$0xff]
        %v3138 = vld [vmem:[%s3097 + $0x140] sm:$0xff]
        %v3139 = vld [vmem:[%s3097 + $0x148] sm:$0xff]
        %v3140 = vld [vmem:[%s3097 + $0x150] sm:$0xff]
        %v3141 = vld [vmem:[%s3097 + $0x158] sm:$0xff]
        %v3142 = vld [vmem:[%s3097 + $0x160] sm:$0xff]
        %v3143 = vld [vmem:[%s3097 + $0x168] sm:$0xff]
        %v3144 = vld [vmem:[%s3097 + $0x170] sm:$0xff]
        %v3145 = vld [vmem:[%s3097 + $0x178] sm:$0xff]
        %v3146 = vld [vmem:[%s3097 + $0x180] sm:$0xff]
        %v3147 = vld [vmem:[%s3097 + $0x188] sm:$0xff]
        %v3149 = vsel %vm2065, %v3098, 0
        %v3152 = vsel %vm2065, %v3099, 0
        %v3155 = vsel %vm2065, %v3100, 0
        %v3158 = vsel %vm2065, %v3101, 0
        %v3161 = vsel %vm2065, %v3102, 0
        %v3164 = vsel %vm2065, %v3103, 0
        %v3167 = vsel %vm2065, %v3104, 0
        %v3170 = vsel %vm2065, %v3105, 0
        %v3173 = vsel %vm2065, %v3106, 0
        %v3176 = vsel %vm2065, %v3107, 0
        %v3179 = vsel %vm2065, %v3108, 0
        %v3182 = vsel %vm2065, %v3109, 0
        %v3185 = vsel %vm2065, %v3110, 0
        %v3188 = vsel %vm2065, %v3111, 0
        %v3191 = vsel %vm2065, %v3112, 0
        %v3194 = vsel %vm2065, %v3113, 0
        %v3197 = vsel %vm2065, %v3114, 0
        %v3200 = vsel %vm2065, %v3115, 0
        %v3203 = vsel %vm2065, %v3116, 0
        %v3206 = vsel %vm2065, %v3117, 0
        %v3209 = vsel %vm2065, %v3118, 0
        %v3212 = vsel %vm2065, %v3119, 0
        %v3215 = vsel %vm2065, %v3120, 0
        %v3218 = vsel %vm2065, %v3121, 0
        %v3221 = vsel %vm2065, %v3122, 0
        %v3224 = vsel %vm2065, %v3123, 0
        %v3227 = vsel %vm2065, %v3124, 0
        %v3230 = vsel %vm2065, %v3125, 0
        %v3233 = vsel %vm2065, %v3126, 0
        %v3236 = vsel %vm2065, %v3127, 0
        %v3239 = vsel %vm2065, %v3128, 0
        %v3242 = vsel %vm2065, %v3129, 0
        %v3245 = vsel %vm2065, %v3130, 0
        %v3248 = vsel %vm2065, %v3131, 0
        %v3251 = vsel %vm2065, %v3132, 0
        %v3254 = vsel %vm2065, %v3133, 0
        %v3257 = vsel %vm2065, %v3134, 0
        %v3260 = vsel %vm2065, %v3135, 0
        %v3263 = vsel %vm2065, %v3136, 0
        %v3266 = vsel %vm2065, %v3137, 0
        %v3269 = vsel %vm2065, %v3138, 0
        %v3272 = vsel %vm2065, %v3139, 0
        %v3275 = vsel %vm2065, %v3140, 0
        %v3278 = vsel %vm2065, %v3141, 0
        %v3281 = vsel %vm2065, %v3142, 0
        %v3284 = vsel %vm2065, %v3143, 0
        %v3287 = vsel %vm2065, %v3144, 0
        %v3290 = vsel %vm2065, %v3145, 0
        %v3293 = vsel %vm2065, %v3146, 0
        %v3296 = vsel %vm2065, %v3147, 0
        %3298 = vmatprep.subr.mxu0 0.0
        %3299 = vmatpush1.msra.mxu0 %v2004
        %3300 = vmatprep.subr.mxu0 0.0
        %3301 = vmatpush1.msra.mxu0 %v2005
        %3302 = vmatprep.subr.mxu0 0.0
        %3303 = vmatpush1.msra.mxu0 %v2006
        %3304 = vmatprep.subr.mxu0 0.0
        %3305 = vmatpush1.msra.mxu0 %v2007
        %3306 = vmatprep.subr.mxu0 0.0
        %3307 = vmatpush1.msra.mxu0 0.0
        %3308 = vmatprep.subr.mxu0 0.0
        %3309 = vmatpush1.msra.mxu0 0.0
        %3310 = vmatprep.subr.mxu0 0.0
        %3311 = vmatpush1.msra.mxu0 0.0
        %3312 = vmatprep.subr.mxu0 0.0
        %3313 = vmatpush1.msra.mxu0 0.0
        %3314 = vmatprep.subr.mxu0 0.0
        %3315 = vmatpush1.msra.mxu0 0.0
        %3316 = vmatprep.subr.mxu0 0.0
        %3317 = vmatpush1.msra.mxu0 0.0
        %3318 = vmatprep.subr.mxu0 0.0
        %3319 = vmatpush1.msra.mxu0 0.0
        %3320 = vmatprep.subr.mxu0 0.0
        %3321 = vmatpush1.msra.mxu0 0.0
        %3322 = vmatprep.subr.mxu0 0.0
        %3323 = vmatpush1.msra.mxu0 0.0
        %3324 = vmatprep.subr.mxu0 0.0
        %3325 = vmatpush1.msra.mxu0 0.0
        %3326 = vmatprep.subr.mxu0 0.0
        %3327 = vmatpush1.msra.mxu0 0.0
        %3328 = vmatprep.subr.mxu0 0.0
        %3329 = vmatpush1.msra.mxu0 0.0
        %3330 = vmatprep.subr.mxu0 0.0
        %3331 = vmatpush1.msra.mxu0 0.0
        %3332 = vmatprep.subr.mxu0 0.0
        %3333 = vmatpush1.msra.mxu0 0.0
        %3334 = vmatprep.subr.mxu0 0.0
        %3335 = vmatpush1.msra.mxu0 0.0
        %3336 = vmatprep.subr.mxu0 0.0
        %3337 = vmatpush1.msra.mxu0 0.0
        %3338 = vmatprep.subr.mxu0 0.0
        %3339 = vmatpush1.msra.mxu0 0.0
        %3340 = vmatprep.subr.mxu0 0.0
        %3341 = vmatpush1.msra.mxu0 0.0
        %3342 = vmatprep.subr.mxu0 0.0
        %3343 = vmatpush1.msra.mxu0 0.0
        %3344 = vmatprep.subr.mxu0 0.0
        %3345 = vmatpush1.msra.mxu0 0.0
        %3346 = vmatprep.subr.mxu0 0.0
        %3347 = vmatpush1.msra.mxu0 0.0
        %3348 = vmatprep.subr.mxu0 0.0
        %3349 = vmatpush1.msra.mxu0 0.0
        %3350 = vmatprep.subr.mxu0 0.0
        %3351 = vmatpush1.msra.mxu0 0.0
        %3352 = vmatprep.subr.mxu0 0.0
        %3353 = vmatpush1.msra.mxu0 0.0
        %3354 = vmatprep.subr.mxu0 0.0
        %3355 = vmatpush1.msra.mxu0 0.0
        %3356 = vmatprep.subr.mxu0 0.0
        %3357 = vmatpush1.msra.mxu0 0.0
        %3358 = vmatprep.subr.mxu0 0.0
        %3359 = vmatpush1.msra.mxu0 0.0
        %3360 = vmatprep.subr.mxu0 0.0
        %3361 = vmatpush1.msra.mxu0 0.0
        %3362 = vmatprep.mubr.f32.mxu0 0.0
        %3363 = vmatmul.mubr.f32.gmra.mrb[0].mxu0 %v3149
        %v3364 = vpop.f32.mrb[0].mxu0
        %v3365 = vadd.f32 %v2063, %v3364
        %v3366 = vpop.f32.mrb[0].mxu0
        %3367 = vmatprep.mubr.f32.mxu0 0.0
        %3368 = vmatmul.mubr.f32.gmra.mrb[0].mxu0 %v3152
        %v3369 = vpop.f32.mrb[0].mxu0
        %v3370 = vadd.f32 %v2063, %v3369
        %v3371 = vpop.f32.mrb[0].mxu0
        %3372 = vmatprep.mubr.f32.mxu0 0.0
        %3373 = vmatmul.mubr.f32.gmra.mrb[0].mxu0 %v3155
        %v3374 = vpop.f32.mrb[0].mxu0
        %v3375 = vadd.f32 %v2063, %v3374
        %v3376 = vpop.f32.mrb[0].mxu0
        %3377 = vmatprep.mubr.f32.mxu0 0.0
        %3378 = vmatmul.mubr.f32.gmra.mrb[0].mxu0 %v3158
        %v3379 = vpop.f32.mrb[0].mxu0
        %v3380 = vadd.f32 %v2063, %v3379
        %v3381 = vpop.f32.mrb[0].mxu0
        %3382 = vmatprep.mubr.f32.mxu0 0.0
        %3383 = vmatmul.mubr.f32.gmra.mrb[0].mxu0 %v3161
        %v3384 = vpop.f32.mrb[0].mxu0
        %v3385 = vadd.f32 %v2063, %v3384
        %v3386 = vpop.f32.mrb[0].mxu0
        %3387 = vmatprep.mubr.f32.mxu0 0.0
        %3388 = vmatmul.mubr.f32.gmra.mrb[0].mxu0 %v3164
        %v3389 = vpop.f32.mrb[0].mxu0
        %v3390 = vadd.f32 %v2063, %v3389
        %v3391 = vpop.f32.mrb[0].mxu0
        %3392 = vmatprep.mubr.f32.mxu0 0.0
        %3393 = vmatmul.mubr.f32.gmra.mrb[0].mxu0 %v3167
        %v3394 = vpop.f32.mrb[0].mxu0
        %v3395 = vadd.f32 %v2063, %v3394
        %v3396 = vpop.f32.mrb[0].mxu0
        %3397 = vmatprep.mubr.f32.mxu0 0.0
        %3398 = vmatmul.mubr.f32.gmra.mrb[0].mxu0 %v3170
        %v3399 = vpop.f32.mrb[0].mxu0
        %v3400 = vadd.f32 %v2063, %v3399
        %v3401 = vpop.f32.mrb[0].mxu0
        %3402 = vmatprep.mubr.f32.mxu0 0.0
        %3403 = vmatmul.mubr.f32.gmra.mrb[0].mxu0 %v3173
        %v3404 = vpop.f32.mrb[0].mxu0
        %v3405 = vadd.f32 %v2063, %v3404
        %v3406 = vpop.f32.mrb[0].mxu0
        %3407 = vmatprep.mubr.f32.mxu0 0.0
        %3408 = vmatmul.mubr.f32.gmra.mrb[0].mxu0 %v3176
        %v3409 = vpop.f32.mrb[0].mxu0
        %v3410 = vadd.f32 %v2063, %v3409
        %v3411 = vpop.f32.mrb[0].mxu0
        %3412 = vmatprep.mubr.f32.mxu0 0.0
        %3413 = vmatmul.mubr.f32.gmra.mrb[0].mxu0 %v3179
        %v3414 = vpop.f32.mrb[0].mxu0
        %v3415 = vadd.f32 %v2063, %v3414
        %v3416 = vpop.f32.mrb[0].mxu0
        %3417 = vmatprep.mubr.f32.mxu0 0.0
        %3418 = vmatmul.mubr.f32.gmra.mrb[0].mxu0 %v3182
        %v3419 = vpop.f32.mrb[0].mxu0
        %v3420 = vadd.f32 %v2063, %v3419
        %v3421 = vpop.f32.mrb[0].mxu0
        %3422 = vmatprep.mubr.f32.mxu0 0.0
        %3423 = vmatmul.mubr.f32.gmra.mrb[0].mxu0 %v3185
        %v3424 = vpop.f32.mrb[0].mxu0
        %v3425 = vadd.f32 %v2063, %v3424
        %v3426 = vpop.f32.mrb[0].mxu0
        %3427 = vmatprep.mubr.f32.mxu0 0.0
        %3428 = vmatmul.mubr.f32.gmra.mrb[0].mxu0 %v3188
        %v3429 = vpop.f32.mrb[0].mxu0
        %v3430 = vadd.f32 %v2063, %v3429
        %v3431 = vpop.f32.mrb[0].mxu0
        %3432 = vmatprep.mubr.f32.mxu0 0.0
        %3433 = vmatmul.mubr.f32.gmra.mrb[0].mxu0 %v3191
        %v3434 = vpop.f32.mrb[0].mxu0
        %v3435 = vadd.f32 %v2063, %v3434
        %v3436 = vpop.f32.mrb[0].mxu0
        %3437 = vmatprep.mubr.f32.mxu0 0.0
        %3438 = vmatmul.mubr.f32.gmra.mrb[0].mxu0 %v3194
        %v3439 = vpop.f32.mrb[0].mxu0
        %v3440 = vadd.f32 %v2063, %v3439
        %v3441 = vpop.f32.mrb[0].mxu0
        %3442 = vmatprep.mubr.f32.mxu0 0.0
        %3443 = vmatmul.mubr.f32.gmra.mrb[0].mxu0 %v3197
        %v3444 = vpop.f32.mrb[0].mxu0
        %v3445 = vadd.f32 %v2063, %v3444
        %v3446 = vpop.f32.mrb[0].mxu0
        %3447 = vmatprep.mubr.f32.mxu0 0.0
        %3448 = vmatmul.mubr.f32.gmra.mrb[0].mxu0 %v3200
        %v3449 = vpop.f32.mrb[0].mxu0
        %v3450 = vadd.f32 %v2063, %v3449
        %v3451 = vpop.f32.mrb[0].mxu0
        %3452 = vmatprep.mubr.f32.mxu0 0.0
        %3453 = vmatmul.mubr.f32.gmra.mrb[0].mxu0 %v3203
        %v3454 = vpop.f32.mrb[0].mxu0
        %v3455 = vadd.f32 %v2063, %v3454
        %v3456 = vpop.f32.mrb[0].mxu0
        %3457 = vmatprep.mubr.f32.mxu0 0.0
        %3458 = vmatmul.mubr.f32.gmra.mrb[0].mxu0 %v3206
        %v3459 = vpop.f32.mrb[0].mxu0
        %v3460 = vadd.f32 %v2063, %v3459
        %v3461 = vpop.f32.mrb[0].mxu0
        %3462 = vmatprep.mubr.f32.mxu0 0.0
        %3463 = vmatmul.mubr.f32.gmra.mrb[0].mxu0 %v3209
        %v3464 = vpop.f32.mrb[0].mxu0
        %v3465 = vadd.f32 %v2063, %v3464
        %v3466 = vpop.f32.mrb[0].mxu0
        %3467 = vmatprep.mubr.f32.mxu0 0.0
        %3468 = vmatmul.mubr.f32.gmra.mrb[0].mxu0 %v3212
        %v3469 = vpop.f32.mrb[0].mxu0
        %v3470 = vadd.f32 %v2063, %v3469
        %v3471 = vpop.f32.mrb[0].mxu0
        %3472 = vmatprep.mubr.f32.mxu0 0.0
        %3473 = vmatmul.mubr.f32.gmra.mrb[0].mxu0 %v3215
        %v3474 = vpop.f32.mrb[0].mxu0
        %v3475 = vadd.f32 %v2063, %v3474
        %v3476 = vpop.f32.mrb[0].mxu0
        %3477 = vmatprep.mubr.f32.mxu0 0.0
        %3478 = vmatmul.mubr.f32.gmra.mrb[0].mxu0 %v3218
        %v3479 = vpop.f32.mrb[0].mxu0
        %v3480 = vadd.f32 %v2063, %v3479
        %v3481 = vpop.f32.mrb[0].mxu0
        %3482 = vmatprep.mubr.f32.mxu0 0.0
        %3483 = vmatmul.mubr.f32.gmra.mrb[0].mxu0 %v3221
        %v3484 = vpop.f32.mrb[0].mxu0
        %v3485 = vadd.f32 %v2063, %v3484
        %v3486 = vpop.f32.mrb[0].mxu0
        %3487 = vmatprep.mubr.f32.mxu0 0.0
        %3488 = vmatmul.mubr.f32.gmra.mrb[0].mxu0 %v3224
        %v3489 = vpop.f32.mrb[0].mxu0
        %v3490 = vadd.f32 %v2063, %v3489
        %v3491 = vpop.f32.mrb[0].mxu0
        %3492 = vmatprep.mubr.f32.mxu0 0.0
        %3493 = vmatmul.mubr.f32.gmra.mrb[0].mxu0 %v3227
        %v3494 = vpop.f32.mrb[0].mxu0
        %v3495 = vadd.f32 %v2063, %v3494
        %v3496 = vpop.f32.mrb[0].mxu0
        %3497 = vmatprep.mubr.f32.mxu0 0.0
        %3498 = vmatmul.mubr.f32.gmra.mrb[0].mxu0 %v3230
        %v3499 = vpop.f32.mrb[0].mxu0
        %v3500 = vadd.f32 %v2063, %v3499
        %v3501 = vpop.f32.mrb[0].mxu0
        %3502 = vmatprep.mubr.f32.mxu0 0.0
        %3503 = vmatmul.mubr.f32.gmra.mrb[0].mxu0 %v3233
        %v3504 = vpop.f32.mrb[0].mxu0
        %v3505 = vadd.f32 %v2063, %v3504
        %v3506 = vpop.f32.mrb[0].mxu0
        %3507 = vmatprep.mubr.f32.mxu0 0.0
        %3508 = vmatmul.mubr.f32.gmra.mrb[0].mxu0 %v3236
        %v3509 = vpop.f32.mrb[0].mxu0
        %v3510 = vadd.f32 %v2063, %v3509
        %v3511 = vpop.f32.mrb[0].mxu0
        %3512 = vmatprep.mubr.f32.mxu0 0.0
        %3513 = vmatmul.mubr.f32.gmra.mrb[0].mxu0 %v3239
        %v3514 = vpop.f32.mrb[0].mxu0
        %v3515 = vadd.f32 %v2063, %v3514
        %v3516 = vpop.f32.mrb[0].mxu0
        %3517 = vmatprep.mubr.f32.mxu0 0.0
        %3518 = vmatmul.mubr.f32.gmra.mrb[0].mxu0 %v3242
        %v3519 = vpop.f32.mrb[0].mxu0
        %v3520 = vadd.f32 %v2063, %v3519
        %v3521 = vpop.f32.mrb[0].mxu0
        %3522 = vmatprep.mubr.f32.mxu0 0.0
        %3523 = vmatmul.mubr.f32.gmra.mrb[0].mxu0 %v3245
        %v3524 = vpop.f32.mrb[0].mxu0
        %v3525 = vadd.f32 %v2063, %v3524
        %v3526 = vpop.f32.mrb[0].mxu0
        %3527 = vmatprep.mubr.f32.mxu0 0.0
        %3528 = vmatmul.mubr.f32.gmra.mrb[0].mxu0 %v3248
        %v3529 = vpop.f32.mrb[0].mxu0
        %v3530 = vadd.f32 %v2063, %v3529
        %v3531 = vpop.f32.mrb[0].mxu0
        %3532 = vmatprep.mubr.f32.mxu0 0.0
        %3533 = vmatmul.mubr.f32.gmra.mrb[0].mxu0 %v3251
        %v3534 = vpop.f32.mrb[0].mxu0
        %v3535 = vadd.f32 %v2063, %v3534
        %v3536 = vpop.f32.mrb[0].mxu0
        %3537 = vmatprep.mubr.f32.mxu0 0.0
        %3538 = vmatmul.mubr.f32.gmra.mrb[0].mxu0 %v3254
        %v3539 = vpop.f32.mrb[0].mxu0
        %v3540 = vadd.f32 %v2063, %v3539
        %v3541 = vpop.f32.mrb[0].mxu0
        %3542 = vmatprep.mubr.f32.mxu0 0.0
        %3543 = vmatmul.mubr.f32.gmra.mrb[0].mxu0 %v3257
        %v3544 = vpop.f32.mrb[0].mxu0
        %v3545 = vadd.f32 %v2063, %v3544
        %v3546 = vpop.f32.mrb[0].mxu0
        %3547 = vmatprep.mubr.f32.mxu0 0.0
        %3548 = vmatmul.mubr.f32.gmra.mrb[0].mxu0 %v3260
        %v3549 = vpop.f32.mrb[0].mxu0
        %v3550 = vadd.f32 %v2063, %v3549
        %v3551 = vpop.f32.mrb[0].mxu0
        %3552 = vmatprep.mubr.f32.mxu0 0.0
        %3553 = vmatmul.mubr.f32.gmra.mrb[0].mxu0 %v3263
        %v3554 = vpop.f32.mrb[0].mxu0
        %v3555 = vadd.f32 %v2063, %v3554
        %v3556 = vpop.f32.mrb[0].mxu0
        %3557 = vmatprep.mubr.f32.mxu0 0.0
        %3558 = vmatmul.mubr.f32.gmra.mrb[0].mxu0 %v3266
        %v3559 = vpop.f32.mrb[0].mxu0
        %v3560 = vadd.f32 %v2063, %v3559
        %v3561 = vpop.f32.mrb[0].mxu0
        %3562 = vmatprep.mubr.f32.mxu0 0.0
        %3563 = vmatmul.mubr.f32.gmra.mrb[0].mxu0 %v3269
        %v3564 = vpop.f32.mrb[0].mxu0
        %v3565 = vadd.f32 %v2063, %v3564
        %v3566 = vpop.f32.mrb[0].mxu0
        %3567 = vmatprep.mubr.f32.mxu0 0.0
        %3568 = vmatmul.mubr.f32.gmra.mrb[0].mxu0 %v3272
        %v3569 = vpop.f32.mrb[0].mxu0
        %v3570 = vadd.f32 %v2063, %v3569
        %v3571 = vpop.f32.mrb[0].mxu0
        %3572 = vmatprep.mubr.f32.mxu0 0.0
        %3573 = vmatmul.mubr.f32.gmra.mrb[0].mxu0 %v3275
        %v3574 = vpop.f32.mrb[0].mxu0
        %v3575 = vadd.f32 %v2063, %v3574
        %v3576 = vpop.f32.mrb[0].mxu0
        %3577 = vmatprep.mubr.f32.mxu0 0.0
        %3578 = vmatmul.mubr.f32.gmra.mrb[0].mxu0 %v3278
        %v3579 = vpop.f32.mrb[0].mxu0
        %v3580 = vadd.f32 %v2063, %v3579
        %v3581 = vpop.f32.mrb[0].mxu0
        %3582 = vmatprep.mubr.f32.mxu0 0.0
        %3583 = vmatmul.mubr.f32.gmra.mrb[0].mxu0 %v3281
        %v3584 = vpop.f32.mrb[0].mxu0
        %v3585 = vadd.f32 %v2063, %v3584
        %v3586 = vpop.f32.mrb[0].mxu0
        %3587 = vmatprep.mubr.f32.mxu0 0.0
        %3588 = vmatmul.mubr.f32.gmra.mrb[0].mxu0 %v3284
        %v3589 = vpop.f32.mrb[0].mxu0
        %v3590 = vadd.f32 %v2063, %v3589
        %v3591 = vpop.f32.mrb[0].mxu0
        %3592 = vmatprep.mubr.f32.mxu0 0.0
        %3593 = vmatmul.mubr.f32.gmra.mrb[0].mxu0 %v3287
        %v3594 = vpop.f32.mrb[0].mxu0
        %v3595 = vadd.f32 %v2063, %v3594
        %v3596 = vpop.f32.mrb[0].mxu0
        %3597 = vmatprep.mubr.f32.mxu0 0.0
        %3598 = vmatmul.mubr.f32.gmra.mrb[0].mxu0 %v3290
        %v3599 = vpop.f32.mrb[0].mxu0
        %v3600 = vadd.f32 %v2063, %v3599
        %v3601 = vpop.f32.mrb[0].mxu0
        %3602 = vmatprep.mubr.f32.mxu0 0.0
        %3603 = vmatmul.mubr.f32.gmra.mrb[0].mxu0 %v3293
        %v3604 = vpop.f32.mrb[0].mxu0
        %v3605 = vadd.f32 %v2063, %v3604
        %v3606 = vpop.f32.mrb[0].mxu0
        %3607 = vmatprep.mubr.f32.mxu0 0.0
        %3608 = vmatmul.mubr.f32.gmra.mrb[0].mxu0 %v3296
        %v3609 = vpop.f32.mrb[0].mxu0
        %v3610 = vadd.f32 %v2063, %v3609
        %v3611 = vpop.f32.mrb[0].mxu0
        %3612 = vdwg.mxu0
        %v3613 = vmax.f32 %v3047, %v3365
        %v3614 = vmax.f32 %v3048, %v3370
        %v3615 = vmax.f32 %v3049, %v3375
        %v3616 = vmax.f32 %v3050, %v3380
        %v3617 = vmax.f32 %v3051, %v3385
        %v3618 = vmax.f32 %v3052, %v3390
        %v3619 = vmax.f32 %v3053, %v3395
        %v3620 = vmax.f32 %v3054, %v3400
        %v3621 = vmax.f32 %v3055, %v3405
        %v3622 = vmax.f32 %v3056, %v3410
        %v3623 = vmax.f32 %v3057, %v3415
        %v3624 = vmax.f32 %v3058, %v3420
        %v3625 = vmax.f32 %v3059, %v3425
        %v3626 = vmax.f32 %v3060, %v3430
        %v3627 = vmax.f32 %v3061, %v3435
        %v3628 = vmax.f32 %v3062, %v3440
        %v3629 = vmax.f32 %v3063, %v3445
        %v3630 = vmax.f32 %v3064, %v3450
        %v3631 = vmax.f32 %v3065, %v3455
        %v3632 = vmax.f32 %v3066, %v3460
        %v3633 = vmax.f32 %v3067, %v3465
        %v3634 = vmax.f32 %v3068, %v3470
        %v3635 = vmax.f32 %v3069, %v3475
        %v3636 = vmax.f32 %v3070, %v3480
        %v3637 = vmax.f32 %v3071, %v3485
        %v3638 = vmax.f32 %v3072, %v3490
        %v3639 = vmax.f32 %v3073, %v3495
        %v3640 = vmax.f32 %v3074, %v3500
        %v3641 = vmax.f32 %v3075, %v3505
        %v3642 = vmax.f32 %v3076, %v3510
        %v3643 = vmax.f32 %v3077, %v3515
        %v3644 = vmax.f32 %v3078, %v3520
        %v3645 = vmax.f32 %v3079, %v3525
        %v3646 = vmax.f32 %v3080, %v3530
        %v3647 = vmax.f32 %v3081, %v3535
        %v3648 = vmax.f32 %v3082, %v3540
        %v3649 = vmax.f32 %v3083, %v3545
        %v3650 = vmax.f32 %v3084, %v3550
        %v3651 = vmax.f32 %v3085, %v3555
        %v3652 = vmax.f32 %v3086, %v3560
        %v3653 = vmax.f32 %v3087, %v3565
        %v3654 = vmax.f32 %v3088, %v3570
        %v3655 = vmax.f32 %v3089, %v3575
        %v3656 = vmax.f32 %v3090, %v3580
        %v3657 = vmax.f32 %v3091, %v3585
        %v3658 = vmax.f32 %v3092, %v3590
        %v3659 = vmax.f32 %v3093, %v3595
        %v3660 = vmax.f32 %v3094, %v3600
        %v3661 = vmax.f32 %v3095, %v3605
        %v3662 = vmax.f32 %v3096, %v3610
        %s3663 = scalar_lea.vmem %s1976, 1200 [#allocation2]
        %v3664 = vld [vmem:[%s3663] sm:$0xff]
        %v3665 = vld [vmem:[%s3663 + $0x8] sm:$0xff]
        %v3666 = vld [vmem:[%s3663 + $0x10] sm:$0xff]
        %v3667 = vld [vmem:[%s3663 + $0x18] sm:$0xff]
        %v3668 = vld [vmem:[%s3663 + $0x20] sm:$0xff]
        %v3669 = vld [vmem:[%s3663 + $0x28] sm:$0xff]
        %v3670 = vld [vmem:[%s3663 + $0x30] sm:$0xff]
        %v3671 = vld [vmem:[%s3663 + $0x38] sm:$0xff]
        %v3672 = vld [vmem:[%s3663 + $0x40] sm:$0xff]
        %v3673 = vld [vmem:[%s3663 + $0x48] sm:$0xff]
        %v3674 = vld [vmem:[%s3663 + $0x50] sm:$0xff]
        %v3675 = vld [vmem:[%s3663 + $0x58] sm:$0xff]
        %v3676 = vld [vmem:[%s3663 + $0x60] sm:$0xff]
        %v3677 = vld [vmem:[%s3663 + $0x68] sm:$0xff]
        %v3678 = vld [vmem:[%s3663 + $0x70] sm:$0xff]
        %v3679 = vld [vmem:[%s3663 + $0x78] sm:$0xff]
        %v3680 = vld [vmem:[%s3663 + $0x80] sm:$0xff]
        %v3681 = vld [vmem:[%s3663 + $0x88] sm:$0xff]
        %v3682 = vld [vmem:[%s3663 + $0x90] sm:$0xff]
        %v3683 = vld [vmem:[%s3663 + $0x98] sm:$0xff]
        %v3684 = vld [vmem:[%s3663 + $0xa0] sm:$0xff]
        %v3685 = vld [vmem:[%s3663 + $0xa8] sm:$0xff]
        %v3686 = vld [vmem:[%s3663 + $0xb0] sm:$0xff]
        %v3687 = vld [vmem:[%s3663 + $0xb8] sm:$0xff]
        %v3688 = vld [vmem:[%s3663 + $0xc0] sm:$0xff]
        %v3689 = vld [vmem:[%s3663 + $0xc8] sm:$0xff]
        %v3690 = vld [vmem:[%s3663 + $0xd0] sm:$0xff]
        %v3691 = vld [vmem:[%s3663 + $0xd8] sm:$0xff]
        %v3692 = vld [vmem:[%s3663 + $0xe0] sm:$0xff]
        %v3693 = vld [vmem:[%s3663 + $0xe8] sm:$0xff]
        %v3694 = vld [vmem:[%s3663 + $0xf0] sm:$0xff]
        %v3695 = vld [vmem:[%s3663 + $0xf8] sm:$0xff]
        %v3696 = vld [vmem:[%s3663 + $0x100] sm:$0xff]
        %v3697 = vld [vmem:[%s3663 + $0x108] sm:$0xff]
        %v3698 = vld [vmem:[%s3663 + $0x110] sm:$0xff]
        %v3699 = vld [vmem:[%s3663 + $0x118] sm:$0xff]
        %v3700 = vld [vmem:[%s3663 + $0x120] sm:$0xff]
        %v3701 = vld [vmem:[%s3663 + $0x128] sm:$0xff]
        %v3702 = vld [vmem:[%s3663 + $0x130] sm:$0xff]
        %v3703 = vld [vmem:[%s3663 + $0x138] sm:$0xff]
        %v3704 = vld [vmem:[%s3663 + $0x140] sm:$0xff]
        %v3705 = vld [vmem:[%s3663 + $0x148] sm:$0xff]
        %v3706 = vld [vmem:[%s3663 + $0x150] sm:$0xff]
        %v3707 = vld [vmem:[%s3663 + $0x158] sm:$0xff]
        %v3708 = vld [vmem:[%s3663 + $0x160] sm:$0xff]
        %v3709 = vld [vmem:[%s3663 + $0x168] sm:$0xff]
        %v3710 = vld [vmem:[%s3663 + $0x170] sm:$0xff]
        %v3711 = vld [vmem:[%s3663 + $0x178] sm:$0xff]
        %v3712 = vld [vmem:[%s3663 + $0x180] sm:$0xff]
        %v3713 = vld [vmem:[%s3663 + $0x188] sm:$0xff]
        %v3715 = vsel %vm2065, %v3664, 0
        %v3718 = vsel %vm2065, %v3665, 0
        %v3721 = vsel %vm2065, %v3666, 0
        %v3724 = vsel %vm2065, %v3667, 0
        %v3727 = vsel %vm2065, %v3668, 0
        %v3730 = vsel %vm2065, %v3669, 0
        %v3733 = vsel %vm2065, %v3670, 0
        %v3736 = vsel %vm2065, %v3671, 0
        %v3739 = vsel %vm2065, %v3672, 0
        %v3742 = vsel %vm2065, %v3673, 0
        %v3745 = vsel %vm2065, %v3674, 0
        %v3748 = vsel %vm2065, %v3675, 0
        %v3751 = vsel %vm2065, %v3676, 0
        %v3754 = vsel %vm2065, %v3677, 0
        %v3757 = vsel %vm2065, %v3678, 0
        %v3760 = vsel %vm2065, %v3679, 0
        %v3763 = vsel %vm2065, %v3680, 0
        %v3766 = vsel %vm2065, %v3681, 0
        %v3769 = vsel %vm2065, %v3682, 0
        %v3772 = vsel %vm2065, %v3683, 0
        %v3775 = vsel %vm2065, %v3684, 0
        %v3778 = vsel %vm2065, %v3685, 0
        %v3781 = vsel %vm2065, %v3686, 0
        %v3784 = vsel %vm2065, %v3687, 0
        %v3787 = vsel %vm2065, %v3688, 0
        %v3790 = vsel %vm2065, %v3689, 0
        %v3793 = vsel %vm2065, %v3690, 0
        %v3796 = vsel %vm2065, %v3691, 0
        %v3799 = vsel %vm2065, %v3692, 0
        %v3802 = vsel %vm2065, %v3693, 0
        %v3805 = vsel %vm2065, %v3694, 0
        %v3808 = vsel %vm2065, %v3695, 0
        %v3811 = vsel %vm2065, %v3696, 0
        %v3814 = vsel %vm2065, %v3697, 0
        %v3817 = vsel %vm2065, %v3698, 0
        %v3820 = vsel %vm2065, %v3699, 0
        %v3823 = vsel %vm2065, %v3700, 0
        %v3826 = vsel %vm2065, %v3701, 0
        %v3829 = vsel %vm2065, %v3702, 0
        %v3832 = vsel %vm2065, %v3703, 0
        %v3835 = vsel %vm2065, %v3704, 0
        %v3838 = vsel %vm2065, %v3705, 0
        %v3841 = vsel %vm2065, %v3706, 0
        %v3844 = vsel %vm2065, %v3707, 0
        %v3847 = vsel %vm2065, %v3708, 0
        %v3850 = vsel %vm2065, %v3709, 0
        %v3853 = vsel %vm2065, %v3710, 0
        %v3856 = vsel %vm2065, %v3711, 0
        %v3859 = vsel %vm2065, %v3712, 0
        %v3862 = vsel %vm2065, %v3713, 0
        %3864 = vmatprep.subr.mxu0 0.0
        %3865 = vmatpush1.msra.mxu0 %v2004
        %3866 = vmatprep.subr.mxu0 0.0
        %3867 = vmatpush1.msra.mxu0 %v2005
        %3868 = vmatprep.subr.mxu0 0.0
        %3869 = vmatpush1.msra.mxu0 %v2006
        %3870 = vmatprep.subr.mxu0 0.0
        %3871 = vmatpush1.msra.mxu0 %v2007
        %3872 = vmatprep.subr.mxu0 0.0
        %3873 = vmatpush1.msra.mxu0 0.0
        %3874 = vmatprep.subr.mxu0 0.0
        %3875 = vmatpush1.msra.mxu0 0.0
        %3876 = vmatprep.subr.mxu0 0.0
        %3877 = vmatpush1.msra.mxu0 0.0
        %3878 = vmatprep.subr.mxu0 0.0
        %3879 = vmatpush1.msra.mxu0 0.0
        %3880 = vmatprep.subr.mxu0 0.0
        %3881 = vmatpush1.msra.mxu0 0.0
        %3882 = vmatprep.subr.mxu0 0.0
        %3883 = vmatpush1.msra.mxu0 0.0
        %3884 = vmatprep.subr.mxu0 0.0
        %3885 = vmatpush1.msra.mxu0 0.0
        %3886 = vmatprep.subr.mxu0 0.0
        %3887 = vmatpush1.msra.mxu0 0.0
        %3888 = vmatprep.subr.mxu0 0.0
        %3889 = vmatpush1.msra.mxu0 0.0
        %3890 = vmatprep.subr.mxu0 0.0
        %3891 = vmatpush1.msra.mxu0 0.0
        %3892 = vmatprep.subr.mxu0 0.0
        %3893 = vmatpush1.msra.mxu0 0.0
        %3894 = vmatprep.subr.mxu0 0.0
        %3895 = vmatpush1.msra.mxu0 0.0
        %3896 = vmatprep.subr.mxu0 0.0
        %3897 = vmatpush1.msra.mxu0 0.0
        %3898 = vmatprep.subr.mxu0 0.0
        %3899 = vmatpush1.msra.mxu0 0.0
        %3900 = vmatprep.subr.mxu0 0.0
        %3901 = vmatpush1.msra.mxu0 0.0
        %3902 = vmatprep.subr.mxu0 0.0
        %3903 = vmatpush1.msra.mxu0 0.0
        %3904 = vmatprep.subr.mxu0 0.0
        %3905 = vmatpush1.msra.mxu0 0.0
        %3906 = vmatprep.subr.mxu0 0.0
        %3907 = vmatpush1.msra.mxu0 0.0
        %3908 = vmatprep.subr.mxu0 0.0
        %3909 = vmatpush1.msra.mxu0 0.0
        %3910 = vmatprep.subr.mxu0 0.0
        %3911 = vmatpush1.msra.mxu0 0.0
        %3912 = vmatprep.subr.mxu0 0.0
        %3913 = vmatpush1.msra.mxu0 0.0
        %3914 = vmatprep.subr.mxu0 0.0
        %3915 = vmatpush1.msra.mxu0 0.0
        %3916 = vmatprep.subr.mxu0 0.0
        %3917 = vmatpush1.msra.mxu0 0.0
        %3918 = vmatprep.subr.mxu0 0.0
        %3919 = vmatpush1.msra.mxu0 0.0
        %3920 = vmatprep.subr.mxu0 0.0
        %3921 = vmatpush1.msra.mxu0 0.0
        %3922 = vmatprep.subr.mxu0 0.0
        %3923 = vmatpush1.msra.mxu0 0.0
        %3924 = vmatprep.subr.mxu0 0.0
        %3925 = vmatpush1.msra.mxu0 0.0
        %3926 = vmatprep.subr.mxu0 0.0
        %3927 = vmatpush1.msra.mxu0 0.0
        %3928 = vmatprep.mubr.f32.mxu0 0.0
        %3929 = vmatmul.mubr.f32.gmra.mrb[0].mxu0 %v3715
        %v3930 = vpop.f32.mrb[0].mxu0
        %v3931 = vadd.f32 %v2063, %v3930
        %v3932 = vpop.f32.mrb[0].mxu0
        %3933 = vmatprep.mubr.f32.mxu0 0.0
        %3934 = vmatmul.mubr.f32.gmra.mrb[0].mxu0 %v3718
        %v3935 = vpop.f32.mrb[0].mxu0
        %v3936 = vadd.f32 %v2063, %v3935
        %v3937 = vpop.f32.mrb[0].mxu0
        %3938 = vmatprep.mubr.f32.mxu0 0.0
        %3939 = vmatmul.mubr.f32.gmra.mrb[0].mxu0 %v3721
        %v3940 = vpop.f32.mrb[0].mxu0
        %v3941 = vadd.f32 %v2063, %v3940
        %v3942 = vpop.f32.mrb[0].mxu0
        %3943 = vmatprep.mubr.f32.mxu0 0.0
        %3944 = vmatmul.mubr.f32.gmra.mrb[0].mxu0 %v3724
        %v3945 = vpop.f32.mrb[0].mxu0
        %v3946 = vadd.f32 %v2063, %v3945
        %v3947 = vpop.f32.mrb[0].mxu0
        %3948 = vmatprep.mubr.f32.mxu0 0.0
        %3949 = vmatmul.mubr.f32.gmra.mrb[0].mxu0 %v3727
        %v3950 = vpop.f32.mrb[0].mxu0
        %v3951 = vadd.f32 %v2063, %v3950
        %v3952 = vpop.f32.mrb[0].mxu0
        %3953 = vmatprep.mubr.f32.mxu0 0.0
        %3954 = vmatmul.mubr.f32.gmra.mrb[0].mxu0 %v3730
        %v3955 = vpop.f32.mrb[0].mxu0
        %v3956 = vadd.f32 %v2063, %v3955
        %v3957 = vpop.f32.mrb[0].mxu0
        %3958 = vmatprep.mubr.f32.mxu0 0.0
        %3959 = vmatmul.mubr.f32.gmra.mrb[0].mxu0 %v3733
        %v3960 = vpop.f32.mrb[0].mxu0
        %v3961 = vadd.f32 %v2063, %v3960
        %v3962 = vpop.f32.mrb[0].mxu0
        %3963 = vmatprep.mubr.f32.mxu0 0.0
        %3964 = vmatmul.mubr.f32.gmra.mrb[0].mxu0 %v3736
        %v3965 = vpop.f32.mrb[0].mxu0
        %v3966 = vadd.f32 %v2063, %v3965
        %v3967 = vpop.f32.mrb[0].mxu0
        %3968 = vmatprep.mubr.f32.mxu0 0.0
        %3969 = vmatmul.mubr.f32.gmra.mrb[0].mxu0 %v3739
        %v3970 = vpop.f32.mrb[0].mxu0
        %v3971 = vadd.f32 %v2063, %v3970
        %v3972 = vpop.f32.mrb[0].mxu0
        %3973 = vmatprep.mubr.f32.mxu0 0.0
        %3974 = vmatmul.mubr.f32.gmra.mrb[0].mxu0 %v3742
        %v3975 = vpop.f32.mrb[0].mxu0
        %v3976 = vadd.f32 %v2063, %v3975
        %v3977 = vpop.f32.mrb[0].mxu0
        %3978 = vmatprep.mubr.f32.mxu0 0.0
        %3979 = vmatmul.mubr.f32.gmra.mrb[0].mxu0 %v3745
        %v3980 = vpop.f32.mrb[0].mxu0
        %v3981 = vadd.f32 %v2063, %v3980
        %v3982 = vpop.f32.mrb[0].mxu0
        %3983 = vmatprep.mubr.f32.mxu0 0.0
        %3984 = vmatmul.mubr.f32.gmra.mrb[0].mxu0 %v3748
        %v3985 = vpop.f32.mrb[0].mxu0
        %v3986 = vadd.f32 %v2063, %v3985
        %v3987 = vpop.f32.mrb[0].mxu0
        %3988 = vmatprep.mubr.f32.mxu0 0.0
        %3989 = vmatmul.mubr.f32.gmra.mrb[0].mxu0 %v3751
        %v3990 = vpop.f32.mrb[0].mxu0
        %v3991 = vadd.f32 %v2063, %v3990
        %v3992 = vpop.f32.mrb[0].mxu0
        %3993 = vmatprep.mubr.f32.mxu0 0.0
        %3994 = vmatmul.mubr.f32.gmra.mrb[0].mxu0 %v3754
        %v3995 = vpop.f32.mrb[0].mxu0
        %v3996 = vadd.f32 %v2063, %v3995
        %v3997 = vpop.f32.mrb[0].mxu0
        %3998 = vmatprep.mubr.f32.mxu0 0.0
        %3999 = vmatmul.mubr.f32.gmra.mrb[0].mxu0 %v3757
        %v4000 = vpop.f32.mrb[0].mxu0
        %v4001 = vadd.f32 %v2063, %v4000
        %v4002 = vpop.f32.mrb[0].mxu0
        %4003 = vmatprep.mubr.f32.mxu0 0.0
        %4004 = vmatmul.mubr.f32.gmra.mrb[0].mxu0 %v3760
        %v4005 = vpop.f32.mrb[0].mxu0
        %v4006 = vadd.f32 %v2063, %v4005
        %v4007 = vpop.f32.mrb[0].mxu0
        %4008 = vmatprep.mubr.f32.mxu0 0.0
        %4009 = vmatmul.mubr.f32.gmra.mrb[0].mxu0 %v3763
        %v4010 = vpop.f32.mrb[0].mxu0
        %v4011 = vadd.f32 %v2063, %v4010
        %v4012 = vpop.f32.mrb[0].mxu0
        %4013 = vmatprep.mubr.f32.mxu0 0.0
        %4014 = vmatmul.mubr.f32.gmra.mrb[0].mxu0 %v3766
        %v4015 = vpop.f32.mrb[0].mxu0
        %v4016 = vadd.f32 %v2063, %v4015
        %v4017 = vpop.f32.mrb[0].mxu0
        %4018 = vmatprep.mubr.f32.mxu0 0.0
        %4019 = vmatmul.mubr.f32.gmra.mrb[0].mxu0 %v3769
        %v4020 = vpop.f32.mrb[0].mxu0
        %v4021 = vadd.f32 %v2063, %v4020
        %v4022 = vpop.f32.mrb[0].mxu0
        %4023 = vmatprep.mubr.f32.mxu0 0.0
        %4024 = vmatmul.mubr.f32.gmra.mrb[0].mxu0 %v3772
        %v4025 = vpop.f32.mrb[0].mxu0
        %v4026 = vadd.f32 %v2063, %v4025
        %v4027 = vpop.f32.mrb[0].mxu0
        %4028 = vmatprep.mubr.f32.mxu0 0.0
        %4029 = vmatmul.mubr.f32.gmra.mrb[0].mxu0 %v3775
        %v4030 = vpop.f32.mrb[0].mxu0
        %v4031 = vadd.f32 %v2063, %v4030
        %v4032 = vpop.f32.mrb[0].mxu0
        %4033 = vmatprep.mubr.f32.mxu0 0.0
        %4034 = vmatmul.mubr.f32.gmra.mrb[0].mxu0 %v3778
        %v4035 = vpop.f32.mrb[0].mxu0
        %v4036 = vadd.f32 %v2063, %v4035
        %v4037 = vpop.f32.mrb[0].mxu0
        %4038 = vmatprep.mubr.f32.mxu0 0.0
        %4039 = vmatmul.mubr.f32.gmra.mrb[0].mxu0 %v3781
        %v4040 = vpop.f32.mrb[0].mxu0
        %v4041 = vadd.f32 %v2063, %v4040
        %v4042 = vpop.f32.mrb[0].mxu0
        %4043 = vmatprep.mubr.f32.mxu0 0.0
        %4044 = vmatmul.mubr.f32.gmra.mrb[0].mxu0 %v3784
        %v4045 = vpop.f32.mrb[0].mxu0
        %v4046 = vadd.f32 %v2063, %v4045
        %v4047 = vpop.f32.mrb[0].mxu0
        %4048 = vmatprep.mubr.f32.mxu0 0.0
        %4049 = vmatmul.mubr.f32.gmra.mrb[0].mxu0 %v3787
        %v4050 = vpop.f32.mrb[0].mxu0
        %v4051 = vadd.f32 %v2063, %v4050
        %v4052 = vpop.f32.mrb[0].mxu0
        %4053 = vmatprep.mubr.f32.mxu0 0.0
        %4054 = vmatmul.mubr.f32.gmra.mrb[0].mxu0 %v3790
        %v4055 = vpop.f32.mrb[0].mxu0
        %v4056 = vadd.f32 %v2063, %v4055
        %v4057 = vpop.f32.mrb[0].mxu0
        %4058 = vmatprep.mubr.f32.mxu0 0.0
        %4059 = vmatmul.mubr.f32.gmra.mrb[0].mxu0 %v3793
        %v4060 = vpop.f32.mrb[0].mxu0
        %v4061 = vadd.f32 %v2063, %v4060
        %v4062 = vpop.f32.mrb[0].mxu0
        %4063 = vmatprep.mubr.f32.mxu0 0.0
        %4064 = vmatmul.mubr.f32.gmra.mrb[0].mxu0 %v3796
        %v4065 = vpop.f32.mrb[0].mxu0
        %v4066 = vadd.f32 %v2063, %v4065
        %v4067 = vpop.f32.mrb[0].mxu0
        %4068 = vmatprep.mubr.f32.mxu0 0.0
        %4069 = vmatmul.mubr.f32.gmra.mrb[0].mxu0 %v3799
        %v4070 = vpop.f32.mrb[0].mxu0
        %v4071 = vadd.f32 %v2063, %v4070
        %v4072 = vpop.f32.mrb[0].mxu0
        %4073 = vmatprep.mubr.f32.mxu0 0.0
        %4074 = vmatmul.mubr.f32.gmra.mrb[0].mxu0 %v3802
        %v4075 = vpop.f32.mrb[0].mxu0
        %v4076 = vadd.f32 %v2063, %v4075
        %v4077 = vpop.f32.mrb[0].mxu0
        %4078 = vmatprep.mubr.f32.mxu0 0.0
        %4079 = vmatmul.mubr.f32.gmra.mrb[0].mxu0 %v3805
        %v4080 = vpop.f32.mrb[0].mxu0
        %v4081 = vadd.f32 %v2063, %v4080
        %v4082 = vpop.f32.mrb[0].mxu0
        %4083 = vmatprep.mubr.f32.mxu0 0.0
        %4084 = vmatmul.mubr.f32.gmra.mrb[0].mxu0 %v3808
        %v4085 = vpop.f32.mrb[0].mxu0
        %v4086 = vadd.f32 %v2063, %v4085
        %v4087 = vpop.f32.mrb[0].mxu0
        %4088 = vmatprep.mubr.f32.mxu0 0.0
        %4089 = vmatmul.mubr.f32.gmra.mrb[0].mxu0 %v3811
        %v4090 = vpop.f32.mrb[0].mxu0
        %v4091 = vadd.f32 %v2063, %v4090
        %v4092 = vpop.f32.mrb[0].mxu0
        %4093 = vmatprep.mubr.f32.mxu0 0.0
        %4094 = vmatmul.mubr.f32.gmra.mrb[0].mxu0 %v3814
        %v4095 = vpop.f32.mrb[0].mxu0
        %v4096 = vadd.f32 %v2063, %v4095
        %v4097 = vpop.f32.mrb[0].mxu0
        %4098 = vmatprep.mubr.f32.mxu0 0.0
        %4099 = vmatmul.mubr.f32.gmra.mrb[0].mxu0 %v3817
        %v4100 = vpop.f32.mrb[0].mxu0
        %v4101 = vadd.f32 %v2063, %v4100
        %v4102 = vpop.f32.mrb[0].mxu0
        %4103 = vmatprep.mubr.f32.mxu0 0.0
        %4104 = vmatmul.mubr.f32.gmra.mrb[0].mxu0 %v3820
        %v4105 = vpop.f32.mrb[0].mxu0
        %v4106 = vadd.f32 %v2063, %v4105
        %v4107 = vpop.f32.mrb[0].mxu0
        %4108 = vmatprep.mubr.f32.mxu0 0.0
        %4109 = vmatmul.mubr.f32.gmra.mrb[0].mxu0 %v3823
        %v4110 = vpop.f32.mrb[0].mxu0
        %v4111 = vadd.f32 %v2063, %v4110
        %v4112 = vpop.f32.mrb[0].mxu0
        %4113 = vmatprep.mubr.f32.mxu0 0.0
        %4114 = vmatmul.mubr.f32.gmra.mrb[0].mxu0 %v3826
        %v4115 = vpop.f32.mrb[0].mxu0
        %v4116 = vadd.f32 %v2063, %v4115
        %v4117 = vpop.f32.mrb[0].mxu0
        %4118 = vmatprep.mubr.f32.mxu0 0.0
        %4119 = vmatmul.mubr.f32.gmra.mrb[0].mxu0 %v3829
        %v4120 = vpop.f32.mrb[0].mxu0
        %v4121 = vadd.f32 %v2063, %v4120
        %v4122 = vpop.f32.mrb[0].mxu0
        %4123 = vmatprep.mubr.f32.mxu0 0.0
        %4124 = vmatmul.mubr.f32.gmra.mrb[0].mxu0 %v3832
        %v4125 = vpop.f32.mrb[0].mxu0
        %v4126 = vadd.f32 %v2063, %v4125
        %v4127 = vpop.f32.mrb[0].mxu0
        %4128 = vmatprep.mubr.f32.mxu0 0.0
        %4129 = vmatmul.mubr.f32.gmra.mrb[0].mxu0 %v3835
        %v4130 = vpop.f32.mrb[0].mxu0
        %v4131 = vadd.f32 %v2063, %v4130
        %v4132 = vpop.f32.mrb[0].mxu0
        %4133 = vmatprep.mubr.f32.mxu0 0.0
        %4134 = vmatmul.mubr.f32.gmra.mrb[0].mxu0 %v3838
        %v4135 = vpop.f32.mrb[0].mxu0
        %v4136 = vadd.f32 %v2063, %v4135
        %v4137 = vpop.f32.mrb[0].mxu0
        %4138 = vmatprep.mubr.f32.mxu0 0.0
        %4139 = vmatmul.mubr.f32.gmra.mrb[0].mxu0 %v3841
        %v4140 = vpop.f32.mrb[0].mxu0
        %v4141 = vadd.f32 %v2063, %v4140
        %v4142 = vpop.f32.mrb[0].mxu0
        %4143 = vmatprep.mubr.f32.mxu0 0.0
        %4144 = vmatmul.mubr.f32.gmra.mrb[0].mxu0 %v3844
        %v4145 = vpop.f32.mrb[0].mxu0
        %v4146 = vadd.f32 %v2063, %v4145
        %v4147 = vpop.f32.mrb[0].mxu0
        %4148 = vmatprep.mubr.f32.mxu0 0.0
        %4149 = vmatmul.mubr.f32.gmra.mrb[0].mxu0 %v3847
        %v4150 = vpop.f32.mrb[0].mxu0
        %v4151 = vadd.f32 %v2063, %v4150
        %v4152 = vpop.f32.mrb[0].mxu0
        %4153 = vmatprep.mubr.f32.mxu0 0.0
        %4154 = vmatmul.mubr.f32.gmra.mrb[0].mxu0 %v3850
        %v4155 = vpop.f32.mrb[0].mxu0
        %v4156 = vadd.f32 %v2063, %v4155
        %v4157 = vpop.f32.mrb[0].mxu0
        %4158 = vmatprep.mubr.f32.mxu0 0.0
        %4159 = vmatmul.mubr.f32.gmra.mrb[0].mxu0 %v3853
        %v4160 = vpop.f32.mrb[0].mxu0
        %v4161 = vadd.f32 %v2063, %v4160
        %v4162 = vpop.f32.mrb[0].mxu0
        %4163 = vmatprep.mubr.f32.mxu0 0.0
        %4164 = vmatmul.mubr.f32.gmra.mrb[0].mxu0 %v3856
        %v4165 = vpop.f32.mrb[0].mxu0
        %v4166 = vadd.f32 %v2063, %v4165
        %v4167 = vpop.f32.mrb[0].mxu0
        %4168 = vmatprep.mubr.f32.mxu0 0.0
        %4169 = vmatmul.mubr.f32.gmra.mrb[0].mxu0 %v3859
        %v4170 = vpop.f32.mrb[0].mxu0
        %v4171 = vadd.f32 %v2063, %v4170
        %v4172 = vpop.f32.mrb[0].mxu0
        %4173 = vmatprep.mubr.f32.mxu0 0.0
        %4174 = vmatmul.mubr.f32.gmra.mrb[0].mxu0 %v3862
        %v4175 = vpop.f32.mrb[0].mxu0
        %v4176 = vadd.f32 %v2063, %v4175
        %v4177 = vpop.f32.mrb[0].mxu0
        %4178 = vdwg.mxu0
        %v4179 = vmax.f32 %v3613, %v3931
        %v4180 = vmax.f32 %v3614, %v3936
        %v4181 = vmax.f32 %v3615, %v3941
        %v4182 = vmax.f32 %v3616, %v3946
        %v4183 = vmax.f32 %v3617, %v3951
        %v4184 = vmax.f32 %v3618, %v3956
        %v4185 = vmax.f32 %v3619, %v3961
        %v4186 = vmax.f32 %v3620, %v3966
        %v4187 = vmax.f32 %v3621, %v3971
        %v4188 = vmax.f32 %v3622, %v3976
        %v4189 = vmax.f32 %v3623, %v3981
        %v4190 = vmax.f32 %v3624, %v3986
        %v4191 = vmax.f32 %v3625, %v3991
        %v4192 = vmax.f32 %v3626, %v3996
        %v4193 = vmax.f32 %v3627, %v4001
        %v4194 = vmax.f32 %v3628, %v4006
        %v4195 = vmax.f32 %v3629, %v4011
        %v4196 = vmax.f32 %v3630, %v4016
        %v4197 = vmax.f32 %v3631, %v4021
        %v4198 = vmax.f32 %v3632, %v4026
        %v4199 = vmax.f32 %v3633, %v4031
        %v4200 = vmax.f32 %v3634, %v4036
        %v4201 = vmax.f32 %v3635, %v4041
        %v4202 = vmax.f32 %v3636, %v4046
        %v4203 = vmax.f32 %v3637, %v4051
        %v4204 = vmax.f32 %v3638, %v4056
        %v4205 = vmax.f32 %v3639, %v4061
        %v4206 = vmax.f32 %v3640, %v4066
        %v4207 = vmax.f32 %v3641, %v4071
        %v4208 = vmax.f32 %v3642, %v4076
        %v4209 = vmax.f32 %v3643, %v4081
        %v4210 = vmax.f32 %v3644, %v4086
        %v4211 = vmax.f32 %v3645, %v4091
        %v4212 = vmax.f32 %v3646, %v4096
        %v4213 = vmax.f32 %v3647, %v4101
        %v4214 = vmax.f32 %v3648, %v4106
        %v4215 = vmax.f32 %v3649, %v4111
        %v4216 = vmax.f32 %v3650, %v4116
        %v4217 = vmax.f32 %v3651, %v4121
        %v4218 = vmax.f32 %v3652, %v4126
        %v4219 = vmax.f32 %v3653, %v4131
        %v4220 = vmax.f32 %v3654, %v4136
        %v4221 = vmax.f32 %v3655, %v4141
        %v4222 = vmax.f32 %v3656, %v4146
        %v4223 = vmax.f32 %v3657, %v4151
        %v4224 = vmax.f32 %v3658, %v4156
        %v4225 = vmax.f32 %v3659, %v4161
        %v4226 = vmax.f32 %v3660, %v4166
        %v4227 = vmax.f32 %v3661, %v4171
        %v4228 = vmax.f32 %v3662, %v4176
        %s4229 = scalar_lea.vmem %s1976, 1600 [#allocation2]
        %v4230 = vld [vmem:[%s4229] sm:$0xff]
        %v4231 = vld [vmem:[%s4229 + $0x8] sm:$0xff]
        %v4232 = vld [vmem:[%s4229 + $0x10] sm:$0xff]
        %v4233 = vld [vmem:[%s4229 + $0x18] sm:$0xff]
        %v4234 = vld [vmem:[%s4229 + $0x20] sm:$0xff]
        %v4235 = vld [vmem:[%s4229 + $0x28] sm:$0xff]
        %v4236 = vld [vmem:[%s4229 + $0x30] sm:$0xff]
        %v4237 = vld [vmem:[%s4229 + $0x38] sm:$0xff]
        %v4238 = vld [vmem:[%s4229 + $0x40] sm:$0xff]
        %v4239 = vld [vmem:[%s4229 + $0x48] sm:$0xff]
        %v4240 = vld [vmem:[%s4229 + $0x50] sm:$0xff]
        %v4241 = vld [vmem:[%s4229 + $0x58] sm:$0xff]
        %v4242 = vld [vmem:[%s4229 + $0x60] sm:$0xff]
        %v4243 = vld [vmem:[%s4229 + $0x68] sm:$0xff]
        %v4244 = vld [vmem:[%s4229 + $0x70] sm:$0xff]
        %v4245 = vld [vmem:[%s4229 + $0x78] sm:$0xff]
        %v4246 = vld [vmem:[%s4229 + $0x80] sm:$0xff]
        %v4247 = vld [vmem:[%s4229 + $0x88] sm:$0xff]
        %v4248 = vld [vmem:[%s4229 + $0x90] sm:$0xff]
        %v4249 = vld [vmem:[%s4229 + $0x98] sm:$0xff]
        %v4250 = vld [vmem:[%s4229 + $0xa0] sm:$0xff]
        %v4251 = vld [vmem:[%s4229 + $0xa8] sm:$0xff]
        %v4252 = vld [vmem:[%s4229 + $0xb0] sm:$0xff]
        %v4253 = vld [vmem:[%s4229 + $0xb8] sm:$0xff]
        %v4254 = vld [vmem:[%s4229 + $0xc0] sm:$0xff]
        %v4255 = vld [vmem:[%s4229 + $0xc8] sm:$0xff]
        %v4256 = vld [vmem:[%s4229 + $0xd0] sm:$0xff]
        %v4257 = vld [vmem:[%s4229 + $0xd8] sm:$0xff]
        %v4258 = vld [vmem:[%s4229 + $0xe0] sm:$0xff]
        %v4259 = vld [vmem:[%s4229 + $0xe8] sm:$0xff]
        %v4260 = vld [vmem:[%s4229 + $0xf0] sm:$0xff]
        %v4261 = vld [vmem:[%s4229 + $0xf8] sm:$0xff]
        %v4262 = vld [vmem:[%s4229 + $0x100] sm:$0xff]
        %v4263 = vld [vmem:[%s4229 + $0x108] sm:$0xff]
        %v4264 = vld [vmem:[%s4229 + $0x110] sm:$0xff]
        %v4265 = vld [vmem:[%s4229 + $0x118] sm:$0xff]
        %v4266 = vld [vmem:[%s4229 + $0x120] sm:$0xff]
        %v4267 = vld [vmem:[%s4229 + $0x128] sm:$0xff]
        %v4268 = vld [vmem:[%s4229 + $0x130] sm:$0xff]
        %v4269 = vld [vmem:[%s4229 + $0x138] sm:$0xff]
        %v4270 = vld [vmem:[%s4229 + $0x140] sm:$0xff]
        %v4271 = vld [vmem:[%s4229 + $0x148] sm:$0xff]
        %v4272 = vld [vmem:[%s4229 + $0x150] sm:$0xff]
        %v4273 = vld [vmem:[%s4229 + $0x158] sm:$0xff]
        %v4274 = vld [vmem:[%s4229 + $0x160] sm:$0xff]
        %v4275 = vld [vmem:[%s4229 + $0x168] sm:$0xff]
        %v4276 = vld [vmem:[%s4229 + $0x170] sm:$0xff]
        %v4277 = vld [vmem:[%s4229 + $0x178] sm:$0xff]
        %v4278 = vld [vmem:[%s4229 + $0x180] sm:$0xff]
        %v4279 = vld [vmem:[%s4229 + $0x188] sm:$0xff]
        %v4281 = vsel %vm2065, %v4230, 0
        %v4284 = vsel %vm2065, %v4231, 0
        %v4287 = vsel %vm2065, %v4232, 0
        %v4290 = vsel %vm2065, %v4233, 0
        %v4293 = vsel %vm2065, %v4234, 0
        %v4296 = vsel %vm2065, %v4235, 0
        %v4299 = vsel %vm2065, %v4236, 0
        %v4302 = vsel %vm2065, %v4237, 0
        %v4305 = vsel %vm2065, %v4238, 0
        %v4308 = vsel %vm2065, %v4239, 0
        %v4311 = vsel %vm2065, %v4240, 0
        %v4314 = vsel %vm2065, %v4241, 0
        %v4317 = vsel %vm2065, %v4242, 0
        %v4320 = vsel %vm2065, %v4243, 0
        %v4323 = vsel %vm2065, %v4244, 0
        %v4326 = vsel %vm2065, %v4245, 0
        %v4329 = vsel %vm2065, %v4246, 0
        %v4332 = vsel %vm2065, %v4247, 0
        %v4335 = vsel %vm2065, %v4248, 0
        %v4338 = vsel %vm2065, %v4249, 0
        %v4341 = vsel %vm2065, %v4250, 0
        %v4344 = vsel %vm2065, %v4251, 0
        %v4347 = vsel %vm2065, %v4252, 0
        %v4350 = vsel %vm2065, %v4253, 0
        %v4353 = vsel %vm2065, %v4254, 0
        %v4356 = vsel %vm2065, %v4255, 0
        %v4359 = vsel %vm2065, %v4256, 0
        %v4362 = vsel %vm2065, %v4257, 0
        %v4365 = vsel %vm2065, %v4258, 0
        %v4368 = vsel %vm2065, %v4259, 0
        %v4371 = vsel %vm2065, %v4260, 0
        %v4374 = vsel %vm2065, %v4261, 0
        %v4377 = vsel %vm2065, %v4262, 0
        %v4380 = vsel %vm2065, %v4263, 0
        %v4383 = vsel %vm2065, %v4264, 0
        %v4386 = vsel %vm2065, %v4265, 0
        %v4389 = vsel %vm2065, %v4266, 0
        %v4392 = vsel %vm2065, %v4267, 0
        %v4395 = vsel %vm2065, %v4268, 0
        %v4398 = vsel %vm2065, %v4269, 0
        %v4401 = vsel %vm2065, %v4270, 0
        %v4404 = vsel %vm2065, %v4271, 0
        %v4407 = vsel %vm2065, %v4272, 0
        %v4410 = vsel %vm2065, %v4273, 0
        %v4413 = vsel %vm2065, %v4274, 0
        %v4416 = vsel %vm2065, %v4275, 0
        %v4419 = vsel %vm2065, %v4276, 0
        %v4422 = vsel %vm2065, %v4277, 0
        %v4425 = vsel %vm2065, %v4278, 0
        %v4428 = vsel %vm2065, %v4279, 0
        %4430 = vmatprep.subr.mxu0 0.0
        %4431 = vmatpush1.msra.mxu0 %v2004
        %4432 = vmatprep.subr.mxu0 0.0
        %4433 = vmatpush1.msra.mxu0 %v2005
        %4434 = vmatprep.subr.mxu0 0.0
        %4435 = vmatpush1.msra.mxu0 %v2006
        %4436 = vmatprep.subr.mxu0 0.0
        %4437 = vmatpush1.msra.mxu0 %v2007
        %4438 = vmatprep.subr.mxu0 0.0
        %4439 = vmatpush1.msra.mxu0 0.0
        %4440 = vmatprep.subr.mxu0 0.0
        %4441 = vmatpush1.msra.mxu0 0.0
        %4442 = vmatprep.subr.mxu0 0.0
        %4443 = vmatpush1.msra.mxu0 0.0
        %4444 = vmatprep.subr.mxu0 0.0
        %4445 = vmatpush1.msra.mxu0 0.0
        %4446 = vmatprep.subr.mxu0 0.0
        %4447 = vmatpush1.msra.mxu0 0.0
        %4448 = vmatprep.subr.mxu0 0.0
        %4449 = vmatpush1.msra.mxu0 0.0
        %4450 = vmatprep.subr.mxu0 0.0
        %4451 = vmatpush1.msra.mxu0 0.0
        %4452 = vmatprep.subr.mxu0 0.0
        %4453 = vmatpush1.msra.mxu0 0.0
        %4454 = vmatprep.subr.mxu0 0.0
        %4455 = vmatpush1.msra.mxu0 0.0
        %4456 = vmatprep.subr.mxu0 0.0
        %4457 = vmatpush1.msra.mxu0 0.0
        %4458 = vmatprep.subr.mxu0 0.0
        %4459 = vmatpush1.msra.mxu0 0.0
        %4460 = vmatprep.subr.mxu0 0.0
        %4461 = vmatpush1.msra.mxu0 0.0
        %4462 = vmatprep.subr.mxu0 0.0
        %4463 = vmatpush1.msra.mxu0 0.0
        %4464 = vmatprep.subr.mxu0 0.0
        %4465 = vmatpush1.msra.mxu0 0.0
        %4466 = vmatprep.subr.mxu0 0.0
        %4467 = vmatpush1.msra.mxu0 0.0
        %4468 = vmatprep.subr.mxu0 0.0
        %4469 = vmatpush1.msra.mxu0 0.0
        %4470 = vmatprep.subr.mxu0 0.0
        %4471 = vmatpush1.msra.mxu0 0.0
        %4472 = vmatprep.subr.mxu0 0.0
        %4473 = vmatpush1.msra.mxu0 0.0
        %4474 = vmatprep.subr.mxu0 0.0
        %4475 = vmatpush1.msra.mxu0 0.0
        %4476 = vmatprep.subr.mxu0 0.0
        %4477 = vmatpush1.msra.mxu0 0.0
        %4478 = vmatprep.subr.mxu0 0.0
        %4479 = vmatpush1.msra.mxu0 0.0
        %4480 = vmatprep.subr.mxu0 0.0
        %4481 = vmatpush1.msra.mxu0 0.0
        %4482 = vmatprep.subr.mxu0 0.0
        %4483 = vmatpush1.msra.mxu0 0.0
        %4484 = vmatprep.subr.mxu0 0.0
        %4485 = vmatpush1.msra.mxu0 0.0
        %4486 = vmatprep.subr.mxu0 0.0
        %4487 = vmatpush1.msra.mxu0 0.0
        %4488 = vmatprep.subr.mxu0 0.0
        %4489 = vmatpush1.msra.mxu0 0.0
        %4490 = vmatprep.subr.mxu0 0.0
        %4491 = vmatpush1.msra.mxu0 0.0
        %4492 = vmatprep.subr.mxu0 0.0
        %4493 = vmatpush1.msra.mxu0 0.0
        %4494 = vmatprep.mubr.f32.mxu0 0.0
        %4495 = vmatmul.mubr.f32.gmra.mrb[0].mxu0 %v4281
        %v4496 = vpop.f32.mrb[0].mxu0
        %v4497 = vadd.f32 %v2063, %v4496
        %v4498 = vpop.f32.mrb[0].mxu0
        %4499 = vmatprep.mubr.f32.mxu0 0.0
        %4500 = vmatmul.mubr.f32.gmra.mrb[0].mxu0 %v4284
        %v4501 = vpop.f32.mrb[0].mxu0
        %v4502 = vadd.f32 %v2063, %v4501
        %v4503 = vpop.f32.mrb[0].mxu0
        %4504 = vmatprep.mubr.f32.mxu0 0.0
        %4505 = vmatmul.mubr.f32.gmra.mrb[0].mxu0 %v4287
        %v4506 = vpop.f32.mrb[0].mxu0
        %v4507 = vadd.f32 %v2063, %v4506
        %v4508 = vpop.f32.mrb[0].mxu0
        %4509 = vmatprep.mubr.f32.mxu0 0.0
        %4510 = vmatmul.mubr.f32.gmra.mrb[0].mxu0 %v4290
        %v4511 = vpop.f32.mrb[0].mxu0
        %v4512 = vadd.f32 %v2063, %v4511
        %v4513 = vpop.f32.mrb[0].mxu0
        %4514 = vmatprep.mubr.f32.mxu0 0.0
        %4515 = vmatmul.mubr.f32.gmra.mrb[0].mxu0 %v4293
        %v4516 = vpop.f32.mrb[0].mxu0
        %v4517 = vadd.f32 %v2063, %v4516
        %v4518 = vpop.f32.mrb[0].mxu0
        %4519 = vmatprep.mubr.f32.mxu0 0.0
        %4520 = vmatmul.mubr.f32.gmra.mrb[0].mxu0 %v4296
        %v4521 = vpop.f32.mrb[0].mxu0
        %v4522 = vadd.f32 %v2063, %v4521
        %v4523 = vpop.f32.mrb[0].mxu0
        %4524 = vmatprep.mubr.f32.mxu0 0.0
        %4525 = vmatmul.mubr.f32.gmra.mrb[0].mxu0 %v4299
        %v4526 = vpop.f32.mrb[0].mxu0
        %v4527 = vadd.f32 %v2063, %v4526
        %v4528 = vpop.f32.mrb[0].mxu0
        %4529 = vmatprep.mubr.f32.mxu0 0.0
        %4530 = vmatmul.mubr.f32.gmra.mrb[0].mxu0 %v4302
        %v4531 = vpop.f32.mrb[0].mxu0
        %v4532 = vadd.f32 %v2063, %v4531
        %v4533 = vpop.f32.mrb[0].mxu0
        %4534 = vmatprep.mubr.f32.mxu0 0.0
        %4535 = vmatmul.mubr.f32.gmra.mrb[0].mxu0 %v4305
        %v4536 = vpop.f32.mrb[0].mxu0
        %v4537 = vadd.f32 %v2063, %v4536
        %v4538 = vpop.f32.mrb[0].mxu0
        %4539 = vmatprep.mubr.f32.mxu0 0.0
        %4540 = vmatmul.mubr.f32.gmra.mrb[0].mxu0 %v4308
        %v4541 = vpop.f32.mrb[0].mxu0
        %v4542 = vadd.f32 %v2063, %v4541
        %v4543 = vpop.f32.mrb[0].mxu0
        %4544 = vmatprep.mubr.f32.mxu0 0.0
        %4545 = vmatmul.mubr.f32.gmra.mrb[0].mxu0 %v4311
        %v4546 = vpop.f32.mrb[0].mxu0
        %v4547 = vadd.f32 %v2063, %v4546
        %v4548 = vpop.f32.mrb[0].mxu0
        %4549 = vmatprep.mubr.f32.mxu0 0.0
        %4550 = vmatmul.mubr.f32.gmra.mrb[0].mxu0 %v4314
        %v4551 = vpop.f32.mrb[0].mxu0
        %v4552 = vadd.f32 %v2063, %v4551
        %v4553 = vpop.f32.mrb[0].mxu0
        %4554 = vmatprep.mubr.f32.mxu0 0.0
        %4555 = vmatmul.mubr.f32.gmra.mrb[0].mxu0 %v4317
        %v4556 = vpop.f32.mrb[0].mxu0
        %v4557 = vadd.f32 %v2063, %v4556
        %v4558 = vpop.f32.mrb[0].mxu0
        %4559 = vmatprep.mubr.f32.mxu0 0.0
        %4560 = vmatmul.mubr.f32.gmra.mrb[0].mxu0 %v4320
        %v4561 = vpop.f32.mrb[0].mxu0
        %v4562 = vadd.f32 %v2063, %v4561
        %v4563 = vpop.f32.mrb[0].mxu0
        %4564 = vmatprep.mubr.f32.mxu0 0.0
        %4565 = vmatmul.mubr.f32.gmra.mrb[0].mxu0 %v4323
        %v4566 = vpop.f32.mrb[0].mxu0
        %v4567 = vadd.f32 %v2063, %v4566
        %v4568 = vpop.f32.mrb[0].mxu0
        %4569 = vmatprep.mubr.f32.mxu0 0.0
        %4570 = vmatmul.mubr.f32.gmra.mrb[0].mxu0 %v4326
        %v4571 = vpop.f32.mrb[0].mxu0
        %v4572 = vadd.f32 %v2063, %v4571
        %v4573 = vpop.f32.mrb[0].mxu0
        %4574 = vmatprep.mubr.f32.mxu0 0.0
        %4575 = vmatmul.mubr.f32.gmra.mrb[0].mxu0 %v4329
        %v4576 = vpop.f32.mrb[0].mxu0
        %v4577 = vadd.f32 %v2063, %v4576
        %v4578 = vpop.f32.mrb[0].mxu0
        %4579 = vmatprep.mubr.f32.mxu0 0.0
        %4580 = vmatmul.mubr.f32.gmra.mrb[0].mxu0 %v4332
        %v4581 = vpop.f32.mrb[0].mxu0
        %v4582 = vadd.f32 %v2063, %v4581
        %v4583 = vpop.f32.mrb[0].mxu0
        %4584 = vmatprep.mubr.f32.mxu0 0.0
        %4585 = vmatmul.mubr.f32.gmra.mrb[0].mxu0 %v4335
        %v4586 = vpop.f32.mrb[0].mxu0
        %v4587 = vadd.f32 %v2063, %v4586
        %v4588 = vpop.f32.mrb[0].mxu0
        %4589 = vmatprep.mubr.f32.mxu0 0.0
        %4590 = vmatmul.mubr.f32.gmra.mrb[0].mxu0 %v4338
        %v4591 = vpop.f32.mrb[0].mxu0
        %v4592 = vadd.f32 %v2063, %v4591
        %v4593 = vpop.f32.mrb[0].mxu0
        %4594 = vmatprep.mubr.f32.mxu0 0.0
        %4595 = vmatmul.mubr.f32.gmra.mrb[0].mxu0 %v4341
        %v4596 = vpop.f32.mrb[0].mxu0
        %v4597 = vadd.f32 %v2063, %v4596
        %v4598 = vpop.f32.mrb[0].mxu0
        %4599 = vmatprep.mubr.f32.mxu0 0.0
        %4600 = vmatmul.mubr.f32.gmra.mrb[0].mxu0 %v4344
        %v4601 = vpop.f32.mrb[0].mxu0
        %v4602 = vadd.f32 %v2063, %v4601
        %v4603 = vpop.f32.mrb[0].mxu0
        %4604 = vmatprep.mubr.f32.mxu0 0.0
        %4605 = vmatmul.mubr.f32.gmra.mrb[0].mxu0 %v4347
        %v4606 = vpop.f32.mrb[0].mxu0
        %v4607 = vadd.f32 %v2063, %v4606
        %v4608 = vpop.f32.mrb[0].mxu0
        %4609 = vmatprep.mubr.f32.mxu0 0.0
        %4610 = vmatmul.mubr.f32.gmra.mrb[0].mxu0 %v4350
        %v4611 = vpop.f32.mrb[0].mxu0
        %v4612 = vadd.f32 %v2063, %v4611
        %v4613 = vpop.f32.mrb[0].mxu0
        %4614 = vmatprep.mubr.f32.mxu0 0.0
        %4615 = vmatmul.mubr.f32.gmra.mrb[0].mxu0 %v4353
        %v4616 = vpop.f32.mrb[0].mxu0
        %v4617 = vadd.f32 %v2063, %v4616
        %v4618 = vpop.f32.mrb[0].mxu0
        %4619 = vmatprep.mubr.f32.mxu0 0.0
        %4620 = vmatmul.mubr.f32.gmra.mrb[0].mxu0 %v4356
        %v4621 = vpop.f32.mrb[0].mxu0
        %v4622 = vadd.f32 %v2063, %v4621
        %v4623 = vpop.f32.mrb[0].mxu0
        %4624 = vmatprep.mubr.f32.mxu0 0.0
        %4625 = vmatmul.mubr.f32.gmra.mrb[0].mxu0 %v4359
        %v4626 = vpop.f32.mrb[0].mxu0
        %v4627 = vadd.f32 %v2063, %v4626
        %v4628 = vpop.f32.mrb[0].mxu0
        %4629 = vmatprep.mubr.f32.mxu0 0.0
        %4630 = vmatmul.mubr.f32.gmra.mrb[0].mxu0 %v4362
        %v4631 = vpop.f32.mrb[0].mxu0
        %v4632 = vadd.f32 %v2063, %v4631
        %v4633 = vpop.f32.mrb[0].mxu0
        %4634 = vmatprep.mubr.f32.mxu0 0.0
        %4635 = vmatmul.mubr.f32.gmra.mrb[0].mxu0 %v4365
        %v4636 = vpop.f32.mrb[0].mxu0
        %v4637 = vadd.f32 %v2063, %v4636
        %v4638 = vpop.f32.mrb[0].mxu0
        %4639 = vmatprep.mubr.f32.mxu0 0.0
        %4640 = vmatmul.mubr.f32.gmra.mrb[0].mxu0 %v4368
        %v4641 = vpop.f32.mrb[0].mxu0
        %v4642 = vadd.f32 %v2063, %v4641
        %v4643 = vpop.f32.mrb[0].mxu0
        %4644 = vmatprep.mubr.f32.mxu0 0.0
        %4645 = vmatmul.mubr.f32.gmra.mrb[0].mxu0 %v4371
        %v4646 = vpop.f32.mrb[0].mxu0
        %v4647 = vadd.f32 %v2063, %v4646
        %v4648 = vpop.f32.mrb[0].mxu0
        %4649 = vmatprep.mubr.f32.mxu0 0.0
        %4650 = vmatmul.mubr.f32.gmra.mrb[0].mxu0 %v4374
        %v4651 = vpop.f32.mrb[0].mxu0
        %v4652 = vadd.f32 %v2063, %v4651
        %v4653 = vpop.f32.mrb[0].mxu0
        %4654 = vmatprep.mubr.f32.mxu0 0.0
        %4655 = vmatmul.mubr.f32.gmra.mrb[0].mxu0 %v4377
        %v4656 = vpop.f32.mrb[0].mxu0
        %v4657 = vadd.f32 %v2063, %v4656
        %v4658 = vpop.f32.mrb[0].mxu0
        %4659 = vmatprep.mubr.f32.mxu0 0.0
        %4660 = vmatmul.mubr.f32.gmra.mrb[0].mxu0 %v4380
        %v4661 = vpop.f32.mrb[0].mxu0
        %v4662 = vadd.f32 %v2063, %v4661
        %v4663 = vpop.f32.mrb[0].mxu0
        %4664 = vmatprep.mubr.f32.mxu0 0.0
        %4665 = vmatmul.mubr.f32.gmra.mrb[0].mxu0 %v4383
        %v4666 = vpop.f32.mrb[0].mxu0
        %v4667 = vadd.f32 %v2063, %v4666
        %v4668 = vpop.f32.mrb[0].mxu0
        %4669 = vmatprep.mubr.f32.mxu0 0.0
        %4670 = vmatmul.mubr.f32.gmra.mrb[0].mxu0 %v4386
        %v4671 = vpop.f32.mrb[0].mxu0
        %v4672 = vadd.f32 %v2063, %v4671
        %v4673 = vpop.f32.mrb[0].mxu0
        %4674 = vmatprep.mubr.f32.mxu0 0.0
        %4675 = vmatmul.mubr.f32.gmra.mrb[0].mxu0 %v4389
        %v4676 = vpop.f32.mrb[0].mxu0
        %v4677 = vadd.f32 %v2063, %v4676
        %v4678 = vpop.f32.mrb[0].mxu0
        %4679 = vmatprep.mubr.f32.mxu0 0.0
        %4680 = vmatmul.mubr.f32.gmra.mrb[0].mxu0 %v4392
        %v4681 = vpop.f32.mrb[0].mxu0
        %v4682 = vadd.f32 %v2063, %v4681
        %v4683 = vpop.f32.mrb[0].mxu0
        %4684 = vmatprep.mubr.f32.mxu0 0.0
        %4685 = vmatmul.mubr.f32.gmra.mrb[0].mxu0 %v4395
        %v4686 = vpop.f32.mrb[0].mxu0
        %v4687 = vadd.f32 %v2063, %v4686
        %v4688 = vpop.f32.mrb[0].mxu0
        %4689 = vmatprep.mubr.f32.mxu0 0.0
        %4690 = vmatmul.mubr.f32.gmra.mrb[0].mxu0 %v4398
        %v4691 = vpop.f32.mrb[0].mxu0
        %v4692 = vadd.f32 %v2063, %v4691
        %v4693 = vpop.f32.mrb[0].mxu0
        %4694 = vmatprep.mubr.f32.mxu0 0.0
        %4695 = vmatmul.mubr.f32.gmra.mrb[0].mxu0 %v4401
        %v4696 = vpop.f32.mrb[0].mxu0
        %v4697 = vadd.f32 %v2063, %v4696
        %v4698 = vpop.f32.mrb[0].mxu0
        %4699 = vmatprep.mubr.f32.mxu0 0.0
        %4700 = vmatmul.mubr.f32.gmra.mrb[0].mxu0 %v4404
        %v4701 = vpop.f32.mrb[0].mxu0
        %v4702 = vadd.f32 %v2063, %v4701
        %v4703 = vpop.f32.mrb[0].mxu0
        %4704 = vmatprep.mubr.f32.mxu0 0.0
        %4705 = vmatmul.mubr.f32.gmra.mrb[0].mxu0 %v4407
        %v4706 = vpop.f32.mrb[0].mxu0
        %v4707 = vadd.f32 %v2063, %v4706
        %v4708 = vpop.f32.mrb[0].mxu0
        %4709 = vmatprep.mubr.f32.mxu0 0.0
        %4710 = vmatmul.mubr.f32.gmra.mrb[0].mxu0 %v4410
        %v4711 = vpop.f32.mrb[0].mxu0
        %v4712 = vadd.f32 %v2063, %v4711
        %v4713 = vpop.f32.mrb[0].mxu0
        %4714 = vmatprep.mubr.f32.mxu0 0.0
        %4715 = vmatmul.mubr.f32.gmra.mrb[0].mxu0 %v4413
        %v4716 = vpop.f32.mrb[0].mxu0
        %v4717 = vadd.f32 %v2063, %v4716
        %v4718 = vpop.f32.mrb[0].mxu0
        %4719 = vmatprep.mubr.f32.mxu0 0.0
        %4720 = vmatmul.mubr.f32.gmra.mrb[0].mxu0 %v4416
        %v4721 = vpop.f32.mrb[0].mxu0
        %v4722 = vadd.f32 %v2063, %v4721
        %v4723 = vpop.f32.mrb[0].mxu0
        %4724 = vmatprep.mubr.f32.mxu0 0.0
        %4725 = vmatmul.mubr.f32.gmra.mrb[0].mxu0 %v4419
        %v4726 = vpop.f32.mrb[0].mxu0
        %v4727 = vadd.f32 %v2063, %v4726
        %v4728 = vpop.f32.mrb[0].mxu0
        %4729 = vmatprep.mubr.f32.mxu0 0.0
        %4730 = vmatmul.mubr.f32.gmra.mrb[0].mxu0 %v4422
        %v4731 = vpop.f32.mrb[0].mxu0
        %v4732 = vadd.f32 %v2063, %v4731
        %v4733 = vpop.f32.mrb[0].mxu0
        %4734 = vmatprep.mubr.f32.mxu0 0.0
        %4735 = vmatmul.mubr.f32.gmra.mrb[0].mxu0 %v4425
        %v4736 = vpop.f32.mrb[0].mxu0
        %v4737 = vadd.f32 %v2063, %v4736
        %v4738 = vpop.f32.mrb[0].mxu0
        %4739 = vmatprep.mubr.f32.mxu0 0.0
        %4740 = vmatmul.mubr.f32.gmra.mrb[0].mxu0 %v4428
        %v4741 = vpop.f32.mrb[0].mxu0
        %v4742 = vadd.f32 %v2063, %v4741
        %v4743 = vpop.f32.mrb[0].mxu0
        %4744 = vdwg.mxu0
        %v4745 = vmax.f32 %v4179, %v4497
        %v4746 = vmax.f32 %v4180, %v4502
        %v4747 = vmax.f32 %v4181, %v4507
        %v4748 = vmax.f32 %v4182, %v4512
        %v4749 = vmax.f32 %v4183, %v4517
        %v4750 = vmax.f32 %v4184, %v4522
        %v4751 = vmax.f32 %v4185, %v4527
        %v4752 = vmax.f32 %v4186, %v4532
        %v4753 = vmax.f32 %v4187, %v4537
        %v4754 = vmax.f32 %v4188, %v4542
        %v4755 = vmax.f32 %v4189, %v4547
        %v4756 = vmax.f32 %v4190, %v4552
        %v4757 = vmax.f32 %v4191, %v4557
        %v4758 = vmax.f32 %v4192, %v4562
        %v4759 = vmax.f32 %v4193, %v4567
        %v4760 = vmax.f32 %v4194, %v4572
        %v4761 = vmax.f32 %v4195, %v4577
        %v4762 = vmax.f32 %v4196, %v4582
        %v4763 = vmax.f32 %v4197, %v4587
        %v4764 = vmax.f32 %v4198, %v4592
        %v4765 = vmax.f32 %v4199, %v4597
        %v4766 = vmax.f32 %v4200, %v4602
        %v4767 = vmax.f32 %v4201, %v4607
        %v4768 = vmax.f32 %v4202, %v4612
        %v4769 = vmax.f32 %v4203, %v4617
        %v4770 = vmax.f32 %v4204, %v4622
        %v4771 = vmax.f32 %v4205, %v4627
        %v4772 = vmax.f32 %v4206, %v4632
        %v4773 = vmax.f32 %v4207, %v4637
        %v4774 = vmax.f32 %v4208, %v4642
        %v4775 = vmax.f32 %v4209, %v4647
        %v4776 = vmax.f32 %v4210, %v4652
        %v4777 = vmax.f32 %v4211, %v4657
        %v4778 = vmax.f32 %v4212, %v4662
        %v4779 = vmax.f32 %v4213, %v4667
        %v4780 = vmax.f32 %v4214, %v4672
        %v4781 = vmax.f32 %v4215, %v4677
        %v4782 = vmax.f32 %v4216, %v4682
        %v4783 = vmax.f32 %v4217, %v4687
        %v4784 = vmax.f32 %v4218, %v4692
        %v4785 = vmax.f32 %v4219, %v4697
        %v4786 = vmax.f32 %v4220, %v4702
        %v4787 = vmax.f32 %v4221, %v4707
        %v4788 = vmax.f32 %v4222, %v4712
        %v4789 = vmax.f32 %v4223, %v4717
        %v4790 = vmax.f32 %v4224, %v4722
        %v4791 = vmax.f32 %v4225, %v4727
        %v4792 = vmax.f32 %v4226, %v4732
        %v4793 = vmax.f32 %v4227, %v4737
        %v4794 = vmax.f32 %v4228, %v4742
        %s4795 = scalar_lea.vmem %s1976, 2000 [#allocation2]
        %v4796 = vld [vmem:[%s4795] sm:$0xff]
        %v4797 = vld [vmem:[%s4795 + $0x8] sm:$0xff]
        %v4798 = vld [vmem:[%s4795 + $0x10] sm:$0xff]
        %v4799 = vld [vmem:[%s4795 + $0x18] sm:$0xff]
        %v4800 = vld [vmem:[%s4795 + $0x20] sm:$0xff]
        %v4801 = vld [vmem:[%s4795 + $0x28] sm:$0xff]
        %v4802 = vld [vmem:[%s4795 + $0x30] sm:$0xff]
        %v4803 = vld [vmem:[%s4795 + $0x38] sm:$0xff]
        %v4804 = vld [vmem:[%s4795 + $0x40] sm:$0xff]
        %v4805 = vld [vmem:[%s4795 + $0x48] sm:$0xff]
        %v4806 = vld [vmem:[%s4795 + $0x50] sm:$0xff]
        %v4807 = vld [vmem:[%s4795 + $0x58] sm:$0xff]
        %v4808 = vld [vmem:[%s4795 + $0x60] sm:$0xff]
        %v4809 = vld [vmem:[%s4795 + $0x68] sm:$0xff]
        %v4810 = vld [vmem:[%s4795 + $0x70] sm:$0xff]
        %v4811 = vld [vmem:[%s4795 + $0x78] sm:$0xff]
        %v4812 = vld [vmem:[%s4795 + $0x80] sm:$0xff]
        %v4813 = vld [vmem:[%s4795 + $0x88] sm:$0xff]
        %v4814 = vld [vmem:[%s4795 + $0x90] sm:$0xff]
        %v4815 = vld [vmem:[%s4795 + $0x98] sm:$0xff]
        %v4816 = vld [vmem:[%s4795 + $0xa0] sm:$0xff]
        %v4817 = vld [vmem:[%s4795 + $0xa8] sm:$0xff]
        %v4818 = vld [vmem:[%s4795 + $0xb0] sm:$0xff]
        %v4819 = vld [vmem:[%s4795 + $0xb8] sm:$0xff]
        %v4820 = vld [vmem:[%s4795 + $0xc0] sm:$0xff]
        %v4821 = vld [vmem:[%s4795 + $0xc8] sm:$0xff]
        %v4822 = vld [vmem:[%s4795 + $0xd0] sm:$0xff]
        %v4823 = vld [vmem:[%s4795 + $0xd8] sm:$0xff]
        %v4824 = vld [vmem:[%s4795 + $0xe0] sm:$0xff]
        %v4825 = vld [vmem:[%s4795 + $0xe8] sm:$0xff]
        %v4826 = vld [vmem:[%s4795 + $0xf0] sm:$0xff]
        %v4827 = vld [vmem:[%s4795 + $0xf8] sm:$0xff]
        %v4828 = vld [vmem:[%s4795 + $0x100] sm:$0xff]
        %v4829 = vld [vmem:[%s4795 + $0x108] sm:$0xff]
        %v4830 = vld [vmem:[%s4795 + $0x110] sm:$0xff]
        %v4831 = vld [vmem:[%s4795 + $0x118] sm:$0xff]
        %v4832 = vld [vmem:[%s4795 + $0x120] sm:$0xff]
        %v4833 = vld [vmem:[%s4795 + $0x128] sm:$0xff]
        %v4834 = vld [vmem:[%s4795 + $0x130] sm:$0xff]
        %v4835 = vld [vmem:[%s4795 + $0x138] sm:$0xff]
        %v4836 = vld [vmem:[%s4795 + $0x140] sm:$0xff]
        %v4837 = vld [vmem:[%s4795 + $0x148] sm:$0xff]
        %v4838 = vld [vmem:[%s4795 + $0x150] sm:$0xff]
        %v4839 = vld [vmem:[%s4795 + $0x158] sm:$0xff]
        %v4840 = vld [vmem:[%s4795 + $0x160] sm:$0xff]
        %v4841 = vld [vmem:[%s4795 + $0x168] sm:$0xff]
        %v4842 = vld [vmem:[%s4795 + $0x170] sm:$0xff]
        %v4843 = vld [vmem:[%s4795 + $0x178] sm:$0xff]
        %v4844 = vld [vmem:[%s4795 + $0x180] sm:$0xff]
        %v4845 = vld [vmem:[%s4795 + $0x188] sm:$0xff]
        %v4847 = vsel %vm2065, %v4796, 0
        %v4850 = vsel %vm2065, %v4797, 0
        %v4853 = vsel %vm2065, %v4798, 0
        %v4856 = vsel %vm2065, %v4799, 0
        %v4859 = vsel %vm2065, %v4800, 0
        %v4862 = vsel %vm2065, %v4801, 0
        %v4865 = vsel %vm2065, %v4802, 0
        %v4868 = vsel %vm2065, %v4803, 0
        %v4871 = vsel %vm2065, %v4804, 0
        %v4874 = vsel %vm2065, %v4805, 0
        %v4877 = vsel %vm2065, %v4806, 0
        %v4880 = vsel %vm2065, %v4807, 0
        %v4883 = vsel %vm2065, %v4808, 0
        %v4886 = vsel %vm2065, %v4809, 0
        %v4889 = vsel %vm2065, %v4810, 0
        %v4892 = vsel %vm2065, %v4811, 0
        %v4895 = vsel %vm2065, %v4812, 0
        %v4898 = vsel %vm2065, %v4813, 0
        %v4901 = vsel %vm2065, %v4814, 0
        %v4904 = vsel %vm2065, %v4815, 0
        %v4907 = vsel %vm2065, %v4816, 0
        %v4910 = vsel %vm2065, %v4817, 0
        %v4913 = vsel %vm2065, %v4818, 0
        %v4916 = vsel %vm2065, %v4819, 0
        %v4919 = vsel %vm2065, %v4820, 0
        %v4922 = vsel %vm2065, %v4821, 0
        %v4925 = vsel %vm2065, %v4822, 0
        %v4928 = vsel %vm2065, %v4823, 0
        %v4931 = vsel %vm2065, %v4824, 0
        %v4934 = vsel %vm2065, %v4825, 0
        %v4937 = vsel %vm2065, %v4826, 0
        %v4940 = vsel %vm2065, %v4827, 0
        %v4943 = vsel %vm2065, %v4828, 0
        %v4946 = vsel %vm2065, %v4829, 0
        %v4949 = vsel %vm2065, %v4830, 0
        %v4952 = vsel %vm2065, %v4831, 0
        %v4955 = vsel %vm2065, %v4832, 0
        %v4958 = vsel %vm2065, %v4833, 0
        %v4961 = vsel %vm2065, %v4834, 0
        %v4964 = vsel %vm2065, %v4835, 0
        %v4967 = vsel %vm2065, %v4836, 0
        %v4970 = vsel %vm2065, %v4837, 0
        %v4973 = vsel %vm2065, %v4838, 0
        %v4976 = vsel %vm2065, %v4839, 0
        %v4979 = vsel %vm2065, %v4840, 0
        %v4982 = vsel %vm2065, %v4841, 0
        %v4985 = vsel %vm2065, %v4842, 0
        %v4988 = vsel %vm2065, %v4843, 0
        %v4991 = vsel %vm2065, %v4844, 0
        %v4994 = vsel %vm2065, %v4845, 0
        %4996 = vmatprep.subr.mxu0 0.0
        %4997 = vmatpush1.msra.mxu0 %v2004
        %4998 = vmatprep.subr.mxu0 0.0
        %4999 = vmatpush1.msra.mxu0 %v2005
        %5000 = vmatprep.subr.mxu0 0.0
        %5001 = vmatpush1.msra.mxu0 %v2006
        %5002 = vmatprep.subr.mxu0 0.0
        %5003 = vmatpush1.msra.mxu0 %v2007
        %5004 = vmatprep.subr.mxu0 0.0
        %5005 = vmatpush1.msra.mxu0 0.0
        %5006 = vmatprep.subr.mxu0 0.0
        %5007 = vmatpush1.msra.mxu0 0.0
        %5008 = vmatprep.subr.mxu0 0.0
        %5009 = vmatpush1.msra.mxu0 0.0
        %5010 = vmatprep.subr.mxu0 0.0
        %5011 = vmatpush1.msra.mxu0 0.0
        %5012 = vmatprep.subr.mxu0 0.0
        %5013 = vmatpush1.msra.mxu0 0.0
        %5014 = vmatprep.subr.mxu0 0.0
        %5015 = vmatpush1.msra.mxu0 0.0
        %5016 = vmatprep.subr.mxu0 0.0
        %5017 = vmatpush1.msra.mxu0 0.0
        %5018 = vmatprep.subr.mxu0 0.0
        %5019 = vmatpush1.msra.mxu0 0.0
        %5020 = vmatprep.subr.mxu0 0.0
        %5021 = vmatpush1.msra.mxu0 0.0
        %5022 = vmatprep.subr.mxu0 0.0
        %5023 = vmatpush1.msra.mxu0 0.0
        %5024 = vmatprep.subr.mxu0 0.0
        %5025 = vmatpush1.msra.mxu0 0.0
        %5026 = vmatprep.subr.mxu0 0.0
        %5027 = vmatpush1.msra.mxu0 0.0
        %5028 = vmatprep.subr.mxu0 0.0
        %5029 = vmatpush1.msra.mxu0 0.0
        %5030 = vmatprep.subr.mxu0 0.0
        %5031 = vmatpush1.msra.mxu0 0.0
        %5032 = vmatprep.subr.mxu0 0.0
        %5033 = vmatpush1.msra.mxu0 0.0
        %5034 = vmatprep.subr.mxu0 0.0
        %5035 = vmatpush1.msra.mxu0 0.0
        %5036 = vmatprep.subr.mxu0 0.0
        %5037 = vmatpush1.msra.mxu0 0.0
        %5038 = vmatprep.subr.mxu0 0.0
        %5039 = vmatpush1.msra.mxu0 0.0
        %5040 = vmatprep.subr.mxu0 0.0
        %5041 = vmatpush1.msra.mxu0 0.0
        %5042 = vmatprep.subr.mxu0 0.0
        %5043 = vmatpush1.msra.mxu0 0.0
        %5044 = vmatprep.subr.mxu0 0.0
        %5045 = vmatpush1.msra.mxu0 0.0
        %5046 = vmatprep.subr.mxu0 0.0
        %5047 = vmatpush1.msra.mxu0 0.0
        %5048 = vmatprep.subr.mxu0 0.0
        %5049 = vmatpush1.msra.mxu0 0.0
        %5050 = vmatprep.subr.mxu0 0.0
        %5051 = vmatpush1.msra.mxu0 0.0
        %5052 = vmatprep.subr.mxu0 0.0
        %5053 = vmatpush1.msra.mxu0 0.0
        %5054 = vmatprep.subr.mxu0 0.0
        %5055 = vmatpush1.msra.mxu0 0.0
        %5056 = vmatprep.subr.mxu0 0.0
        %5057 = vmatpush1.msra.mxu0 0.0
        %5058 = vmatprep.subr.mxu0 0.0
        %5059 = vmatpush1.msra.mxu0 0.0
        %5060 = vmatprep.mubr.f32.mxu0 0.0
        %5061 = vmatmul.mubr.f32.gmra.mrb[0].mxu0 %v4847
        %v5062 = vpop.f32.mrb[0].mxu0
        %v5063 = vadd.f32 %v2063, %v5062
        %v5064 = vpop.f32.mrb[0].mxu0
        %5065 = vmatprep.mubr.f32.mxu0 0.0
        %5066 = vmatmul.mubr.f32.gmra.mrb[0].mxu0 %v4850
        %v5067 = vpop.f32.mrb[0].mxu0
        %v5068 = vadd.f32 %v2063, %v5067
        %v5069 = vpop.f32.mrb[0].mxu0
        %5070 = vmatprep.mubr.f32.mxu0 0.0
        %5071 = vmatmul.mubr.f32.gmra.mrb[0].mxu0 %v4853
        %v5072 = vpop.f32.mrb[0].mxu0
        %v5073 = vadd.f32 %v2063, %v5072
        %v5074 = vpop.f32.mrb[0].mxu0
        %5075 = vmatprep.mubr.f32.mxu0 0.0
        %5076 = vmatmul.mubr.f32.gmra.mrb[0].mxu0 %v4856
        %v5077 = vpop.f32.mrb[0].mxu0
        %v5078 = vadd.f32 %v2063, %v5077
        %v5079 = vpop.f32.mrb[0].mxu0
        %5080 = vmatprep.mubr.f32.mxu0 0.0
        %5081 = vmatmul.mubr.f32.gmra.mrb[0].mxu0 %v4859
        %v5082 = vpop.f32.mrb[0].mxu0
        %v5083 = vadd.f32 %v2063, %v5082
        %v5084 = vpop.f32.mrb[0].mxu0
        %5085 = vmatprep.mubr.f32.mxu0 0.0
        %5086 = vmatmul.mubr.f32.gmra.mrb[0].mxu0 %v4862
        %v5087 = vpop.f32.mrb[0].mxu0
        %v5088 = vadd.f32 %v2063, %v5087
        %v5089 = vpop.f32.mrb[0].mxu0
        %5090 = vmatprep.mubr.f32.mxu0 0.0
        %5091 = vmatmul.mubr.f32.gmra.mrb[0].mxu0 %v4865
        %v5092 = vpop.f32.mrb[0].mxu0
        %v5093 = vadd.f32 %v2063, %v5092
        %v5094 = vpop.f32.mrb[0].mxu0
        %5095 = vmatprep.mubr.f32.mxu0 0.0
        %5096 = vmatmul.mubr.f32.gmra.mrb[0].mxu0 %v4868
        %v5097 = vpop.f32.mrb[0].mxu0
        %v5098 = vadd.f32 %v2063, %v5097
        %v5099 = vpop.f32.mrb[0].mxu0
        %5100 = vmatprep.mubr.f32.mxu0 0.0
        %5101 = vmatmul.mubr.f32.gmra.mrb[0].mxu0 %v4871
        %v5102 = vpop.f32.mrb[0].mxu0
        %v5103 = vadd.f32 %v2063, %v5102
        %v5104 = vpop.f32.mrb[0].mxu0
        %5105 = vmatprep.mubr.f32.mxu0 0.0
        %5106 = vmatmul.mubr.f32.gmra.mrb[0].mxu0 %v4874
        %v5107 = vpop.f32.mrb[0].mxu0
        %v5108 = vadd.f32 %v2063, %v5107
        %v5109 = vpop.f32.mrb[0].mxu0
        %5110 = vmatprep.mubr.f32.mxu0 0.0
        %5111 = vmatmul.mubr.f32.gmra.mrb[0].mxu0 %v4877
        %v5112 = vpop.f32.mrb[0].mxu0
        %v5113 = vadd.f32 %v2063, %v5112
        %v5114 = vpop.f32.mrb[0].mxu0
        %5115 = vmatprep.mubr.f32.mxu0 0.0
        %5116 = vmatmul.mubr.f32.gmra.mrb[0].mxu0 %v4880
        %v5117 = vpop.f32.mrb[0].mxu0
        %v5118 = vadd.f32 %v2063, %v5117
        %v5119 = vpop.f32.mrb[0].mxu0
        %5120 = vmatprep.mubr.f32.mxu0 0.0
        %5121 = vmatmul.mubr.f32.gmra.mrb[0].mxu0 %v4883
        %v5122 = vpop.f32.mrb[0].mxu0
        %v5123 = vadd.f32 %v2063, %v5122
        %v5124 = vpop.f32.mrb[0].mxu0
        %5125 = vmatprep.mubr.f32.mxu0 0.0
        %5126 = vmatmul.mubr.f32.gmra.mrb[0].mxu0 %v4886
        %v5127 = vpop.f32.mrb[0].mxu0
        %v5128 = vadd.f32 %v2063, %v5127
        %v5129 = vpop.f32.mrb[0].mxu0
        %5130 = vmatprep.mubr.f32.mxu0 0.0
        %5131 = vmatmul.mubr.f32.gmra.mrb[0].mxu0 %v4889
        %v5132 = vpop.f32.mrb[0].mxu0
        %v5133 = vadd.f32 %v2063, %v5132
        %v5134 = vpop.f32.mrb[0].mxu0
        %5135 = vmatprep.mubr.f32.mxu0 0.0
        %5136 = vmatmul.mubr.f32.gmra.mrb[0].mxu0 %v4892
        %v5137 = vpop.f32.mrb[0].mxu0
        %v5138 = vadd.f32 %v2063, %v5137
        %v5139 = vpop.f32.mrb[0].mxu0
        %5140 = vmatprep.mubr.f32.mxu0 0.0
        %5141 = vmatmul.mubr.f32.gmra.mrb[0].mxu0 %v4895
        %v5142 = vpop.f32.mrb[0].mxu0
        %v5143 = vadd.f32 %v2063, %v5142
        %v5144 = vpop.f32.mrb[0].mxu0
        %5145 = vmatprep.mubr.f32.mxu0 0.0
        %5146 = vmatmul.mubr.f32.gmra.mrb[0].mxu0 %v4898
        %v5147 = vpop.f32.mrb[0].mxu0
        %v5148 = vadd.f32 %v2063, %v5147
        %v5149 = vpop.f32.mrb[0].mxu0
        %5150 = vmatprep.mubr.f32.mxu0 0.0
        %5151 = vmatmul.mubr.f32.gmra.mrb[0].mxu0 %v4901
        %v5152 = vpop.f32.mrb[0].mxu0
        %v5153 = vadd.f32 %v2063, %v5152
        %v5154 = vpop.f32.mrb[0].mxu0
        %5155 = vmatprep.mubr.f32.mxu0 0.0
        %5156 = vmatmul.mubr.f32.gmra.mrb[0].mxu0 %v4904
        %v5157 = vpop.f32.mrb[0].mxu0
        %v5158 = vadd.f32 %v2063, %v5157
        %v5159 = vpop.f32.mrb[0].mxu0
        %5160 = vmatprep.mubr.f32.mxu0 0.0
        %5161 = vmatmul.mubr.f32.gmra.mrb[0].mxu0 %v4907
        %v5162 = vpop.f32.mrb[0].mxu0
        %v5163 = vadd.f32 %v2063, %v5162
        %v5164 = vpop.f32.mrb[0].mxu0
        %5165 = vmatprep.mubr.f32.mxu0 0.0
        %5166 = vmatmul.mubr.f32.gmra.mrb[0].mxu0 %v4910
        %v5167 = vpop.f32.mrb[0].mxu0
        %v5168 = vadd.f32 %v2063, %v5167
        %v5169 = vpop.f32.mrb[0].mxu0
        %5170 = vmatprep.mubr.f32.mxu0 0.0
        %5171 = vmatmul.mubr.f32.gmra.mrb[0].mxu0 %v4913
        %v5172 = vpop.f32.mrb[0].mxu0
        %v5173 = vadd.f32 %v2063, %v5172
        %v5174 = vpop.f32.mrb[0].mxu0
        %5175 = vmatprep.mubr.f32.mxu0 0.0
        %5176 = vmatmul.mubr.f32.gmra.mrb[0].mxu0 %v4916
        %v5177 = vpop.f32.mrb[0].mxu0
        %v5178 = vadd.f32 %v2063, %v5177
        %v5179 = vpop.f32.mrb[0].mxu0
        %5180 = vmatprep.mubr.f32.mxu0 0.0
        %5181 = vmatmul.mubr.f32.gmra.mrb[0].mxu0 %v4919
        %v5182 = vpop.f32.mrb[0].mxu0
        %v5183 = vadd.f32 %v2063, %v5182
        %v5184 = vpop.f32.mrb[0].mxu0
        %5185 = vmatprep.mubr.f32.mxu0 0.0
        %5186 = vmatmul.mubr.f32.gmra.mrb[0].mxu0 %v4922
        %v5187 = vpop.f32.mrb[0].mxu0
        %v5188 = vadd.f32 %v2063, %v5187
        %v5189 = vpop.f32.mrb[0].mxu0
        %5190 = vmatprep.mubr.f32.mxu0 0.0
        %5191 = vmatmul.mubr.f32.gmra.mrb[0].mxu0 %v4925
        %v5192 = vpop.f32.mrb[0].mxu0
        %v5193 = vadd.f32 %v2063, %v5192
        %v5194 = vpop.f32.mrb[0].mxu0
        %5195 = vmatprep.mubr.f32.mxu0 0.0
        %5196 = vmatmul.mubr.f32.gmra.mrb[0].mxu0 %v4928
        %v5197 = vpop.f32.mrb[0].mxu0
        %v5198 = vadd.f32 %v2063, %v5197
        %v5199 = vpop.f32.mrb[0].mxu0
        %5200 = vmatprep.mubr.f32.mxu0 0.0
        %5201 = vmatmul.mubr.f32.gmra.mrb[0].mxu0 %v4931
        %v5202 = vpop.f32.mrb[0].mxu0
        %v5203 = vadd.f32 %v2063, %v5202
        %v5204 = vpop.f32.mrb[0].mxu0
        %5205 = vmatprep.mubr.f32.mxu0 0.0
        %5206 = vmatmul.mubr.f32.gmra.mrb[0].mxu0 %v4934
        %v5207 = vpop.f32.mrb[0].mxu0
        %v5208 = vadd.f32 %v2063, %v5207
        %v5209 = vpop.f32.mrb[0].mxu0
        %5210 = vmatprep.mubr.f32.mxu0 0.0
        %5211 = vmatmul.mubr.f32.gmra.mrb[0].mxu0 %v4937
        %v5212 = vpop.f32.mrb[0].mxu0
        %v5213 = vadd.f32 %v2063, %v5212
        %v5214 = vpop.f32.mrb[0].mxu0
        %5215 = vmatprep.mubr.f32.mxu0 0.0
        %5216 = vmatmul.mubr.f32.gmra.mrb[0].mxu0 %v4940
        %v5217 = vpop.f32.mrb[0].mxu0
        %v5218 = vadd.f32 %v2063, %v5217
        %v5219 = vpop.f32.mrb[0].mxu0
        %5220 = vmatprep.mubr.f32.mxu0 0.0
        %5221 = vmatmul.mubr.f32.gmra.mrb[0].mxu0 %v4943
        %v5222 = vpop.f32.mrb[0].mxu0
        %v5223 = vadd.f32 %v2063, %v5222
        %v5224 = vpop.f32.mrb[0].mxu0
        %5225 = vmatprep.mubr.f32.mxu0 0.0
        %5226 = vmatmul.mubr.f32.gmra.mrb[0].mxu0 %v4946
        %v5227 = vpop.f32.mrb[0].mxu0
        %v5228 = vadd.f32 %v2063, %v5227
        %v5229 = vpop.f32.mrb[0].mxu0
        %5230 = vmatprep.mubr.f32.mxu0 0.0
        %5231 = vmatmul.mubr.f32.gmra.mrb[0].mxu0 %v4949
        %v5232 = vpop.f32.mrb[0].mxu0
        %v5233 = vadd.f32 %v2063, %v5232
        %v5234 = vpop.f32.mrb[0].mxu0
        %5235 = vmatprep.mubr.f32.mxu0 0.0
        %5236 = vmatmul.mubr.f32.gmra.mrb[0].mxu0 %v4952
        %v5237 = vpop.f32.mrb[0].mxu0
        %v5238 = vadd.f32 %v2063, %v5237
        %v5239 = vpop.f32.mrb[0].mxu0
        %5240 = vmatprep.mubr.f32.mxu0 0.0
        %5241 = vmatmul.mubr.f32.gmra.mrb[0].mxu0 %v4955
        %v5242 = vpop.f32.mrb[0].mxu0
        %v5243 = vadd.f32 %v2063, %v5242
        %v5244 = vpop.f32.mrb[0].mxu0
        %5245 = vmatprep.mubr.f32.mxu0 0.0
        %5246 = vmatmul.mubr.f32.gmra.mrb[0].mxu0 %v4958
        %v5247 = vpop.f32.mrb[0].mxu0
        %v5248 = vadd.f32 %v2063, %v5247
        %v5249 = vpop.f32.mrb[0].mxu0
        %5250 = vmatprep.mubr.f32.mxu0 0.0
        %5251 = vmatmul.mubr.f32.gmra.mrb[0].mxu0 %v4961
        %v5252 = vpop.f32.mrb[0].mxu0
        %v5253 = vadd.f32 %v2063, %v5252
        %v5254 = vpop.f32.mrb[0].mxu0
        %5255 = vmatprep.mubr.f32.mxu0 0.0
        %5256 = vmatmul.mubr.f32.gmra.mrb[0].mxu0 %v4964
        %v5257 = vpop.f32.mrb[0].mxu0
        %v5258 = vadd.f32 %v2063, %v5257
        %v5259 = vpop.f32.mrb[0].mxu0
        %5260 = vmatprep.mubr.f32.mxu0 0.0
        %5261 = vmatmul.mubr.f32.gmra.mrb[0].mxu0 %v4967
        %v5262 = vpop.f32.mrb[0].mxu0
        %v5263 = vadd.f32 %v2063, %v5262
        %v5264 = vpop.f32.mrb[0].mxu0
        %5265 = vmatprep.mubr.f32.mxu0 0.0
        %5266 = vmatmul.mubr.f32.gmra.mrb[0].mxu0 %v4970
        %v5267 = vpop.f32.mrb[0].mxu0
        %v5268 = vadd.f32 %v2063, %v5267
        %v5269 = vpop.f32.mrb[0].mxu0
        %5270 = vmatprep.mubr.f32.mxu0 0.0
        %5271 = vmatmul.mubr.f32.gmra.mrb[0].mxu0 %v4973
        %v5272 = vpop.f32.mrb[0].mxu0
        %v5273 = vadd.f32 %v2063, %v5272
        %v5274 = vpop.f32.mrb[0].mxu0
        %5275 = vmatprep.mubr.f32.mxu0 0.0
        %5276 = vmatmul.mubr.f32.gmra.mrb[0].mxu0 %v4976
        %v5277 = vpop.f32.mrb[0].mxu0
        %v5278 = vadd.f32 %v2063, %v5277
        %v5279 = vpop.f32.mrb[0].mxu0
        %5280 = vmatprep.mubr.f32.mxu0 0.0
        %5281 = vmatmul.mubr.f32.gmra.mrb[0].mxu0 %v4979
        %v5282 = vpop.f32.mrb[0].mxu0
        %v5283 = vadd.f32 %v2063, %v5282
        %v5284 = vpop.f32.mrb[0].mxu0
        %5285 = vmatprep.mubr.f32.mxu0 0.0
        %5286 = vmatmul.mubr.f32.gmra.mrb[0].mxu0 %v4982
        %v5287 = vpop.f32.mrb[0].mxu0
        %v5288 = vadd.f32 %v2063, %v5287
        %v5289 = vpop.f32.mrb[0].mxu0
        %5290 = vmatprep.mubr.f32.mxu0 0.0
        %5291 = vmatmul.mubr.f32.gmra.mrb[0].mxu0 %v4985
        %v5292 = vpop.f32.mrb[0].mxu0
        %v5293 = vadd.f32 %v2063, %v5292
        %v5294 = vpop.f32.mrb[0].mxu0
        %5295 = vmatprep.mubr.f32.mxu0 0.0
        %5296 = vmatmul.mubr.f32.gmra.mrb[0].mxu0 %v4988
        %v5297 = vpop.f32.mrb[0].mxu0
        %v5298 = vadd.f32 %v2063, %v5297
        %v5299 = vpop.f32.mrb[0].mxu0
        %5300 = vmatprep.mubr.f32.mxu0 0.0
        %5301 = vmatmul.mubr.f32.gmra.mrb[0].mxu0 %v4991
        %v5302 = vpop.f32.mrb[0].mxu0
        %v5303 = vadd.f32 %v2063, %v5302
        %v5304 = vpop.f32.mrb[0].mxu0
        %5305 = vmatprep.mubr.f32.mxu0 0.0
        %5306 = vmatmul.mubr.f32.gmra.mrb[0].mxu0 %v4994
        %v5307 = vpop.f32.mrb[0].mxu0
        %v5308 = vadd.f32 %v2063, %v5307
        %v5309 = vpop.f32.mrb[0].mxu0
        %5310 = vdwg.mxu0
        %v5311 = vmax.f32 %v4745, %v5063
        %v5312 = vmax.f32 %v4746, %v5068
        %v5313 = vmax.f32 %v4747, %v5073
        %v5314 = vmax.f32 %v4748, %v5078
        %v5315 = vmax.f32 %v4749, %v5083
        %v5316 = vmax.f32 %v4750, %v5088
        %v5317 = vmax.f32 %v4751, %v5093
        %v5318 = vmax.f32 %v4752, %v5098
        %v5319 = vmax.f32 %v4753, %v5103
        %v5320 = vmax.f32 %v4754, %v5108
        %v5321 = vmax.f32 %v4755, %v5113
        %v5322 = vmax.f32 %v4756, %v5118
        %v5323 = vmax.f32 %v4757, %v5123
        %v5324 = vmax.f32 %v4758, %v5128
        %v5325 = vmax.f32 %v4759, %v5133
        %v5326 = vmax.f32 %v4760, %v5138
        %v5327 = vmax.f32 %v4761, %v5143
        %v5328 = vmax.f32 %v4762, %v5148
        %v5329 = vmax.f32 %v4763, %v5153
        %v5330 = vmax.f32 %v4764, %v5158
        %v5331 = vmax.f32 %v4765, %v5163
        %v5332 = vmax.f32 %v4766, %v5168
        %v5333 = vmax.f32 %v4767, %v5173
        %v5334 = vmax.f32 %v4768, %v5178
        %v5335 = vmax.f32 %v4769, %v5183
        %v5336 = vmax.f32 %v4770, %v5188
        %v5337 = vmax.f32 %v4771, %v5193
        %v5338 = vmax.f32 %v4772, %v5198
        %v5339 = vmax.f32 %v4773, %v5203
        %v5340 = vmax.f32 %v4774, %v5208
        %v5341 = vmax.f32 %v4775, %v5213
        %v5342 = vmax.f32 %v4776, %v5218
        %v5343 = vmax.f32 %v4777, %v5223
        %v5344 = vmax.f32 %v4778, %v5228
        %v5345 = vmax.f32 %v4779, %v5233
        %v5346 = vmax.f32 %v4780, %v5238
        %v5347 = vmax.f32 %v4781, %v5243
        %v5348 = vmax.f32 %v4782, %v5248
        %v5349 = vmax.f32 %v4783, %v5253
        %v5350 = vmax.f32 %v4784, %v5258
        %v5351 = vmax.f32 %v4785, %v5263
        %v5352 = vmax.f32 %v4786, %v5268
        %v5353 = vmax.f32 %v4787, %v5273
        %v5354 = vmax.f32 %v4788, %v5278
        %v5355 = vmax.f32 %v4789, %v5283
        %v5356 = vmax.f32 %v4790, %v5288
        %v5357 = vmax.f32 %v4791, %v5293
        %v5358 = vmax.f32 %v4792, %v5298
        %v5359 = vmax.f32 %v4793, %v5303
        %v5360 = vmax.f32 %v4794, %v5308
        %s5361 = scalar_lea.vmem %s1976, 2400 [#allocation2]
        %v5362 = vld [vmem:[%s5361] sm:$0xff]
        %v5363 = vld [vmem:[%s5361 + $0x8] sm:$0xff]
        %v5364 = vld [vmem:[%s5361 + $0x10] sm:$0xff]
        %v5365 = vld [vmem:[%s5361 + $0x18] sm:$0xff]
        %v5366 = vld [vmem:[%s5361 + $0x20] sm:$0xff]
        %v5367 = vld [vmem:[%s5361 + $0x28] sm:$0xff]
        %v5368 = vld [vmem:[%s5361 + $0x30] sm:$0xff]
        %v5369 = vld [vmem:[%s5361 + $0x38] sm:$0xff]
        %v5370 = vld [vmem:[%s5361 + $0x40] sm:$0xff]
        %v5371 = vld [vmem:[%s5361 + $0x48] sm:$0xff]
        %v5372 = vld [vmem:[%s5361 + $0x50] sm:$0xff]
        %v5373 = vld [vmem:[%s5361 + $0x58] sm:$0xff]
        %v5374 = vld [vmem:[%s5361 + $0x60] sm:$0xff]
        %v5375 = vld [vmem:[%s5361 + $0x68] sm:$0xff]
        %v5376 = vld [vmem:[%s5361 + $0x70] sm:$0xff]
        %v5377 = vld [vmem:[%s5361 + $0x78] sm:$0xff]
        %v5378 = vld [vmem:[%s5361 + $0x80] sm:$0xff]
        %v5379 = vld [vmem:[%s5361 + $0x88] sm:$0xff]
        %v5380 = vld [vmem:[%s5361 + $0x90] sm:$0xff]
        %v5381 = vld [vmem:[%s5361 + $0x98] sm:$0xff]
        %v5382 = vld [vmem:[%s5361 + $0xa0] sm:$0xff]
        %v5383 = vld [vmem:[%s5361 + $0xa8] sm:$0xff]
        %v5384 = vld [vmem:[%s5361 + $0xb0] sm:$0xff]
        %v5385 = vld [vmem:[%s5361 + $0xb8] sm:$0xff]
        %v5386 = vld [vmem:[%s5361 + $0xc0] sm:$0xff]
        %v5387 = vld [vmem:[%s5361 + $0xc8] sm:$0xff]
        %v5388 = vld [vmem:[%s5361 + $0xd0] sm:$0xff]
        %v5389 = vld [vmem:[%s5361 + $0xd8] sm:$0xff]
        %v5390 = vld [vmem:[%s5361 + $0xe0] sm:$0xff]
        %v5391 = vld [vmem:[%s5361 + $0xe8] sm:$0xff]
        %v5392 = vld [vmem:[%s5361 + $0xf0] sm:$0xff]
        %v5393 = vld [vmem:[%s5361 + $0xf8] sm:$0xff]
        %v5394 = vld [vmem:[%s5361 + $0x100] sm:$0xff]
        %v5395 = vld [vmem:[%s5361 + $0x108] sm:$0xff]
        %v5396 = vld [vmem:[%s5361 + $0x110] sm:$0xff]
        %v5397 = vld [vmem:[%s5361 + $0x118] sm:$0xff]
        %v5398 = vld [vmem:[%s5361 + $0x120] sm:$0xff]
        %v5399 = vld [vmem:[%s5361 + $0x128] sm:$0xff]
        %v5400 = vld [vmem:[%s5361 + $0x130] sm:$0xff]
        %v5401 = vld [vmem:[%s5361 + $0x138] sm:$0xff]
        %v5402 = vld [vmem:[%s5361 + $0x140] sm:$0xff]
        %v5403 = vld [vmem:[%s5361 + $0x148] sm:$0xff]
        %v5404 = vld [vmem:[%s5361 + $0x150] sm:$0xff]
        %v5405 = vld [vmem:[%s5361 + $0x158] sm:$0xff]
        %v5406 = vld [vmem:[%s5361 + $0x160] sm:$0xff]
        %v5407 = vld [vmem:[%s5361 + $0x168] sm:$0xff]
        %v5408 = vld [vmem:[%s5361 + $0x170] sm:$0xff]
        %v5409 = vld [vmem:[%s5361 + $0x178] sm:$0xff]
        %v5410 = vld [vmem:[%s5361 + $0x180] sm:$0xff]
        %v5411 = vld [vmem:[%s5361 + $0x188] sm:$0xff]
        %v5413 = vsel %vm2065, %v5362, 0
        %v5416 = vsel %vm2065, %v5363, 0
        %v5419 = vsel %vm2065, %v5364, 0
        %v5422 = vsel %vm2065, %v5365, 0
        %v5425 = vsel %vm2065, %v5366, 0
        %v5428 = vsel %vm2065, %v5367, 0
        %v5431 = vsel %vm2065, %v5368, 0
        %v5434 = vsel %vm2065, %v5369, 0
        %v5437 = vsel %vm2065, %v5370, 0
        %v5440 = vsel %vm2065, %v5371, 0
        %v5443 = vsel %vm2065, %v5372, 0
        %v5446 = vsel %vm2065, %v5373, 0
        %v5449 = vsel %vm2065, %v5374, 0
        %v5452 = vsel %vm2065, %v5375, 0
        %v5455 = vsel %vm2065, %v5376, 0
        %v5458 = vsel %vm2065, %v5377, 0
        %v5461 = vsel %vm2065, %v5378, 0
        %v5464 = vsel %vm2065, %v5379, 0
        %v5467 = vsel %vm2065, %v5380, 0
        %v5470 = vsel %vm2065, %v5381, 0
        %v5473 = vsel %vm2065, %v5382, 0
        %v5476 = vsel %vm2065, %v5383, 0
        %v5479 = vsel %vm2065, %v5384, 0
        %v5482 = vsel %vm2065, %v5385, 0
        %v5485 = vsel %vm2065, %v5386, 0
        %v5488 = vsel %vm2065, %v5387, 0
        %v5491 = vsel %vm2065, %v5388, 0
        %v5494 = vsel %vm2065, %v5389, 0
        %v5497 = vsel %vm2065, %v5390, 0
        %v5500 = vsel %vm2065, %v5391, 0
        %v5503 = vsel %vm2065, %v5392, 0
        %v5506 = vsel %vm2065, %v5393, 0
        %v5509 = vsel %vm2065, %v5394, 0
        %v5512 = vsel %vm2065, %v5395, 0
        %v5515 = vsel %vm2065, %v5396, 0
        %v5518 = vsel %vm2065, %v5397, 0
        %v5521 = vsel %vm2065, %v5398, 0
        %v5524 = vsel %vm2065, %v5399, 0
        %v5527 = vsel %vm2065, %v5400, 0
        %v5530 = vsel %vm2065, %v5401, 0
        %v5533 = vsel %vm2065, %v5402, 0
        %v5536 = vsel %vm2065, %v5403, 0
        %v5539 = vsel %vm2065, %v5404, 0
        %v5542 = vsel %vm2065, %v5405, 0
        %v5545 = vsel %vm2065, %v5406, 0
        %v5548 = vsel %vm2065, %v5407, 0
        %v5551 = vsel %vm2065, %v5408, 0
        %v5554 = vsel %vm2065, %v5409, 0
        %v5557 = vsel %vm2065, %v5410, 0
        %v5560 = vsel %vm2065, %v5411, 0
        %5562 = vmatprep.subr.mxu0 0.0
        %5563 = vmatpush1.msra.mxu0 %v2004
        %5564 = vmatprep.subr.mxu0 0.0
        %5565 = vmatpush1.msra.mxu0 %v2005
        %5566 = vmatprep.subr.mxu0 0.0
        %5567 = vmatpush1.msra.mxu0 %v2006
        %5568 = vmatprep.subr.mxu0 0.0
        %5569 = vmatpush1.msra.mxu0 %v2007
        %5570 = vmatprep.subr.mxu0 0.0
        %5571 = vmatpush1.msra.mxu0 0.0
        %5572 = vmatprep.subr.mxu0 0.0
        %5573 = vmatpush1.msra.mxu0 0.0
        %5574 = vmatprep.subr.mxu0 0.0
        %5575 = vmatpush1.msra.mxu0 0.0
        %5576 = vmatprep.subr.mxu0 0.0
        %5577 = vmatpush1.msra.mxu0 0.0
        %5578 = vmatprep.subr.mxu0 0.0
        %5579 = vmatpush1.msra.mxu0 0.0
        %5580 = vmatprep.subr.mxu0 0.0
        %5581 = vmatpush1.msra.mxu0 0.0
        %5582 = vmatprep.subr.mxu0 0.0
        %5583 = vmatpush1.msra.mxu0 0.0
        %5584 = vmatprep.subr.mxu0 0.0
        %5585 = vmatpush1.msra.mxu0 0.0
        %5586 = vmatprep.subr.mxu0 0.0
        %5587 = vmatpush1.msra.mxu0 0.0
        %5588 = vmatprep.subr.mxu0 0.0
        %5589 = vmatpush1.msra.mxu0 0.0
        %5590 = vmatprep.subr.mxu0 0.0
        %5591 = vmatpush1.msra.mxu0 0.0
        %5592 = vmatprep.subr.mxu0 0.0
        %5593 = vmatpush1.msra.mxu0 0.0
        %5594 = vmatprep.subr.mxu0 0.0
        %5595 = vmatpush1.msra.mxu0 0.0
        %5596 = vmatprep.subr.mxu0 0.0
        %5597 = vmatpush1.msra.mxu0 0.0
        %5598 = vmatprep.subr.mxu0 0.0
        %5599 = vmatpush1.msra.mxu0 0.0
        %5600 = vmatprep.subr.mxu0 0.0
        %5601 = vmatpush1.msra.mxu0 0.0
        %5602 = vmatprep.subr.mxu0 0.0
        %5603 = vmatpush1.msra.mxu0 0.0
        %5604 = vmatprep.subr.mxu0 0.0
        %5605 = vmatpush1.msra.mxu0 0.0
        %5606 = vmatprep.subr.mxu0 0.0
        %5607 = vmatpush1.msra.mxu0 0.0
        %5608 = vmatprep.subr.mxu0 0.0
        %5609 = vmatpush1.msra.mxu0 0.0
        %5610 = vmatprep.subr.mxu0 0.0
        %5611 = vmatpush1.msra.mxu0 0.0
        %5612 = vmatprep.subr.mxu0 0.0
        %5613 = vmatpush1.msra.mxu0 0.0
        %5614 = vmatprep.subr.mxu0 0.0
        %5615 = vmatpush1.msra.mxu0 0.0
        %5616 = vmatprep.subr.mxu0 0.0
        %5617 = vmatpush1.msra.mxu0 0.0
        %5618 = vmatprep.subr.mxu0 0.0
        %5619 = vmatpush1.msra.mxu0 0.0
        %5620 = vmatprep.subr.mxu0 0.0
        %5621 = vmatpush1.msra.mxu0 0.0
        %5622 = vmatprep.subr.mxu0 0.0
        %5623 = vmatpush1.msra.mxu0 0.0
        %5624 = vmatprep.subr.mxu0 0.0
        %5625 = vmatpush1.msra.mxu0 0.0
        %5626 = vmatprep.mubr.f32.mxu0 0.0
        %5627 = vmatmul.mubr.f32.gmra.mrb[0].mxu0 %v5413
        %v5628 = vpop.f32.mrb[0].mxu0
        %v5629 = vadd.f32 %v2063, %v5628
        %v5630 = vpop.f32.mrb[0].mxu0
        %5631 = vmatprep.mubr.f32.mxu0 0.0
        %5632 = vmatmul.mubr.f32.gmra.mrb[0].mxu0 %v5416
        %v5633 = vpop.f32.mrb[0].mxu0
        %v5634 = vadd.f32 %v2063, %v5633
        %v5635 = vpop.f32.mrb[0].mxu0
        %5636 = vmatprep.mubr.f32.mxu0 0.0
        %5637 = vmatmul.mubr.f32.gmra.mrb[0].mxu0 %v5419
        %v5638 = vpop.f32.mrb[0].mxu0
        %v5639 = vadd.f32 %v2063, %v5638
        %v5640 = vpop.f32.mrb[0].mxu0
        %5641 = vmatprep.mubr.f32.mxu0 0.0
        %5642 = vmatmul.mubr.f32.gmra.mrb[0].mxu0 %v5422
        %v5643 = vpop.f32.mrb[0].mxu0
        %v5644 = vadd.f32 %v2063, %v5643
        %v5645 = vpop.f32.mrb[0].mxu0
        %5646 = vmatprep.mubr.f32.mxu0 0.0
        %5647 = vmatmul.mubr.f32.gmra.mrb[0].mxu0 %v5425
        %v5648 = vpop.f32.mrb[0].mxu0
        %v5649 = vadd.f32 %v2063, %v5648
        %v5650 = vpop.f32.mrb[0].mxu0
        %5651 = vmatprep.mubr.f32.mxu0 0.0
        %5652 = vmatmul.mubr.f32.gmra.mrb[0].mxu0 %v5428
        %v5653 = vpop.f32.mrb[0].mxu0
        %v5654 = vadd.f32 %v2063, %v5653
        %v5655 = vpop.f32.mrb[0].mxu0
        %5656 = vmatprep.mubr.f32.mxu0 0.0
        %5657 = vmatmul.mubr.f32.gmra.mrb[0].mxu0 %v5431
        %v5658 = vpop.f32.mrb[0].mxu0
        %v5659 = vadd.f32 %v2063, %v5658
        %v5660 = vpop.f32.mrb[0].mxu0
        %5661 = vmatprep.mubr.f32.mxu0 0.0
        %5662 = vmatmul.mubr.f32.gmra.mrb[0].mxu0 %v5434
        %v5663 = vpop.f32.mrb[0].mxu0
        %v5664 = vadd.f32 %v2063, %v5663
        %v5665 = vpop.f32.mrb[0].mxu0
        %5666 = vmatprep.mubr.f32.mxu0 0.0
        %5667 = vmatmul.mubr.f32.gmra.mrb[0].mxu0 %v5437
        %v5668 = vpop.f32.mrb[0].mxu0
        %v5669 = vadd.f32 %v2063, %v5668
        %v5670 = vpop.f32.mrb[0].mxu0
        %5671 = vmatprep.mubr.f32.mxu0 0.0
        %5672 = vmatmul.mubr.f32.gmra.mrb[0].mxu0 %v5440
        %v5673 = vpop.f32.mrb[0].mxu0
        %v5674 = vadd.f32 %v2063, %v5673
        %v5675 = vpop.f32.mrb[0].mxu0
        %5676 = vmatprep.mubr.f32.mxu0 0.0
        %5677 = vmatmul.mubr.f32.gmra.mrb[0].mxu0 %v5443
        %v5678 = vpop.f32.mrb[0].mxu0
        %v5679 = vadd.f32 %v2063, %v5678
        %v5680 = vpop.f32.mrb[0].mxu0
        %5681 = vmatprep.mubr.f32.mxu0 0.0
        %5682 = vmatmul.mubr.f32.gmra.mrb[0].mxu0 %v5446
        %v5683 = vpop.f32.mrb[0].mxu0
        %v5684 = vadd.f32 %v2063, %v5683
        %v5685 = vpop.f32.mrb[0].mxu0
        %5686 = vmatprep.mubr.f32.mxu0 0.0
        %5687 = vmatmul.mubr.f32.gmra.mrb[0].mxu0 %v5449
        %v5688 = vpop.f32.mrb[0].mxu0
        %v5689 = vadd.f32 %v2063, %v5688
        %v5690 = vpop.f32.mrb[0].mxu0
        %5691 = vmatprep.mubr.f32.mxu0 0.0
        %5692 = vmatmul.mubr.f32.gmra.mrb[0].mxu0 %v5452
        %v5693 = vpop.f32.mrb[0].mxu0
        %v5694 = vadd.f32 %v2063, %v5693
        %v5695 = vpop.f32.mrb[0].mxu0
        %5696 = vmatprep.mubr.f32.mxu0 0.0
        %5697 = vmatmul.mubr.f32.gmra.mrb[0].mxu0 %v5455
        %v5698 = vpop.f32.mrb[0].mxu0
        %v5699 = vadd.f32 %v2063, %v5698
        %v5700 = vpop.f32.mrb[0].mxu0
        %5701 = vmatprep.mubr.f32.mxu0 0.0
        %5702 = vmatmul.mubr.f32.gmra.mrb[0].mxu0 %v5458
        %v5703 = vpop.f32.mrb[0].mxu0
        %v5704 = vadd.f32 %v2063, %v5703
        %v5705 = vpop.f32.mrb[0].mxu0
        %5706 = vmatprep.mubr.f32.mxu0 0.0
        %5707 = vmatmul.mubr.f32.gmra.mrb[0].mxu0 %v5461
        %v5708 = vpop.f32.mrb[0].mxu0
        %v5709 = vadd.f32 %v2063, %v5708
        %v5710 = vpop.f32.mrb[0].mxu0
        %5711 = vmatprep.mubr.f32.mxu0 0.0
        %5712 = vmatmul.mubr.f32.gmra.mrb[0].mxu0 %v5464
        %v5713 = vpop.f32.mrb[0].mxu0
        %v5714 = vadd.f32 %v2063, %v5713
        %v5715 = vpop.f32.mrb[0].mxu0
        %5716 = vmatprep.mubr.f32.mxu0 0.0
        %5717 = vmatmul.mubr.f32.gmra.mrb[0].mxu0 %v5467
        %v5718 = vpop.f32.mrb[0].mxu0
        %v5719 = vadd.f32 %v2063, %v5718
        %v5720 = vpop.f32.mrb[0].mxu0
        %5721 = vmatprep.mubr.f32.mxu0 0.0
        %5722 = vmatmul.mubr.f32.gmra.mrb[0].mxu0 %v5470
        %v5723 = vpop.f32.mrb[0].mxu0
        %v5724 = vadd.f32 %v2063, %v5723
        %v5725 = vpop.f32.mrb[0].mxu0
        %5726 = vmatprep.mubr.f32.mxu0 0.0
        %5727 = vmatmul.mubr.f32.gmra.mrb[0].mxu0 %v5473
        %v5728 = vpop.f32.mrb[0].mxu0
        %v5729 = vadd.f32 %v2063, %v5728
        %v5730 = vpop.f32.mrb[0].mxu0
        %5731 = vmatprep.mubr.f32.mxu0 0.0
        %5732 = vmatmul.mubr.f32.gmra.mrb[0].mxu0 %v5476
        %v5733 = vpop.f32.mrb[0].mxu0
        %v5734 = vadd.f32 %v2063, %v5733
        %v5735 = vpop.f32.mrb[0].mxu0
        %5736 = vmatprep.mubr.f32.mxu0 0.0
        %5737 = vmatmul.mubr.f32.gmra.mrb[0].mxu0 %v5479
        %v5738 = vpop.f32.mrb[0].mxu0
        %v5739 = vadd.f32 %v2063, %v5738
        %v5740 = vpop.f32.mrb[0].mxu0
        %5741 = vmatprep.mubr.f32.mxu0 0.0
        %5742 = vmatmul.mubr.f32.gmra.mrb[0].mxu0 %v5482
        %v5743 = vpop.f32.mrb[0].mxu0
        %v5744 = vadd.f32 %v2063, %v5743
        %v5745 = vpop.f32.mrb[0].mxu0
        %5746 = vmatprep.mubr.f32.mxu0 0.0
        %5747 = vmatmul.mubr.f32.gmra.mrb[0].mxu0 %v5485
        %v5748 = vpop.f32.mrb[0].mxu0
        %v5749 = vadd.f32 %v2063, %v5748
        %v5750 = vpop.f32.mrb[0].mxu0
        %5751 = vmatprep.mubr.f32.mxu0 0.0
        %5752 = vmatmul.mubr.f32.gmra.mrb[0].mxu0 %v5488
        %v5753 = vpop.f32.mrb[0].mxu0
        %v5754 = vadd.f32 %v2063, %v5753
        %v5755 = vpop.f32.mrb[0].mxu0
        %5756 = vmatprep.mubr.f32.mxu0 0.0
        %5757 = vmatmul.mubr.f32.gmra.mrb[0].mxu0 %v5491
        %v5758 = vpop.f32.mrb[0].mxu0
        %v5759 = vadd.f32 %v2063, %v5758
        %v5760 = vpop.f32.mrb[0].mxu0
        %5761 = vmatprep.mubr.f32.mxu0 0.0
        %5762 = vmatmul.mubr.f32.gmra.mrb[0].mxu0 %v5494
        %v5763 = vpop.f32.mrb[0].mxu0
        %v5764 = vadd.f32 %v2063, %v5763
        %v5765 = vpop.f32.mrb[0].mxu0
        %5766 = vmatprep.mubr.f32.mxu0 0.0
        %5767 = vmatmul.mubr.f32.gmra.mrb[0].mxu0 %v5497
        %v5768 = vpop.f32.mrb[0].mxu0
        %v5769 = vadd.f32 %v2063, %v5768
        %v5770 = vpop.f32.mrb[0].mxu0
        %5771 = vmatprep.mubr.f32.mxu0 0.0
        %5772 = vmatmul.mubr.f32.gmra.mrb[0].mxu0 %v5500
        %v5773 = vpop.f32.mrb[0].mxu0
        %v5774 = vadd.f32 %v2063, %v5773
        %v5775 = vpop.f32.mrb[0].mxu0
        %5776 = vmatprep.mubr.f32.mxu0 0.0
        %5777 = vmatmul.mubr.f32.gmra.mrb[0].mxu0 %v5503
        %v5778 = vpop.f32.mrb[0].mxu0
        %v5779 = vadd.f32 %v2063, %v5778
        %v5780 = vpop.f32.mrb[0].mxu0
        %5781 = vmatprep.mubr.f32.mxu0 0.0
        %5782 = vmatmul.mubr.f32.gmra.mrb[0].mxu0 %v5506
        %v5783 = vpop.f32.mrb[0].mxu0
        %v5784 = vadd.f32 %v2063, %v5783
        %v5785 = vpop.f32.mrb[0].mxu0
        %5786 = vmatprep.mubr.f32.mxu0 0.0
        %5787 = vmatmul.mubr.f32.gmra.mrb[0].mxu0 %v5509
        %v5788 = vpop.f32.mrb[0].mxu0
        %v5789 = vadd.f32 %v2063, %v5788
        %v5790 = vpop.f32.mrb[0].mxu0
        %5791 = vmatprep.mubr.f32.mxu0 0.0
        %5792 = vmatmul.mubr.f32.gmra.mrb[0].mxu0 %v5512
        %v5793 = vpop.f32.mrb[0].mxu0
        %v5794 = vadd.f32 %v2063, %v5793
        %v5795 = vpop.f32.mrb[0].mxu0
        %5796 = vmatprep.mubr.f32.mxu0 0.0
        %5797 = vmatmul.mubr.f32.gmra.mrb[0].mxu0 %v5515
        %v5798 = vpop.f32.mrb[0].mxu0
        %v5799 = vadd.f32 %v2063, %v5798
        %v5800 = vpop.f32.mrb[0].mxu0
        %5801 = vmatprep.mubr.f32.mxu0 0.0
        %5802 = vmatmul.mubr.f32.gmra.mrb[0].mxu0 %v5518
        %v5803 = vpop.f32.mrb[0].mxu0
        %v5804 = vadd.f32 %v2063, %v5803
        %v5805 = vpop.f32.mrb[0].mxu0
        %5806 = vmatprep.mubr.f32.mxu0 0.0
        %5807 = vmatmul.mubr.f32.gmra.mrb[0].mxu0 %v5521
        %v5808 = vpop.f32.mrb[0].mxu0
        %v5809 = vadd.f32 %v2063, %v5808
        %v5810 = vpop.f32.mrb[0].mxu0
        %5811 = vmatprep.mubr.f32.mxu0 0.0
        %5812 = vmatmul.mubr.f32.gmra.mrb[0].mxu0 %v5524
        %v5813 = vpop.f32.mrb[0].mxu0
        %v5814 = vadd.f32 %v2063, %v5813
        %v5815 = vpop.f32.mrb[0].mxu0
        %5816 = vmatprep.mubr.f32.mxu0 0.0
        %5817 = vmatmul.mubr.f32.gmra.mrb[0].mxu0 %v5527
        %v5818 = vpop.f32.mrb[0].mxu0
        %v5819 = vadd.f32 %v2063, %v5818
        %v5820 = vpop.f32.mrb[0].mxu0
        %5821 = vmatprep.mubr.f32.mxu0 0.0
        %5822 = vmatmul.mubr.f32.gmra.mrb[0].mxu0 %v5530
        %v5823 = vpop.f32.mrb[0].mxu0
        %v5824 = vadd.f32 %v2063, %v5823
        %v5825 = vpop.f32.mrb[0].mxu0
        %5826 = vmatprep.mubr.f32.mxu0 0.0
        %5827 = vmatmul.mubr.f32.gmra.mrb[0].mxu0 %v5533
        %v5828 = vpop.f32.mrb[0].mxu0
        %v5829 = vadd.f32 %v2063, %v5828
        %v5830 = vpop.f32.mrb[0].mxu0
        %5831 = vmatprep.mubr.f32.mxu0 0.0
        %5832 = vmatmul.mubr.f32.gmra.mrb[0].mxu0 %v5536
        %v5833 = vpop.f32.mrb[0].mxu0
        %v5834 = vadd.f32 %v2063, %v5833
        %v5835 = vpop.f32.mrb[0].mxu0
        %5836 = vmatprep.mubr.f32.mxu0 0.0
        %5837 = vmatmul.mubr.f32.gmra.mrb[0].mxu0 %v5539
        %v5838 = vpop.f32.mrb[0].mxu0
        %v5839 = vadd.f32 %v2063, %v5838
        %v5840 = vpop.f32.mrb[0].mxu0
        %5841 = vmatprep.mubr.f32.mxu0 0.0
        %5842 = vmatmul.mubr.f32.gmra.mrb[0].mxu0 %v5542
        %v5843 = vpop.f32.mrb[0].mxu0
        %v5844 = vadd.f32 %v2063, %v5843
        %v5845 = vpop.f32.mrb[0].mxu0
        %5846 = vmatprep.mubr.f32.mxu0 0.0
        %5847 = vmatmul.mubr.f32.gmra.mrb[0].mxu0 %v5545
        %v5848 = vpop.f32.mrb[0].mxu0
        %v5849 = vadd.f32 %v2063, %v5848
        %v5850 = vpop.f32.mrb[0].mxu0
        %5851 = vmatprep.mubr.f32.mxu0 0.0
        %5852 = vmatmul.mubr.f32.gmra.mrb[0].mxu0 %v5548
        %v5853 = vpop.f32.mrb[0].mxu0
        %v5854 = vadd.f32 %v2063, %v5853
        %v5855 = vpop.f32.mrb[0].mxu0
        %5856 = vmatprep.mubr.f32.mxu0 0.0
        %5857 = vmatmul.mubr.f32.gmra.mrb[0].mxu0 %v5551
        %v5858 = vpop.f32.mrb[0].mxu0
        %v5859 = vadd.f32 %v2063, %v5858
        %v5860 = vpop.f32.mrb[0].mxu0
        %5861 = vmatprep.mubr.f32.mxu0 0.0
        %5862 = vmatmul.mubr.f32.gmra.mrb[0].mxu0 %v5554
        %v5863 = vpop.f32.mrb[0].mxu0
        %v5864 = vadd.f32 %v2063, %v5863
        %v5865 = vpop.f32.mrb[0].mxu0
        %5866 = vmatprep.mubr.f32.mxu0 0.0
        %5867 = vmatmul.mubr.f32.gmra.mrb[0].mxu0 %v5557
        %v5868 = vpop.f32.mrb[0].mxu0
        %v5869 = vadd.f32 %v2063, %v5868
        %v5870 = vpop.f32.mrb[0].mxu0
        %5871 = vmatprep.mubr.f32.mxu0 0.0
        %5872 = vmatmul.mubr.f32.gmra.mrb[0].mxu0 %v5560
        %v5873 = vpop.f32.mrb[0].mxu0
        %v5874 = vadd.f32 %v2063, %v5873
        %v5875 = vpop.f32.mrb[0].mxu0
        %5876 = vdwg.mxu0
        %v5877 = vmax.f32 %v5311, %v5629
        %v5878 = vmax.f32 %v5312, %v5634
        %v5879 = vmax.f32 %v5313, %v5639
        %v5880 = vmax.f32 %v5314, %v5644
        %v5881 = vmax.f32 %v5315, %v5649
        %v5882 = vmax.f32 %v5316, %v5654
        %v5883 = vmax.f32 %v5317, %v5659
        %v5884 = vmax.f32 %v5318, %v5664
        %v5885 = vmax.f32 %v5319, %v5669
        %v5886 = vmax.f32 %v5320, %v5674
        %v5887 = vmax.f32 %v5321, %v5679
        %v5888 = vmax.f32 %v5322, %v5684
        %v5889 = vmax.f32 %v5323, %v5689
        %v5890 = vmax.f32 %v5324, %v5694
        %v5891 = vmax.f32 %v5325, %v5699
        %v5892 = vmax.f32 %v5326, %v5704
        %v5893 = vmax.f32 %v5327, %v5709
        %v5894 = vmax.f32 %v5328, %v5714
        %v5895 = vmax.f32 %v5329, %v5719
        %v5896 = vmax.f32 %v5330, %v5724
        %v5897 = vmax.f32 %v5331, %v5729
        %v5898 = vmax.f32 %v5332, %v5734
        %v5899 = vmax.f32 %v5333, %v5739
        %v5900 = vmax.f32 %v5334, %v5744
        %v5901 = vmax.f32 %v5335, %v5749
        %v5902 = vmax.f32 %v5336, %v5754
        %v5903 = vmax.f32 %v5337, %v5759
        %v5904 = vmax.f32 %v5338, %v5764
        %v5905 = vmax.f32 %v5339, %v5769
        %v5906 = vmax.f32 %v5340, %v5774
        %v5907 = vmax.f32 %v5341, %v5779
        %v5908 = vmax.f32 %v5342, %v5784
        %v5909 = vmax.f32 %v5343, %v5789
        %v5910 = vmax.f32 %v5344, %v5794
        %v5911 = vmax.f32 %v5345, %v5799
        %v5912 = vmax.f32 %v5346, %v5804
        %v5913 = vmax.f32 %v5347, %v5809
        %v5914 = vmax.f32 %v5348, %v5814
        %v5915 = vmax.f32 %v5349, %v5819
        %v5916 = vmax.f32 %v5350, %v5824
        %v5917 = vmax.f32 %v5351, %v5829
        %v5918 = vmax.f32 %v5352, %v5834
        %v5919 = vmax.f32 %v5353, %v5839
        %v5920 = vmax.f32 %v5354, %v5844
        %v5921 = vmax.f32 %v5355, %v5849
        %v5922 = vmax.f32 %v5356, %v5854
        %v5923 = vmax.f32 %v5357, %v5859
        %v5924 = vmax.f32 %v5358, %v5864
        %v5925 = vmax.f32 %v5359, %v5869
        %v5926 = vmax.f32 %v5360, %v5874
        %s5927 = scalar_lea.vmem %s1976, 2800 [#allocation2]
        %v5928 = vld [vmem:[%s5927] sm:$0xff]
        %v5929 = vld [vmem:[%s5927 + $0x8] sm:$0xff]
        %v5930 = vld [vmem:[%s5927 + $0x10] sm:$0xff]
        %v5931 = vld [vmem:[%s5927 + $0x18] sm:$0xff]
        %v5932 = vld [vmem:[%s5927 + $0x20] sm:$0xff]
        %v5933 = vld [vmem:[%s5927 + $0x28] sm:$0xff]
        %v5934 = vld [vmem:[%s5927 + $0x30] sm:$0xff]
        %v5935 = vld [vmem:[%s5927 + $0x38] sm:$0xff]
        %v5936 = vld [vmem:[%s5927 + $0x40] sm:$0xff]
        %v5937 = vld [vmem:[%s5927 + $0x48] sm:$0xff]
        %v5938 = vld [vmem:[%s5927 + $0x50] sm:$0xff]
        %v5939 = vld [vmem:[%s5927 + $0x58] sm:$0xff]
        %v5940 = vld [vmem:[%s5927 + $0x60] sm:$0xff]
        %v5941 = vld [vmem:[%s5927 + $0x68] sm:$0xff]
        %v5942 = vld [vmem:[%s5927 + $0x70] sm:$0xff]
        %v5943 = vld [vmem:[%s5927 + $0x78] sm:$0xff]
        %v5944 = vld [vmem:[%s5927 + $0x80] sm:$0xff]
        %v5945 = vld [vmem:[%s5927 + $0x88] sm:$0xff]
        %v5946 = vld [vmem:[%s5927 + $0x90] sm:$0xff]
        %v5947 = vld [vmem:[%s5927 + $0x98] sm:$0xff]
        %v5948 = vld [vmem:[%s5927 + $0xa0] sm:$0xff]
        %v5949 = vld [vmem:[%s5927 + $0xa8] sm:$0xff]
        %v5950 = vld [vmem:[%s5927 + $0xb0] sm:$0xff]
        %v5951 = vld [vmem:[%s5927 + $0xb8] sm:$0xff]
        %v5952 = vld [vmem:[%s5927 + $0xc0] sm:$0xff]
        %v5953 = vld [vmem:[%s5927 + $0xc8] sm:$0xff]
        %v5954 = vld [vmem:[%s5927 + $0xd0] sm:$0xff]
        %v5955 = vld [vmem:[%s5927 + $0xd8] sm:$0xff]
        %v5956 = vld [vmem:[%s5927 + $0xe0] sm:$0xff]
        %v5957 = vld [vmem:[%s5927 + $0xe8] sm:$0xff]
        %v5958 = vld [vmem:[%s5927 + $0xf0] sm:$0xff]
        %v5959 = vld [vmem:[%s5927 + $0xf8] sm:$0xff]
        %v5960 = vld [vmem:[%s5927 + $0x100] sm:$0xff]
        %v5961 = vld [vmem:[%s5927 + $0x108] sm:$0xff]
        %v5962 = vld [vmem:[%s5927 + $0x110] sm:$0xff]
        %v5963 = vld [vmem:[%s5927 + $0x118] sm:$0xff]
        %v5964 = vld [vmem:[%s5927 + $0x120] sm:$0xff]
        %v5965 = vld [vmem:[%s5927 + $0x128] sm:$0xff]
        %v5966 = vld [vmem:[%s5927 + $0x130] sm:$0xff]
        %v5967 = vld [vmem:[%s5927 + $0x138] sm:$0xff]
        %v5968 = vld [vmem:[%s5927 + $0x140] sm:$0xff]
        %v5969 = vld [vmem:[%s5927 + $0x148] sm:$0xff]
        %v5970 = vld [vmem:[%s5927 + $0x150] sm:$0xff]
        %v5971 = vld [vmem:[%s5927 + $0x158] sm:$0xff]
        %v5972 = vld [vmem:[%s5927 + $0x160] sm:$0xff]
        %v5973 = vld [vmem:[%s5927 + $0x168] sm:$0xff]
        %v5974 = vld [vmem:[%s5927 + $0x170] sm:$0xff]
        %v5975 = vld [vmem:[%s5927 + $0x178] sm:$0xff]
        %v5976 = vld [vmem:[%s5927 + $0x180] sm:$0xff]
        %v5977 = vld [vmem:[%s5927 + $0x188] sm:$0xff]
        %v5979 = vsel %vm2065, %v5928, 0
        %v5982 = vsel %vm2065, %v5929, 0
        %v5985 = vsel %vm2065, %v5930, 0
        %v5988 = vsel %vm2065, %v5931, 0
        %v5991 = vsel %vm2065, %v5932, 0
        %v5994 = vsel %vm2065, %v5933, 0
        %v5997 = vsel %vm2065, %v5934, 0
        %v6000 = vsel %vm2065, %v5935, 0
        %v6003 = vsel %vm2065, %v5936, 0
        %v6006 = vsel %vm2065, %v5937, 0
        %v6009 = vsel %vm2065, %v5938, 0
        %v6012 = vsel %vm2065, %v5939, 0
        %v6015 = vsel %vm2065, %v5940, 0
        %v6018 = vsel %vm2065, %v5941, 0
        %v6021 = vsel %vm2065, %v5942, 0
        %v6024 = vsel %vm2065, %v5943, 0
        %v6027 = vsel %vm2065, %v5944, 0
        %v6030 = vsel %vm2065, %v5945, 0
        %v6033 = vsel %vm2065, %v5946, 0
        %v6036 = vsel %vm2065, %v5947, 0
        %v6039 = vsel %vm2065, %v5948, 0
        %v6042 = vsel %vm2065, %v5949, 0
        %v6045 = vsel %vm2065, %v5950, 0
        %v6048 = vsel %vm2065, %v5951, 0
        %v6051 = vsel %vm2065, %v5952, 0
        %v6054 = vsel %vm2065, %v5953, 0
        %v6057 = vsel %vm2065, %v5954, 0
        %v6060 = vsel %vm2065, %v5955, 0
        %v6063 = vsel %vm2065, %v5956, 0
        %v6066 = vsel %vm2065, %v5957, 0
        %v6069 = vsel %vm2065, %v5958, 0
        %v6072 = vsel %vm2065, %v5959, 0
        %v6075 = vsel %vm2065, %v5960, 0
        %v6078 = vsel %vm2065, %v5961, 0
        %v6081 = vsel %vm2065, %v5962, 0
        %v6084 = vsel %vm2065, %v5963, 0
        %v6087 = vsel %vm2065, %v5964, 0
        %v6090 = vsel %vm2065, %v5965, 0
        %v6093 = vsel %vm2065, %v5966, 0
        %v6096 = vsel %vm2065, %v5967, 0
        %v6099 = vsel %vm2065, %v5968, 0
        %v6102 = vsel %vm2065, %v5969, 0
        %v6105 = vsel %vm2065, %v5970, 0
        %v6108 = vsel %vm2065, %v5971, 0
        %v6111 = vsel %vm2065, %v5972, 0
        %v6114 = vsel %vm2065, %v5973, 0
        %v6117 = vsel %vm2065, %v5974, 0
        %v6120 = vsel %vm2065, %v5975, 0
        %v6123 = vsel %vm2065, %v5976, 0
        %v6126 = vsel %vm2065, %v5977, 0
        %6128 = vmatprep.subr.mxu0 0.0
        %6129 = vmatpush1.msra.mxu0 %v2004
        %6130 = vmatprep.subr.mxu0 0.0
        %6131 = vmatpush1.msra.mxu0 %v2005
        %6132 = vmatprep.subr.mxu0 0.0
        %6133 = vmatpush1.msra.mxu0 %v2006
        %6134 = vmatprep.subr.mxu0 0.0
        %6135 = vmatpush1.msra.mxu0 %v2007
        %6136 = vmatprep.subr.mxu0 0.0
        %6137 = vmatpush1.msra.mxu0 0.0
        %6138 = vmatprep.subr.mxu0 0.0
        %6139 = vmatpush1.msra.mxu0 0.0
        %6140 = vmatprep.subr.mxu0 0.0
        %6141 = vmatpush1.msra.mxu0 0.0
        %6142 = vmatprep.subr.mxu0 0.0
        %6143 = vmatpush1.msra.mxu0 0.0
        %6144 = vmatprep.subr.mxu0 0.0
        %6145 = vmatpush1.msra.mxu0 0.0
        %6146 = vmatprep.subr.mxu0 0.0
        %6147 = vmatpush1.msra.mxu0 0.0
        %6148 = vmatprep.subr.mxu0 0.0
        %6149 = vmatpush1.msra.mxu0 0.0
        %6150 = vmatprep.subr.mxu0 0.0
        %6151 = vmatpush1.msra.mxu0 0.0
        %6152 = vmatprep.subr.mxu0 0.0
        %6153 = vmatpush1.msra.mxu0 0.0
        %6154 = vmatprep.subr.mxu0 0.0
        %6155 = vmatpush1.msra.mxu0 0.0
        %6156 = vmatprep.subr.mxu0 0.0
        %6157 = vmatpush1.msra.mxu0 0.0
        %6158 = vmatprep.subr.mxu0 0.0
        %6159 = vmatpush1.msra.mxu0 0.0
        %6160 = vmatprep.subr.mxu0 0.0
        %6161 = vmatpush1.msra.mxu0 0.0
        %6162 = vmatprep.subr.mxu0 0.0
        %6163 = vmatpush1.msra.mxu0 0.0
        %6164 = vmatprep.subr.mxu0 0.0
        %6165 = vmatpush1.msra.mxu0 0.0
        %6166 = vmatprep.subr.mxu0 0.0
        %6167 = vmatpush1.msra.mxu0 0.0
        %6168 = vmatprep.subr.mxu0 0.0
        %6169 = vmatpush1.msra.mxu0 0.0
        %6170 = vmatprep.subr.mxu0 0.0
        %6171 = vmatpush1.msra.mxu0 0.0
        %6172 = vmatprep.subr.mxu0 0.0
        %6173 = vmatpush1.msra.mxu0 0.0
        %6174 = vmatprep.subr.mxu0 0.0
        %6175 = vmatpush1.msra.mxu0 0.0
        %6176 = vmatprep.subr.mxu0 0.0
        %6177 = vmatpush1.msra.mxu0 0.0
        %6178 = vmatprep.subr.mxu0 0.0
        %6179 = vmatpush1.msra.mxu0 0.0
        %6180 = vmatprep.subr.mxu0 0.0
        %6181 = vmatpush1.msra.mxu0 0.0
        %6182 = vmatprep.subr.mxu0 0.0
        %6183 = vmatpush1.msra.mxu0 0.0
        %6184 = vmatprep.subr.mxu0 0.0
        %6185 = vmatpush1.msra.mxu0 0.0
        %6186 = vmatprep.subr.mxu0 0.0
        %6187 = vmatpush1.msra.mxu0 0.0
        %6188 = vmatprep.subr.mxu0 0.0
        %6189 = vmatpush1.msra.mxu0 0.0
        %6190 = vmatprep.subr.mxu0 0.0
        %6191 = vmatpush1.msra.mxu0 0.0
        %6192 = vmatprep.mubr.f32.mxu0 0.0
        %6193 = vmatmul.mubr.f32.gmra.mrb[0].mxu0 %v5979
        %v6194 = vpop.f32.mrb[0].mxu0
        %v6195 = vadd.f32 %v2063, %v6194
        %v6196 = vpop.f32.mrb[0].mxu0
        %6197 = vmatprep.mubr.f32.mxu0 0.0
        %6198 = vmatmul.mubr.f32.gmra.mrb[0].mxu0 %v5982
        %v6199 = vpop.f32.mrb[0].mxu0
        %v6200 = vadd.f32 %v2063, %v6199
        %v6201 = vpop.f32.mrb[0].mxu0
        %6202 = vmatprep.mubr.f32.mxu0 0.0
        %6203 = vmatmul.mubr.f32.gmra.mrb[0].mxu0 %v5985
        %v6204 = vpop.f32.mrb[0].mxu0
        %v6205 = vadd.f32 %v2063, %v6204
        %v6206 = vpop.f32.mrb[0].mxu0
        %6207 = vmatprep.mubr.f32.mxu0 0.0
        %6208 = vmatmul.mubr.f32.gmra.mrb[0].mxu0 %v5988
        %v6209 = vpop.f32.mrb[0].mxu0
        %v6210 = vadd.f32 %v2063, %v6209
        %v6211 = vpop.f32.mrb[0].mxu0
        %6212 = vmatprep.mubr.f32.mxu0 0.0
        %6213 = vmatmul.mubr.f32.gmra.mrb[0].mxu0 %v5991
        %v6214 = vpop.f32.mrb[0].mxu0
        %v6215 = vadd.f32 %v2063, %v6214
        %v6216 = vpop.f32.mrb[0].mxu0
        %6217 = vmatprep.mubr.f32.mxu0 0.0
        %6218 = vmatmul.mubr.f32.gmra.mrb[0].mxu0 %v5994
        %v6219 = vpop.f32.mrb[0].mxu0
        %v6220 = vadd.f32 %v2063, %v6219
        %v6221 = vpop.f32.mrb[0].mxu0
        %6222 = vmatprep.mubr.f32.mxu0 0.0
        %6223 = vmatmul.mubr.f32.gmra.mrb[0].mxu0 %v5997
        %v6224 = vpop.f32.mrb[0].mxu0
        %v6225 = vadd.f32 %v2063, %v6224
        %v6226 = vpop.f32.mrb[0].mxu0
        %6227 = vmatprep.mubr.f32.mxu0 0.0
        %6228 = vmatmul.mubr.f32.gmra.mrb[0].mxu0 %v6000
        %v6229 = vpop.f32.mrb[0].mxu0
        %v6230 = vadd.f32 %v2063, %v6229
        %v6231 = vpop.f32.mrb[0].mxu0
        %6232 = vmatprep.mubr.f32.mxu0 0.0
        %6233 = vmatmul.mubr.f32.gmra.mrb[0].mxu0 %v6003
        %v6234 = vpop.f32.mrb[0].mxu0
        %v6235 = vadd.f32 %v2063, %v6234
        %v6236 = vpop.f32.mrb[0].mxu0
        %6237 = vmatprep.mubr.f32.mxu0 0.0
        %6238 = vmatmul.mubr.f32.gmra.mrb[0].mxu0 %v6006
        %v6239 = vpop.f32.mrb[0].mxu0
        %v6240 = vadd.f32 %v2063, %v6239
        %v6241 = vpop.f32.mrb[0].mxu0
        %6242 = vmatprep.mubr.f32.mxu0 0.0
        %6243 = vmatmul.mubr.f32.gmra.mrb[0].mxu0 %v6009
        %v6244 = vpop.f32.mrb[0].mxu0
        %v6245 = vadd.f32 %v2063, %v6244
        %v6246 = vpop.f32.mrb[0].mxu0
        %6247 = vmatprep.mubr.f32.mxu0 0.0
        %6248 = vmatmul.mubr.f32.gmra.mrb[0].mxu0 %v6012
        %v6249 = vpop.f32.mrb[0].mxu0
        %v6250 = vadd.f32 %v2063, %v6249
        %v6251 = vpop.f32.mrb[0].mxu0
        %6252 = vmatprep.mubr.f32.mxu0 0.0
        %6253 = vmatmul.mubr.f32.gmra.mrb[0].mxu0 %v6015
        %v6254 = vpop.f32.mrb[0].mxu0
        %v6255 = vadd.f32 %v2063, %v6254
        %v6256 = vpop.f32.mrb[0].mxu0
        %6257 = vmatprep.mubr.f32.mxu0 0.0
        %6258 = vmatmul.mubr.f32.gmra.mrb[0].mxu0 %v6018
        %v6259 = vpop.f32.mrb[0].mxu0
        %v6260 = vadd.f32 %v2063, %v6259
        %v6261 = vpop.f32.mrb[0].mxu0
        %6262 = vmatprep.mubr.f32.mxu0 0.0
        %6263 = vmatmul.mubr.f32.gmra.mrb[0].mxu0 %v6021
        %v6264 = vpop.f32.mrb[0].mxu0
        %v6265 = vadd.f32 %v2063, %v6264
        %v6266 = vpop.f32.mrb[0].mxu0
        %6267 = vmatprep.mubr.f32.mxu0 0.0
        %6268 = vmatmul.mubr.f32.gmra.mrb[0].mxu0 %v6024
        %v6269 = vpop.f32.mrb[0].mxu0
        %v6270 = vadd.f32 %v2063, %v6269
        %v6271 = vpop.f32.mrb[0].mxu0
        %6272 = vmatprep.mubr.f32.mxu0 0.0
        %6273 = vmatmul.mubr.f32.gmra.mrb[0].mxu0 %v6027
        %v6274 = vpop.f32.mrb[0].mxu0
        %v6275 = vadd.f32 %v2063, %v6274
        %v6276 = vpop.f32.mrb[0].mxu0
        %6277 = vmatprep.mubr.f32.mxu0 0.0
        %6278 = vmatmul.mubr.f32.gmra.mrb[0].mxu0 %v6030
        %v6279 = vpop.f32.mrb[0].mxu0
        %v6280 = vadd.f32 %v2063, %v6279
        %v6281 = vpop.f32.mrb[0].mxu0
        %6282 = vmatprep.mubr.f32.mxu0 0.0
        %6283 = vmatmul.mubr.f32.gmra.mrb[0].mxu0 %v6033
        %v6284 = vpop.f32.mrb[0].mxu0
        %v6285 = vadd.f32 %v2063, %v6284
        %v6286 = vpop.f32.mrb[0].mxu0
        %6287 = vmatprep.mubr.f32.mxu0 0.0
        %6288 = vmatmul.mubr.f32.gmra.mrb[0].mxu0 %v6036
        %v6289 = vpop.f32.mrb[0].mxu0
        %v6290 = vadd.f32 %v2063, %v6289
        %v6291 = vpop.f32.mrb[0].mxu0
        %6292 = vmatprep.mubr.f32.mxu0 0.0
        %6293 = vmatmul.mubr.f32.gmra.mrb[0].mxu0 %v6039
        %v6294 = vpop.f32.mrb[0].mxu0
        %v6295 = vadd.f32 %v2063, %v6294
        %v6296 = vpop.f32.mrb[0].mxu0
        %6297 = vmatprep.mubr.f32.mxu0 0.0
        %6298 = vmatmul.mubr.f32.gmra.mrb[0].mxu0 %v6042
        %v6299 = vpop.f32.mrb[0].mxu0
        %v6300 = vadd.f32 %v2063, %v6299
        %v6301 = vpop.f32.mrb[0].mxu0
        %6302 = vmatprep.mubr.f32.mxu0 0.0
        %6303 = vmatmul.mubr.f32.gmra.mrb[0].mxu0 %v6045
        %v6304 = vpop.f32.mrb[0].mxu0
        %v6305 = vadd.f32 %v2063, %v6304
        %v6306 = vpop.f32.mrb[0].mxu0
        %6307 = vmatprep.mubr.f32.mxu0 0.0
        %6308 = vmatmul.mubr.f32.gmra.mrb[0].mxu0 %v6048
        %v6309 = vpop.f32.mrb[0].mxu0
        %v6310 = vadd.f32 %v2063, %v6309
        %v6311 = vpop.f32.mrb[0].mxu0
        %6312 = vmatprep.mubr.f32.mxu0 0.0
        %6313 = vmatmul.mubr.f32.gmra.mrb[0].mxu0 %v6051
        %v6314 = vpop.f32.mrb[0].mxu0
        %v6315 = vadd.f32 %v2063, %v6314
        %v6316 = vpop.f32.mrb[0].mxu0
        %6317 = vmatprep.mubr.f32.mxu0 0.0
        %6318 = vmatmul.mubr.f32.gmra.mrb[0].mxu0 %v6054
        %v6319 = vpop.f32.mrb[0].mxu0
        %v6320 = vadd.f32 %v2063, %v6319
        %v6321 = vpop.f32.mrb[0].mxu0
        %6322 = vmatprep.mubr.f32.mxu0 0.0
        %6323 = vmatmul.mubr.f32.gmra.mrb[0].mxu0 %v6057
        %v6324 = vpop.f32.mrb[0].mxu0
        %v6325 = vadd.f32 %v2063, %v6324
        %v6326 = vpop.f32.mrb[0].mxu0
        %6327 = vmatprep.mubr.f32.mxu0 0.0
        %6328 = vmatmul.mubr.f32.gmra.mrb[0].mxu0 %v6060
        %v6329 = vpop.f32.mrb[0].mxu0
        %v6330 = vadd.f32 %v2063, %v6329
        %v6331 = vpop.f32.mrb[0].mxu0
        %6332 = vmatprep.mubr.f32.mxu0 0.0
        %6333 = vmatmul.mubr.f32.gmra.mrb[0].mxu0 %v6063
        %v6334 = vpop.f32.mrb[0].mxu0
        %v6335 = vadd.f32 %v2063, %v6334
        %v6336 = vpop.f32.mrb[0].mxu0
        %6337 = vmatprep.mubr.f32.mxu0 0.0
        %6338 = vmatmul.mubr.f32.gmra.mrb[0].mxu0 %v6066
        %v6339 = vpop.f32.mrb[0].mxu0
        %v6340 = vadd.f32 %v2063, %v6339
        %v6341 = vpop.f32.mrb[0].mxu0
        %6342 = vmatprep.mubr.f32.mxu0 0.0
        %6343 = vmatmul.mubr.f32.gmra.mrb[0].mxu0 %v6069
        %v6344 = vpop.f32.mrb[0].mxu0
        %v6345 = vadd.f32 %v2063, %v6344
        %v6346 = vpop.f32.mrb[0].mxu0
        %6347 = vmatprep.mubr.f32.mxu0 0.0
        %6348 = vmatmul.mubr.f32.gmra.mrb[0].mxu0 %v6072
        %v6349 = vpop.f32.mrb[0].mxu0
        %v6350 = vadd.f32 %v2063, %v6349
        %v6351 = vpop.f32.mrb[0].mxu0
        %6352 = vmatprep.mubr.f32.mxu0 0.0
        %6353 = vmatmul.mubr.f32.gmra.mrb[0].mxu0 %v6075
        %v6354 = vpop.f32.mrb[0].mxu0
        %v6355 = vadd.f32 %v2063, %v6354
        %v6356 = vpop.f32.mrb[0].mxu0
        %6357 = vmatprep.mubr.f32.mxu0 0.0
        %6358 = vmatmul.mubr.f32.gmra.mrb[0].mxu0 %v6078
        %v6359 = vpop.f32.mrb[0].mxu0
        %v6360 = vadd.f32 %v2063, %v6359
        %v6361 = vpop.f32.mrb[0].mxu0
        %6362 = vmatprep.mubr.f32.mxu0 0.0
        %6363 = vmatmul.mubr.f32.gmra.mrb[0].mxu0 %v6081
        %v6364 = vpop.f32.mrb[0].mxu0
        %v6365 = vadd.f32 %v2063, %v6364
        %v6366 = vpop.f32.mrb[0].mxu0
        %6367 = vmatprep.mubr.f32.mxu0 0.0
        %6368 = vmatmul.mubr.f32.gmra.mrb[0].mxu0 %v6084
        %v6369 = vpop.f32.mrb[0].mxu0
        %v6370 = vadd.f32 %v2063, %v6369
        %v6371 = vpop.f32.mrb[0].mxu0
        %6372 = vmatprep.mubr.f32.mxu0 0.0
        %6373 = vmatmul.mubr.f32.gmra.mrb[0].mxu0 %v6087
        %v6374 = vpop.f32.mrb[0].mxu0
        %v6375 = vadd.f32 %v2063, %v6374
        %v6376 = vpop.f32.mrb[0].mxu0
        %6377 = vmatprep.mubr.f32.mxu0 0.0
        %6378 = vmatmul.mubr.f32.gmra.mrb[0].mxu0 %v6090
        %v6379 = vpop.f32.mrb[0].mxu0
        %v6380 = vadd.f32 %v2063, %v6379
        %v6381 = vpop.f32.mrb[0].mxu0
        %6382 = vmatprep.mubr.f32.mxu0 0.0
        %6383 = vmatmul.mubr.f32.gmra.mrb[0].mxu0 %v6093
        %v6384 = vpop.f32.mrb[0].mxu0
        %v6385 = vadd.f32 %v2063, %v6384
        %v6386 = vpop.f32.mrb[0].mxu0
        %6387 = vmatprep.mubr.f32.mxu0 0.0
        %6388 = vmatmul.mubr.f32.gmra.mrb[0].mxu0 %v6096
        %v6389 = vpop.f32.mrb[0].mxu0
        %v6390 = vadd.f32 %v2063, %v6389
        %v6391 = vpop.f32.mrb[0].mxu0
        %6392 = vmatprep.mubr.f32.mxu0 0.0
        %6393 = vmatmul.mubr.f32.gmra.mrb[0].mxu0 %v6099
        %v6394 = vpop.f32.mrb[0].mxu0
        %v6395 = vadd.f32 %v2063, %v6394
        %v6396 = vpop.f32.mrb[0].mxu0
        %6397 = vmatprep.mubr.f32.mxu0 0.0
        %6398 = vmatmul.mubr.f32.gmra.mrb[0].mxu0 %v6102
        %v6399 = vpop.f32.mrb[0].mxu0
        %v6400 = vadd.f32 %v2063, %v6399
        %v6401 = vpop.f32.mrb[0].mxu0
        %6402 = vmatprep.mubr.f32.mxu0 0.0
        %6403 = vmatmul.mubr.f32.gmra.mrb[0].mxu0 %v6105
        %v6404 = vpop.f32.mrb[0].mxu0
        %v6405 = vadd.f32 %v2063, %v6404
        %v6406 = vpop.f32.mrb[0].mxu0
        %6407 = vmatprep.mubr.f32.mxu0 0.0
        %6408 = vmatmul.mubr.f32.gmra.mrb[0].mxu0 %v6108
        %v6409 = vpop.f32.mrb[0].mxu0
        %v6410 = vadd.f32 %v2063, %v6409
        %v6411 = vpop.f32.mrb[0].mxu0
        %6412 = vmatprep.mubr.f32.mxu0 0.0
        %6413 = vmatmul.mubr.f32.gmra.mrb[0].mxu0 %v6111
        %v6414 = vpop.f32.mrb[0].mxu0
        %v6415 = vadd.f32 %v2063, %v6414
        %v6416 = vpop.f32.mrb[0].mxu0
        %6417 = vmatprep.mubr.f32.mxu0 0.0
        %6418 = vmatmul.mubr.f32.gmra.mrb[0].mxu0 %v6114
        %v6419 = vpop.f32.mrb[0].mxu0
        %v6420 = vadd.f32 %v2063, %v6419
        %v6421 = vpop.f32.mrb[0].mxu0
        %6422 = vmatprep.mubr.f32.mxu0 0.0
        %6423 = vmatmul.mubr.f32.gmra.mrb[0].mxu0 %v6117
        %v6424 = vpop.f32.mrb[0].mxu0
        %v6425 = vadd.f32 %v2063, %v6424
        %v6426 = vpop.f32.mrb[0].mxu0
        %6427 = vmatprep.mubr.f32.mxu0 0.0
        %6428 = vmatmul.mubr.f32.gmra.mrb[0].mxu0 %v6120
        %v6429 = vpop.f32.mrb[0].mxu0
        %v6430 = vadd.f32 %v2063, %v6429
        %v6431 = vpop.f32.mrb[0].mxu0
        %6432 = vmatprep.mubr.f32.mxu0 0.0
        %6433 = vmatmul.mubr.f32.gmra.mrb[0].mxu0 %v6123
        %v6434 = vpop.f32.mrb[0].mxu0
        %v6435 = vadd.f32 %v2063, %v6434
        %v6436 = vpop.f32.mrb[0].mxu0
        %6437 = vmatprep.mubr.f32.mxu0 0.0
        %6438 = vmatmul.mubr.f32.gmra.mrb[0].mxu0 %v6126
        %v6439 = vpop.f32.mrb[0].mxu0
        %v6440 = vadd.f32 %v2063, %v6439
        %v6441 = vpop.f32.mrb[0].mxu0
        %6442 = vdwg.mxu0
        %v6443 = vmax.f32 %v5877, %v6195
        %v6444 = vmax.f32 %v5878, %v6200
        %v6445 = vmax.f32 %v5879, %v6205
        %v6446 = vmax.f32 %v5880, %v6210
        %v6447 = vmax.f32 %v5881, %v6215
        %v6448 = vmax.f32 %v5882, %v6220
        %v6449 = vmax.f32 %v5883, %v6225
        %v6450 = vmax.f32 %v5884, %v6230
        %v6451 = vmax.f32 %v5885, %v6235
        %v6452 = vmax.f32 %v5886, %v6240
        %v6453 = vmax.f32 %v5887, %v6245
        %v6454 = vmax.f32 %v5888, %v6250
        %v6455 = vmax.f32 %v5889, %v6255
        %v6456 = vmax.f32 %v5890, %v6260
        %v6457 = vmax.f32 %v5891, %v6265
        %v6458 = vmax.f32 %v5892, %v6270
        %v6459 = vmax.f32 %v5893, %v6275
        %v6460 = vmax.f32 %v5894, %v6280
        %v6461 = vmax.f32 %v5895, %v6285
        %v6462 = vmax.f32 %v5896, %v6290
        %v6463 = vmax.f32 %v5897, %v6295
        %v6464 = vmax.f32 %v5898, %v6300
        %v6465 = vmax.f32 %v5899, %v6305
        %v6466 = vmax.f32 %v5900, %v6310
        %v6467 = vmax.f32 %v5901, %v6315
        %v6468 = vmax.f32 %v5902, %v6320
        %v6469 = vmax.f32 %v5903, %v6325
        %v6470 = vmax.f32 %v5904, %v6330
        %v6471 = vmax.f32 %v5905, %v6335
        %v6472 = vmax.f32 %v5906, %v6340
        %v6473 = vmax.f32 %v5907, %v6345
        %v6474 = vmax.f32 %v5908, %v6350
        %v6475 = vmax.f32 %v5909, %v6355
        %v6476 = vmax.f32 %v5910, %v6360
        %v6477 = vmax.f32 %v5911, %v6365
        %v6478 = vmax.f32 %v5912, %v6370
        %v6479 = vmax.f32 %v5913, %v6375
        %v6480 = vmax.f32 %v5914, %v6380
        %v6481 = vmax.f32 %v5915, %v6385
        %v6482 = vmax.f32 %v5916, %v6390
        %v6483 = vmax.f32 %v5917, %v6395
        %v6484 = vmax.f32 %v5918, %v6400
        %v6485 = vmax.f32 %v5919, %v6405
        %v6486 = vmax.f32 %v5920, %v6410
        %v6487 = vmax.f32 %v5921, %v6415
        %v6488 = vmax.f32 %v5922, %v6420
        %v6489 = vmax.f32 %v5923, %v6425
        %v6490 = vmax.f32 %v5924, %v6430
        %v6491 = vmax.f32 %v5925, %v6435
        %v6492 = vmax.f32 %v5926, %v6440
        %s6493 = scalar_lea.vmem %s1976, 3200 [#allocation2]
        %v6494 = vld [vmem:[%s6493] sm:$0xff]
        %v6495 = vld [vmem:[%s6493 + $0x8] sm:$0xff]
        %v6496 = vld [vmem:[%s6493 + $0x10] sm:$0xff]
        %v6497 = vld [vmem:[%s6493 + $0x18] sm:$0xff]
        %v6498 = vld [vmem:[%s6493 + $0x20] sm:$0xff]
        %v6499 = vld [vmem:[%s6493 + $0x28] sm:$0xff]
        %v6500 = vld [vmem:[%s6493 + $0x30] sm:$0xff]
        %v6501 = vld [vmem:[%s6493 + $0x38] sm:$0xff]
        %v6502 = vld [vmem:[%s6493 + $0x40] sm:$0xff]
        %v6503 = vld [vmem:[%s6493 + $0x48] sm:$0xff]
        %v6504 = vld [vmem:[%s6493 + $0x50] sm:$0xff]
        %v6505 = vld [vmem:[%s6493 + $0x58] sm:$0xff]
        %v6506 = vld [vmem:[%s6493 + $0x60] sm:$0xff]
        %v6507 = vld [vmem:[%s6493 + $0x68] sm:$0xff]
        %v6508 = vld [vmem:[%s6493 + $0x70] sm:$0xff]
        %v6509 = vld [vmem:[%s6493 + $0x78] sm:$0xff]
        %v6510 = vld [vmem:[%s6493 + $0x80] sm:$0xff]
        %v6511 = vld [vmem:[%s6493 + $0x88] sm:$0xff]
        %v6512 = vld [vmem:[%s6493 + $0x90] sm:$0xff]
        %v6513 = vld [vmem:[%s6493 + $0x98] sm:$0xff]
        %v6514 = vld [vmem:[%s6493 + $0xa0] sm:$0xff]
        %v6515 = vld [vmem:[%s6493 + $0xa8] sm:$0xff]
        %v6516 = vld [vmem:[%s6493 + $0xb0] sm:$0xff]
        %v6517 = vld [vmem:[%s6493 + $0xb8] sm:$0xff]
        %v6518 = vld [vmem:[%s6493 + $0xc0] sm:$0xff]
        %v6519 = vld [vmem:[%s6493 + $0xc8] sm:$0xff]
        %v6520 = vld [vmem:[%s6493 + $0xd0] sm:$0xff]
        %v6521 = vld [vmem:[%s6493 + $0xd8] sm:$0xff]
        %v6522 = vld [vmem:[%s6493 + $0xe0] sm:$0xff]
        %v6523 = vld [vmem:[%s6493 + $0xe8] sm:$0xff]
        %v6524 = vld [vmem:[%s6493 + $0xf0] sm:$0xff]
        %v6525 = vld [vmem:[%s6493 + $0xf8] sm:$0xff]
        %v6526 = vld [vmem:[%s6493 + $0x100] sm:$0xff]
        %v6527 = vld [vmem:[%s6493 + $0x108] sm:$0xff]
        %v6528 = vld [vmem:[%s6493 + $0x110] sm:$0xff]
        %v6529 = vld [vmem:[%s6493 + $0x118] sm:$0xff]
        %v6530 = vld [vmem:[%s6493 + $0x120] sm:$0xff]
        %v6531 = vld [vmem:[%s6493 + $0x128] sm:$0xff]
        %v6532 = vld [vmem:[%s6493 + $0x130] sm:$0xff]
        %v6533 = vld [vmem:[%s6493 + $0x138] sm:$0xff]
        %v6534 = vld [vmem:[%s6493 + $0x140] sm:$0xff]
        %v6535 = vld [vmem:[%s6493 + $0x148] sm:$0xff]
        %v6536 = vld [vmem:[%s6493 + $0x150] sm:$0xff]
        %v6537 = vld [vmem:[%s6493 + $0x158] sm:$0xff]
        %v6538 = vld [vmem:[%s6493 + $0x160] sm:$0xff]
        %v6539 = vld [vmem:[%s6493 + $0x168] sm:$0xff]
        %v6540 = vld [vmem:[%s6493 + $0x170] sm:$0xff]
        %v6541 = vld [vmem:[%s6493 + $0x178] sm:$0xff]
        %v6542 = vld [vmem:[%s6493 + $0x180] sm:$0xff]
        %v6543 = vld [vmem:[%s6493 + $0x188] sm:$0xff]
        %v6545 = vsel %vm2065, %v6494, 0
        %v6548 = vsel %vm2065, %v6495, 0
        %v6551 = vsel %vm2065, %v6496, 0
        %v6554 = vsel %vm2065, %v6497, 0
        %v6557 = vsel %vm2065, %v6498, 0
        %v6560 = vsel %vm2065, %v6499, 0
        %v6563 = vsel %vm2065, %v6500, 0
        %v6566 = vsel %vm2065, %v6501, 0
        %v6569 = vsel %vm2065, %v6502, 0
        %v6572 = vsel %vm2065, %v6503, 0
        %v6575 = vsel %vm2065, %v6504, 0
        %v6578 = vsel %vm2065, %v6505, 0
        %v6581 = vsel %vm2065, %v6506, 0
        %v6584 = vsel %vm2065, %v6507, 0
        %v6587 = vsel %vm2065, %v6508, 0
        %v6590 = vsel %vm2065, %v6509, 0
        %v6593 = vsel %vm2065, %v6510, 0
        %v6596 = vsel %vm2065, %v6511, 0
        %v6599 = vsel %vm2065, %v6512, 0
        %v6602 = vsel %vm2065, %v6513, 0
        %v6605 = vsel %vm2065, %v6514, 0
        %v6608 = vsel %vm2065, %v6515, 0
        %v6611 = vsel %vm2065, %v6516, 0
        %v6614 = vsel %vm2065, %v6517, 0
        %v6617 = vsel %vm2065, %v6518, 0
        %v6620 = vsel %vm2065, %v6519, 0
        %v6623 = vsel %vm2065, %v6520, 0
        %v6626 = vsel %vm2065, %v6521, 0
        %v6629 = vsel %vm2065, %v6522, 0
        %v6632 = vsel %vm2065, %v6523, 0
        %v6635 = vsel %vm2065, %v6524, 0
        %v6638 = vsel %vm2065, %v6525, 0
        %v6641 = vsel %vm2065, %v6526, 0
        %v6644 = vsel %vm2065, %v6527, 0
        %v6647 = vsel %vm2065, %v6528, 0
        %v6650 = vsel %vm2065, %v6529, 0
        %v6653 = vsel %vm2065, %v6530, 0
        %v6656 = vsel %vm2065, %v6531, 0
        %v6659 = vsel %vm2065, %v6532, 0
        %v6662 = vsel %vm2065, %v6533, 0
        %v6665 = vsel %vm2065, %v6534, 0
        %v6668 = vsel %vm2065, %v6535, 0
        %v6671 = vsel %vm2065, %v6536, 0
        %v6674 = vsel %vm2065, %v6537, 0
        %v6677 = vsel %vm2065, %v6538, 0
        %v6680 = vsel %vm2065, %v6539, 0
        %v6683 = vsel %vm2065, %v6540, 0
        %v6686 = vsel %vm2065, %v6541, 0
        %v6689 = vsel %vm2065, %v6542, 0
        %v6692 = vsel %vm2065, %v6543, 0
        %6694 = vmatprep.subr.mxu0 0.0
        %6695 = vmatpush1.msra.mxu0 %v2004
        %6696 = vmatprep.subr.mxu0 0.0
        %6697 = vmatpush1.msra.mxu0 %v2005
        %6698 = vmatprep.subr.mxu0 0.0
        %6699 = vmatpush1.msra.mxu0 %v2006
        %6700 = vmatprep.subr.mxu0 0.0
        %6701 = vmatpush1.msra.mxu0 %v2007
        %6702 = vmatprep.subr.mxu0 0.0
        %6703 = vmatpush1.msra.mxu0 0.0
        %6704 = vmatprep.subr.mxu0 0.0
        %6705 = vmatpush1.msra.mxu0 0.0
        %6706 = vmatprep.subr.mxu0 0.0
        %6707 = vmatpush1.msra.mxu0 0.0
        %6708 = vmatprep.subr.mxu0 0.0
        %6709 = vmatpush1.msra.mxu0 0.0
        %6710 = vmatprep.subr.mxu0 0.0
        %6711 = vmatpush1.msra.mxu0 0.0
        %6712 = vmatprep.subr.mxu0 0.0
        %6713 = vmatpush1.msra.mxu0 0.0
        %6714 = vmatprep.subr.mxu0 0.0
        %6715 = vmatpush1.msra.mxu0 0.0
        %6716 = vmatprep.subr.mxu0 0.0
        %6717 = vmatpush1.msra.mxu0 0.0
        %6718 = vmatprep.subr.mxu0 0.0
        %6719 = vmatpush1.msra.mxu0 0.0
        %6720 = vmatprep.subr.mxu0 0.0
        %6721 = vmatpush1.msra.mxu0 0.0
        %6722 = vmatprep.subr.mxu0 0.0
        %6723 = vmatpush1.msra.mxu0 0.0
        %6724 = vmatprep.subr.mxu0 0.0
        %6725 = vmatpush1.msra.mxu0 0.0
        %6726 = vmatprep.subr.mxu0 0.0
        %6727 = vmatpush1.msra.mxu0 0.0
        %6728 = vmatprep.subr.mxu0 0.0
        %6729 = vmatpush1.msra.mxu0 0.0
        %6730 = vmatprep.subr.mxu0 0.0
        %6731 = vmatpush1.msra.mxu0 0.0
        %6732 = vmatprep.subr.mxu0 0.0
        %6733 = vmatpush1.msra.mxu0 0.0
        %6734 = vmatprep.subr.mxu0 0.0
        %6735 = vmatpush1.msra.mxu0 0.0
        %6736 = vmatprep.subr.mxu0 0.0
        %6737 = vmatpush1.msra.mxu0 0.0
        %6738 = vmatprep.subr.mxu0 0.0
        %6739 = vmatpush1.msra.mxu0 0.0
        %6740 = vmatprep.subr.mxu0 0.0
        %6741 = vmatpush1.msra.mxu0 0.0
        %6742 = vmatprep.subr.mxu0 0.0
        %6743 = vmatpush1.msra.mxu0 0.0
        %6744 = vmatprep.subr.mxu0 0.0
        %6745 = vmatpush1.msra.mxu0 0.0
        %6746 = vmatprep.subr.mxu0 0.0
        %6747 = vmatpush1.msra.mxu0 0.0
        %6748 = vmatprep.subr.mxu0 0.0
        %6749 = vmatpush1.msra.mxu0 0.0
        %6750 = vmatprep.subr.mxu0 0.0
        %6751 = vmatpush1.msra.mxu0 0.0
        %6752 = vmatprep.subr.mxu0 0.0
        %6753 = vmatpush1.msra.mxu0 0.0
        %6754 = vmatprep.subr.mxu0 0.0
        %6755 = vmatpush1.msra.mxu0 0.0
        %6756 = vmatprep.subr.mxu0 0.0
        %6757 = vmatpush1.msra.mxu0 0.0
        %6758 = vmatprep.mubr.f32.mxu0 0.0
        %6759 = vmatmul.mubr.f32.gmra.mrb[0].mxu0 %v6545
        %v6760 = vpop.f32.mrb[0].mxu0
        %v6761 = vadd.f32 %v2063, %v6760
        %v6762 = vpop.f32.mrb[0].mxu0
        %6763 = vmatprep.mubr.f32.mxu0 0.0
        %6764 = vmatmul.mubr.f32.gmra.mrb[0].mxu0 %v6548
        %v6765 = vpop.f32.mrb[0].mxu0
        %v6766 = vadd.f32 %v2063, %v6765
        %v6767 = vpop.f32.mrb[0].mxu0
        %6768 = vmatprep.mubr.f32.mxu0 0.0
        %6769 = vmatmul.mubr.f32.gmra.mrb[0].mxu0 %v6551
        %v6770 = vpop.f32.mrb[0].mxu0
        %v6771 = vadd.f32 %v2063, %v6770
        %v6772 = vpop.f32.mrb[0].mxu0
        %6773 = vmatprep.mubr.f32.mxu0 0.0
        %6774 = vmatmul.mubr.f32.gmra.mrb[0].mxu0 %v6554
        %v6775 = vpop.f32.mrb[0].mxu0
        %v6776 = vadd.f32 %v2063, %v6775
        %v6777 = vpop.f32.mrb[0].mxu0
        %6778 = vmatprep.mubr.f32.mxu0 0.0
        %6779 = vmatmul.mubr.f32.gmra.mrb[0].mxu0 %v6557
        %v6780 = vpop.f32.mrb[0].mxu0
        %v6781 = vadd.f32 %v2063, %v6780
        %v6782 = vpop.f32.mrb[0].mxu0
        %6783 = vmatprep.mubr.f32.mxu0 0.0
        %6784 = vmatmul.mubr.f32.gmra.mrb[0].mxu0 %v6560
        %v6785 = vpop.f32.mrb[0].mxu0
        %v6786 = vadd.f32 %v2063, %v6785
        %v6787 = vpop.f32.mrb[0].mxu0
        %6788 = vmatprep.mubr.f32.mxu0 0.0
        %6789 = vmatmul.mubr.f32.gmra.mrb[0].mxu0 %v6563
        %v6790 = vpop.f32.mrb[0].mxu0
        %v6791 = vadd.f32 %v2063, %v6790
        %v6792 = vpop.f32.mrb[0].mxu0
        %6793 = vmatprep.mubr.f32.mxu0 0.0
        %6794 = vmatmul.mubr.f32.gmra.mrb[0].mxu0 %v6566
        %v6795 = vpop.f32.mrb[0].mxu0
        %v6796 = vadd.f32 %v2063, %v6795
        %v6797 = vpop.f32.mrb[0].mxu0
        %6798 = vmatprep.mubr.f32.mxu0 0.0
        %6799 = vmatmul.mubr.f32.gmra.mrb[0].mxu0 %v6569
        %v6800 = vpop.f32.mrb[0].mxu0
        %v6801 = vadd.f32 %v2063, %v6800
        %v6802 = vpop.f32.mrb[0].mxu0
        %6803 = vmatprep.mubr.f32.mxu0 0.0
        %6804 = vmatmul.mubr.f32.gmra.mrb[0].mxu0 %v6572
        %v6805 = vpop.f32.mrb[0].mxu0
        %v6806 = vadd.f32 %v2063, %v6805
        %v6807 = vpop.f32.mrb[0].mxu0
        %6808 = vmatprep.mubr.f32.mxu0 0.0
        %6809 = vmatmul.mubr.f32.gmra.mrb[0].mxu0 %v6575
        %v6810 = vpop.f32.mrb[0].mxu0
        %v6811 = vadd.f32 %v2063, %v6810
        %v6812 = vpop.f32.mrb[0].mxu0
        %6813 = vmatprep.mubr.f32.mxu0 0.0
        %6814 = vmatmul.mubr.f32.gmra.mrb[0].mxu0 %v6578
        %v6815 = vpop.f32.mrb[0].mxu0
        %v6816 = vadd.f32 %v2063, %v6815
        %v6817 = vpop.f32.mrb[0].mxu0
        %6818 = vmatprep.mubr.f32.mxu0 0.0
        %6819 = vmatmul.mubr.f32.gmra.mrb[0].mxu0 %v6581
        %v6820 = vpop.f32.mrb[0].mxu0
        %v6821 = vadd.f32 %v2063, %v6820
        %v6822 = vpop.f32.mrb[0].mxu0
        %6823 = vmatprep.mubr.f32.mxu0 0.0
        %6824 = vmatmul.mubr.f32.gmra.mrb[0].mxu0 %v6584
        %v6825 = vpop.f32.mrb[0].mxu0
        %v6826 = vadd.f32 %v2063, %v6825
        %v6827 = vpop.f32.mrb[0].mxu0
        %6828 = vmatprep.mubr.f32.mxu0 0.0
        %6829 = vmatmul.mubr.f32.gmra.mrb[0].mxu0 %v6587
        %v6830 = vpop.f32.mrb[0].mxu0
        %v6831 = vadd.f32 %v2063, %v6830
        %v6832 = vpop.f32.mrb[0].mxu0
        %6833 = vmatprep.mubr.f32.mxu0 0.0
        %6834 = vmatmul.mubr.f32.gmra.mrb[0].mxu0 %v6590
        %v6835 = vpop.f32.mrb[0].mxu0
        %v6836 = vadd.f32 %v2063, %v6835
        %v6837 = vpop.f32.mrb[0].mxu0
        %6838 = vmatprep.mubr.f32.mxu0 0.0
        %6839 = vmatmul.mubr.f32.gmra.mrb[0].mxu0 %v6593
        %v6840 = vpop.f32.mrb[0].mxu0
        %v6841 = vadd.f32 %v2063, %v6840
        %v6842 = vpop.f32.mrb[0].mxu0
        %6843 = vmatprep.mubr.f32.mxu0 0.0
        %6844 = vmatmul.mubr.f32.gmra.mrb[0].mxu0 %v6596
        %v6845 = vpop.f32.mrb[0].mxu0
        %v6846 = vadd.f32 %v2063, %v6845
        %v6847 = vpop.f32.mrb[0].mxu0
        %6848 = vmatprep.mubr.f32.mxu0 0.0
        %6849 = vmatmul.mubr.f32.gmra.mrb[0].mxu0 %v6599
        %v6850 = vpop.f32.mrb[0].mxu0
        %v6851 = vadd.f32 %v2063, %v6850
        %v6852 = vpop.f32.mrb[0].mxu0
        %6853 = vmatprep.mubr.f32.mxu0 0.0
        %6854 = vmatmul.mubr.f32.gmra.mrb[0].mxu0 %v6602
        %v6855 = vpop.f32.mrb[0].mxu0
        %v6856 = vadd.f32 %v2063, %v6855
        %v6857 = vpop.f32.mrb[0].mxu0
        %6858 = vmatprep.mubr.f32.mxu0 0.0
        %6859 = vmatmul.mubr.f32.gmra.mrb[0].mxu0 %v6605
        %v6860 = vpop.f32.mrb[0].mxu0
        %v6861 = vadd.f32 %v2063, %v6860
        %v6862 = vpop.f32.mrb[0].mxu0
        %6863 = vmatprep.mubr.f32.mxu0 0.0
        %6864 = vmatmul.mubr.f32.gmra.mrb[0].mxu0 %v6608
        %v6865 = vpop.f32.mrb[0].mxu0
        %v6866 = vadd.f32 %v2063, %v6865
        %v6867 = vpop.f32.mrb[0].mxu0
        %6868 = vmatprep.mubr.f32.mxu0 0.0
        %6869 = vmatmul.mubr.f32.gmra.mrb[0].mxu0 %v6611
        %v6870 = vpop.f32.mrb[0].mxu0
        %v6871 = vadd.f32 %v2063, %v6870
        %v6872 = vpop.f32.mrb[0].mxu0
        %6873 = vmatprep.mubr.f32.mxu0 0.0
        %6874 = vmatmul.mubr.f32.gmra.mrb[0].mxu0 %v6614
        %v6875 = vpop.f32.mrb[0].mxu0
        %v6876 = vadd.f32 %v2063, %v6875
        %v6877 = vpop.f32.mrb[0].mxu0
        %6878 = vmatprep.mubr.f32.mxu0 0.0
        %6879 = vmatmul.mubr.f32.gmra.mrb[0].mxu0 %v6617
        %v6880 = vpop.f32.mrb[0].mxu0
        %v6881 = vadd.f32 %v2063, %v6880
        %v6882 = vpop.f32.mrb[0].mxu0
        %6883 = vmatprep.mubr.f32.mxu0 0.0
        %6884 = vmatmul.mubr.f32.gmra.mrb[0].mxu0 %v6620
        %v6885 = vpop.f32.mrb[0].mxu0
        %v6886 = vadd.f32 %v2063, %v6885
        %v6887 = vpop.f32.mrb[0].mxu0
        %6888 = vmatprep.mubr.f32.mxu0 0.0
        %6889 = vmatmul.mubr.f32.gmra.mrb[0].mxu0 %v6623
        %v6890 = vpop.f32.mrb[0].mxu0
        %v6891 = vadd.f32 %v2063, %v6890
        %v6892 = vpop.f32.mrb[0].mxu0
        %6893 = vmatprep.mubr.f32.mxu0 0.0
        %6894 = vmatmul.mubr.f32.gmra.mrb[0].mxu0 %v6626
        %v6895 = vpop.f32.mrb[0].mxu0
        %v6896 = vadd.f32 %v2063, %v6895
        %v6897 = vpop.f32.mrb[0].mxu0
        %6898 = vmatprep.mubr.f32.mxu0 0.0
        %6899 = vmatmul.mubr.f32.gmra.mrb[0].mxu0 %v6629
        %v6900 = vpop.f32.mrb[0].mxu0
        %v6901 = vadd.f32 %v2063, %v6900
        %v6902 = vpop.f32.mrb[0].mxu0
        %6903 = vmatprep.mubr.f32.mxu0 0.0
        %6904 = vmatmul.mubr.f32.gmra.mrb[0].mxu0 %v6632
        %v6905 = vpop.f32.mrb[0].mxu0
        %v6906 = vadd.f32 %v2063, %v6905
        %v6907 = vpop.f32.mrb[0].mxu0
        %6908 = vmatprep.mubr.f32.mxu0 0.0
        %6909 = vmatmul.mubr.f32.gmra.mrb[0].mxu0 %v6635
        %v6910 = vpop.f32.mrb[0].mxu0
        %v6911 = vadd.f32 %v2063, %v6910
        %v6912 = vpop.f32.mrb[0].mxu0
        %6913 = vmatprep.mubr.f32.mxu0 0.0
        %6914 = vmatmul.mubr.f32.gmra.mrb[0].mxu0 %v6638
        %v6915 = vpop.f32.mrb[0].mxu0
        %v6916 = vadd.f32 %v2063, %v6915
        %v6917 = vpop.f32.mrb[0].mxu0
        %6918 = vmatprep.mubr.f32.mxu0 0.0
        %6919 = vmatmul.mubr.f32.gmra.mrb[0].mxu0 %v6641
        %v6920 = vpop.f32.mrb[0].mxu0
        %v6921 = vadd.f32 %v2063, %v6920
        %v6922 = vpop.f32.mrb[0].mxu0
        %6923 = vmatprep.mubr.f32.mxu0 0.0
        %6924 = vmatmul.mubr.f32.gmra.mrb[0].mxu0 %v6644
        %v6925 = vpop.f32.mrb[0].mxu0
        %v6926 = vadd.f32 %v2063, %v6925
        %v6927 = vpop.f32.mrb[0].mxu0
        %6928 = vmatprep.mubr.f32.mxu0 0.0
        %6929 = vmatmul.mubr.f32.gmra.mrb[0].mxu0 %v6647
        %v6930 = vpop.f32.mrb[0].mxu0
        %v6931 = vadd.f32 %v2063, %v6930
        %v6932 = vpop.f32.mrb[0].mxu0
        %6933 = vmatprep.mubr.f32.mxu0 0.0
        %6934 = vmatmul.mubr.f32.gmra.mrb[0].mxu0 %v6650
        %v6935 = vpop.f32.mrb[0].mxu0
        %v6936 = vadd.f32 %v2063, %v6935
        %v6937 = vpop.f32.mrb[0].mxu0
        %6938 = vmatprep.mubr.f32.mxu0 0.0
        %6939 = vmatmul.mubr.f32.gmra.mrb[0].mxu0 %v6653
        %v6940 = vpop.f32.mrb[0].mxu0
        %v6941 = vadd.f32 %v2063, %v6940
        %v6942 = vpop.f32.mrb[0].mxu0
        %6943 = vmatprep.mubr.f32.mxu0 0.0
        %6944 = vmatmul.mubr.f32.gmra.mrb[0].mxu0 %v6656
        %v6945 = vpop.f32.mrb[0].mxu0
        %v6946 = vadd.f32 %v2063, %v6945
        %v6947 = vpop.f32.mrb[0].mxu0
        %6948 = vmatprep.mubr.f32.mxu0 0.0
        %6949 = vmatmul.mubr.f32.gmra.mrb[0].mxu0 %v6659
        %v6950 = vpop.f32.mrb[0].mxu0
        %v6951 = vadd.f32 %v2063, %v6950
        %v6952 = vpop.f32.mrb[0].mxu0
        %6953 = vmatprep.mubr.f32.mxu0 0.0
        %6954 = vmatmul.mubr.f32.gmra.mrb[0].mxu0 %v6662
        %v6955 = vpop.f32.mrb[0].mxu0
        %v6956 = vadd.f32 %v2063, %v6955
        %v6957 = vpop.f32.mrb[0].mxu0
        %6958 = vmatprep.mubr.f32.mxu0 0.0
        %6959 = vmatmul.mubr.f32.gmra.mrb[0].mxu0 %v6665
        %v6960 = vpop.f32.mrb[0].mxu0
        %v6961 = vadd.f32 %v2063, %v6960
        %v6962 = vpop.f32.mrb[0].mxu0
        %6963 = vmatprep.mubr.f32.mxu0 0.0
        %6964 = vmatmul.mubr.f32.gmra.mrb[0].mxu0 %v6668
        %v6965 = vpop.f32.mrb[0].mxu0
        %v6966 = vadd.f32 %v2063, %v6965
        %v6967 = vpop.f32.mrb[0].mxu0
        %6968 = vmatprep.mubr.f32.mxu0 0.0
        %6969 = vmatmul.mubr.f32.gmra.mrb[0].mxu0 %v6671
        %v6970 = vpop.f32.mrb[0].mxu0
        %v6971 = vadd.f32 %v2063, %v6970
        %v6972 = vpop.f32.mrb[0].mxu0
        %6973 = vmatprep.mubr.f32.mxu0 0.0
        %6974 = vmatmul.mubr.f32.gmra.mrb[0].mxu0 %v6674
        %v6975 = vpop.f32.mrb[0].mxu0
        %v6976 = vadd.f32 %v2063, %v6975
        %v6977 = vpop.f32.mrb[0].mxu0
        %6978 = vmatprep.mubr.f32.mxu0 0.0
        %6979 = vmatmul.mubr.f32.gmra.mrb[0].mxu0 %v6677
        %v6980 = vpop.f32.mrb[0].mxu0
        %v6981 = vadd.f32 %v2063, %v6980
        %v6982 = vpop.f32.mrb[0].mxu0
        %6983 = vmatprep.mubr.f32.mxu0 0.0
        %6984 = vmatmul.mubr.f32.gmra.mrb[0].mxu0 %v6680
        %v6985 = vpop.f32.mrb[0].mxu0
        %v6986 = vadd.f32 %v2063, %v6985
        %v6987 = vpop.f32.mrb[0].mxu0
        %6988 = vmatprep.mubr.f32.mxu0 0.0
        %6989 = vmatmul.mubr.f32.gmra.mrb[0].mxu0 %v6683
        %v6990 = vpop.f32.mrb[0].mxu0
        %v6991 = vadd.f32 %v2063, %v6990
        %v6992 = vpop.f32.mrb[0].mxu0
        %6993 = vmatprep.mubr.f32.mxu0 0.0
        %6994 = vmatmul.mubr.f32.gmra.mrb[0].mxu0 %v6686
        %v6995 = vpop.f32.mrb[0].mxu0
        %v6996 = vadd.f32 %v2063, %v6995
        %v6997 = vpop.f32.mrb[0].mxu0
        %6998 = vmatprep.mubr.f32.mxu0 0.0
        %6999 = vmatmul.mubr.f32.gmra.mrb[0].mxu0 %v6689
        %v7000 = vpop.f32.mrb[0].mxu0
        %v7001 = vadd.f32 %v2063, %v7000
        %v7002 = vpop.f32.mrb[0].mxu0
        %7003 = vmatprep.mubr.f32.mxu0 0.0
        %7004 = vmatmul.mubr.f32.gmra.mrb[0].mxu0 %v6692
        %v7005 = vpop.f32.mrb[0].mxu0
        %v7006 = vadd.f32 %v2063, %v7005
        %v7007 = vpop.f32.mrb[0].mxu0
        %7008 = vdwg.mxu0
        %v7009 = vmax.f32 %v6443, %v6761
        %v7010 = vmax.f32 %v6444, %v6766
        %v7011 = vmax.f32 %v6445, %v6771
        %v7012 = vmax.f32 %v6446, %v6776
        %v7013 = vmax.f32 %v6447, %v6781
        %v7014 = vmax.f32 %v6448, %v6786
        %v7015 = vmax.f32 %v6449, %v6791
        %v7016 = vmax.f32 %v6450, %v6796
        %v7017 = vmax.f32 %v6451, %v6801
        %v7018 = vmax.f32 %v6452, %v6806
        %v7019 = vmax.f32 %v6453, %v6811
        %v7020 = vmax.f32 %v6454, %v6816
        %v7021 = vmax.f32 %v6455, %v6821
        %v7022 = vmax.f32 %v6456, %v6826
        %v7023 = vmax.f32 %v6457, %v6831
        %v7024 = vmax.f32 %v6458, %v6836
        %v7025 = vmax.f32 %v6459, %v6841
        %v7026 = vmax.f32 %v6460, %v6846
        %v7027 = vmax.f32 %v6461, %v6851
        %v7028 = vmax.f32 %v6462, %v6856
        %v7029 = vmax.f32 %v6463, %v6861
        %v7030 = vmax.f32 %v6464, %v6866
        %v7031 = vmax.f32 %v6465, %v6871
        %v7032 = vmax.f32 %v6466, %v6876
        %v7033 = vmax.f32 %v6467, %v6881
        %v7034 = vmax.f32 %v6468, %v6886
        %v7035 = vmax.f32 %v6469, %v6891
        %v7036 = vmax.f32 %v6470, %v6896
        %v7037 = vmax.f32 %v6471, %v6901
        %v7038 = vmax.f32 %v6472, %v6906
        %v7039 = vmax.f32 %v6473, %v6911
        %v7040 = vmax.f32 %v6474, %v6916
        %v7041 = vmax.f32 %v6475, %v6921
        %v7042 = vmax.f32 %v6476, %v6926
        %v7043 = vmax.f32 %v6477, %v6931
        %v7044 = vmax.f32 %v6478, %v6936
        %v7045 = vmax.f32 %v6479, %v6941
        %v7046 = vmax.f32 %v6480, %v6946
        %v7047 = vmax.f32 %v6481, %v6951
        %v7048 = vmax.f32 %v6482, %v6956
        %v7049 = vmax.f32 %v6483, %v6961
        %v7050 = vmax.f32 %v6484, %v6966
        %v7051 = vmax.f32 %v6485, %v6971
        %v7052 = vmax.f32 %v6486, %v6976
        %v7053 = vmax.f32 %v6487, %v6981
        %v7054 = vmax.f32 %v6488, %v6986
        %v7055 = vmax.f32 %v6489, %v6991
        %v7056 = vmax.f32 %v6490, %v6996
        %v7057 = vmax.f32 %v6491, %v7001
        %v7058 = vmax.f32 %v6492, %v7006
        %v7059 = vmax.f32 %v7009, 0.0
        %v7060 = vmax.f32 %v7010, 0.0
        %v7061 = vmax.f32 %v7011, 0.0
        %v7062 = vmax.f32 %v7012, 0.0
        %v7063 = vmax.f32 %v7013, 0.0
        %v7064 = vmax.f32 %v7014, 0.0
        %v7065 = vmax.f32 %v7015, 0.0
        %v7066 = vmax.f32 %v7016, 0.0
        %v7067 = vmax.f32 %v7017, 0.0
        %v7068 = vmax.f32 %v7018, 0.0
        %v7069 = vmax.f32 %v7019, 0.0
        %v7070 = vmax.f32 %v7020, 0.0
        %v7071 = vmax.f32 %v7021, 0.0
        %v7072 = vmax.f32 %v7022, 0.0
        %v7073 = vmax.f32 %v7023, 0.0
        %v7074 = vmax.f32 %v7024, 0.0
        %v7075 = vmax.f32 %v7025, 0.0
        %v7076 = vmax.f32 %v7026, 0.0
        %v7077 = vmax.f32 %v7027, 0.0
        %v7078 = vmax.f32 %v7028, 0.0
        %v7079 = vmax.f32 %v7029, 0.0
        %v7080 = vmax.f32 %v7030, 0.0
        %v7081 = vmax.f32 %v7031, 0.0
        %v7082 = vmax.f32 %v7032, 0.0
        %v7083 = vmax.f32 %v7033, 0.0
        %v7084 = vmax.f32 %v7034, 0.0
        %v7085 = vmax.f32 %v7035, 0.0
        %v7086 = vmax.f32 %v7036, 0.0
        %v7087 = vmax.f32 %v7037, 0.0
        %v7088 = vmax.f32 %v7038, 0.0
        %v7089 = vmax.f32 %v7039, 0.0
        %v7090 = vmax.f32 %v7040, 0.0
        %v7091 = vmax.f32 %v7041, 0.0
        %v7092 = vmax.f32 %v7042, 0.0
        %v7093 = vmax.f32 %v7043, 0.0
        %v7094 = vmax.f32 %v7044, 0.0
        %v7095 = vmax.f32 %v7045, 0.0
        %v7096 = vmax.f32 %v7046, 0.0
        %v7097 = vmax.f32 %v7047, 0.0
        %v7098 = vmax.f32 %v7048, 0.0
        %v7099 = vmax.f32 %v7049, 0.0
        %v7100 = vmax.f32 %v7050, 0.0
        %v7101 = vmax.f32 %v7051, 0.0
        %v7102 = vmax.f32 %v7052, 0.0
        %v7103 = vmax.f32 %v7053, 0.0
        %v7104 = vmax.f32 %v7054, 0.0
        %v7105 = vmax.f32 %v7055, 0.0
        %v7106 = vmax.f32 %v7056, 0.0
        %v7107 = vmax.f32 %v7057, 0.0
        %v7108 = vmax.f32 %v7058, 0.0
        %7109 = vst [vmem:[%s2002] sm:$0xff] %v7059
        %7110 = vst [vmem:[%s2002 + $0x8] sm:$0xff] %v7060
        %7111 = vst [vmem:[%s2002 + $0x10] sm:$0xff] %v7061
        %7112 = vst [vmem:[%s2002 + $0x18] sm:$0xff] %v7062
        %7113 = vst [vmem:[%s2002 + $0x20] sm:$0xff] %v7063
        %7114 = vst [vmem:[%s2002 + $0x28] sm:$0xff] %v7064
        %7115 = vst [vmem:[%s2002 + $0x30] sm:$0xff] %v7065
        %7116 = vst [vmem:[%s2002 + $0x38] sm:$0xff] %v7066
        %7117 = vst [vmem:[%s2002 + $0x40] sm:$0xff] %v7067
        %7118 = vst [vmem:[%s2002 + $0x48] sm:$0xff] %v7068
        %7119 = vst [vmem:[%s2002 + $0x50] sm:$0xff] %v7069
        %7120 = vst [vmem:[%s2002 + $0x58] sm:$0xff] %v7070
        %7121 = vst [vmem:[%s2002 + $0x60] sm:$0xff] %v7071
        %7122 = vst [vmem:[%s2002 + $0x68] sm:$0xff] %v7072
        %7123 = vst [vmem:[%s2002 + $0x70] sm:$0xff] %v7073
        %7124 = vst [vmem:[%s2002 + $0x78] sm:$0xff] %v7074
        %7125 = vst [vmem:[%s2002 + $0x80] sm:$0xff] %v7075
        %7126 = vst [vmem:[%s2002 + $0x88] sm:$0xff] %v7076
        %7127 = vst [vmem:[%s2002 + $0x90] sm:$0xff] %v7077
        %7128 = vst [vmem:[%s2002 + $0x98] sm:$0xff] %v7078
        %7129 = vst [vmem:[%s2002 + $0xa0] sm:$0xff] %v7079
        %7130 = vst [vmem:[%s2002 + $0xa8] sm:$0xff] %v7080
        %7131 = vst [vmem:[%s2002 + $0xb0] sm:$0xff] %v7081
        %7132 = vst [vmem:[%s2002 + $0xb8] sm:$0xff] %v7082
        %7133 = vst [vmem:[%s2002 + $0xc0] sm:$0xff] %v7083
        %7134 = vst [vmem:[%s2002 + $0xc8] sm:$0xff] %v7084
        %7135 = vst [vmem:[%s2002 + $0xd0] sm:$0xff] %v7085
        %7136 = vst [vmem:[%s2002 + $0xd8] sm:$0xff] %v7086
        %7137 = vst [vmem:[%s2002 + $0xe0] sm:$0xff] %v7087
        %7138 = vst [vmem:[%s2002 + $0xe8] sm:$0xff] %v7088
        %7139 = vst [vmem:[%s2002 + $0xf0] sm:$0xff] %v7089
        %7140 = vst [vmem:[%s2002 + $0xf8] sm:$0xff] %v7090
        %7141 = vst [vmem:[%s2002 + $0x100] sm:$0xff] %v7091
        %7142 = vst [vmem:[%s2002 + $0x108] sm:$0xff] %v7092
        %7143 = vst [vmem:[%s2002 + $0x110] sm:$0xff] %v7093
        %7144 = vst [vmem:[%s2002 + $0x118] sm:$0xff] %v7094
        %7145 = vst [vmem:[%s2002 + $0x120] sm:$0xff] %v7095
        %7146 = vst [vmem:[%s2002 + $0x128] sm:$0xff] %v7096
        %7147 = vst [vmem:[%s2002 + $0x130] sm:$0xff] %v7097
        %7148 = vst [vmem:[%s2002 + $0x138] sm:$0xff] %v7098
        %7149 = vst [vmem:[%s2002 + $0x140] sm:$0xff] %v7099
        %7150 = vst [vmem:[%s2002 + $0x148] sm:$0xff] %v7100
        %7151 = vst [vmem:[%s2002 + $0x150] sm:$0xff] %v7101
        %7152 = vst [vmem:[%s2002 + $0x158] sm:$0xff] %v7102
        %7153 = vst [vmem:[%s2002 + $0x160] sm:$0xff] %v7103
        %7154 = vst [vmem:[%s2002 + $0x168] sm:$0xff] %v7104
        %7155 = vst [vmem:[%s2002 + $0x170] sm:$0xff] %v7105
        %7156 = vst [vmem:[%s2002 + $0x178] sm:$0xff] %v7106
        %7157 = vst [vmem:[%s2002 + $0x180] sm:$0xff] %v7107
        %7158 = vst [vmem:[%s2002 + $0x188] sm:$0xff] %v7108
        %s7159 = smul.u32 50, %s14
        %p7160 = scmp.lt.s32.totalorder %s7159, 99
        %s7161 = scalar_select %p7160, %s7159, 99
        %s7162 = smul.addr %s7161, 8
        %s7163 = scalar_lea.vmem %s3, %s7162
        // Predicated region
        $region71: #{net_forward.3} parent=65 // pred_check
          %p7164 = pneg %p100
        $region72: #{net_forward.3} parent=65 // pred_check_branch
          %7166 = sbr.rel (%p7164) target = $region74
        $region73: #{net_forward.3} parent=65 // pred_region
          %s7167 = smul.u32 50, %s14
        $region74: #{net_forward.3} parent=65 // pred_fallthru
          _
      $region66: #{net_forward.3} parent=5 // pred_fallthru
        _
      %p7168 = scmp.le.s32.totalorder 2, %s9
      // Predicated region
      $region75: #{net_forward.3} parent=5 // pred_check
        %p7169 = pneg %p7168
      $region76: #{net_forward.3} parent=5 // pred_check_branch
        %7171 = sbr.rel (%p7169) target = $region78
      $region77: #{net_forward.3} parent=5 // pred_region
        %s7172 = ssub.s32 %s9, 2
        // Predicated region
        $region79: #{net_forward.3} parent=77 // pred_check
          %p7173 = pneg %p106
        $region80: #{net_forward.3} parent=77 // pred_check_branch
          %7175 = sbr.rel (%p7173) target = $region82
        $region81: #{net_forward.3} parent=77 // pred_region
          %s7176 = smul.u32 50, %s15
          %p7177 = scmp.lt.s32.totalorder %s7176, 99
          %s7178 = scalar_select %p7177, %s7176, 99
          %s7179 = smul.addr %s7178, 8
          %s7180 = scalar_lea.vmem %s3, %s7179
        $region82: #{net_forward.3} parent=77 // pred_fallthru
          _
      $region78: #{net_forward.3} parent=5 // pred_fallthru
        _
    $region6: #{net_forward.3} parent=1 // loop_footer
      %s13 = sadd.s32 1, %s9
    $region7: #{net_forward.3} parent=1 // loop_footer_branch
      %8 = sbr.rel target = $region3
    $region8: #{net_forward.3} parent=1 // loop_exit
      _

// kernel: net_forward.4
$region0: #{net_forward.4}
  #allocation0 [shape = 'u32[]', space=smem, size = 0x4, offset = 0x4, fixed_abs, tag = 'smem constant byte address 0x4 - core index']
  #allocation1 [shape = 'u32[144,128]{1,0:T(1,128)}', space=vmem, size = 0x12000, scoped, tag = 'internal scratch']
  %s0 = inlined_call_operand.vmem [shape: f32[16,32,160], index: 0, kind: input, shape index: {}]
  %s1 = inlined_call_operand.vmem [shape: f32[160,128], index: 1, kind: input, shape index: {}]
  %s2 = inlined_call_operand.vmem [shape: f32[1,128], index: 2, kind: input, shape index: {}]
  %s3 = inlined_call_operand.vmem [shape: f32[32,128], index: 3, kind: output, shape index: {}]
  %s4 = sld [smem:[#allocation0]]
  $region22: #{net_forward.4} parent=0
    _
  %s6 = ssub.s32 1, %s4
  %s7 = scalar_select 0, %s6, %s4
  // Predicated region
  $region2: #{net_forward.4} parent=0 // pred_check
    _
  $region3: #{net_forward.4} parent=0 // pred_check_branch
    %9 = sbr.rel (0) target = $region5
  $region4: #{net_forward.4} parent=0 // pred_region
    _
  $region5: #{net_forward.4} parent=0 // pred_fallthru
    _
  // Predicated region
  $region6: #{net_forward.4} parent=0 // pred_check
    _
  $region7: #{net_forward.4} parent=0 // pred_check_branch
    %11 = sbr.rel (0) target = $region9
  $region8: #{net_forward.4} parent=0 // pred_region
    _
  $region9: #{net_forward.4} parent=0 // pred_fallthru
    _
  // Predicated region
  $region10: #{net_forward.4} parent=0 // pred_check
    _
  $region11: #{net_forward.4} parent=0 // pred_check_branch
    %13 = sbr.rel (0) target = $region13
  $region12: #{net_forward.4} parent=0 // pred_region
    _
  $region13: #{net_forward.4} parent=0 // pred_fallthru
    _
  %v14 = vld [vmem:[%s1] sm:$0xff]
  %v15 = vld [vmem:[%s1 + $0x8] sm:$0xff]
  %v16 = vld [vmem:[%s1 + $0x10] sm:$0xff]
  %v17 = vld [vmem:[%s1 + $0x18] sm:$0xff]
  %v18 = vld [vmem:[%s1 + $0x20] sm:$0xff]
  %v19 = vld [vmem:[%s1 + $0x28] sm:$0xff]
  %v20 = vld [vmem:[%s1 + $0x30] sm:$0xff]
  %v21 = vld [vmem:[%s1 + $0x38] sm:$0xff]
  %v22 = vld [vmem:[%s1 + $0x40] sm:$0xff]
  %v23 = vld [vmem:[%s1 + $0x48] sm:$0xff]
  %v24 = vld [vmem:[%s1 + $0x50] sm:$0xff]
  %v25 = vld [vmem:[%s1 + $0x58] sm:$0xff]
  %v26 = vld [vmem:[%s1 + $0x60] sm:$0xff]
  %v27 = vld [vmem:[%s1 + $0x68] sm:$0xff]
  %v28 = vld [vmem:[%s1 + $0x70] sm:$0xff]
  %v29 = vld [vmem:[%s1 + $0x78] sm:$0xff]
  %v30 = vld [vmem:[%s1 + $0x80] sm:$0xff]
  %v31 = vld [vmem:[%s1 + $0x88] sm:$0xff]
  %v32 = vld [vmem:[%s1 + $0x90] sm:$0xff]
  %v33 = vld [vmem:[%s1 + $0x98] sm:$0xff]
  %v34 = vld [vmem:[%s2] sm:$0x1]
  %v35 = vld [vmem:[%s0] sm:$0xff]
  %v36 = vld [vmem:[%s0 + $0x8] sm:$0xff]
  %v37 = vld [vmem:[%s0 + $0x10] sm:$0xff]
  %v38 = vld [vmem:[%s0 + $0x18] sm:$0xff]
  %v39 = vld [vmem:[%s0 + $0x20] sm:$0xff]
  %v40 = vld [vmem:[%s0 + $0x28] sm:$0xff]
  %v41 = vld [vmem:[%s0 + $0x30] sm:$0xff]
  %v42 = vld [vmem:[%s0 + $0x38] sm:$0xff]
  %v44 = vlaneseq
  %v45 = vshrl.u32 %v44, 7
  %v46 = vsub.s32 0, %v45
  %v47 = vrot.slane %v34, %v46
  %vm49 = vcmask 261120
  %v51 = vsel %vm49, %v36, 0
  %v54 = vsel %vm49, %v38, 0
  %v57 = vsel %vm49, %v40, 0
  %v60 = vsel %vm49, %v42, 0
  %62 = vmatprep.subr.mxu0 0.0
  %63 = vmatpush1.msra.mxu0 %v14
  %64 = vmatprep.subr.mxu0 0.0
  %65 = vmatpush1.msra.mxu0 %v15
  %66 = vmatprep.subr.mxu0 0.0
  %67 = vmatpush1.msra.mxu0 %v16
  %68 = vmatprep.subr.mxu0 0.0
  %69 = vmatpush1.msra.mxu0 %v17
  %70 = vmatprep.subr.mxu0 0.0
  %71 = vmatpush1.msra.mxu0 %v18
  %72 = vmatprep.subr.mxu0 0.0
  %73 = vmatpush1.msra.mxu0 %v19
  %74 = vmatprep.subr.mxu0 0.0
  %75 = vmatpush1.msra.mxu0 %v20
  %76 = vmatprep.subr.mxu0 0.0
  %77 = vmatpush1.msra.mxu0 %v21
  %78 = vmatprep.subr.mxu0 0.0
  %79 = vmatpush1.msra.mxu0 %v22
  %80 = vmatprep.subr.mxu0 0.0
  %81 = vmatpush1.msra.mxu0 %v23
  %82 = vmatprep.subr.mxu0 0.0
  %83 = vmatpush1.msra.mxu0 %v24
  %84 = vmatprep.subr.mxu0 0.0
  %85 = vmatpush1.msra.mxu0 %v25
  %86 = vmatprep.subr.mxu0 0.0
  %87 = vmatpush1.msra.mxu0 %v26
  %88 = vmatprep.subr.mxu0 0.0
  %89 = vmatpush1.msra.mxu0 %v27
  %90 = vmatprep.subr.mxu0 0.0
  %91 = vmatpush1.msra.mxu0 %v28
  %92 = vmatprep.subr.mxu0 0.0
  %93 = vmatpush1.msra.mxu0 %v29
  %94 = vmatprep.subr.mxu0 0.0
  %95 = vmatpush1.msra.mxu0 %v30
  %96 = vmatprep.subr.mxu0 0.0
  %97 = vmatpush1.msra.mxu0 %v31
  %98 = vmatprep.subr.mxu0 0.0
  %99 = vmatpush1.msra.mxu0 %v32
  %100 = vmatprep.subr.mxu0 0.0
  %101 = vmatpush1.msra.mxu0 %v33
  %102 = vmatprep.subr.mxu0 0.0
  %103 = vmatpush1.msra.mxu0 0.0
  %104 = vmatprep.subr.mxu0 0.0
  %105 = vmatpush1.msra.mxu0 0.0
  %106 = vmatprep.subr.mxu0 0.0
  %107 = vmatpush1.msra.mxu0 0.0
  %108 = vmatprep.subr.mxu0 0.0
  %109 = vmatpush1.msra.mxu0 0.0
  %110 = vmatprep.subr.mxu0 0.0
  %111 = vmatpush1.msra.mxu0 0.0
  %112 = vmatprep.subr.mxu0 0.0
  %113 = vmatpush1.msra.mxu0 0.0
  %114 = vmatprep.subr.mxu0 0.0
  %115 = vmatpush1.msra.mxu0 0.0
  %116 = vmatprep.subr.mxu0 0.0
  %117 = vmatpush1.msra.mxu0 0.0
  %118 = vmatprep.subr.mxu0 0.0
  %119 = vmatpush1.msra.mxu0 0.0
  %120 = vmatprep.subr.mxu0 0.0
  %121 = vmatpush1.msra.mxu0 0.0
  %122 = vmatprep.subr.mxu0 0.0
  %123 = vmatpush1.msra.mxu0 0.0
  %124 = vmatprep.subr.mxu0 0.0
  %125 = vmatpush1.msra.mxu0 0.0
  %126 = vmatprep.mubr.f32.mxu0 %v51
  %127 = vmatmul.mubr.f32.gmra.mrb[0].mxu0 %v35
  %v128 = vpop.f32.mrb[0].mxu0
  %v129 = vadd.f32 %v47, %v128
  %v130 = vpop.f32.mrb[0].mxu0
  %131 = vmatprep.mubr.f32.mxu0 %v54
  %132 = vmatmul.mubr.f32.gmra.mrb[0].mxu0 %v37
  %v133 = vpop.f32.mrb[0].mxu0
  %v134 = vadd.f32 %v47, %v133
  %v135 = vpop.f32.mrb[0].mxu0
  %136 = vmatprep.mubr.f32.mxu0 %v57
  %137 = vmatmul.mubr.f32.gmra.mrb[0].mxu0 %v39
  %v138 = vpop.f32.mrb[0].mxu0
  %v139 = vadd.f32 %v47, %v138
  %v140 = vpop.f32.mrb[0].mxu0
  %141 = vmatprep.mubr.f32.mxu0 %v60
  %142 = vmatmul.mubr.f32.gmra.mrb[0].mxu0 %v41
  %v143 = vpop.f32.mrb[0].mxu0
  %v144 = vadd.f32 %v47, %v143
  %v145 = vpop.f32.mrb[0].mxu0
  %146 = vdwg.mxu0
  %s147 = scalar_lea.vmem %s0, 64
  %v148 = vld [vmem:[%s147] sm:$0xff]
  %v149 = vld [vmem:[%s147 + $0x8] sm:$0xff]
  %v150 = vld [vmem:[%s147 + $0x10] sm:$0xff]
  %v151 = vld [vmem:[%s147 + $0x18] sm:$0xff]
  %v152 = vld [vmem:[%s147 + $0x20] sm:$0xff]
  %v153 = vld [vmem:[%s147 + $0x28] sm:$0xff]
  %v154 = vld [vmem:[%s147 + $0x30] sm:$0xff]
  %v155 = vld [vmem:[%s147 + $0x38] sm:$0xff]
  %v157 = vsel %vm49, %v149, 0
  %v160 = vsel %vm49, %v151, 0
  %v163 = vsel %vm49, %v153, 0
  %v166 = vsel %vm49, %v155, 0
  %168 = vmatprep.subr.mxu0 0.0
  %169 = vmatpush1.msra.mxu0 %v14
  %170 = vmatprep.subr.mxu0 0.0
  %171 = vmatpush1.msra.mxu0 %v15
  %172 = vmatprep.subr.mxu0 0.0
  %173 = vmatpush1.msra.mxu0 %v16
  %174 = vmatprep.subr.mxu0 0.0
  %175 = vmatpush1.msra.mxu0 %v17
  %176 = vmatprep.subr.mxu0 0.0
  %177 = vmatpush1.msra.mxu0 %v18
  %178 = vmatprep.subr.mxu0 0.0
  %179 = vmatpush1.msra.mxu0 %v19
  %180 = vmatprep.subr.mxu0 0.0
  %181 = vmatpush1.msra.mxu0 %v20
  %182 = vmatprep.subr.mxu0 0.0
  %183 = vmatpush1.msra.mxu0 %v21
  %184 = vmatprep.subr.mxu0 0.0
  %185 = vmatpush1.msra.mxu0 %v22
  %186 = vmatprep.subr.mxu0 0.0
  %187 = vmatpush1.msra.mxu0 %v23
  %188 = vmatprep.subr.mxu0 0.0
  %189 = vmatpush1.msra.mxu0 %v24
  %190 = vmatprep.subr.mxu0 0.0
  %191 = vmatpush1.msra.mxu0 %v25
  %192 = vmatprep.subr.mxu0 0.0
  %193 = vmatpush1.msra.mxu0 %v26
  %194 = vmatprep.subr.mxu0 0.0
  %195 = vmatpush1.msra.mxu0 %v27
  %196 = vmatprep.subr.mxu0 0.0
  %197 = vmatpush1.msra.mxu0 %v28
  %198 = vmatprep.subr.mxu0 0.0
  %199 = vmatpush1.msra.mxu0 %v29
  %200 = vmatprep.subr.mxu0 0.0
  %201 = vmatpush1.msra.mxu0 %v30
  %202 = vmatprep.subr.mxu0 0.0
  %203 = vmatpush1.msra.mxu0 %v31
  %204 = vmatprep.subr.mxu0 0.0
  %205 = vmatpush1.msra.mxu0 %v32
  %206 = vmatprep.subr.mxu0 0.0
  %207 = vmatpush1.msra.mxu0 %v33
  %208 = vmatprep.subr.mxu0 0.0
  %209 = vmatpush1.msra.mxu0 0.0
  %210 = vmatprep.subr.mxu0 0.0
  %211 = vmatpush1.msra.mxu0 0.0
  %212 = vmatprep.subr.mxu0 0.0
  %213 = vmatpush1.msra.mxu0 0.0
  %214 = vmatprep.subr.mxu0 0.0
  %215 = vmatpush1.msra.mxu0 0.0
  %216 = vmatprep.subr.mxu0 0.0
  %217 = vmatpush1.msra.mxu0 0.0
  %218 = vmatprep.subr.mxu0 0.0
  %219 = vmatpush1.msra.mxu0 0.0
  %220 = vmatprep.subr.mxu0 0.0
  %221 = vmatpush1.msra.mxu0 0.0
  %222 = vmatprep.subr.mxu0 0.0
  %223 = vmatpush1.msra.mxu0 0.0
  %224 = vmatprep.subr.mxu0 0.0
  %225 = vmatpush1.msra.mxu0 0.0
  %226 = vmatprep.subr.mxu0 0.0
  %227 = vmatpush1.msra.mxu0 0.0
  %228 = vmatprep.subr.mxu0 0.0
  %229 = vmatpush1.msra.mxu0 0.0
  %230 = vmatprep.subr.mxu0 0.0
  %231 = vmatpush1.msra.mxu0 0.0
  %232 = vmatprep.mubr.f32.mxu0 %v157
  %233 = vmatmul.mubr.f32.gmra.mrb[0].mxu0 %v148
  %v234 = vpop.f32.mrb[0].mxu0
  %v235 = vadd.f32 %v47, %v234
  %v236 = vpop.f32.mrb[0].mxu0
  %237 = vmatprep.mubr.f32.mxu0 %v160
  %238 = vmatmul.mubr.f32.gmra.mrb[0].mxu0 %v150
  %v239 = vpop.f32.mrb[0].mxu0
  %v240 = vadd.f32 %v47, %v239
  %v241 = vpop.f32.mrb[0].mxu0
  %242 = vmatprep.mubr.f32.mxu0 %v163
  %243 = vmatmul.mubr.f32.gmra.mrb[0].mxu0 %v152
  %v244 = vpop.f32.mrb[0].mxu0
  %v245 = vadd.f32 %v47, %v244
  %v246 = vpop.f32.mrb[0].mxu0
  %247 = vmatprep.mubr.f32.mxu0 %v166
  %248 = vmatmul.mubr.f32.gmra.mrb[0].mxu0 %v154
  %v249 = vpop.f32.mrb[0].mxu0
  %v250 = vadd.f32 %v47, %v249
  %v251 = vpop.f32.mrb[0].mxu0
  %252 = vdwg.mxu0
  %v253 = vmax.f32 %v129, %v235
  %v254 = vmax.f32 %v134, %v240
  %v255 = vmax.f32 %v139, %v245
  %v256 = vmax.f32 %v144, %v250
  %s257 = scalar_lea.vmem %s0, 128
  %v258 = vld [vmem:[%s257] sm:$0xff]
  %v259 = vld [vmem:[%s257 + $0x8] sm:$0xff]
  %v260 = vld [vmem:[%s257 + $0x10] sm:$0xff]
  %v261 = vld [vmem:[%s257 + $0x18] sm:$0xff]
  %v262 = vld [vmem:[%s257 + $0x20] sm:$0xff]
  %v263 = vld [vmem:[%s257 + $0x28] sm:$0xff]
  %v264 = vld [vmem:[%s257 + $0x30] sm:$0xff]
  %v265 = vld [vmem:[%s257 + $0x38] sm:$0xff]
  %v267 = vsel %vm49, %v259, 0
  %v270 = vsel %vm49, %v261, 0
  %v273 = vsel %vm49, %v263, 0
  %v276 = vsel %vm49, %v265, 0
  %278 = vmatprep.subr.mxu0 0.0
  %279 = vmatpush1.msra.mxu0 %v14
  %280 = vmatprep.subr.mxu0 0.0
  %281 = vmatpush1.msra.mxu0 %v15
  %282 = vmatprep.subr.mxu0 0.0
  %283 = vmatpush1.msra.mxu0 %v16
  %284 = vmatprep.subr.mxu0 0.0
  %285 = vmatpush1.msra.mxu0 %v17
  %286 = vmatprep.subr.mxu0 0.0
  %287 = vmatpush1.msra.mxu0 %v18
  %288 = vmatprep.subr.mxu0 0.0
  %289 = vmatpush1.msra.mxu0 %v19
  %290 = vmatprep.subr.mxu0 0.0
  %291 = vmatpush1.msra.mxu0 %v20
  %292 = vmatprep.subr.mxu0 0.0
  %293 = vmatpush1.msra.mxu0 %v21
  %294 = vmatprep.subr.mxu0 0.0
  %295 = vmatpush1.msra.mxu0 %v22
  %296 = vmatprep.subr.mxu0 0.0
  %297 = vmatpush1.msra.mxu0 %v23
  %298 = vmatprep.subr.mxu0 0.0
  %299 = vmatpush1.msra.mxu0 %v24
  %300 = vmatprep.subr.mxu0 0.0
  %301 = vmatpush1.msra.mxu0 %v25
  %302 = vmatprep.subr.mxu0 0.0
  %303 = vmatpush1.msra.mxu0 %v26
  %304 = vmatprep.subr.mxu0 0.0
  %305 = vmatpush1.msra.mxu0 %v27
  %306 = vmatprep.subr.mxu0 0.0
  %307 = vmatpush1.msra.mxu0 %v28
  %308 = vmatprep.subr.mxu0 0.0
  %309 = vmatpush1.msra.mxu0 %v29
  %310 = vmatprep.subr.mxu0 0.0
  %311 = vmatpush1.msra.mxu0 %v30
  %312 = vmatprep.subr.mxu0 0.0
  %313 = vmatpush1.msra.mxu0 %v31
  %314 = vmatprep.subr.mxu0 0.0
  %315 = vmatpush1.msra.mxu0 %v32
  %316 = vmatprep.subr.mxu0 0.0
  %317 = vmatpush1.msra.mxu0 %v33
  %318 = vmatprep.subr.mxu0 0.0
  %319 = vmatpush1.msra.mxu0 0.0
  %320 = vmatprep.subr.mxu0 0.0
  %321 = vmatpush1.msra.mxu0 0.0
  %322 = vmatprep.subr.mxu0 0.0
  %323 = vmatpush1.msra.mxu0 0.0
  %324 = vmatprep.subr.mxu0 0.0
  %325 = vmatpush1.msra.mxu0 0.0
  %326 = vmatprep.subr.mxu0 0.0
  %327 = vmatpush1.msra.mxu0 0.0
  %328 = vmatprep.subr.mxu0 0.0
  %329 = vmatpush1.msra.mxu0 0.0
  %330 = vmatprep.subr.mxu0 0.0
  %331 = vmatpush1.msra.mxu0 0.0
  %332 = vmatprep.subr.mxu0 0.0
  %333 = vmatpush1.msra.mxu0 0.0
  %334 = vmatprep.subr.mxu0 0.0
  %335 = vmatpush1.msra.mxu0 0.0
  %336 = vmatprep.subr.mxu0 0.0
  %337 = vmatpush1.msra.mxu0 0.0
  %338 = vmatprep.subr.mxu0 0.0
  %339 = vmatpush1.msra.mxu0 0.0
  %340 = vmatprep.subr.mxu0 0.0
  %341 = vmatpush1.msra.mxu0 0.0
  %342 = vmatprep.mubr.f32.mxu0 %v267
  %343 = vmatmul.mubr.f32.gmra.mrb[0].mxu0 %v258
  %v344 = vpop.f32.mrb[0].mxu0
  %v345 = vadd.f32 %v47, %v344
  %v346 = vpop.f32.mrb[0].mxu0
  %347 = vmatprep.mubr.f32.mxu0 %v270
  %348 = vmatmul.mubr.f32.gmra.mrb[0].mxu0 %v260
  %v349 = vpop.f32.mrb[0].mxu0
  %v350 = vadd.f32 %v47, %v349
  %v351 = vpop.f32.mrb[0].mxu0
  %352 = vmatprep.mubr.f32.mxu0 %v273
  %353 = vmatmul.mubr.f32.gmra.mrb[0].mxu0 %v262
  %v354 = vpop.f32.mrb[0].mxu0
  %v355 = vadd.f32 %v47, %v354
  %v356 = vpop.f32.mrb[0].mxu0
  %357 = vmatprep.mubr.f32.mxu0 %v276
  %358 = vmatmul.mubr.f32.gmra.mrb[0].mxu0 %v264
  %v359 = vpop.f32.mrb[0].mxu0
  %v360 = vadd.f32 %v47, %v359
  %v361 = vpop.f32.mrb[0].mxu0
  %362 = vdwg.mxu0
  %v363 = vmax.f32 %v253, %v345
  %v364 = vmax.f32 %v254, %v350
  %v365 = vmax.f32 %v255, %v355
  %v366 = vmax.f32 %v256, %v360
  %s367 = scalar_lea.vmem %s0, 192
  %v368 = vld [vmem:[%s367] sm:$0xff]
  %v369 = vld [vmem:[%s367 + $0x8] sm:$0xff]
  %v370 = vld [vmem:[%s367 + $0x10] sm:$0xff]
  %v371 = vld [vmem:[%s367 + $0x18] sm:$0xff]
  %v372 = vld [vmem:[%s367 + $0x20] sm:$0xff]
  %v373 = vld [vmem:[%s367 + $0x28] sm:$0xff]
  %v374 = vld [vmem:[%s367 + $0x30] sm:$0xff]
  %v375 = vld [vmem:[%s367 + $0x38] sm:$0xff]
  %v377 = vsel %vm49, %v369, 0
  %v380 = vsel %vm49, %v371, 0
  %v383 = vsel %vm49, %v373, 0
  %v386 = vsel %vm49, %v375, 0
  %388 = vmatprep.subr.mxu0 0.0
  %389 = vmatpush1.msra.mxu0 %v14
  %390 = vmatprep.subr.mxu0 0.0
  %391 = vmatpush1.msra.mxu0 %v15
  %392 = vmatprep.subr.mxu0 0.0
  %393 = vmatpush1.msra.mxu0 %v16
  %394 = vmatprep.subr.mxu0 0.0
  %395 = vmatpush1.msra.mxu0 %v17
  %396 = vmatprep.subr.mxu0 0.0
  %397 = vmatpush1.msra.mxu0 %v18
  %398 = vmatprep.subr.mxu0 0.0
  %399 = vmatpush1.msra.mxu0 %v19
  %400 = vmatprep.subr.mxu0 0.0
  %401 = vmatpush1.msra.mxu0 %v20
  %402 = vmatprep.subr.mxu0 0.0
  %403 = vmatpush1.msra.mxu0 %v21
  %404 = vmatprep.subr.mxu0 0.0
  %405 = vmatpush1.msra.mxu0 %v22
  %406 = vmatprep.subr.mxu0 0.0
  %407 = vmatpush1.msra.mxu0 %v23
  %408 = vmatprep.subr.mxu0 0.0
  %409 = vmatpush1.msra.mxu0 %v24
  %410 = vmatprep.subr.mxu0 0.0
  %411 = vmatpush1.msra.mxu0 %v25
  %412 = vmatprep.subr.mxu0 0.0
  %413 = vmatpush1.msra.mxu0 %v26
  %414 = vmatprep.subr.mxu0 0.0
  %415 = vmatpush1.msra.mxu0 %v27
  %416 = vmatprep.subr.mxu0 0.0
  %417 = vmatpush1.msra.mxu0 %v28
  %418 = vmatprep.subr.mxu0 0.0
  %419 = vmatpush1.msra.mxu0 %v29
  %420 = vmatprep.subr.mxu0 0.0
  %421 = vmatpush1.msra.mxu0 %v30
  %422 = vmatprep.subr.mxu0 0.0
  %423 = vmatpush1.msra.mxu0 %v31
  %424 = vmatprep.subr.mxu0 0.0
  %425 = vmatpush1.msra.mxu0 %v32
  %426 = vmatprep.subr.mxu0 0.0
  %427 = vmatpush1.msra.mxu0 %v33
  %428 = vmatprep.subr.mxu0 0.0
  %429 = vmatpush1.msra.mxu0 0.0
  %430 = vmatprep.subr.mxu0 0.0
  %431 = vmatpush1.msra.mxu0 0.0
  %432 = vmatprep.subr.mxu0 0.0
  %433 = vmatpush1.msra.mxu0 0.0
  %434 = vmatprep.subr.mxu0 0.0
  %435 = vmatpush1.msra.mxu0 0.0
  %436 = vmatprep.subr.mxu0 0.0
  %437 = vmatpush1.msra.mxu0 0.0
  %438 = vmatprep.subr.mxu0 0.0
  %439 = vmatpush1.msra.mxu0 0.0
  %440 = vmatprep.subr.mxu0 0.0
  %441 = vmatpush1.msra.mxu0 0.0
  %442 = vmatprep.subr.mxu0 0.0
  %443 = vmatpush1.msra.mxu0 0.0
  %444 = vmatprep.subr.mxu0 0.0
  %445 = vmatpush1.msra.mxu0 0.0
  %446 = vmatprep.subr.mxu0 0.0
  %447 = vmatpush1.msra.mxu0 0.0
  %448 = vmatprep.subr.mxu0 0.0
  %449 = vmatpush1.msra.mxu0 0.0
  %450 = vmatprep.subr.mxu0 0.0
  %451 = vmatpush1.msra.mxu0 0.0
  %452 = vmatprep.mubr.f32.mxu0 %v377
  %453 = vmatmul.mubr.f32.gmra.mrb[0].mxu0 %v368
  %v454 = vpop.f32.mrb[0].mxu0
  %v455 = vadd.f32 %v47, %v454
  %v456 = vpop.f32.mrb[0].mxu0
  %457 = vmatprep.mubr.f32.mxu0 %v380
  %458 = vmatmul.mubr.f32.gmra.mrb[0].mxu0 %v370
  %v459 = vpop.f32.mrb[0].mxu0
  %v460 = vadd.f32 %v47, %v459
  %v461 = vpop.f32.mrb[0].mxu0
  %462 = vmatprep.mubr.f32.mxu0 %v383
  %463 = vmatmul.mubr.f32.gmra.mrb[0].mxu0 %v372
  %v464 = vpop.f32.mrb[0].mxu0
  %v465 = vadd.f32 %v47, %v464
  %v466 = vpop.f32.mrb[0].mxu0
  %467 = vmatprep.mubr.f32.mxu0 %v386
  %468 = vmatmul.mubr.f32.gmra.mrb[0].mxu0 %v374
  %v469 = vpop.f32.mrb[0].mxu0
  %v470 = vadd.f32 %v47, %v469
  %v471 = vpop.f32.mrb[0].mxu0
  %472 = vdwg.mxu0
  %v473 = vmax.f32 %v363, %v455
  %v474 = vmax.f32 %v364, %v460
  %v475 = vmax.f32 %v365, %v465
  %v476 = vmax.f32 %v366, %v470
  %s477 = scalar_lea.vmem %s0, 256
  %v478 = vld [vmem:[%s477] sm:$0xff]
  %v479 = vld [vmem:[%s477 + $0x8] sm:$0xff]
  %v480 = vld [vmem:[%s477 + $0x10] sm:$0xff]
  %v481 = vld [vmem:[%s477 + $0x18] sm:$0xff]
  %v482 = vld [vmem:[%s477 + $0x20] sm:$0xff]
  %v483 = vld [vmem:[%s477 + $0x28] sm:$0xff]
  %v484 = vld [vmem:[%s477 + $0x30] sm:$0xff]
  %v485 = vld [vmem:[%s477 + $0x38] sm:$0xff]
  %v487 = vsel %vm49, %v479, 0
  %v490 = vsel %vm49, %v481, 0
  %v493 = vsel %vm49, %v483, 0
  %v496 = vsel %vm49, %v485, 0
  %498 = vmatprep.subr.mxu0 0.0
  %499 = vmatpush1.msra.mxu0 %v14
  %500 = vmatprep.subr.mxu0 0.0
  %501 = vmatpush1.msra.mxu0 %v15
  %502 = vmatprep.subr.mxu0 0.0
  %503 = vmatpush1.msra.mxu0 %v16
  %504 = vmatprep.subr.mxu0 0.0
  %505 = vmatpush1.msra.mxu0 %v17
  %506 = vmatprep.subr.mxu0 0.0
  %507 = vmatpush1.msra.mxu0 %v18
  %508 = vmatprep.subr.mxu0 0.0
  %509 = vmatpush1.msra.mxu0 %v19
  %510 = vmatprep.subr.mxu0 0.0
  %511 = vmatpush1.msra.mxu0 %v20
  %512 = vmatprep.subr.mxu0 0.0
  %513 = vmatpush1.msra.mxu0 %v21
  %514 = vmatprep.subr.mxu0 0.0
  %515 = vmatpush1.msra.mxu0 %v22
  %516 = vmatprep.subr.mxu0 0.0
  %517 = vmatpush1.msra.mxu0 %v23
  %518 = vmatprep.subr.mxu0 0.0
  %519 = vmatpush1.msra.mxu0 %v24
  %520 = vmatprep.subr.mxu0 0.0
  %521 = vmatpush1.msra.mxu0 %v25
  %522 = vmatprep.subr.mxu0 0.0
  %523 = vmatpush1.msra.mxu0 %v26
  %524 = vmatprep.subr.mxu0 0.0
  %525 = vmatpush1.msra.mxu0 %v27
  %526 = vmatprep.subr.mxu0 0.0
  %527 = vmatpush1.msra.mxu0 %v28
  %528 = vmatprep.subr.mxu0 0.0
  %529 = vmatpush1.msra.mxu0 %v29
  %530 = vmatprep.subr.mxu0 0.0
  %531 = vmatpush1.msra.mxu0 %v30
  %532 = vmatprep.subr.mxu0 0.0
  %533 = vmatpush1.msra.mxu0 %v31
  %534 = vmatprep.subr.mxu0 0.0
  %535 = vmatpush1.msra.mxu0 %v32
  %536 = vmatprep.subr.mxu0 0.0
  %537 = vmatpush1.msra.mxu0 %v33
  %538 = vmatprep.subr.mxu0 0.0
  %539 = vmatpush1.msra.mxu0 0.0
  %540 = vmatprep.subr.mxu0 0.0
  %541 = vmatpush1.msra.mxu0 0.0
  %542 = vmatprep.subr.mxu0 0.0
  %543 = vmatpush1.msra.mxu0 0.0
  %544 = vmatprep.subr.mxu0 0.0
  %545 = vmatpush1.msra.mxu0 0.0
  %546 = vmatprep.subr.mxu0 0.0
  %547 = vmatpush1.msra.mxu0 0.0
  %548 = vmatprep.subr.mxu0 0.0
  %549 = vmatpush1.msra.mxu0 0.0
  %550 = vmatprep.subr.mxu0 0.0
  %551 = vmatpush1.msra.mxu0 0.0
  %552 = vmatprep.subr.mxu0 0.0
  %553 = vmatpush1.msra.mxu0 0.0
  %554 = vmatprep.subr.mxu0 0.0
  %555 = vmatpush1.msra.mxu0 0.0
  %556 = vmatprep.subr.mxu0 0.0
  %557 = vmatpush1.msra.mxu0 0.0
  %558 = vmatprep.subr.mxu0 0.0
  %559 = vmatpush1.msra.mxu0 0.0
  %560 = vmatprep.subr.mxu0 0.0
  %561 = vmatpush1.msra.mxu0 0.0
  %562 = vmatprep.mubr.f32.mxu0 %v487
  %563 = vmatmul.mubr.f32.gmra.mrb[0].mxu0 %v478
  %v564 = vpop.f32.mrb[0].mxu0
  %v565 = vadd.f32 %v47, %v564
  %v566 = vpop.f32.mrb[0].mxu0
  %567 = vmatprep.mubr.f32.mxu0 %v490
  %568 = vmatmul.mubr.f32.gmra.mrb[0].mxu0 %v480
  %v569 = vpop.f32.mrb[0].mxu0
  %v570 = vadd.f32 %v47, %v569
  %v571 = vpop.f32.mrb[0].mxu0
  %572 = vmatprep.mubr.f32.mxu0 %v493
  %573 = vmatmul.mubr.f32.gmra.mrb[0].mxu0 %v482
  %v574 = vpop.f32.mrb[0].mxu0
  %v575 = vadd.f32 %v47, %v574
  %v576 = vpop.f32.mrb[0].mxu0
  %577 = vmatprep.mubr.f32.mxu0 %v496
  %578 = vmatmul.mubr.f32.gmra.mrb[0].mxu0 %v484
  %v579 = vpop.f32.mrb[0].mxu0
  %v580 = vadd.f32 %v47, %v579
  %v581 = vpop.f32.mrb[0].mxu0
  %582 = vdwg.mxu0
  %v583 = vmax.f32 %v473, %v565
  %v584 = vmax.f32 %v474, %v570
  %v585 = vmax.f32 %v475, %v575
  %v586 = vmax.f32 %v476, %v580
  %s587 = scalar_lea.vmem %s0, 320
  %v588 = vld [vmem:[%s587] sm:$0xff]
  %v589 = vld [vmem:[%s587 + $0x8] sm:$0xff]
  %v590 = vld [vmem:[%s587 + $0x10] sm:$0xff]
  %v591 = vld [vmem:[%s587 + $0x18] sm:$0xff]
  %v592 = vld [vmem:[%s587 + $0x20] sm:$0xff]
  %v593 = vld [vmem:[%s587 + $0x28] sm:$0xff]
  %v594 = vld [vmem:[%s587 + $0x30] sm:$0xff]
  %v595 = vld [vmem:[%s587 + $0x38] sm:$0xff]
  %v597 = vsel %vm49, %v589, 0
  %v600 = vsel %vm49, %v591, 0
  %v603 = vsel %vm49, %v593, 0
  %v606 = vsel %vm49, %v595, 0
  %608 = vmatprep.subr.mxu0 0.0
  %609 = vmatpush1.msra.mxu0 %v14
  %610 = vmatprep.subr.mxu0 0.0
  %611 = vmatpush1.msra.mxu0 %v15
  %612 = vmatprep.subr.mxu0 0.0
  %613 = vmatpush1.msra.mxu0 %v16
  %614 = vmatprep.subr.mxu0 0.0
  %615 = vmatpush1.msra.mxu0 %v17
  %616 = vmatprep.subr.mxu0 0.0
  %617 = vmatpush1.msra.mxu0 %v18
  %618 = vmatprep.subr.mxu0 0.0
  %619 = vmatpush1.msra.mxu0 %v19
  %620 = vmatprep.subr.mxu0 0.0
  %621 = vmatpush1.msra.mxu0 %v20
  %622 = vmatprep.subr.mxu0 0.0
  %623 = vmatpush1.msra.mxu0 %v21
  %624 = vmatprep.subr.mxu0 0.0
  %625 = vmatpush1.msra.mxu0 %v22
  %626 = vmatprep.subr.mxu0 0.0
  %627 = vmatpush1.msra.mxu0 %v23
  %628 = vmatprep.subr.mxu0 0.0
  %629 = vmatpush1.msra.mxu0 %v24
  %630 = vmatprep.subr.mxu0 0.0
  %631 = vmatpush1.msra.mxu0 %v25
  %632 = vmatprep.subr.mxu0 0.0
  %633 = vmatpush1.msra.mxu0 %v26
  %634 = vmatprep.subr.mxu0 0.0
  %635 = vmatpush1.msra.mxu0 %v27
  %636 = vmatprep.subr.mxu0 0.0
  %637 = vmatpush1.msra.mxu0 %v28
  %638 = vmatprep.subr.mxu0 0.0
  %639 = vmatpush1.msra.mxu0 %v29
  %640 = vmatprep.subr.mxu0 0.0
  %641 = vmatpush1.msra.mxu0 %v30
  %642 = vmatprep.subr.mxu0 0.0
  %643 = vmatpush1.msra.mxu0 %v31
  %644 = vmatprep.subr.mxu0 0.0
  %645 = vmatpush1.msra.mxu0 %v32
  %646 = vmatprep.subr.mxu0 0.0
  %647 = vmatpush1.msra.mxu0 %v33
  %648 = vmatprep.subr.mxu0 0.0
  %649 = vmatpush1.msra.mxu0 0.0
  %650 = vmatprep.subr.mxu0 0.0
  %651 = vmatpush1.msra.mxu0 0.0
  %652 = vmatprep.subr.mxu0 0.0
  %653 = vmatpush1.msra.mxu0 0.0
  %654 = vmatprep.subr.mxu0 0.0
  %655 = vmatpush1.msra.mxu0 0.0
  %656 = vmatprep.subr.mxu0 0.0
  %657 = vmatpush1.msra.mxu0 0.0
  %658 = vmatprep.subr.mxu0 0.0
  %659 = vmatpush1.msra.mxu0 0.0
  %660 = vmatprep.subr.mxu0 0.0
  %661 = vmatpush1.msra.mxu0 0.0
  %662 = vmatprep.subr.mxu0 0.0
  %663 = vmatpush1.msra.mxu0 0.0
  %664 = vmatprep.subr.mxu0 0.0
  %665 = vmatpush1.msra.mxu0 0.0
  %666 = vmatprep.subr.mxu0 0.0
  %667 = vmatpush1.msra.mxu0 0.0
  %668 = vmatprep.subr.mxu0 0.0
  %669 = vmatpush1.msra.mxu0 0.0
  %670 = vmatprep.subr.mxu0 0.0
  %671 = vmatpush1.msra.mxu0 0.0
  %672 = vmatprep.mubr.f32.mxu0 %v597
  %673 = vmatmul.mubr.f32.gmra.mrb[0].mxu0 %v588
  %v674 = vpop.f32.mrb[0].mxu0
  %v675 = vadd.f32 %v47, %v674
  %v676 = vpop.f32.mrb[0].mxu0
  %677 = vmatprep.mubr.f32.mxu0 %v600
  %678 = vmatmul.mubr.f32.gmra.mrb[0].mxu0 %v590
  %v679 = vpop.f32.mrb[0].mxu0
  %v680 = vadd.f32 %v47, %v679
  %v681 = vpop.f32.mrb[0].mxu0
  %682 = vmatprep.mubr.f32.mxu0 %v603
  %683 = vmatmul.mubr.f32.gmra.mrb[0].mxu0 %v592
  %v684 = vpop.f32.mrb[0].mxu0
  %v685 = vadd.f32 %v47, %v684
  %v686 = vpop.f32.mrb[0].mxu0
  %687 = vmatprep.mubr.f32.mxu0 %v606
  %688 = vmatmul.mubr.f32.gmra.mrb[0].mxu0 %v594
  %v689 = vpop.f32.mrb[0].mxu0
  %v690 = vadd.f32 %v47, %v689
  %v691 = vpop.f32.mrb[0].mxu0
  %692 = vdwg.mxu0
  %v693 = vmax.f32 %v583, %v675
  %v694 = vmax.f32 %v584, %v680
  %v695 = vmax.f32 %v585, %v685
  %v696 = vmax.f32 %v586, %v690
  %s697 = scalar_lea.vmem %s0, 384
  %v698 = vld [vmem:[%s697] sm:$0xff]
  %v699 = vld [vmem:[%s697 + $0x8] sm:$0xff]
  %v700 = vld [vmem:[%s697 + $0x10] sm:$0xff]
  %v701 = vld [vmem:[%s697 + $0x18] sm:$0xff]
  %v702 = vld [vmem:[%s697 + $0x20] sm:$0xff]
  %v703 = vld [vmem:[%s697 + $0x28] sm:$0xff]
  %v704 = vld [vmem:[%s697 + $0x30] sm:$0xff]
  %v705 = vld [vmem:[%s697 + $0x38] sm:$0xff]
  %v707 = vsel %vm49, %v699, 0
  %v710 = vsel %vm49, %v701, 0
  %v713 = vsel %vm49, %v703, 0
  %v716 = vsel %vm49, %v705, 0
  %718 = vmatprep.subr.mxu0 0.0
  %719 = vmatpush1.msra.mxu0 %v14
  %720 = vmatprep.subr.mxu0 0.0
  %721 = vmatpush1.msra.mxu0 %v15
  %722 = vmatprep.subr.mxu0 0.0
  %723 = vmatpush1.msra.mxu0 %v16
  %724 = vmatprep.subr.mxu0 0.0
  %725 = vmatpush1.msra.mxu0 %v17
  %726 = vmatprep.subr.mxu0 0.0
  %727 = vmatpush1.msra.mxu0 %v18
  %728 = vmatprep.subr.mxu0 0.0
  %729 = vmatpush1.msra.mxu0 %v19
  %730 = vmatprep.subr.mxu0 0.0
  %731 = vmatpush1.msra.mxu0 %v20
  %732 = vmatprep.subr.mxu0 0.0
  %733 = vmatpush1.msra.mxu0 %v21
  %734 = vmatprep.subr.mxu0 0.0
  %735 = vmatpush1.msra.mxu0 %v22
  %736 = vmatprep.subr.mxu0 0.0
  %737 = vmatpush1.msra.mxu0 %v23
  %738 = vmatprep.subr.mxu0 0.0
  %739 = vmatpush1.msra.mxu0 %v24
  %740 = vmatprep.subr.mxu0 0.0
  %741 = vmatpush1.msra.mxu0 %v25
  %742 = vmatprep.subr.mxu0 0.0
  %743 = vmatpush1.msra.mxu0 %v26
  %744 = vmatprep.subr.mxu0 0.0
  %745 = vmatpush1.msra.mxu0 %v27
  %746 = vmatprep.subr.mxu0 0.0
  %747 = vmatpush1.msra.mxu0 %v28
  %748 = vmatprep.subr.mxu0 0.0
  %749 = vmatpush1.msra.mxu0 %v29
  %750 = vmatprep.subr.mxu0 0.0
  %751 = vmatpush1.msra.mxu0 %v30
  %752 = vmatprep.subr.mxu0 0.0
  %753 = vmatpush1.msra.mxu0 %v31
  %754 = vmatprep.subr.mxu0 0.0
  %755 = vmatpush1.msra.mxu0 %v32
  %756 = vmatprep.subr.mxu0 0.0
  %757 = vmatpush1.msra.mxu0 %v33
  %758 = vmatprep.subr.mxu0 0.0
  %759 = vmatpush1.msra.mxu0 0.0
  %760 = vmatprep.subr.mxu0 0.0
  %761 = vmatpush1.msra.mxu0 0.0
  %762 = vmatprep.subr.mxu0 0.0
  %763 = vmatpush1.msra.mxu0 0.0
  %764 = vmatprep.subr.mxu0 0.0
  %765 = vmatpush1.msra.mxu0 0.0
  %766 = vmatprep.subr.mxu0 0.0
  %767 = vmatpush1.msra.mxu0 0.0
  %768 = vmatprep.subr.mxu0 0.0
  %769 = vmatpush1.msra.mxu0 0.0
  %770 = vmatprep.subr.mxu0 0.0
  %771 = vmatpush1.msra.mxu0 0.0
  %772 = vmatprep.subr.mxu0 0.0
  %773 = vmatpush1.msra.mxu0 0.0
  %774 = vmatprep.subr.mxu0 0.0
  %775 = vmatpush1.msra.mxu0 0.0
  %776 = vmatprep.subr.mxu0 0.0
  %777 = vmatpush1.msra.mxu0 0.0
  %778 = vmatprep.subr.mxu0 0.0
  %779 = vmatpush1.msra.mxu0 0.0
  %780 = vmatprep.subr.mxu0 0.0
  %781 = vmatpush1.msra.mxu0 0.0
  %782 = vmatprep.mubr.f32.mxu0 %v707
  %783 = vmatmul.mubr.f32.gmra.mrb[0].mxu0 %v698
  %v784 = vpop.f32.mrb[0].mxu0
  %v785 = vadd.f32 %v47, %v784
  %v786 = vpop.f32.mrb[0].mxu0
  %787 = vmatprep.mubr.f32.mxu0 %v710
  %788 = vmatmul.mubr.f32.gmra.mrb[0].mxu0 %v700
  %v789 = vpop.f32.mrb[0].mxu0
  %v790 = vadd.f32 %v47, %v789
  %v791 = vpop.f32.mrb[0].mxu0
  %792 = vmatprep.mubr.f32.mxu0 %v713
  %793 = vmatmul.mubr.f32.gmra.mrb[0].mxu0 %v702
  %v794 = vpop.f32.mrb[0].mxu0
  %v795 = vadd.f32 %v47, %v794
  %v796 = vpop.f32.mrb[0].mxu0
  %797 = vmatprep.mubr.f32.mxu0 %v716
  %798 = vmatmul.mubr.f32.gmra.mrb[0].mxu0 %v704
  %v799 = vpop.f32.mrb[0].mxu0
  %v800 = vadd.f32 %v47, %v799
  %v801 = vpop.f32.mrb[0].mxu0
  %802 = vdwg.mxu0
  %v803 = vmax.f32 %v693, %v785
  %v804 = vmax.f32 %v694, %v790
  %v805 = vmax.f32 %v695, %v795
  %v806 = vmax.f32 %v696, %v800
  %s807 = scalar_lea.vmem %s0, 448
  %v808 = vld [vmem:[%s807] sm:$0xff]
  %v809 = vld [vmem:[%s807 + $0x8] sm:$0xff]
  %v810 = vld [vmem:[%s807 + $0x10] sm:$0xff]
  %v811 = vld [vmem:[%s807 + $0x18] sm:$0xff]
  %v812 = vld [vmem:[%s807 + $0x20] sm:$0xff]
  %v813 = vld [vmem:[%s807 + $0x28] sm:$0xff]
  %v814 = vld [vmem:[%s807 + $0x30] sm:$0xff]
  %v815 = vld [vmem:[%s807 + $0x38] sm:$0xff]
  %v817 = vsel %vm49, %v809, 0
  %v820 = vsel %vm49, %v811, 0
  %v823 = vsel %vm49, %v813, 0
  %v826 = vsel %vm49, %v815, 0
  %828 = vmatprep.subr.mxu0 0.0
  %829 = vmatpush1.msra.mxu0 %v14
  %830 = vmatprep.subr.mxu0 0.0
  %831 = vmatpush1.msra.mxu0 %v15
  %832 = vmatprep.subr.mxu0 0.0
  %833 = vmatpush1.msra.mxu0 %v16
  %834 = vmatprep.subr.mxu0 0.0
  %835 = vmatpush1.msra.mxu0 %v17
  %836 = vmatprep.subr.mxu0 0.0
  %837 = vmatpush1.msra.mxu0 %v18
  %838 = vmatprep.subr.mxu0 0.0
  %839 = vmatpush1.msra.mxu0 %v19
  %840 = vmatprep.subr.mxu0 0.0
  %841 = vmatpush1.msra.mxu0 %v20
  %842 = vmatprep.subr.mxu0 0.0
  %843 = vmatpush1.msra.mxu0 %v21
  %844 = vmatprep.subr.mxu0 0.0
  %845 = vmatpush1.msra.mxu0 %v22
  %846 = vmatprep.subr.mxu0 0.0
  %847 = vmatpush1.msra.mxu0 %v23
  %848 = vmatprep.subr.mxu0 0.0
  %849 = vmatpush1.msra.mxu0 %v24
  %850 = vmatprep.subr.mxu0 0.0
  %851 = vmatpush1.msra.mxu0 %v25
  %852 = vmatprep.subr.mxu0 0.0
  %853 = vmatpush1.msra.mxu0 %v26
  %854 = vmatprep.subr.mxu0 0.0
  %855 = vmatpush1.msra.mxu0 %v27
  %856 = vmatprep.subr.mxu0 0.0
  %857 = vmatpush1.msra.mxu0 %v28
  %858 = vmatprep.subr.mxu0 0.0
  %859 = vmatpush1.msra.mxu0 %v29
  %860 = vmatprep.subr.mxu0 0.0
  %861 = vmatpush1.msra.mxu0 %v30
  %862 = vmatprep.subr.mxu0 0.0
  %863 = vmatpush1.msra.mxu0 %v31
  %864 = vmatprep.subr.mxu0 0.0
  %865 = vmatpush1.msra.mxu0 %v32
  %866 = vmatprep.subr.mxu0 0.0
  %867 = vmatpush1.msra.mxu0 %v33
  %868 = vmatprep.subr.mxu0 0.0
  %869 = vmatpush1.msra.mxu0 0.0
  %870 = vmatprep.subr.mxu0 0.0
  %871 = vmatpush1.msra.mxu0 0.0
  %872 = vmatprep.subr.mxu0 0.0
  %873 = vmatpush1.msra.mxu0 0.0
  %874 = vmatprep.subr.mxu0 0.0
  %875 = vmatpush1.msra.mxu0 0.0
  %876 = vmatprep.subr.mxu0 0.0
  %877 = vmatpush1.msra.mxu0 0.0
  %878 = vmatprep.subr.mxu0 0.0
  %879 = vmatpush1.msra.mxu0 0.0
  %880 = vmatprep.subr.mxu0 0.0
  %881 = vmatpush1.msra.mxu0 0.0
  %882 = vmatprep.subr.mxu0 0.0
  %883 = vmatpush1.msra.mxu0 0.0
  %884 = vmatprep.subr.mxu0 0.0
  %885 = vmatpush1.msra.mxu0 0.0
  %886 = vmatprep.subr.mxu0 0.0
  %887 = vmatpush1.msra.mxu0 0.0
  %888 = vmatprep.subr.mxu0 0.0
  %889 = vmatpush1.msra.mxu0 0.0
  %890 = vmatprep.subr.mxu0 0.0
  %891 = vmatpush1.msra.mxu0 0.0
  %892 = vmatprep.mubr.f32.mxu0 %v817
  %893 = vmatmul.mubr.f32.gmra.mrb[0].mxu0 %v808
  %v894 = vpop.f32.mrb[0].mxu0
  %v895 = vadd.f32 %v47, %v894
  %v896 = vpop.f32.mrb[0].mxu0
  %897 = vmatprep.mubr.f32.mxu0 %v820
  %898 = vmatmul.mubr.f32.gmra.mrb[0].mxu0 %v810
  %v899 = vpop.f32.mrb[0].mxu0
  %v900 = vadd.f32 %v47, %v899
  %v901 = vpop.f32.mrb[0].mxu0
  %902 = vmatprep.mubr.f32.mxu0 %v823
  %903 = vmatmul.mubr.f32.gmra.mrb[0].mxu0 %v812
  %v904 = vpop.f32.mrb[0].mxu0
  %v905 = vadd.f32 %v47, %v904
  %v906 = vpop.f32.mrb[0].mxu0
  %907 = vmatprep.mubr.f32.mxu0 %v826
  %908 = vmatmul.mubr.f32.gmra.mrb[0].mxu0 %v814
  %v909 = vpop.f32.mrb[0].mxu0
  %v910 = vadd.f32 %v47, %v909
  %v911 = vpop.f32.mrb[0].mxu0
  %912 = vdwg.mxu0
  %v913 = vmax.f32 %v803, %v895
  %v914 = vmax.f32 %v804, %v900
  %v915 = vmax.f32 %v805, %v905
  %v916 = vmax.f32 %v806, %v910
  %s917 = scalar_lea.vmem %s0, 512
  %v918 = vld [vmem:[%s917] sm:$0xff]
  %v919 = vld [vmem:[%s917 + $0x8] sm:$0xff]
  %v920 = vld [vmem:[%s917 + $0x10] sm:$0xff]
  %v921 = vld [vmem:[%s917 + $0x18] sm:$0xff]
  %v922 = vld [vmem:[%s917 + $0x20] sm:$0xff]
  %v923 = vld [vmem:[%s917 + $0x28] sm:$0xff]
  %v924 = vld [vmem:[%s917 + $0x30] sm:$0xff]
  %v925 = vld [vmem:[%s917 + $0x38] sm:$0xff]
  %v927 = vsel %vm49, %v919, 0
  %v930 = vsel %vm49, %v921, 0
  %v933 = vsel %vm49, %v923, 0
  %v936 = vsel %vm49, %v925, 0
  %938 = vmatprep.subr.mxu0 0.0
  %939 = vmatpush1.msra.mxu0 %v14
  %940 = vmatprep.subr.mxu0 0.0
  %941 = vmatpush1.msra.mxu0 %v15
  %942 = vmatprep.subr.mxu0 0.0
  %943 = vmatpush1.msra.mxu0 %v16
  %944 = vmatprep.subr.mxu0 0.0
  %945 = vmatpush1.msra.mxu0 %v17
  %946 = vmatprep.subr.mxu0 0.0
  %947 = vmatpush1.msra.mxu0 %v18
  %948 = vmatprep.subr.mxu0 0.0
  %949 = vmatpush1.msra.mxu0 %v19
  %950 = vmatprep.subr.mxu0 0.0
  %951 = vmatpush1.msra.mxu0 %v20
  %952 = vmatprep.subr.mxu0 0.0
  %953 = vmatpush1.msra.mxu0 %v21
  %954 = vmatprep.subr.mxu0 0.0
  %955 = vmatpush1.msra.mxu0 %v22
  %956 = vmatprep.subr.mxu0 0.0
  %957 = vmatpush1.msra.mxu0 %v23
  %958 = vmatprep.subr.mxu0 0.0
  %959 = vmatpush1.msra.mxu0 %v24
  %960 = vmatprep.subr.mxu0 0.0
  %961 = vmatpush1.msra.mxu0 %v25
  %962 = vmatprep.subr.mxu0 0.0
  %963 = vmatpush1.msra.mxu0 %v26
  %964 = vmatprep.subr.mxu0 0.0
  %965 = vmatpush1.msra.mxu0 %v27
  %966 = vmatprep.subr.mxu0 0.0
  %967 = vmatpush1.msra.mxu0 %v28
  %968 = vmatprep.subr.mxu0 0.0
  %969 = vmatpush1.msra.mxu0 %v29
  %970 = vmatprep.subr.mxu0 0.0
  %971 = vmatpush1.msra.mxu0 %v30
  %972 = vmatprep.subr.mxu0 0.0
  %973 = vmatpush1.msra.mxu0 %v31
  %974 = vmatprep.subr.mxu0 0.0
  %975 = vmatpush1.msra.mxu0 %v32
  %976 = vmatprep.subr.mxu0 0.0
  %977 = vmatpush1.msra.mxu0 %v33
  %978 = vmatprep.subr.mxu0 0.0
  %979 = vmatpush1.msra.mxu0 0.0
  %980 = vmatprep.subr.mxu0 0.0
  %981 = vmatpush1.msra.mxu0 0.0
  %982 = vmatprep.subr.mxu0 0.0
  %983 = vmatpush1.msra.mxu0 0.0
  %984 = vmatprep.subr.mxu0 0.0
  %985 = vmatpush1.msra.mxu0 0.0
  %986 = vmatprep.subr.mxu0 0.0
  %987 = vmatpush1.msra.mxu0 0.0
  %988 = vmatprep.subr.mxu0 0.0
  %989 = vmatpush1.msra.mxu0 0.0
  %990 = vmatprep.subr.mxu0 0.0
  %991 = vmatpush1.msra.mxu0 0.0
  %992 = vmatprep.subr.mxu0 0.0
  %993 = vmatpush1.msra.mxu0 0.0
  %994 = vmatprep.subr.mxu0 0.0
  %995 = vmatpush1.msra.mxu0 0.0
  %996 = vmatprep.subr.mxu0 0.0
  %997 = vmatpush1.msra.mxu0 0.0
  %998 = vmatprep.subr.mxu0 0.0
  %999 = vmatpush1.msra.mxu0 0.0
  %1000 = vmatprep.subr.mxu0 0.0
  %1001 = vmatpush1.msra.mxu0 0.0
  %1002 = vmatprep.mubr.f32.mxu0 %v927
  %1003 = vmatmul.mubr.f32.gmra.mrb[0].mxu0 %v918
  %v1004 = vpop.f32.mrb[0].mxu0
  %v1005 = vadd.f32 %v47, %v1004
  %v1006 = vpop.f32.mrb[0].mxu0
  %1007 = vmatprep.mubr.f32.mxu0 %v930
  %1008 = vmatmul.mubr.f32.gmra.mrb[0].mxu0 %v920
  %v1009 = vpop.f32.mrb[0].mxu0
  %v1010 = vadd.f32 %v47, %v1009
  %v1011 = vpop.f32.mrb[0].mxu0
  %1012 = vmatprep.mubr.f32.mxu0 %v933
  %1013 = vmatmul.mubr.f32.gmra.mrb[0].mxu0 %v922
  %v1014 = vpop.f32.mrb[0].mxu0
  %v1015 = vadd.f32 %v47, %v1014
  %v1016 = vpop.f32.mrb[0].mxu0
  %1017 = vmatprep.mubr.f32.mxu0 %v936
  %1018 = vmatmul.mubr.f32.gmra.mrb[0].mxu0 %v924
  %v1019 = vpop.f32.mrb[0].mxu0
  %v1020 = vadd.f32 %v47, %v1019
  %v1021 = vpop.f32.mrb[0].mxu0
  %1022 = vdwg.mxu0
  %v1023 = vmax.f32 %v913, %v1005
  %v1024 = vmax.f32 %v914, %v1010
  %v1025 = vmax.f32 %v915, %v1015
  %v1026 = vmax.f32 %v916, %v1020
  %s1027 = scalar_lea.vmem %s0, 576
  %v1028 = vld [vmem:[%s1027] sm:$0xff]
  %v1029 = vld [vmem:[%s1027 + $0x8] sm:$0xff]
  %v1030 = vld [vmem:[%s1027 + $0x10] sm:$0xff]
  %v1031 = vld [vmem:[%s1027 + $0x18] sm:$0xff]
  %v1032 = vld [vmem:[%s1027 + $0x20] sm:$0xff]
  %v1033 = vld [vmem:[%s1027 + $0x28] sm:$0xff]
  %v1034 = vld [vmem:[%s1027 + $0x30] sm:$0xff]
  %v1035 = vld [vmem:[%s1027 + $0x38] sm:$0xff]
  %v1037 = vsel %vm49, %v1029, 0
  %v1040 = vsel %vm49, %v1031, 0
  %v1043 = vsel %vm49, %v1033, 0
  %v1046 = vsel %vm49, %v1035, 0
  %1048 = vmatprep.subr.mxu0 0.0
  %1049 = vmatpush1.msra.mxu0 %v14
  %1050 = vmatprep.subr.mxu0 0.0
  %1051 = vmatpush1.msra.mxu0 %v15
  %1052 = vmatprep.subr.mxu0 0.0
  %1053 = vmatpush1.msra.mxu0 %v16
  %1054 = vmatprep.subr.mxu0 0.0
  %1055 = vmatpush1.msra.mxu0 %v17
  %1056 = vmatprep.subr.mxu0 0.0
  %1057 = vmatpush1.msra.mxu0 %v18
  %1058 = vmatprep.subr.mxu0 0.0
  %1059 = vmatpush1.msra.mxu0 %v19
  %1060 = vmatprep.subr.mxu0 0.0
  %1061 = vmatpush1.msra.mxu0 %v20
  %1062 = vmatprep.subr.mxu0 0.0
  %1063 = vmatpush1.msra.mxu0 %v21
  %1064 = vmatprep.subr.mxu0 0.0
  %1065 = vmatpush1.msra.mxu0 %v22
  %1066 = vmatprep.subr.mxu0 0.0
  %1067 = vmatpush1.msra.mxu0 %v23
  %1068 = vmatprep.subr.mxu0 0.0
  %1069 = vmatpush1.msra.mxu0 %v24
  %1070 = vmatprep.subr.mxu0 0.0
  %1071 = vmatpush1.msra.mxu0 %v25
  %1072 = vmatprep.subr.mxu0 0.0
  %1073 = vmatpush1.msra.mxu0 %v26
  %1074 = vmatprep.subr.mxu0 0.0
  %1075 = vmatpush1.msra.mxu0 %v27
  %1076 = vmatprep.subr.mxu0 0.0
  %1077 = vmatpush1.msra.mxu0 %v28
  %1078 = vmatprep.subr.mxu0 0.0
  %1079 = vmatpush1.msra.mxu0 %v29
  %1080 = vmatprep.subr.mxu0 0.0
  %1081 = vmatpush1.msra.mxu0 %v30
  %1082 = vmatprep.subr.mxu0 0.0
  %1083 = vmatpush1.msra.mxu0 %v31
  %1084 = vmatprep.subr.mxu0 0.0
  %1085 = vmatpush1.msra.mxu0 %v32
  %1086 = vmatprep.subr.mxu0 0.0
  %1087 = vmatpush1.msra.mxu0 %v33
  %1088 = vmatprep.subr.mxu0 0.0
  %1089 = vmatpush1.msra.mxu0 0.0
  %1090 = vmatprep.subr.mxu0 0.0
  %1091 = vmatpush1.msra.mxu0 0.0
  %1092 = vmatprep.subr.mxu0 0.0
  %1093 = vmatpush1.msra.mxu0 0.0
  %1094 = vmatprep.subr.mxu0 0.0
  %1095 = vmatpush1.msra.mxu0 0.0
  %1096 = vmatprep.subr.mxu0 0.0
  %1097 = vmatpush1.msra.mxu0 0.0
  %1098 = vmatprep.subr.mxu0 0.0
  %1099 = vmatpush1.msra.mxu0 0.0
  %1100 = vmatprep.subr.mxu0 0.0
  %1101 = vmatpush1.msra.mxu0 0.0
  %1102 = vmatprep.subr.mxu0 0.0
  %1103 = vmatpush1.msra.mxu0 0.0
  %1104 = vmatprep.subr.mxu0 0.0
  %1105 = vmatpush1.msra.mxu0 0.0
  %1106 = vmatprep.subr.mxu0 0.0
  %1107 = vmatpush1.msra.mxu0 0.0
  %1108 = vmatprep.subr.mxu0 0.0
  %1109 = vmatpush1.msra.mxu0 0.0
  %1110 = vmatprep.subr.mxu0 0.0
  %1111 = vmatpush1.msra.mxu0 0.0
  %1112 = vmatprep.mubr.f32.mxu0 %v1037
  %1113 = vmatmul.mubr.f32.gmra.mrb[0].mxu0 %v1028
  %v1114 = vpop.f32.mrb[0].mxu0
  %v1115 = vadd.f32 %v47, %v1114
  %v1116 = vpop.f32.mrb[0].mxu0
  %1117 = vmatprep.mubr.f32.mxu0 %v1040
  %1118 = vmatmul.mubr.f32.gmra.mrb[0].mxu0 %v1030
  %v1119 = vpop.f32.mrb[0].mxu0
  %v1120 = vadd.f32 %v47, %v1119
  %v1121 = vpop.f32.mrb[0].mxu0
  %1122 = vmatprep.mubr.f32.mxu0 %v1043
  %1123 = vmatmul.mubr.f32.gmra.mrb[0].mxu0 %v1032
  %v1124 = vpop.f32.mrb[0].mxu0
  %v1125 = vadd.f32 %v47, %v1124
  %v1126 = vpop.f32.mrb[0].mxu0
  %1127 = vmatprep.mubr.f32.mxu0 %v1046
  %1128 = vmatmul.mubr.f32.gmra.mrb[0].mxu0 %v1034
  %v1129 = vpop.f32.mrb[0].mxu0
  %v1130 = vadd.f32 %v47, %v1129
  %v1131 = vpop.f32.mrb[0].mxu0
  %1132 = vdwg.mxu0
  %v1133 = vmax.f32 %v1023, %v1115
  %v1134 = vmax.f32 %v1024, %v1120
  %v1135 = vmax.f32 %v1025, %v1125
  %v1136 = vmax.f32 %v1026, %v1130
  %s1137 = scalar_lea.vmem %s0, 640
  %v1138 = vld [vmem:[%s1137] sm:$0xff]
  %v1139 = vld [vmem:[%s1137 + $0x8] sm:$0xff]
  %v1140 = vld [vmem:[%s1137 + $0x10] sm:$0xff]
  %v1141 = vld [vmem:[%s1137 + $0x18] sm:$0xff]
  %v1142 = vld [vmem:[%s1137 + $0x20] sm:$0xff]
  %v1143 = vld [vmem:[%s1137 + $0x28] sm:$0xff]
  %v1144 = vld [vmem:[%s1137 + $0x30] sm:$0xff]
  %v1145 = vld [vmem:[%s1137 + $0x38] sm:$0xff]
  %v1147 = vsel %vm49, %v1139, 0
  %v1150 = vsel %vm49, %v1141, 0
  %v1153 = vsel %vm49, %v1143, 0
  %v1156 = vsel %vm49, %v1145, 0
  %1158 = vmatprep.subr.mxu0 0.0
  %1159 = vmatpush1.msra.mxu0 %v14
  %1160 = vmatprep.subr.mxu0 0.0
  %1161 = vmatpush1.msra.mxu0 %v15
  %1162 = vmatprep.subr.mxu0 0.0
  %1163 = vmatpush1.msra.mxu0 %v16
  %1164 = vmatprep.subr.mxu0 0.0
  %1165 = vmatpush1.msra.mxu0 %v17
  %1166 = vmatprep.subr.mxu0 0.0
  %1167 = vmatpush1.msra.mxu0 %v18
  %1168 = vmatprep.subr.mxu0 0.0
  %1169 = vmatpush1.msra.mxu0 %v19
  %1170 = vmatprep.subr.mxu0 0.0
  %1171 = vmatpush1.msra.mxu0 %v20
  %1172 = vmatprep.subr.mxu0 0.0
  %1173 = vmatpush1.msra.mxu0 %v21
  %1174 = vmatprep.subr.mxu0 0.0
  %1175 = vmatpush1.msra.mxu0 %v22
  %1176 = vmatprep.subr.mxu0 0.0
  %1177 = vmatpush1.msra.mxu0 %v23
  %1178 = vmatprep.subr.mxu0 0.0
  %1179 = vmatpush1.msra.mxu0 %v24
  %1180 = vmatprep.subr.mxu0 0.0
  %1181 = vmatpush1.msra.mxu0 %v25
  %1182 = vmatprep.subr.mxu0 0.0
  %1183 = vmatpush1.msra.mxu0 %v26
  %1184 = vmatprep.subr.mxu0 0.0
  %1185 = vmatpush1.msra.mxu0 %v27
  %1186 = vmatprep.subr.mxu0 0.0
  %1187 = vmatpush1.msra.mxu0 %v28
  %1188 = vmatprep.subr.mxu0 0.0
  %1189 = vmatpush1.msra.mxu0 %v29
  %1190 = vmatprep.subr.mxu0 0.0
  %1191 = vmatpush1.msra.mxu0 %v30
  %1192 = vmatprep.subr.mxu0 0.0
  %1193 = vmatpush1.msra.mxu0 %v31
  %1194 = vmatprep.subr.mxu0 0.0
  %1195 = vmatpush1.msra.mxu0 %v32
  %1196 = vmatprep.subr.mxu0 0.0
  %1197 = vmatpush1.msra.mxu0 %v33
  %1198 = vmatprep.subr.mxu0 0.0
  %1199 = vmatpush1.msra.mxu0 0.0
  %1200 = vmatprep.subr.mxu0 0.0
  %1201 = vmatpush1.msra.mxu0 0.0
  %1202 = vmatprep.subr.mxu0 0.0
  %1203 = vmatpush1.msra.mxu0 0.0
  %1204 = vmatprep.subr.mxu0 0.0
  %1205 = vmatpush1.msra.mxu0 0.0
  %1206 = vmatprep.subr.mxu0 0.0
  %1207 = vmatpush1.msra.mxu0 0.0
  %1208 = vmatprep.subr.mxu0 0.0
  %1209 = vmatpush1.msra.mxu0 0.0
  %1210 = vmatprep.subr.mxu0 0.0
  %1211 = vmatpush1.msra.mxu0 0.0
  %1212 = vmatprep.subr.mxu0 0.0
  %1213 = vmatpush1.msra.mxu0 0.0
  %1214 = vmatprep.subr.mxu0 0.0
  %1215 = vmatpush1.msra.mxu0 0.0
  %1216 = vmatprep.subr.mxu0 0.0
  %1217 = vmatpush1.msra.mxu0 0.0
  %1218 = vmatprep.subr.mxu0 0.0
  %1219 = vmatpush1.msra.mxu0 0.0
  %1220 = vmatprep.subr.mxu0 0.0
  %1221 = vmatpush1.msra.mxu0 0.0
  %1222 = vmatprep.mubr.f32.mxu0 %v1147
  %1223 = vmatmul.mubr.f32.gmra.mrb[0].mxu0 %v1138
  %v1224 = vpop.f32.mrb[0].mxu0
  %v1225 = vadd.f32 %v47, %v1224
  %v1226 = vpop.f32.mrb[0].mxu0
  %1227 = vmatprep.mubr.f32.mxu0 %v1150
  %1228 = vmatmul.mubr.f32.gmra.mrb[0].mxu0 %v1140
  %v1229 = vpop.f32.mrb[0].mxu0
  %v1230 = vadd.f32 %v47, %v1229
  %v1231 = vpop.f32.mrb[0].mxu0
  %1232 = vmatprep.mubr.f32.mxu0 %v1153
  %1233 = vmatmul.mubr.f32.gmra.mrb[0].mxu0 %v1142
  %v1234 = vpop.f32.mrb[0].mxu0
  %v1235 = vadd.f32 %v47, %v1234
  %v1236 = vpop.f32.mrb[0].mxu0
  %1237 = vmatprep.mubr.f32.mxu0 %v1156
  %1238 = vmatmul.mubr.f32.gmra.mrb[0].mxu0 %v1144
  %v1239 = vpop.f32.mrb[0].mxu0
  %v1240 = vadd.f32 %v47, %v1239
  %v1241 = vpop.f32.mrb[0].mxu0
  %1242 = vdwg.mxu0
  %v1243 = vmax.f32 %v1133, %v1225
  %v1244 = vmax.f32 %v1134, %v1230
  %v1245 = vmax.f32 %v1135, %v1235
  %v1246 = vmax.f32 %v1136, %v1240
  %s1247 = scalar_lea.vmem %s0, 704
  %v1248 = vld [vmem:[%s1247] sm:$0xff]
  %v1249 = vld [vmem:[%s1247 + $0x8] sm:$0xff]
  %v1250 = vld [vmem:[%s1247 + $0x10] sm:$0xff]
  %v1251 = vld [vmem:[%s1247 + $0x18] sm:$0xff]
  %v1252 = vld [vmem:[%s1247 + $0x20] sm:$0xff]
  %v1253 = vld [vmem:[%s1247 + $0x28] sm:$0xff]
  %v1254 = vld [vmem:[%s1247 + $0x30] sm:$0xff]
  %v1255 = vld [vmem:[%s1247 + $0x38] sm:$0xff]
  %v1257 = vsel %vm49, %v1249, 0
  %v1260 = vsel %vm49, %v1251, 0
  %v1263 = vsel %vm49, %v1253, 0
  %v1266 = vsel %vm49, %v1255, 0
  %1268 = vmatprep.subr.mxu0 0.0
  %1269 = vmatpush1.msra.mxu0 %v14
  %1270 = vmatprep.subr.mxu0 0.0
  %1271 = vmatpush1.msra.mxu0 %v15
  %1272 = vmatprep.subr.mxu0 0.0
  %1273 = vmatpush1.msra.mxu0 %v16
  %1274 = vmatprep.subr.mxu0 0.0
  %1275 = vmatpush1.msra.mxu0 %v17
  %1276 = vmatprep.subr.mxu0 0.0
  %1277 = vmatpush1.msra.mxu0 %v18
  %1278 = vmatprep.subr.mxu0 0.0
  %1279 = vmatpush1.msra.mxu0 %v19
  %1280 = vmatprep.subr.mxu0 0.0
  %1281 = vmatpush1.msra.mxu0 %v20
  %1282 = vmatprep.subr.mxu0 0.0
  %1283 = vmatpush1.msra.mxu0 %v21
  %1284 = vmatprep.subr.mxu0 0.0
  %1285 = vmatpush1.msra.mxu0 %v22
  %1286 = vmatprep.subr.mxu0 0.0
  %1287 = vmatpush1.msra.mxu0 %v23
  %1288 = vmatprep.subr.mxu0 0.0
  %1289 = vmatpush1.msra.mxu0 %v24
  %1290 = vmatprep.subr.mxu0 0.0
  %1291 = vmatpush1.msra.mxu0 %v25
  %1292 = vmatprep.subr.mxu0 0.0
  %1293 = vmatpush1.msra.mxu0 %v26
  %1294 = vmatprep.subr.mxu0 0.0
  %1295 = vmatpush1.msra.mxu0 %v27
  %1296 = vmatprep.subr.mxu0 0.0
  %1297 = vmatpush1.msra.mxu0 %v28
  %1298 = vmatprep.subr.mxu0 0.0
  %1299 = vmatpush1.msra.mxu0 %v29
  %1300 = vmatprep.subr.mxu0 0.0
  %1301 = vmatpush1.msra.mxu0 %v30
  %1302 = vmatprep.subr.mxu0 0.0
  %1303 = vmatpush1.msra.mxu0 %v31
  %1304 = vmatprep.subr.mxu0 0.0
  %1305 = vmatpush1.msra.mxu0 %v32
  %1306 = vmatprep.subr.mxu0 0.0
  %1307 = vmatpush1.msra.mxu0 %v33
  %1308 = vmatprep.subr.mxu0 0.0
  %1309 = vmatpush1.msra.mxu0 0.0
  %1310 = vmatprep.subr.mxu0 0.0
  %1311 = vmatpush1.msra.mxu0 0.0
  %1312 = vmatprep.subr.mxu0 0.0
  %1313 = vmatpush1.msra.mxu0 0.0
  %1314 = vmatprep.subr.mxu0 0.0
  %1315 = vmatpush1.msra.mxu0 0.0
  %1316 = vmatprep.subr.mxu0 0.0
  %1317 = vmatpush1.msra.mxu0 0.0
  %1318 = vmatprep.subr.mxu0 0.0
  %1319 = vmatpush1.msra.mxu0 0.0
  %1320 = vmatprep.subr.mxu0 0.0
  %1321 = vmatpush1.msra.mxu0 0.0
  %1322 = vmatprep.subr.mxu0 0.0
  %1323 = vmatpush1.msra.mxu0 0.0
  %1324 = vmatprep.subr.mxu0 0.0
  %1325 = vmatpush1.msra.mxu0 0.0
  %1326 = vmatprep.subr.mxu0 0.0
  %1327 = vmatpush1.msra.mxu0 0.0
  %1328 = vmatprep.subr.mxu0 0.0
  %1329 = vmatpush1.msra.mxu0 0.0
  %1330 = vmatprep.subr.mxu0 0.0
  %1331 = vmatpush1.msra.mxu0 0.0
  %1332 = vmatprep.mubr.f32.mxu0 %v1257
  %1333 = vmatmul.mubr.f32.gmra.mrb[0].mxu0 %v1248
  %v1334 = vpop.f32.mrb[0].mxu0
  %v1335 = vadd.f32 %v47, %v1334
  %v1336 = vpop.f32.mrb[0].mxu0
  %1337 = vmatprep.mubr.f32.mxu0 %v1260
  %1338 = vmatmul.mubr.f32.gmra.mrb[0].mxu0 %v1250
  %v1339 = vpop.f32.mrb[0].mxu0
  %v1340 = vadd.f32 %v47, %v1339
  %v1341 = vpop.f32.mrb[0].mxu0
  %1342 = vmatprep.mubr.f32.mxu0 %v1263
  %1343 = vmatmul.mubr.f32.gmra.mrb[0].mxu0 %v1252
  %v1344 = vpop.f32.mrb[0].mxu0
  %v1345 = vadd.f32 %v47, %v1344
  %v1346 = vpop.f32.mrb[0].mxu0
  %1347 = vmatprep.mubr.f32.mxu0 %v1266
  %1348 = vmatmul.mubr.f32.gmra.mrb[0].mxu0 %v1254
  %v1349 = vpop.f32.mrb[0].mxu0
  %v1350 = vadd.f32 %v47, %v1349
  %v1351 = vpop.f32.mrb[0].mxu0
  %1352 = vdwg.mxu0
  %v1353 = vmax.f32 %v1243, %v1335
  %v1354 = vmax.f32 %v1244, %v1340
  %v1355 = vmax.f32 %v1245, %v1345
  %v1356 = vmax.f32 %v1246, %v1350
  %s1357 = scalar_lea.vmem %s0, 768
  %v1358 = vld [vmem:[%s1357] sm:$0xff]
  %v1359 = vld [vmem:[%s1357 + $0x8] sm:$0xff]
  %v1360 = vld [vmem:[%s1357 + $0x10] sm:$0xff]
  %v1361 = vld [vmem:[%s1357 + $0x18] sm:$0xff]
  %v1362 = vld [vmem:[%s1357 + $0x20] sm:$0xff]
  %v1363 = vld [vmem:[%s1357 + $0x28] sm:$0xff]
  %v1364 = vld [vmem:[%s1357 + $0x30] sm:$0xff]
  %v1365 = vld [vmem:[%s1357 + $0x38] sm:$0xff]
  %v1367 = vsel %vm49, %v1359, 0
  %v1370 = vsel %vm49, %v1361, 0
  %v1373 = vsel %vm49, %v1363, 0
  %v1376 = vsel %vm49, %v1365, 0
  %1378 = vmatprep.subr.mxu0 0.0
  %1379 = vmatpush1.msra.mxu0 %v14
  %1380 = vmatprep.subr.mxu0 0.0
  %1381 = vmatpush1.msra.mxu0 %v15
  %1382 = vmatprep.subr.mxu0 0.0
  %1383 = vmatpush1.msra.mxu0 %v16
  %1384 = vmatprep.subr.mxu0 0.0
  %1385 = vmatpush1.msra.mxu0 %v17
  %1386 = vmatprep.subr.mxu0 0.0
  %1387 = vmatpush1.msra.mxu0 %v18
  %1388 = vmatprep.subr.mxu0 0.0
  %1389 = vmatpush1.msra.mxu0 %v19
  %1390 = vmatprep.subr.mxu0 0.0
  %1391 = vmatpush1.msra.mxu0 %v20
  %1392 = vmatprep.subr.mxu0 0.0
  %1393 = vmatpush1.msra.mxu0 %v21
  %1394 = vmatprep.subr.mxu0 0.0
  %1395 = vmatpush1.msra.mxu0 %v22
  %1396 = vmatprep.subr.mxu0 0.0
  %1397 = vmatpush1.msra.mxu0 %v23
  %1398 = vmatprep.subr.mxu0 0.0
  %1399 = vmatpush1.msra.mxu0 %v24
  %1400 = vmatprep.subr.mxu0 0.0
  %1401 = vmatpush1.msra.mxu0 %v25
  %1402 = vmatprep.subr.mxu0 0.0
  %1403 = vmatpush1.msra.mxu0 %v26
  %1404 = vmatprep.subr.mxu0 0.0
  %1405 = vmatpush1.msra.mxu0 %v27
  %1406 = vmatprep.subr.mxu0 0.0
  %1407 = vmatpush1.msra.mxu0 %v28
  %1408 = vmatprep.subr.mxu0 0.0
  %1409 = vmatpush1.msra.mxu0 %v29
  %1410 = vmatprep.subr.mxu0 0.0
  %1411 = vmatpush1.msra.mxu0 %v30
  %1412 = vmatprep.subr.mxu0 0.0
  %1413 = vmatpush1.msra.mxu0 %v31
  %1414 = vmatprep.subr.mxu0 0.0
  %1415 = vmatpush1.msra.mxu0 %v32
  %1416 = vmatprep.subr.mxu0 0.0
  %1417 = vmatpush1.msra.mxu0 %v33
  %1418 = vmatprep.subr.mxu0 0.0
  %1419 = vmatpush1.msra.mxu0 0.0
  %1420 = vmatprep.subr.mxu0 0.0
  %1421 = vmatpush1.msra.mxu0 0.0
  %1422 = vmatprep.subr.mxu0 0.0
  %1423 = vmatpush1.msra.mxu0 0.0
  %1424 = vmatprep.subr.mxu0 0.0
  %1425 = vmatpush1.msra.mxu0 0.0
  %1426 = vmatprep.subr.mxu0 0.0
  %1427 = vmatpush1.msra.mxu0 0.0
  %1428 = vmatprep.subr.mxu0 0.0
  %1429 = vmatpush1.msra.mxu0 0.0
  %1430 = vmatprep.subr.mxu0 0.0
  %1431 = vmatpush1.msra.mxu0 0.0
  %1432 = vmatprep.subr.mxu0 0.0
  %1433 = vmatpush1.msra.mxu0 0.0
  %1434 = vmatprep.subr.mxu0 0.0
  %1435 = vmatpush1.msra.mxu0 0.0
  %1436 = vmatprep.subr.mxu0 0.0
  %1437 = vmatpush1.msra.mxu0 0.0
  %1438 = vmatprep.subr.mxu0 0.0
  %1439 = vmatpush1.msra.mxu0 0.0
  %1440 = vmatprep.subr.mxu0 0.0
  %1441 = vmatpush1.msra.mxu0 0.0
  %1442 = vmatprep.mubr.f32.mxu0 %v1367
  %1443 = vmatmul.mubr.f32.gmra.mrb[0].mxu0 %v1358
  %v1444 = vpop.f32.mrb[0].mxu0
  %v1445 = vadd.f32 %v47, %v1444
  %v1446 = vpop.f32.mrb[0].mxu0
  %1447 = vmatprep.mubr.f32.mxu0 %v1370
  %1448 = vmatmul.mubr.f32.gmra.mrb[0].mxu0 %v1360
  %v1449 = vpop.f32.mrb[0].mxu0
  %v1450 = vadd.f32 %v47, %v1449
  %v1451 = vpop.f32.mrb[0].mxu0
  %1452 = vmatprep.mubr.f32.mxu0 %v1373
  %1453 = vmatmul.mubr.f32.gmra.mrb[0].mxu0 %v1362
  %v1454 = vpop.f32.mrb[0].mxu0
  %v1455 = vadd.f32 %v47, %v1454
  %v1456 = vpop.f32.mrb[0].mxu0
  %1457 = vmatprep.mubr.f32.mxu0 %v1376
  %1458 = vmatmul.mubr.f32.gmra.mrb[0].mxu0 %v1364
  %v1459 = vpop.f32.mrb[0].mxu0
  %v1460 = vadd.f32 %v47, %v1459
  %v1461 = vpop.f32.mrb[0].mxu0
  %1462 = vdwg.mxu0
  %v1463 = vmax.f32 %v1353, %v1445
  %v1464 = vmax.f32 %v1354, %v1450
  %v1465 = vmax.f32 %v1355, %v1455
  %v1466 = vmax.f32 %v1356, %v1460
  %s1467 = scalar_lea.vmem %s0, 832
  %v1468 = vld [vmem:[%s1467] sm:$0xff]
  %v1469 = vld [vmem:[%s1467 + $0x8] sm:$0xff]
  %v1470 = vld [vmem:[%s1467 + $0x10] sm:$0xff]
  %v1471 = vld [vmem:[%s1467 + $0x18] sm:$0xff]
  %v1472 = vld [vmem:[%s1467 + $0x20] sm:$0xff]
  %v1473 = vld [vmem:[%s1467 + $0x28] sm:$0xff]
  %v1474 = vld [vmem:[%s1467 + $0x30] sm:$0xff]
  %v1475 = vld [vmem:[%s1467 + $0x38] sm:$0xff]
  %v1477 = vsel %vm49, %v1469, 0
  %v1480 = vsel %vm49, %v1471, 0
  %v1483 = vsel %vm49, %v1473, 0
  %v1486 = vsel %vm49, %v1475, 0
  %1488 = vmatprep.subr.mxu0 0.0
  %1489 = vmatpush1.msra.mxu0 %v14
  %1490 = vmatprep.subr.mxu0 0.0
  %1491 = vmatpush1.msra.mxu0 %v15
  %1492 = vmatprep.subr.mxu0 0.0
  %1493 = vmatpush1.msra.mxu0 %v16
  %1494 = vmatprep.subr.mxu0 0.0
  %1495 = vmatpush1.msra.mxu0 %v17
  %1496 = vmatprep.subr.mxu0 0.0
  %1497 = vmatpush1.msra.mxu0 %v18
  %1498 = vmatprep.subr.mxu0 0.0
  %1499 = vmatpush1.msra.mxu0 %v19
  %1500 = vmatprep.subr.mxu0 0.0
  %1501 = vmatpush1.msra.mxu0 %v20
  %1502 = vmatprep.subr.mxu0 0.0
  %1503 = vmatpush1.msra.mxu0 %v21
  %1504 = vmatprep.subr.mxu0 0.0
  %1505 = vmatpush1.msra.mxu0 %v22
  %1506 = vmatprep.subr.mxu0 0.0
  %1507 = vmatpush1.msra.mxu0 %v23
  %1508 = vmatprep.subr.mxu0 0.0
  %1509 = vmatpush1.msra.mxu0 %v24
  %1510 = vmatprep.subr.mxu0 0.0
  %1511 = vmatpush1.msra.mxu0 %v25
  %1512 = vmatprep.subr.mxu0 0.0
  %1513 = vmatpush1.msra.mxu0 %v26
  %1514 = vmatprep.subr.mxu0 0.0
  %1515 = vmatpush1.msra.mxu0 %v27
  %1516 = vmatprep.subr.mxu0 0.0
  %1517 = vmatpush1.msra.mxu0 %v28
  %1518 = vmatprep.subr.mxu0 0.0
  %1519 = vmatpush1.msra.mxu0 %v29
  %1520 = vmatprep.subr.mxu0 0.0
  %1521 = vmatpush1.msra.mxu0 %v30
  %1522 = vmatprep.subr.mxu0 0.0
  %1523 = vmatpush1.msra.mxu0 %v31
  %1524 = vmatprep.subr.mxu0 0.0
  %1525 = vmatpush1.msra.mxu0 %v32
  %1526 = vmatprep.subr.mxu0 0.0
  %1527 = vmatpush1.msra.mxu0 %v33
  %1528 = vmatprep.subr.mxu0 0.0
  %1529 = vmatpush1.msra.mxu0 0.0
  %1530 = vmatprep.subr.mxu0 0.0
  %1531 = vmatpush1.msra.mxu0 0.0
  %1532 = vmatprep.subr.mxu0 0.0
  %1533 = vmatpush1.msra.mxu0 0.0
  %1534 = vmatprep.subr.mxu0 0.0
  %1535 = vmatpush1.msra.mxu0 0.0
  %1536 = vmatprep.subr.mxu0 0.0
  %1537 = vmatpush1.msra.mxu0 0.0
  %1538 = vmatprep.subr.mxu0 0.0
  %1539 = vmatpush1.msra.mxu0 0.0
  %1540 = vmatprep.subr.mxu0 0.0
  %1541 = vmatpush1.msra.mxu0 0.0
  %1542 = vmatprep.subr.mxu0 0.0
  %1543 = vmatpush1.msra.mxu0 0.0
  %1544 = vmatprep.subr.mxu0 0.0
  %1545 = vmatpush1.msra.mxu0 0.0
  %1546 = vmatprep.subr.mxu0 0.0
  %1547 = vmatpush1.msra.mxu0 0.0
  %1548 = vmatprep.subr.mxu0 0.0
  %1549 = vmatpush1.msra.mxu0 0.0
  %1550 = vmatprep.subr.mxu0 0.0
  %1551 = vmatpush1.msra.mxu0 0.0
  %1552 = vmatprep.mubr.f32.mxu0 %v1477
  %1553 = vmatmul.mubr.f32.gmra.mrb[0].mxu0 %v1468
  %v1554 = vpop.f32.mrb[0].mxu0
  %v1555 = vadd.f32 %v47, %v1554
  %v1556 = vpop.f32.mrb[0].mxu0
  %1557 = vmatprep.mubr.f32.mxu0 %v1480
  %1558 = vmatmul.mubr.f32.gmra.mrb[0].mxu0 %v1470
  %v1559 = vpop.f32.mrb[0].mxu0
  %v1560 = vadd.f32 %v47, %v1559
  %v1561 = vpop.f32.mrb[0].mxu0
  %1562 = vmatprep.mubr.f32.mxu0 %v1483
  %1563 = vmatmul.mubr.f32.gmra.mrb[0].mxu0 %v1472
  %v1564 = vpop.f32.mrb[0].mxu0
  %v1565 = vadd.f32 %v47, %v1564
  %v1566 = vpop.f32.mrb[0].mxu0
  %1567 = vmatprep.mubr.f32.mxu0 %v1486
  %1568 = vmatmul.mubr.f32.gmra.mrb[0].mxu0 %v1474
  %v1569 = vpop.f32.mrb[0].mxu0
  %v1570 = vadd.f32 %v47, %v1569
  %v1571 = vpop.f32.mrb[0].mxu0
  %1572 = vdwg.mxu0
  %v1573 = vmax.f32 %v1463, %v1555
  %v1574 = vmax.f32 %v1464, %v1560
  %v1575 = vmax.f32 %v1465, %v1565
  %v1576 = vmax.f32 %v1466, %v1570
  %s1577 = scalar_lea.vmem %s0, 896
  %v1578 = vld [vmem:[%s1577] sm:$0xff]
  %v1579 = vld [vmem:[%s1577 + $0x8] sm:$0xff]
  %v1580 = vld [vmem:[%s1577 + $0x10] sm:$0xff]
  %v1581 = vld [vmem:[%s1577 + $0x18] sm:$0xff]
  %v1582 = vld [vmem:[%s1577 + $0x20] sm:$0xff]
  %v1583 = vld [vmem:[%s1577 + $0x28] sm:$0xff]
  %v1584 = vld [vmem:[%s1577 + $0x30] sm:$0xff]
  %v1585 = vld [vmem:[%s1577 + $0x38] sm:$0xff]
  %v1587 = vsel %vm49, %v1579, 0
  %v1590 = vsel %vm49, %v1581, 0
  %v1593 = vsel %vm49, %v1583, 0
  %v1596 = vsel %vm49, %v1585, 0
  %1598 = vmatprep.subr.mxu0 0.0
  %1599 = vmatpush1.msra.mxu0 %v14
  %1600 = vmatprep.subr.mxu0 0.0
  %1601 = vmatpush1.msra.mxu0 %v15
  %1602 = vmatprep.subr.mxu0 0.0
  %1603 = vmatpush1.msra.mxu0 %v16
  %1604 = vmatprep.subr.mxu0 0.0
  %1605 = vmatpush1.msra.mxu0 %v17
  %1606 = vmatprep.subr.mxu0 0.0
  %1607 = vmatpush1.msra.mxu0 %v18
  %1608 = vmatprep.subr.mxu0 0.0
  %1609 = vmatpush1.msra.mxu0 %v19
  %1610 = vmatprep.subr.mxu0 0.0
  %1611 = vmatpush1.msra.mxu0 %v20
  %1612 = vmatprep.subr.mxu0 0.0
  %1613 = vmatpush1.msra.mxu0 %v21
  %1614 = vmatprep.subr.mxu0 0.0
  %1615 = vmatpush1.msra.mxu0 %v22
  %1616 = vmatprep.subr.mxu0 0.0
  %1617 = vmatpush1.msra.mxu0 %v23
  %1618 = vmatprep.subr.mxu0 0.0
  %1619 = vmatpush1.msra.mxu0 %v24
  %1620 = vmatprep.subr.mxu0 0.0
  %1621 = vmatpush1.msra.mxu0 %v25
  %1622 = vmatprep.subr.mxu0 0.0
  %1623 = vmatpush1.msra.mxu0 %v26
  %1624 = vmatprep.subr.mxu0 0.0
  %1625 = vmatpush1.msra.mxu0 %v27
  %1626 = vmatprep.subr.mxu0 0.0
  %1627 = vmatpush1.msra.mxu0 %v28
  %1628 = vmatprep.subr.mxu0 0.0
  %1629 = vmatpush1.msra.mxu0 %v29
  %1630 = vmatprep.subr.mxu0 0.0
  %1631 = vmatpush1.msra.mxu0 %v30
  %1632 = vmatprep.subr.mxu0 0.0
  %1633 = vmatpush1.msra.mxu0 %v31
  %1634 = vmatprep.subr.mxu0 0.0
  %1635 = vmatpush1.msra.mxu0 %v32
  %1636 = vmatprep.subr.mxu0 0.0
  %1637 = vmatpush1.msra.mxu0 %v33
  %1638 = vmatprep.subr.mxu0 0.0
  %1639 = vmatpush1.msra.mxu0 0.0
  %1640 = vmatprep.subr.mxu0 0.0
  %1641 = vmatpush1.msra.mxu0 0.0
  %1642 = vmatprep.subr.mxu0 0.0
  %1643 = vmatpush1.msra.mxu0 0.0
  %1644 = vmatprep.subr.mxu0 0.0
  %1645 = vmatpush1.msra.mxu0 0.0
  %1646 = vmatprep.subr.mxu0 0.0
  %1647 = vmatpush1.msra.mxu0 0.0
  %1648 = vmatprep.subr.mxu0 0.0
  %1649 = vmatpush1.msra.mxu0 0.0
  %1650 = vmatprep.subr.mxu0 0.0
  %1651 = vmatpush1.msra.mxu0 0.0
  %1652 = vmatprep.subr.mxu0 0.0
  %1653 = vmatpush1.msra.mxu0 0.0
  %1654 = vmatprep.subr.mxu0 0.0
  %1655 = vmatpush1.msra.mxu0 0.0
  %1656 = vmatprep.subr.mxu0 0.0
  %1657 = vmatpush1.msra.mxu0 0.0
  %1658 = vmatprep.subr.mxu0 0.0
  %1659 = vmatpush1.msra.mxu0 0.0
  %1660 = vmatprep.subr.mxu0 0.0
  %1661 = vmatpush1.msra.mxu0 0.0
  %1662 = vmatprep.mubr.f32.mxu0 %v1587
  %1663 = vmatmul.mubr.f32.gmra.mrb[0].mxu0 %v1578
  %v1664 = vpop.f32.mrb[0].mxu0
  %v1665 = vadd.f32 %v47, %v1664
  %v1666 = vpop.f32.mrb[0].mxu0
  %1667 = vmatprep.mubr.f32.mxu0 %v1590
  %1668 = vmatmul.mubr.f32.gmra.mrb[0].mxu0 %v1580
  %v1669 = vpop.f32.mrb[0].mxu0
  %v1670 = vadd.f32 %v47, %v1669
  %v1671 = vpop.f32.mrb[0].mxu0
  %1672 = vmatprep.mubr.f32.mxu0 %v1593
  %1673 = vmatmul.mubr.f32.gmra.mrb[0].mxu0 %v1582
  %v1674 = vpop.f32.mrb[0].mxu0
  %v1675 = vadd.f32 %v47, %v1674
  %v1676 = vpop.f32.mrb[0].mxu0
  %1677 = vmatprep.mubr.f32.mxu0 %v1596
  %1678 = vmatmul.mubr.f32.gmra.mrb[0].mxu0 %v1584
  %v1679 = vpop.f32.mrb[0].mxu0
  %v1680 = vadd.f32 %v47, %v1679
  %v1681 = vpop.f32.mrb[0].mxu0
  %1682 = vdwg.mxu0
  %v1683 = vmax.f32 %v1573, %v1665
  %v1684 = vmax.f32 %v1574, %v1670
  %v1685 = vmax.f32 %v1575, %v1675
  %v1686 = vmax.f32 %v1576, %v1680
  %s1687 = scalar_lea.vmem %s0, 960
  %v1688 = vld [vmem:[%s1687] sm:$0xff]
  %v1689 = vld [vmem:[%s1687 + $0x8] sm:$0xff]
  %v1690 = vld [vmem:[%s1687 + $0x10] sm:$0xff]
  %v1691 = vld [vmem:[%s1687 + $0x18] sm:$0xff]
  %v1692 = vld [vmem:[%s1687 + $0x20] sm:$0xff]
  %v1693 = vld [vmem:[%s1687 + $0x28] sm:$0xff]
  %v1694 = vld [vmem:[%s1687 + $0x30] sm:$0xff]
  %v1695 = vld [vmem:[%s1687 + $0x38] sm:$0xff]
  %v1697 = vsel %vm49, %v1689, 0
  %v1700 = vsel %vm49, %v1691, 0
  %v1703 = vsel %vm49, %v1693, 0
  %v1706 = vsel %vm49, %v1695, 0
  %1708 = vmatprep.subr.mxu0 0.0
  %1709 = vmatpush1.msra.mxu0 %v14
  %1710 = vmatprep.subr.mxu0 0.0
  %1711 = vmatpush1.msra.mxu0 %v15
  %1712 = vmatprep.subr.mxu0 0.0
  %1713 = vmatpush1.msra.mxu0 %v16
  %1714 = vmatprep.subr.mxu0 0.0
  %1715 = vmatpush1.msra.mxu0 %v17
  %1716 = vmatprep.subr.mxu0 0.0
  %1717 = vmatpush1.msra.mxu0 %v18
  %1718 = vmatprep.subr.mxu0 0.0
  %1719 = vmatpush1.msra.mxu0 %v19
  %1720 = vmatprep.subr.mxu0 0.0
  %1721 = vmatpush1.msra.mxu0 %v20
  %1722 = vmatprep.subr.mxu0 0.0
  %1723 = vmatpush1.msra.mxu0 %v21
  %1724 = vmatprep.subr.mxu0 0.0
  %1725 = vmatpush1.msra.mxu0 %v22
  %1726 = vmatprep.subr.mxu0 0.0
  %1727 = vmatpush1.msra.mxu0 %v23
  %1728 = vmatprep.subr.mxu0 0.0
  %1729 = vmatpush1.msra.mxu0 %v24
  %1730 = vmatprep.subr.mxu0 0.0
  %1731 = vmatpush1.msra.mxu0 %v25
  %1732 = vmatprep.subr.mxu0 0.0
  %1733 = vmatpush1.msra.mxu0 %v26
  %1734 = vmatprep.subr.mxu0 0.0
  %1735 = vmatpush1.msra.mxu0 %v27
  %1736 = vmatprep.subr.mxu0 0.0
  %1737 = vmatpush1.msra.mxu0 %v28
  %1738 = vmatprep.subr.mxu0 0.0
  %1739 = vmatpush1.msra.mxu0 %v29
  %1740 = vmatprep.subr.mxu0 0.0
  %1741 = vmatpush1.msra.mxu0 %v30
  %1742 = vmatprep.subr.mxu0 0.0
  %1743 = vmatpush1.msra.mxu0 %v31
  %1744 = vmatprep.subr.mxu0 0.0
  %1745 = vmatpush1.msra.mxu0 %v32
  %1746 = vmatprep.subr.mxu0 0.0
  %1747 = vmatpush1.msra.mxu0 %v33
  %1748 = vmatprep.subr.mxu0 0.0
  %1749 = vmatpush1.msra.mxu0 0.0
  %1750 = vmatprep.subr.mxu0 0.0
  %1751 = vmatpush1.msra.mxu0 0.0
  %1752 = vmatprep.subr.mxu0 0.0
  %1753 = vmatpush1.msra.mxu0 0.0
  %1754 = vmatprep.subr.mxu0 0.0
  %1755 = vmatpush1.msra.mxu0 0.0
  %1756 = vmatprep.subr.mxu0 0.0
  %1757 = vmatpush1.msra.mxu0 0.0
  %1758 = vmatprep.subr.mxu0 0.0
  %1759 = vmatpush1.msra.mxu0 0.0
  %1760 = vmatprep.subr.mxu0 0.0
  %1761 = vmatpush1.msra.mxu0 0.0
  %1762 = vmatprep.subr.mxu0 0.0
  %1763 = vmatpush1.msra.mxu0 0.0
  %1764 = vmatprep.subr.mxu0 0.0
  %1765 = vmatpush1.msra.mxu0 0.0
  %1766 = vmatprep.subr.mxu0 0.0
  %1767 = vmatpush1.msra.mxu0 0.0
  %1768 = vmatprep.subr.mxu0 0.0
  %1769 = vmatpush1.msra.mxu0 0.0
  %1770 = vmatprep.subr.mxu0 0.0
  %1771 = vmatpush1.msra.mxu0 0.0
  %1772 = vmatprep.mubr.f32.mxu0 %v1697
  %1773 = vmatmul.mubr.f32.gmra.mrb[0].mxu0 %v1688
  %v1774 = vpop.f32.mrb[0].mxu0
  %v1775 = vadd.f32 %v47, %v1774
  %v1776 = vpop.f32.mrb[0].mxu0
  %1777 = vmatprep.mubr.f32.mxu0 %v1700
  %1778 = vmatmul.mubr.f32.gmra.mrb[0].mxu0 %v1690
  %v1779 = vpop.f32.mrb[0].mxu0
  %v1780 = vadd.f32 %v47, %v1779
  %v1781 = vpop.f32.mrb[0].mxu0
  %1782 = vmatprep.mubr.f32.mxu0 %v1703
  %1783 = vmatmul.mubr.f32.gmra.mrb[0].mxu0 %v1692
  %v1784 = vpop.f32.mrb[0].mxu0
  %v1785 = vadd.f32 %v47, %v1784
  %v1786 = vpop.f32.mrb[0].mxu0
  %1787 = vmatprep.mubr.f32.mxu0 %v1706
  %1788 = vmatmul.mubr.f32.gmra.mrb[0].mxu0 %v1694
  %v1789 = vpop.f32.mrb[0].mxu0
  %v1790 = vadd.f32 %v47, %v1789
  %v1791 = vpop.f32.mrb[0].mxu0
  %1792 = vdwg.mxu0
  %v1793 = vmax.f32 %v1683, %v1775
  %v1794 = vmax.f32 %v1684, %v1780
  %v1795 = vmax.f32 %v1685, %v1785
  %v1796 = vmax.f32 %v1686, %v1790
  %v1797 = vmax.f32 %v1793, 0.0
  %v1798 = vmax.f32 %v1794, 0.0
  %v1799 = vmax.f32 %v1795, 0.0
  %v1800 = vmax.f32 %v1796, 0.0
  %1801 = vst [vmem:[%s3] sm:$0xff] %v1797
  %1802 = vst [vmem:[%s3 + $0x8] sm:$0xff] %v1798
  %1803 = vst [vmem:[%s3 + $0x10] sm:$0xff] %v1799
  %1804 = vst [vmem:[%s3 + $0x18] sm:$0xff] %v1800
  // Predicated region
  $region14: #{net_forward.4} parent=0 // pred_check
    _
  $region15: #{net_forward.4} parent=0 // pred_check_branch
    %1806 = sbr.rel (0) target = $region17
  $region16: #{net_forward.4} parent=0 // pred_region
    _
  $region17: #{net_forward.4} parent=0 // pred_fallthru
    _
  // Predicated region
  $region18: #{net_forward.4} parent=0 // pred_check
    _
  $region19: #{net_forward.4} parent=0 // pred_check_branch
    %1808 = sbr.rel (0) target = $region21
  $region20: #{net_forward.4} parent=0 // pred_region
    _
  $region21: #{net_forward.4} parent=0 // pred_fallthru
    _

// kernel: net_forward.5
$region0: #{net_forward.5}
  #allocation0 [shape = 'u32[]', space=smem, size = 0x4, offset = 0x4, fixed_abs, tag = 'smem constant byte address 0x4 - core index']
  #allocation1 [shape = 'u32[144,128]{1,0:T(1,128)}', space=vmem, size = 0x12000, scoped, tag = 'internal scratch']
  %s0 = inlined_call_operand.vmem [shape: f32[2,256], index: 0, kind: input, shape index: {}]
  %s1 = inlined_call_operand.vmem [shape: f32[256,128], index: 1, kind: input, shape index: {}]
  %s2 = inlined_call_operand.vmem [shape: f32[1,128], index: 2, kind: input, shape index: {}]
  %s3 = inlined_call_operand.vmem [shape: f32[128,128], index: 3, kind: input, shape index: {}]
  %s4 = inlined_call_operand.vmem [shape: f32[1,128], index: 4, kind: input, shape index: {}]
  %s5 = inlined_call_operand.vmem [shape: f32[128,128], index: 5, kind: input, shape index: {}]
  %s6 = inlined_call_operand.vmem [shape: f32[1,128], index: 6, kind: input, shape index: {}]
  %s7 = inlined_call_operand.hbm [shape: f32[2,128], index: 7, kind: output, shape index: {}]
  %s8 = sld [smem:[#allocation0]]
  $region38: #{net_forward.5} parent=0
    _
  %s10 = ssub.s32 1, %s8
  %s11 = scalar_select 0, %s10, %s8
  $region1: #{net_forward.5} parent=0
    #allocation2 [shape = 'u8[1024]{0}', space=vmem, size = 0x400, scoped, tag = 'output window, operand 0, single buffered']
    #allocation3 [shape = 's32[1]{0}', space=sflag, size = 0x4, scoped, tag = 'scoped memory for net_forward.5']
    %12 = vsyncpa [#allocation3], 0
    // Predicated region
    $region2: #{net_forward.5} parent=1 // pred_check
      _
    $region3: #{net_forward.5} parent=1 // pred_check_branch
      %14 = sbr.rel (0) target = $region5
    $region4: #{net_forward.5} parent=1 // pred_region
      _
    $region5: #{net_forward.5} parent=1 // pred_fallthru
      _
    // Predicated region
    $region6: #{net_forward.5} parent=1 // pred_check
      _
    $region7: #{net_forward.5} parent=1 // pred_check_branch
      %16 = sbr.rel (0) target = $region9
    $region8: #{net_forward.5} parent=1 // pred_region
      _
    $region9: #{net_forward.5} parent=1 // pred_fallthru
      _
    // Predicated region
    $region10: #{net_forward.5} parent=1 // pred_check
      _
    $region11: #{net_forward.5} parent=1 // pred_check_branch
      %18 = sbr.rel (0) target = $region13
    $region12: #{net_forward.5} parent=1 // pred_region
      _
    $region13: #{net_forward.5} parent=1 // pred_fallthru
      _
    // Predicated region
    $region14: #{net_forward.5} parent=1 // pred_check
      _
    $region15: #{net_forward.5} parent=1 // pred_check_branch
      %20 = sbr.rel (0) target = $region17
    $region16: #{net_forward.5} parent=1 // pred_region
      _
    $region17: #{net_forward.5} parent=1 // pred_fallthru
      _
    // Predicated region
    $region18: #{net_forward.5} parent=1 // pred_check
      _
    $region19: #{net_forward.5} parent=1 // pred_check_branch
      %22 = sbr.rel (0) target = $region21
    $region20: #{net_forward.5} parent=1 // pred_region
      _
    $region21: #{net_forward.5} parent=1 // pred_fallthru
      _
    // Predicated region
    $region22: #{net_forward.5} parent=1 // pred_check
      _
    $region23: #{net_forward.5} parent=1 // pred_check_branch
      %24 = sbr.rel (0) target = $region25
    $region24: #{net_forward.5} parent=1 // pred_region
      _
    $region25: #{net_forward.5} parent=1 // pred_fallthru
      _
    // Predicated region
    $region26: #{net_forward.5} parent=1 // pred_check
      _
    $region27: #{net_forward.5} parent=1 // pred_check_branch
      %26 = sbr.rel (0) target = $region29
    $region28: #{net_forward.5} parent=1 // pred_region
      _
    $region29: #{net_forward.5} parent=1 // pred_fallthru
      _
    %v27 = vld [vmem:[%s0] sm:$0xf]
    %v28 = vld [vmem:[%s1] sm:$0xff]
    %v29 = vld [vmem:[%s1 + $0x8] sm:$0xff]
    %v30 = vld [vmem:[%s1 + $0x10] sm:$0xff]
    %v31 = vld [vmem:[%s1 + $0x18] sm:$0xff]
    %v32 = vld [vmem:[%s1 + $0x20] sm:$0xff]
    %v33 = vld [vmem:[%s1 + $0x28] sm:$0xff]
    %v34 = vld [vmem:[%s1 + $0x30] sm:$0xff]
    %v35 = vld [vmem:[%s1 + $0x38] sm:$0xff]
    %v36 = vld [vmem:[%s1 + $0x40] sm:$0xff]
    %v37 = vld [vmem:[%s1 + $0x48] sm:$0xff]
    %v38 = vld [vmem:[%s1 + $0x50] sm:$0xff]
    %v39 = vld [vmem:[%s1 + $0x58] sm:$0xff]
    %v40 = vld [vmem:[%s1 + $0x60] sm:$0xff]
    %v41 = vld [vmem:[%s1 + $0x68] sm:$0xff]
    %v42 = vld [vmem:[%s1 + $0x70] sm:$0xff]
    %v43 = vld [vmem:[%s1 + $0x78] sm:$0xff]
    %v44 = vld [vmem:[%s1 + $0x80] sm:$0xff]
    %v45 = vld [vmem:[%s1 + $0x88] sm:$0xff]
    %v46 = vld [vmem:[%s1 + $0x90] sm:$0xff]
    %v47 = vld [vmem:[%s1 + $0x98] sm:$0xff]
    %v48 = vld [vmem:[%s1 + $0xa0] sm:$0xff]
    %v49 = vld [vmem:[%s1 + $0xa8] sm:$0xff]
    %v50 = vld [vmem:[%s1 + $0xb0] sm:$0xff]
    %v51 = vld [vmem:[%s1 + $0xb8] sm:$0xff]
    %v52 = vld [vmem:[%s1 + $0xc0] sm:$0xff]
    %v53 = vld [vmem:[%s1 + $0xc8] sm:$0xff]
    %v54 = vld [vmem:[%s1 + $0xd0] sm:$0xff]
    %v55 = vld [vmem:[%s1 + $0xd8] sm:$0xff]
    %v56 = vld [vmem:[%s1 + $0xe0] sm:$0xff]
    %v57 = vld [vmem:[%s1 + $0xe8] sm:$0xff]
    %v58 = vld [vmem:[%s1 + $0xf0] sm:$0xff]
    %v59 = vld [vmem:[%s1 + $0xf8] sm:$0xff]
    %v60 = vld [vmem:[%s2] sm:$0x1]
    %v62 = vlaneseq
    %v63 = vshrl.u32 %v62, 7
    %v64 = vsub.s32 0, %v63
    %v65 = vrot.slane %v60, %v64
    %v69 = vunpack.c.l.s4 1983009808
    %v70 = vunpack.c.0.s8 %v69
    %v71 = vlaneseq
    %v72 = vshrl.u32 %v71, 7
    %v73 = vsub.s32 %v70, %v72
    %v74 = vrot.slane %v27, %v73
    %v75 = vcombine.high %v74, %v74
    %78 = vmatprep.subr.mxu0 0.0
    %79 = vmatpush1.msra.mxu0 %v28
    %80 = vmatprep.subr.mxu0 0.0
    %81 = vmatpush1.msra.mxu0 %v29
    %82 = vmatprep.subr.mxu0 0.0
    %83 = vmatpush1.msra.mxu0 %v30
    %84 = vmatprep.subr.mxu0 0.0
    %85 = vmatpush1.msra.mxu0 %v31
    %86 = vmatprep.subr.mxu0 0.0
    %87 = vmatpush1.msra.mxu0 %v32
    %88 = vmatprep.subr.mxu0 0.0
    %89 = vmatpush1.msra.mxu0 %v33
    %90 = vmatprep.subr.mxu0 0.0
    %91 = vmatpush1.msra.mxu0 %v34
    %92 = vmatprep.subr.mxu0 0.0
    %93 = vmatpush1.msra.mxu0 %v35
    %94 = vmatprep.subr.mxu0 0.0
    %95 = vmatpush1.msra.mxu0 %v36
    %96 = vmatprep.subr.mxu0 0.0
    %97 = vmatpush1.msra.mxu0 %v37
    %98 = vmatprep.subr.mxu0 0.0
    %99 = vmatpush1.msra.mxu0 %v38
    %100 = vmatprep.subr.mxu0 0.0
    %101 = vmatpush1.msra.mxu0 %v39
    %102 = vmatprep.subr.mxu0 0.0
    %103 = vmatpush1.msra.mxu0 %v40
    %104 = vmatprep.subr.mxu0 0.0
    %105 = vmatpush1.msra.mxu0 %v41
    %106 = vmatprep.subr.mxu0 0.0
    %107 = vmatpush1.msra.mxu0 %v42
    %108 = vmatprep.subr.mxu0 0.0
    %109 = vmatpush1.msra.mxu0 %v43
    %110 = vmatprep.subr.mxu0 0.0
    %111 = vmatpush1.msra.mxu0 %v44
    %112 = vmatprep.subr.mxu0 0.0
    %113 = vmatpush1.msra.mxu0 %v45
    %114 = vmatprep.subr.mxu0 0.0
    %115 = vmatpush1.msra.mxu0 %v46
    %116 = vmatprep.subr.mxu0 0.0
    %117 = vmatpush1.msra.mxu0 %v47
    %118 = vmatprep.subr.mxu0 0.0
    %119 = vmatpush1.msra.mxu0 %v48
    %120 = vmatprep.subr.mxu0 0.0
    %121 = vmatpush1.msra.mxu0 %v49
    %122 = vmatprep.subr.mxu0 0.0
    %123 = vmatpush1.msra.mxu0 %v50
    %124 = vmatprep.subr.mxu0 0.0
    %125 = vmatpush1.msra.mxu0 %v51
    %126 = vmatprep.subr.mxu0 0.0
    %127 = vmatpush1.msra.mxu0 %v52
    %128 = vmatprep.subr.mxu0 0.0
    %129 = vmatpush1.msra.mxu0 %v53
    %130 = vmatprep.subr.mxu0 0.0
    %131 = vmatpush1.msra.mxu0 %v54
    %132 = vmatprep.subr.mxu0 0.0
    %133 = vmatpush1.msra.mxu0 %v55
    %134 = vmatprep.subr.mxu0 0.0
    %135 = vmatpush1.msra.mxu0 %v56
    %136 = vmatprep.subr.mxu0 0.0
    %137 = vmatpush1.msra.mxu0 %v57
    %138 = vmatprep.subr.mxu0 0.0
    %139 = vmatpush1.msra.mxu0 %v58
    %140 = vmatprep.subr.mxu0 0.0
    %141 = vmatpush1.msra.mxu0 %v59
    %142 = vmatprep.mubr.f32.mxu0 %v75
    %143 = vmatmul.mubr.f32.gmra.mrb[0].mxu0 %v74
    %v144 = vpop.f32.mrb[0].mxu0
    %v145 = vadd.f32 %v65, %v144
    %v146 = vpop.f32.mrb[0].mxu0
    %147 = vdwg.mxu0
    %v148 = vmax.f32 %v145, 0.0
    %v149 = vld [vmem:[%s3] sm:$0xff]
    %v150 = vld [vmem:[%s3 + $0x8] sm:$0xff]
    %v151 = vld [vmem:[%s3 + $0x10] sm:$0xff]
    %v152 = vld [vmem:[%s3 + $0x18] sm:$0xff]
    %v153 = vld [vmem:[%s3 + $0x20] sm:$0xff]
    %v154 = vld [vmem:[%s3 + $0x28] sm:$0xff]
    %v155 = vld [vmem:[%s3 + $0x30] sm:$0xff]
    %v156 = vld [vmem:[%s3 + $0x38] sm:$0xff]
    %v157 = vld [vmem:[%s3 + $0x40] sm:$0xff]
    %v158 = vld [vmem:[%s3 + $0x48] sm:$0xff]
    %v159 = vld [vmem:[%s3 + $0x50] sm:$0xff]
    %v160 = vld [vmem:[%s3 + $0x58] sm:$0xff]
    %v161 = vld [vmem:[%s3 + $0x60] sm:$0xff]
    %v162 = vld [vmem:[%s3 + $0x68] sm:$0xff]
    %v163 = vld [vmem:[%s3 + $0x70] sm:$0xff]
    %v164 = vld [vmem:[%s3 + $0x78] sm:$0xff]
    %v165 = vld [vmem:[%s4] sm:$0x1]
    %v167 = vlaneseq
    %v168 = vshrl.u32 %v167, 7
    %v169 = vsub.s32 0, %v168
    %v170 = vrot.slane %v165, %v169
    %172 = vmatprep.subr.mxu0 0.0
    %173 = vmatpush1.msra.mxu0 %v149
    %174 = vmatprep.subr.mxu0 0.0
    %175 = vmatpush1.msra.mxu0 %v150
    %176 = vmatprep.subr.mxu0 0.0
    %177 = vmatpush1.msra.mxu0 %v151
    %178 = vmatprep.subr.mxu0 0.0
    %179 = vmatpush1.msra.mxu0 %v152
    %180 = vmatprep.subr.mxu0 0.0
    %181 = vmatpush1.msra.mxu0 %v153
    %182 = vmatprep.subr.mxu0 0.0
    %183 = vmatpush1.msra.mxu0 %v154
    %184 = vmatprep.subr.mxu0 0.0
    %185 = vmatpush1.msra.mxu0 %v155
    %186 = vmatprep.subr.mxu0 0.0
    %187 = vmatpush1.msra.mxu0 %v156
    %188 = vmatprep.subr.mxu0 0.0
    %189 = vmatpush1.msra.mxu0 %v157
    %190 = vmatprep.subr.mxu0 0.0
    %191 = vmatpush1.msra.mxu0 %v158
    %192 = vmatprep.subr.mxu0 0.0
    %193 = vmatpush1.msra.mxu0 %v159
    %194 = vmatprep.subr.mxu0 0.0
    %195 = vmatpush1.msra.mxu0 %v160
    %196 = vmatprep.subr.mxu0 0.0
    %197 = vmatpush1.msra.mxu0 %v161
    %198 = vmatprep.subr.mxu0 0.0
    %199 = vmatpush1.msra.mxu0 %v162
    %200 = vmatprep.subr.mxu0 0.0
    %201 = vmatpush1.msra.mxu0 %v163
    %202 = vmatprep.subr.mxu0 0.0
    %203 = vmatpush1.msra.mxu0 %v164
    %204 = vmatprep.subr.mxu0 0.0
    %205 = vmatpush1.msra.mxu0 0.0
    %206 = vmatprep.subr.mxu0 0.0
    %207 = vmatpush1.msra.mxu0 0.0
    %208 = vmatprep.subr.mxu0 0.0
    %209 = vmatpush1.msra.mxu0 0.0
    %210 = vmatprep.subr.mxu0 0.0
    %211 = vmatpush1.msra.mxu0 0.0
    %212 = vmatprep.subr.mxu0 0.0
    %213 = vmatpush1.msra.mxu0 0.0
    %214 = vmatprep.subr.mxu0 0.0
    %215 = vmatpush1.msra.mxu0 0.0
    %216 = vmatprep.subr.mxu0 0.0
    %217 = vmatpush1.msra.mxu0 0.0
    %218 = vmatprep.subr.mxu0 0.0
    %219 = vmatpush1.msra.mxu0 0.0
    %220 = vmatprep.subr.mxu0 0.0
    %221 = vmatpush1.msra.mxu0 0.0
    %222 = vmatprep.subr.mxu0 0.0
    %223 = vmatpush1.msra.mxu0 0.0
    %224 = vmatprep.subr.mxu0 0.0
    %225 = vmatpush1.msra.mxu0 0.0
    %226 = vmatprep.subr.mxu0 0.0
    %227 = vmatpush1.msra.mxu0 0.0
    %228 = vmatprep.subr.mxu0 0.0
    %229 = vmatpush1.msra.mxu0 0.0
    %230 = vmatprep.subr.mxu0 0.0
    %231 = vmatpush1.msra.mxu0 0.0
    %232 = vmatprep.subr.mxu0 0.0
    %233 = vmatpush1.msra.mxu0 0.0
    %234 = vmatprep.subr.mxu0 0.0
    %235 = vmatpush1.msra.mxu0 0.0
    %236 = vmatprep.mubr.f32.mxu0 0.0
    %237 = vmatmul.mubr.f32.gmra.mrb[0].mxu0 %v148
    %v238 = vpop.f32.mrb[0].mxu0
    %v239 = vadd.f32 %v170, %v238
    %v240 = vpop.f32.mrb[0].mxu0
    %241 = vdwg.mxu0
    %v242 = vmax.f32 %v239, 0.0
    %v243 = vld [vmem:[%s5] sm:$0xff]
    %v244 = vld [vmem:[%s5 + $0x8] sm:$0xff]
    %v245 = vld [vmem:[%s5 + $0x10] sm:$0xff]
    %v246 = vld [vmem:[%s5 + $0x18] sm:$0xff]
    %v247 = vld [vmem:[%s5 + $0x20] sm:$0xff]
    %v248 = vld [vmem:[%s5 + $0x28] sm:$0xff]
    %v249 = vld [vmem:[%s5 + $0x30] sm:$0xff]
    %v250 = vld [vmem:[%s5 + $0x38] sm:$0xff]
    %v251 = vld [vmem:[%s5 + $0x40] sm:$0xff]
    %v252 = vld [vmem:[%s5 + $0x48] sm:$0xff]
    %v253 = vld [vmem:[%s5 + $0x50] sm:$0xff]
    %v254 = vld [vmem:[%s5 + $0x58] sm:$0xff]
    %v255 = vld [vmem:[%s5 + $0x60] sm:$0xff]
    %v256 = vld [vmem:[%s5 + $0x68] sm:$0xff]
    %v257 = vld [vmem:[%s5 + $0x70] sm:$0xff]
    %v258 = vld [vmem:[%s5 + $0x78] sm:$0xff]
    %v259 = vld [vmem:[%s6] sm:$0x1]
    %v261 = vlaneseq
    %v262 = vshrl.u32 %v261, 7
    %v263 = vsub.s32 0, %v262
    %v264 = vrot.slane %v259, %v263
    %266 = vmatprep.subr.mxu0 0.0
    %267 = vmatpush1.msra.mxu0 %v243
    %268 = vmatprep.subr.mxu0 0.0
    %269 = vmatpush1.msra.mxu0 %v244
    %270 = vmatprep.subr.mxu0 0.0
    %271 = vmatpush1.msra.mxu0 %v245
    %272 = vmatprep.subr.mxu0 0.0
    %273 = vmatpush1.msra.mxu0 %v246
    %274 = vmatprep.subr.mxu0 0.0
    %275 = vmatpush1.msra.mxu0 %v247
    %276 = vmatprep.subr.mxu0 0.0
    %277 = vmatpush1.msra.mxu0 %v248
    %278 = vmatprep.subr.mxu0 0.0
    %279 = vmatpush1.msra.mxu0 %v249
    %280 = vmatprep.subr.mxu0 0.0
    %281 = vmatpush1.msra.mxu0 %v250
    %282 = vmatprep.subr.mxu0 0.0
    %283 = vmatpush1.msra.mxu0 %v251
    %284 = vmatprep.subr.mxu0 0.0
    %285 = vmatpush1.msra.mxu0 %v252
    %286 = vmatprep.subr.mxu0 0.0
    %287 = vmatpush1.msra.mxu0 %v253
    %288 = vmatprep.subr.mxu0 0.0
    %289 = vmatpush1.msra.mxu0 %v254
    %290 = vmatprep.subr.mxu0 0.0
    %291 = vmatpush1.msra.mxu0 %v255
    %292 = vmatprep.subr.mxu0 0.0
    %293 = vmatpush1.msra.mxu0 %v256
    %294 = vmatprep.subr.mxu0 0.0
    %295 = vmatpush1.msra.mxu0 %v257
    %296 = vmatprep.subr.mxu0 0.0
    %297 = vmatpush1.msra.mxu0 %v258
    %298 = vmatprep.subr.mxu0 0.0
    %299 = vmatpush1.msra.mxu0 0.0
    %300 = vmatprep.subr.mxu0 0.0
    %301 = vmatpush1.msra.mxu0 0.0
    %302 = vmatprep.subr.mxu0 0.0
    %303 = vmatpush1.msra.mxu0 0.0
    %304 = vmatprep.subr.mxu0 0.0
    %305 = vmatpush1.msra.mxu0 0.0
    %306 = vmatprep.subr.mxu0 0.0
    %307 = vmatpush1.msra.mxu0 0.0
    %308 = vmatprep.subr.mxu0 0.0
    %309 = vmatpush1.msra.mxu0 0.0
    %310 = vmatprep.subr.mxu0 0.0
    %311 = vmatpush1.msra.mxu0 0.0
    %312 = vmatprep.subr.mxu0 0.0
    %313 = vmatpush1.msra.mxu0 0.0
    %314 = vmatprep.subr.mxu0 0.0
    %315 = vmatpush1.msra.mxu0 0.0
    %316 = vmatprep.subr.mxu0 0.0
    %317 = vmatpush1.msra.mxu0 0.0
    %318 = vmatprep.subr.mxu0 0.0
    %319 = vmatpush1.msra.mxu0 0.0
    %320 = vmatprep.subr.mxu0 0.0
    %321 = vmatpush1.msra.mxu0 0.0
    %322 = vmatprep.subr.mxu0 0.0
    %323 = vmatpush1.msra.mxu0 0.0
    %324 = vmatprep.subr.mxu0 0.0
    %325 = vmatpush1.msra.mxu0 0.0
    %326 = vmatprep.subr.mxu0 0.0
    %327 = vmatpush1.msra.mxu0 0.0
    %328 = vmatprep.subr.mxu0 0.0
    %329 = vmatpush1.msra.mxu0 0.0
    %330 = vmatprep.mubr.f32.mxu0 0.0
    %331 = vmatmul.mubr.f32.gmra.mrb[0].mxu0 %v242
    %v332 = vpop.f32.mrb[0].mxu0
    %v333 = vadd.f32 %v264, %v332
    %v334 = vpop.f32.mrb[0].mxu0
    %335 = vdwg.mxu0
    %336 = vst [vmem:[#allocation2] sm:$0x3] %v333
    // Predicated region
    $region30: #{net_forward.5} parent=1 // pred_check
      _
    $region31: #{net_forward.5} parent=1 // pred_check_branch
      %338 = sbr.rel (0) target = $region33
    $region32: #{net_forward.5} parent=1 // pred_region
      %s340 = ssub.s32 32, 32
      %341 = vsyncadd [#allocation3], %s340
      %s343 = sshll.u32 [#allocation2], 4
      %s344 = int_to_ptr.vmem [resolvable:$true] %s343
      %346 = dma.vmem_to_hbm [thread:$0]  %s344, 32, %s7, [#allocation3]
    $region33: #{net_forward.5} parent=1 // pred_fallthru
      _
    // Predicated region
    $region34: #{net_forward.5} parent=1 // pred_check
      _
    $region35: #{net_forward.5} parent=1 // pred_check_branch
      %348 = sbr.rel (0) target = $region37
    $region36: #{net_forward.5} parent=1 // pred_region
      %349 = dma.done [#allocation3], 32
    $region37: #{net_forward.5} parent=1 // pred_fallthru
      _
    %350 = vsyncpa [#allocation3], 1

</llo_original>
